<compile_context>
chip_gen: v6e
topology: v6e:2x2x1
jax: 0.10.0
libtpu: 0.0.40
codegen_flags: <defaults>
</compile_context>

<pallas_src>
import functools

import jax
import jax.numpy as jnp
from jax import lax
from jax.experimental import pallas as pl
from jax.experimental.pallas import tpu as pltpu

_INV_SQRT2 = 0.7071067811865476


def _erf(x):
    # Abramowitz & Stegun 7.1.26 rational approximation (max abs error ~1.5e-7),
    # so GELU matches nn.GELU()'s erf default within float32 noise.
    p = 0.3275911
    a1, a2, a3, a4, a5 = 0.254829592, -0.284496736, 1.421413741, -1.453152027, 1.061405429
    sgn = jnp.where(x >= 0.0, 1.0, -1.0)
    ax = jnp.abs(x)
    t = 1.0 / (1.0 + p * ax)
    poly = ((((a5 * t + a4) * t + a3) * t + a2) * t + a1) * t
    return sgn * (1.0 - poly * jnp.exp(-ax * ax))


def _gelu_exact(x):
    return 0.5 * x * (1.0 + _erf(x * _INV_SQRT2))


def lfa_encoder_kernel(x_ref, w1_ref, b1_ref, w2_ref,
                       gamma_ref, beta_ref, wp1_ref, bp1_ref, wp2_ref, bp2_ref,
                       wse1_ref, wse2_ref, o_ref, *, Cp, K):
    f32 = jnp.float32
    Bb, H, W, C = x_ref.shape
    P = K // 2
    N = Bb * H * W

    # ---- dwconv1: 3x3 depthwise conv (+ bias), then residual add ------------
    x4 = x_ref[...].astype(f32)                                   # (Bb, H, W, C)
    w1 = w1_ref[...]                                              # (9, C)
    zc = jnp.zeros((Bb, H, 1, C), f32)
    zr = jnp.zeros((Bb, 1, W + 2, C), f32)
    xp = jnp.concatenate(
        [zr, jnp.concatenate([zc, x4, zc], axis=2), zr], axis=1)  # (Bb, H+2, W+2, C)
    y3 = x4 + b1_ref[...]                                         # residual + bias
    for kh in range(3):
        for kw in range(3):
            y3 = y3 + xp[:, kh:kh + H, kw:kw + W, :] * w1[3 * kh + kw]

    # ---- Pconv (split_cat): KxK conv over the first Cp channels -------------
    # Single im2col matmul (contraction K*K*Cp) instead of K*K tiny
    # contraction-Cp matmuls.  Taps are assembled with value-level
    # pad / outer-dim slice / concat only (no scratch refs).
    y1in = y3[..., :Cp]                                           # (Bb, H, W, Cp)
    zw = jnp.zeros((Bb, H, P, Cp), f32)
    ypw = jnp.concatenate([zw, y1in, zw], axis=2)                 # (Bb, H, W+2P, Cp)
    bstack = jnp.concatenate(
        [ypw[:, :, dx:dx + W, :] for dx in range(K)], axis=-1)    # (Bb, H, W, K*Cp)
    zh = jnp.zeros((Bb, P, W, K * Cp), f32)
    bpad = jnp.concatenate([zh, bstack, zh], axis=1)              # (Bb, H+2P, W, K*Cp)
    imcol = jnp.concatenate(
        [bpad[:, dy:dy + H] for dy in range(K)], axis=-1)         # (Bb, H, W, K*K*Cp)
    y1 = jnp.dot(imcol.reshape(N, K * K * Cp), w2_ref[...],
                 preferred_element_type=f32)                      # (N, C); cols >= Cp are 0

    y3f = y3.reshape(N, C)
    ch = lax.broadcasted_iota(jnp.int32, (1, C), 1)
    t = jnp.where(ch < Cp, y1, y3f)        # conv result only on the first Cp channels

    # ---- LayerNorm (eps=1e-6) + pwconv1 + exact GELU + pwconv2 --------------
    mu = jnp.mean(t, axis=-1, keepdims=True)
    var = jnp.mean((t - mu) ** 2, axis=-1, keepdims=True)
    tn = (t - mu) * lax.rsqrt(var + 1e-6) * gamma_ref[...] + beta_ref[...]
    h = jnp.dot(tn, wp1_ref[...], preferred_element_type=f32) + bp1_ref[...]
    h = _gelu_exact(h)                     # dropout p=0 / drop_path=0 -> identity
    z = jnp.dot(h, wp2_ref[...], preferred_element_type=f32) + bp2_ref[...]

    # ---- SE module on (input + z), then final residual ----------------------
    xin3 = x4.reshape(Bb, H * W, C)
    s3 = xin3 + z.reshape(Bb, H * W, C)
    pooled = jnp.mean(s3, axis=1)                                 # (Bb, C) per-image pool
    wse1 = wse1_ref[...]                                          # (Cr, C)
    wse2 = wse2_ref[...]                                          # (Cr, C)
    attn = jnp.zeros((Bb, C), f32)
    for j in range(wse1.shape[0]):         # tiny FCs on the VPU (no M=1 MXU matmuls)
        aj = jnp.maximum(jnp.sum(pooled * wse1[j], axis=-1, keepdims=True), 0.0)
        attn = attn + aj * wse2[j]
    attn = jax.nn.sigmoid(attn)                                   # (Bb, C)
    out = s3 * attn[:, None, :] + xin3     # SE scaling + final `x + input` (spect=False)
    o_ref[...] = out.reshape(Bb, H, W, C)


def _lane_pad(v):
    return ((v + 127) // 128) * 128


def _vmem_bytes_estimate(Bblk, H, W, C, Cp, K, Hid, Cr):
    f = 4
    n = Bblk * H * W
    cpad, hidpad = _lane_pad(C), _lane_pad(Hid)
    kkcp = _lane_pad(K * K * Cp)
    io = 2 * 2 * n * cpad                                   # x + out blocks, double-buffered
    weights = 2 * (K * K * Cp * cpad + (C + 2) * hidpad
                   + (Hid + 16 + 2 * Cr) * cpad)
    live = n * (2 * kkcp + hidpad + 8 * cpad)               # im2col + MLP + misc temporaries
    return f * (io + weights + live)


def _vmem_capacity_bytes():
    try:
        return int(pltpu.get_tpu_info().vmem_capacity_bytes)
    except Exception:
        return 64 << 20   # conservative fallback = v7x per-core VMEM


def _pick_bblk(B, H, W, C, Cp, K, Hid, Cr, cap_bytes):
    budget = cap_bytes // 2
    for cand in range(min(B, 8), 0, -1):
        if B % cand == 0 and _vmem_bytes_estimate(cand, H, W, C, Cp, K, Hid, Cr) <= budget:
            return cand
    return 1


def lfa_encoder_forward_nhwc(x_nhwc, params, *, kernel_s=7):
    """LFAEncoder forward, NHWC in / NHWC out (use this when stacking blocks)."""
    B, H, W, C = x_nhwc.shape
    Cp = C // 4
    K = kernel_s
    P = K // 2
    assert C % 4 == 0 and Cp >= 1
    assert H > P and W > P
    # TODO(synk): relax by padding W up to a multiple of 8; the cheap in-kernel
    # reshapes (outer-dim merges/splits) assume a sublane-aligned W.
    assert W % 8 == 0

    x = x_nhwc.astype(jnp.float32)

    # ---- weights in kernel-friendly layouts (tiny glue, plain JAX) ----------
    w1 = jnp.transpose(params['dw1_w'][:, 0], (1, 2, 0)).reshape(9, C)   # (9, C)
    b1 = params['dw1_b'].reshape(1, C)
    wt = jnp.transpose(params['pconv_w'], (2, 3, 1, 0))                  # (K, K, Cin=Cp, Cout=Cp)
    w2 = jnp.zeros((K, K, Cp, C), jnp.float32).at[..., :Cp].set(wt)
    w2 = w2.reshape(K * K * Cp, C)            # im2col weight; output cols >= Cp stay zero
    gamma = params['ln_g'].reshape(1, C)
    beta = params['ln_b'].reshape(1, C)
    wp1 = params['pw1_w'].T                                              # (C, Hid)
    bp1 = params['pw1_b'].reshape(1, -1)
    wp2 = params['pw2_w'].T                                              # (Hid, C)
    bp2 = params['pw2_b'].reshape(1, C)
    wse1 = params['se1_w']                                               # (Cr, C)
    wse2 = params['se2_w'].T                                             # (Cr, C)
    Hid = wp1.shape[1]
    Cr = wse1.shape[0]

    cap = _vmem_capacity_bytes()
    Bblk = _pick_bblk(B, H, W, C, Cp, K, Hid, Cr, cap)
    est = _vmem_bytes_estimate(Bblk, H, W, C, Cp, K, Hid, Cr)
    vmem_limit = int(min(max(48 << 20, 2 * est), int(cap * 0.9)))

    kernel = functools.partial(lfa_encoder_kernel, Cp=Cp, K=K)

    def full_spec(shape):
        return pl.BlockSpec(shape, lambda b: tuple(0 for _ in shape))

    # TODO(synk): for large feature maps (e.g. 56x56, C>=96) add a second
    # "parallel" grid axis over row strips (halo rows via the index_map) so both
    # v7x TensorCores are used at small B and the per-step block stays in VMEM.
    # TODO(synk): if a trace shows the writeback DMA exposed, present lane-dense
    # I/O by reshaping to (B, H, W*C) at the wrapper (C=32 => 25% lane density).
    out_nhwc = pl.pallas_call(
        kernel,
        out_shape=jax.ShapeDtypeStruct((B, H, W, C), jnp.float32),
        grid=(B // Bblk,),
        in_specs=[
            pl.BlockSpec((Bblk, H, W, C), lambda b: (b, 0, 0, 0)),
            full_spec((9, C)),            # dwconv1 weight
            full_spec((1, C)),            # dwconv1 bias
            full_spec((K * K * Cp, C)),   # Pconv im2col weight
            full_spec((1, C)),            # LN gamma
            full_spec((1, C)),            # LN beta
            full_spec((C, Hid)),          # pwconv1 weight
            full_spec((1, Hid)),          # pwconv1 bias
            full_spec((Hid, C)),          # pwconv2 weight
            full_spec((1, C)),            # pwconv2 bias
            full_spec((Cr, C)),           # SE fc1 weight (rows = hidden units)
            full_spec((Cr, C)),           # SE fc2 weight (rows = hidden units)
        ],
        out_specs=pl.BlockSpec((Bblk, H, W, C), lambda b: (b, 0, 0, 0)),
        compiler_params=pltpu.CompilerParams(
            dimension_semantics=("parallel",),
            vmem_limit_bytes=vmem_limit),
    )(x, w1, b1, w2, gamma, beta, wp1, bp1, wp2, bp2, wse1, wse2)
    return out_nhwc


@functools.partial(jax.jit, static_argnames=("kernel_s",))
def lfa_encoder_forward(x_nchw, params, *, kernel_s=7):
    """PyTorch-compatible NCHW interface (transposes are glue around the kernel)."""
    x = jnp.transpose(x_nchw, (0, 2, 3, 1))
    out = lfa_encoder_forward_nhwc(x, params, kernel_s=kernel_s)
    return jnp.transpose(out, (0, 3, 1, 2))


def make_params(key, C, expan_ratio=4, kernel_s=7, reduction=16):
    Cp = C // 4
    Hid = int(expan_ratio * C)
    Cr = max(C // reduction, 1)
    keys = jax.random.split(key, 11)

    def n(k, shape, scale):
        return jax.random.normal(k, shape, jnp.float32) * scale

    return {
        'dw1_w': n(keys[0], (C, 1, 3, 3), 1.0 / 3.0),
        'dw1_b': n(keys[1], (C,), 0.1),
        'pconv_w': n(keys[2], (Cp, Cp, kernel_s, kernel_s), 1.0 / (kernel_s * float(Cp) ** 0.5)),
        'ln_g': 1.0 + n(keys[3], (C,), 0.1),
        'ln_b': n(keys[4], (C,), 0.1),
        'pw1_w': n(keys[5], (Hid, C), 1.0 / float(C) ** 0.5),
        'pw1_b': n(keys[6], (Hid,), 0.1),
        'pw2_w': n(keys[7], (C, Hid), 1.0 / float(Hid) ** 0.5),
        'pw2_b': n(keys[8], (C,), 0.1),
        'se1_w': n(keys[9], (Cr, C), 1.0 / float(C) ** 0.5),
        'se2_w': n(keys[10], (C, Cr), 1.0 / float(Cr) ** 0.5),
    }


def ref_forward(x, params):
    """Pure-JAX reference mirroring the PyTorch forward (NCHW)."""
    C = x.shape[1]
    Cp = C // 4
    dn = ('NCHW', 'OIHW', 'NCHW')
    y = lax.conv_general_dilated(x, params['dw1_w'], (1, 1), 'SAME',
                                 feature_group_count=C, dimension_numbers=dn)
    y = y + params['dw1_b'][None, :, None, None] + x
    y1 = lax.conv_general_dilated(y[:, :Cp], params['pconv_w'], (1, 1), 'SAME',
                                  dimension_numbers=dn)
    y = jnp.concatenate([y1, y[:, Cp:]], axis=1)
    t = jnp.transpose(y, (0, 2, 3, 1))
    mu = t.mean(-1, keepdims=True)
    var = ((t - mu) ** 2).mean(-1, keepdims=True)
    tn = (t - mu) / jnp.sqrt(var + 1e-6) * params['ln_g'] + params['ln_b']
    h = jax.nn.gelu(tn @ params['pw1_w'].T + params['pw1_b'], approximate=False)
    z = h @ params['pw2_w'].T + params['pw2_b']
    z = jnp.transpose(z, (0, 3, 1, 2))
    s = x + z
    pooled = s.mean((2, 3))
    a = jax.nn.sigmoid(jax.nn.relu(pooled @ params['se1_w'].T) @ params['se2_w'].T)
    return s * a[:, :, None, None] + x


if __name__ == "__main__":
    B, C, H, W = 2, 32, 16, 16          # dim=32 so SE reduction (//16) and n_div=4 stay valid
    key = jax.random.PRNGKey(0)
    kx, kp = jax.random.split(key)
    x = jax.random.normal(kx, (B, C, H, W), jnp.float32)
    params = make_params(kp, C)

    out = lfa_encoder_forward(x, params)
    out = jax.block_until_ready(out)

    ref = ref_forward(x, params)
    assert out.shape == (B, C, H, W)
    if not bool(jnp.allclose(out, ref, atol=3e-4, rtol=3e-3)):
        max_err = float(jnp.max(jnp.abs(out - ref)))
        raise AssertionError(f"mismatch vs JAX reference, max abs err = {max_err}")
    print("KERNEL_OK")
</pallas_src>

<mosaic_0001>
module attributes {stable_mosaic.version = 11 : i64} {
  func.func @lfa_encoder_kernel(%arg0: i32, %arg1: memref<2x16x16x32xf32, #tpu.memory_space<vmem>>, %arg2: memref<9x32xf32, #tpu.memory_space<vmem>>, %arg3: memref<1x32xf32, #tpu.memory_space<vmem>>, %arg4: memref<392x32xf32, #tpu.memory_space<vmem>>, %arg5: memref<1x32xf32, #tpu.memory_space<vmem>>, %arg6: memref<1x32xf32, #tpu.memory_space<vmem>>, %arg7: memref<32x128xf32, #tpu.memory_space<vmem>>, %arg8: memref<1x128xf32, #tpu.memory_space<vmem>>, %arg9: memref<128x32xf32, #tpu.memory_space<vmem>>, %arg10: memref<1x32xf32, #tpu.memory_space<vmem>>, %arg11: memref<2x32xf32, #tpu.memory_space<vmem>>, %arg12: memref<2x32xf32, #tpu.memory_space<vmem>>, %arg13: memref<2x16x16x32xf32, #tpu.memory_space<vmem>>) attributes {dimension_semantics = [#tpu.dimension_semantics<parallel>], iteration_bounds = array<i64: 1>, scalar_prefetch = 0 : i64, scratch_operands = 0 : i64, tpu.core_type = #tpu.core_type<tc>, window_params = [{transform_indices = @transform_0, window_bounds = array<i64: 2, 16, 16, 32>}, {pipeline_mode = #tpu.pipeline_mode<synchronous>, transform_indices = @transform_1, window_bounds = array<i64: 9, 32>}, {pipeline_mode = #tpu.pipeline_mode<synchronous>, transform_indices = @transform_2, window_bounds = array<i64: 1, 32>}, {pipeline_mode = #tpu.pipeline_mode<synchronous>, transform_indices = @transform_3, window_bounds = array<i64: 392, 32>}, {pipeline_mode = #tpu.pipeline_mode<synchronous>, transform_indices = @transform_4, window_bounds = array<i64: 1, 32>}, {pipeline_mode = #tpu.pipeline_mode<synchronous>, transform_indices = @transform_5, window_bounds = array<i64: 1, 32>}, {pipeline_mode = #tpu.pipeline_mode<synchronous>, transform_indices = @transform_6, window_bounds = array<i64: 32, 128>}, {pipeline_mode = #tpu.pipeline_mode<synchronous>, transform_indices = @transform_7, window_bounds = array<i64: 1, 128>}, {pipeline_mode = #tpu.pipeline_mode<synchronous>, transform_indices = @transform_8, window_bounds = array<i64: 128, 32>}, {pipeline_mode = #tpu.pipeline_mode<synchronous>, transform_indices = @transform_9, window_bounds = array<i64: 1, 32>}, {pipeline_mode = #tpu.pipeline_mode<synchronous>, transform_indices = @transform_10, window_bounds = array<i64: 2, 32>}, {pipeline_mode = #tpu.pipeline_mode<synchronous>, transform_indices = @transform_11, window_bounds = array<i64: 2, 32>}, {transform_indices = @transform_12, window_bounds = array<i64: 2, 16, 16, 32>}]} {
    %c0 = arith.constant 0 : index
    %c0_0 = arith.constant 0 : index
    %c0_1 = arith.constant 0 : index
    %c0_2 = arith.constant 0 : index
    %0 = vector.load %arg1[%c0, %c0_0, %c0_1, %c0_2] : memref<2x16x16x32xf32, #tpu.memory_space<vmem>>, vector<2x16x16x32xf32>
    %c0_3 = arith.constant 0 : index
    %c0_4 = arith.constant 0 : index
    %1 = vector.load %arg2[%c0_3, %c0_4] : memref<9x32xf32, #tpu.memory_space<vmem>>, vector<9x32xf32>
    %cst = arith.constant 0.000000e+00 : f32
    %2 = vector.broadcast %cst : f32 to vector<2x16x1x32xf32>
    %cst_5 = arith.constant 0.000000e+00 : f32
    %3 = vector.broadcast %cst_5 : f32 to vector<2x1x18x32xf32>
    %4 = tpu.concatenate %2, %0, %2 in 2 : vector<2x16x1x32xf32>, vector<2x16x16x32xf32>, vector<2x16x1x32xf32> -> vector<2x16x18x32xf32>
    %5 = tpu.concatenate %3, %4, %3 in 1 : vector<2x1x18x32xf32>, vector<2x16x18x32xf32>, vector<2x1x18x32xf32> -> vector<2x18x18x32xf32>
    %c0_6 = arith.constant 0 : index
    %c0_7 = arith.constant 0 : index
    %6 = vector.load %arg3[%c0_6, %c0_7] : memref<1x32xf32, #tpu.memory_space<vmem>>, vector<1x32xf32>
    %7 = vector.shape_cast %6 : vector<1x32xf32> to vector<1x1x1x32xf32>
    %8 = vector.broadcast %7 : vector<1x1x1x32xf32> to vector<2x16x16x32xf32>
    %9 = arith.addf %0, %8 : vector<2x16x16x32xf32>
    %10 = vector.extract_strided_slice %5 {offsets = [0, 0, 0, 0], sizes = [2, 16, 16, 32], strides = [1, 1, 1, 1]} : vector<2x18x18x32xf32> to vector<2x16x16x32xf32>
    %11 = vector.extract_strided_slice %1 {offsets = [0, 0], sizes = [1, 32], strides = [1, 1]} : vector<9x32xf32> to vector<1x32xf32>
    %12 = vector.shape_cast %11 : vector<1x32xf32> to vector<32xf32>
    %13 = vector.shape_cast %12 : vector<32xf32> to vector<1x1x1x32xf32>
    %14 = vector.broadcast %13 : vector<1x1x1x32xf32> to vector<2x16x16x32xf32>
    %15 = arith.mulf %10, %14 : vector<2x16x16x32xf32>
    %16 = arith.addf %9, %15 : vector<2x16x16x32xf32>
    %17 = vector.extract_strided_slice %5 {offsets = [0, 0, 1, 0], sizes = [2, 16, 16, 32], strides = [1, 1, 1, 1]} : vector<2x18x18x32xf32> to vector<2x16x16x32xf32>
    %18 = vector.extract_strided_slice %1 {offsets = [1, 0], sizes = [1, 32], strides = [1, 1]} : vector<9x32xf32> to vector<1x32xf32>
    %19 = vector.shape_cast %18 : vector<1x32xf32> to vector<32xf32>
    %20 = vector.shape_cast %19 : vector<32xf32> to vector<1x1x1x32xf32>
    %21 = vector.broadcast %20 : vector<1x1x1x32xf32> to vector<2x16x16x32xf32>
    %22 = arith.mulf %17, %21 : vector<2x16x16x32xf32>
    %23 = arith.addf %16, %22 : vector<2x16x16x32xf32>
    %24 = vector.extract_strided_slice %5 {offsets = [0, 0, 2, 0], sizes = [2, 16, 16, 32], strides = [1, 1, 1, 1]} : vector<2x18x18x32xf32> to vector<2x16x16x32xf32>
    %25 = vector.extract_strided_slice %1 {offsets = [2, 0], sizes = [1, 32], strides = [1, 1]} : vector<9x32xf32> to vector<1x32xf32>
    %26 = vector.shape_cast %25 : vector<1x32xf32> to vector<32xf32>
    %27 = vector.shape_cast %26 : vector<32xf32> to vector<1x1x1x32xf32>
    %28 = vector.broadcast %27 : vector<1x1x1x32xf32> to vector<2x16x16x32xf32>
    %29 = arith.mulf %24, %28 : vector<2x16x16x32xf32>
    %30 = arith.addf %23, %29 : vector<2x16x16x32xf32>
    %31 = vector.extract_strided_slice %5 {offsets = [0, 1, 0, 0], sizes = [2, 16, 16, 32], strides = [1, 1, 1, 1]} : vector<2x18x18x32xf32> to vector<2x16x16x32xf32>
    %32 = vector.extract_strided_slice %1 {offsets = [3, 0], sizes = [1, 32], strides = [1, 1]} : vector<9x32xf32> to vector<1x32xf32>
    %33 = vector.shape_cast %32 : vector<1x32xf32> to vector<32xf32>
    %34 = vector.shape_cast %33 : vector<32xf32> to vector<1x1x1x32xf32>
    %35 = vector.broadcast %34 : vector<1x1x1x32xf32> to vector<2x16x16x32xf32>
    %36 = arith.mulf %31, %35 : vector<2x16x16x32xf32>
    %37 = arith.addf %30, %36 : vector<2x16x16x32xf32>
    %38 = vector.extract_strided_slice %5 {offsets = [0, 1, 1, 0], sizes = [2, 16, 16, 32], strides = [1, 1, 1, 1]} : vector<2x18x18x32xf32> to vector<2x16x16x32xf32>
    %39 = vector.extract_strided_slice %1 {offsets = [4, 0], sizes = [1, 32], strides = [1, 1]} : vector<9x32xf32> to vector<1x32xf32>
    %40 = vector.shape_cast %39 : vector<1x32xf32> to vector<32xf32>
    %41 = vector.shape_cast %40 : vector<32xf32> to vector<1x1x1x32xf32>
    %42 = vector.broadcast %41 : vector<1x1x1x32xf32> to vector<2x16x16x32xf32>
    %43 = arith.mulf %38, %42 : vector<2x16x16x32xf32>
    %44 = arith.addf %37, %43 : vector<2x16x16x32xf32>
    %45 = vector.extract_strided_slice %5 {offsets = [0, 1, 2, 0], sizes = [2, 16, 16, 32], strides = [1, 1, 1, 1]} : vector<2x18x18x32xf32> to vector<2x16x16x32xf32>
    %46 = vector.extract_strided_slice %1 {offsets = [5, 0], sizes = [1, 32], strides = [1, 1]} : vector<9x32xf32> to vector<1x32xf32>
    %47 = vector.shape_cast %46 : vector<1x32xf32> to vector<32xf32>
    %48 = vector.shape_cast %47 : vector<32xf32> to vector<1x1x1x32xf32>
    %49 = vector.broadcast %48 : vector<1x1x1x32xf32> to vector<2x16x16x32xf32>
    %50 = arith.mulf %45, %49 : vector<2x16x16x32xf32>
    %51 = arith.addf %44, %50 : vector<2x16x16x32xf32>
    %52 = vector.extract_strided_slice %5 {offsets = [0, 2, 0, 0], sizes = [2, 16, 16, 32], strides = [1, 1, 1, 1]} : vector<2x18x18x32xf32> to vector<2x16x16x32xf32>
    %53 = vector.extract_strided_slice %1 {offsets = [6, 0], sizes = [1, 32], strides = [1, 1]} : vector<9x32xf32> to vector<1x32xf32>
    %54 = vector.shape_cast %53 : vector<1x32xf32> to vector<32xf32>
    %55 = vector.shape_cast %54 : vector<32xf32> to vector<1x1x1x32xf32>
    %56 = vector.broadcast %55 : vector<1x1x1x32xf32> to vector<2x16x16x32xf32>
    %57 = arith.mulf %52, %56 : vector<2x16x16x32xf32>
    %58 = arith.addf %51, %57 : vector<2x16x16x32xf32>
    %59 = vector.extract_strided_slice %5 {offsets = [0, 2, 1, 0], sizes = [2, 16, 16, 32], strides = [1, 1, 1, 1]} : vector<2x18x18x32xf32> to vector<2x16x16x32xf32>
    %60 = vector.extract_strided_slice %1 {offsets = [7, 0], sizes = [1, 32], strides = [1, 1]} : vector<9x32xf32> to vector<1x32xf32>
    %61 = vector.shape_cast %60 : vector<1x32xf32> to vector<32xf32>
    %62 = vector.shape_cast %61 : vector<32xf32> to vector<1x1x1x32xf32>
    %63 = vector.broadcast %62 : vector<1x1x1x32xf32> to vector<2x16x16x32xf32>
    %64 = arith.mulf %59, %63 : vector<2x16x16x32xf32>
    %65 = arith.addf %58, %64 : vector<2x16x16x32xf32>
    %66 = vector.extract_strided_slice %5 {offsets = [0, 2, 2, 0], sizes = [2, 16, 16, 32], strides = [1, 1, 1, 1]} : vector<2x18x18x32xf32> to vector<2x16x16x32xf32>
    %67 = vector.extract_strided_slice %1 {offsets = [8, 0], sizes = [1, 32], strides = [1, 1]} : vector<9x32xf32> to vector<1x32xf32>
    %68 = vector.shape_cast %67 : vector<1x32xf32> to vector<32xf32>
    %69 = vector.shape_cast %68 : vector<32xf32> to vector<1x1x1x32xf32>
    %70 = vector.broadcast %69 : vector<1x1x1x32xf32> to vector<2x16x16x32xf32>
    %71 = arith.mulf %66, %70 : vector<2x16x16x32xf32>
    %72 = arith.addf %65, %71 : vector<2x16x16x32xf32>
    %73 = vector.extract_strided_slice %72 {offsets = [0, 0, 0, 0], sizes = [2, 16, 16, 8], strides = [1, 1, 1, 1]} : vector<2x16x16x32xf32> to vector<2x16x16x8xf32>
    %cst_8 = arith.constant 0.000000e+00 : f32
    %74 = vector.broadcast %cst_8 : f32 to vector<2x16x3x8xf32>
    %75 = tpu.concatenate %74, %73, %74 in 2 : vector<2x16x3x8xf32>, vector<2x16x16x8xf32>, vector<2x16x3x8xf32> -> vector<2x16x22x8xf32>
    %76 = vector.extract_strided_slice %75 {offsets = [0, 0, 0, 0], sizes = [2, 16, 16, 8], strides = [1, 1, 1, 1]} : vector<2x16x22x8xf32> to vector<2x16x16x8xf32>
    %77 = vector.extract_strided_slice %75 {offsets = [0, 0, 1, 0], sizes = [2, 16, 16, 8], strides = [1, 1, 1, 1]} : vector<2x16x22x8xf32> to vector<2x16x16x8xf32>
    %78 = vector.extract_strided_slice %75 {offsets = [0, 0, 2, 0], sizes = [2, 16, 16, 8], strides = [1, 1, 1, 1]} : vector<2x16x22x8xf32> to vector<2x16x16x8xf32>
    %79 = vector.extract_strided_slice %75 {offsets = [0, 0, 3, 0], sizes = [2, 16, 16, 8], strides = [1, 1, 1, 1]} : vector<2x16x22x8xf32> to vector<2x16x16x8xf32>
    %80 = vector.extract_strided_slice %75 {offsets = [0, 0, 4, 0], sizes = [2, 16, 16, 8], strides = [1, 1, 1, 1]} : vector<2x16x22x8xf32> to vector<2x16x16x8xf32>
    %81 = vector.extract_strided_slice %75 {offsets = [0, 0, 5, 0], sizes = [2, 16, 16, 8], strides = [1, 1, 1, 1]} : vector<2x16x22x8xf32> to vector<2x16x16x8xf32>
    %82 = vector.extract_strided_slice %75 {offsets = [0, 0, 6, 0], sizes = [2, 16, 16, 8], strides = [1, 1, 1, 1]} : vector<2x16x22x8xf32> to vector<2x16x16x8xf32>
    %83 = tpu.concatenate %76, %77, %78, %79, %80, %81, %82 in 3 : vector<2x16x16x8xf32>, vector<2x16x16x8xf32>, vector<2x16x16x8xf32>, vector<2x16x16x8xf32>, vector<2x16x16x8xf32>, vector<2x16x16x8xf32>, vector<2x16x16x8xf32> -> vector<2x16x16x56xf32>
    %cst_9 = arith.constant 0.000000e+00 : f32
    %84 = vector.broadcast %cst_9 : f32 to vector<2x3x16x56xf32>
    %85 = tpu.concatenate %84, %83, %84 in 1 : vector<2x3x16x56xf32>, vector<2x16x16x56xf32>, vector<2x3x16x56xf32> -> vector<2x22x16x56xf32>
    %86 = vector.extract_strided_slice %85 {offsets = [0, 0, 0, 0], sizes = [2, 16, 16, 56], strides = [1, 1, 1, 1]} : vector<2x22x16x56xf32> to vector<2x16x16x56xf32>
    %87 = vector.extract_strided_slice %85 {offsets = [0, 1, 0, 0], sizes = [2, 16, 16, 56], strides = [1, 1, 1, 1]} : vector<2x22x16x56xf32> to vector<2x16x16x56xf32>
    %88 = vector.extract_strided_slice %85 {offsets = [0, 2, 0, 0], sizes = [2, 16, 16, 56], strides = [1, 1, 1, 1]} : vector<2x22x16x56xf32> to vector<2x16x16x56xf32>
    %89 = vector.extract_strided_slice %85 {offsets = [0, 3, 0, 0], sizes = [2, 16, 16, 56], strides = [1, 1, 1, 1]} : vector<2x22x16x56xf32> to vector<2x16x16x56xf32>
    %90 = vector.extract_strided_slice %85 {offsets = [0, 4, 0, 0], sizes = [2, 16, 16, 56], strides = [1, 1, 1, 1]} : vector<2x22x16x56xf32> to vector<2x16x16x56xf32>
    %91 = vector.extract_strided_slice %85 {offsets = [0, 5, 0, 0], sizes = [2, 16, 16, 56], strides = [1, 1, 1, 1]} : vector<2x22x16x56xf32> to vector<2x16x16x56xf32>
    %92 = vector.extract_strided_slice %85 {offsets = [0, 6, 0, 0], sizes = [2, 16, 16, 56], strides = [1, 1, 1, 1]} : vector<2x22x16x56xf32> to vector<2x16x16x56xf32>
    %93 = tpu.concatenate %86, %87, %88, %89, %90, %91, %92 in 3 : vector<2x16x16x56xf32>, vector<2x16x16x56xf32>, vector<2x16x16x56xf32>, vector<2x16x16x56xf32>, vector<2x16x16x56xf32>, vector<2x16x16x56xf32>, vector<2x16x16x56xf32> -> vector<2x16x16x392xf32>
    %94 = vector.shape_cast %93 : vector<2x16x16x392xf32> to vector<512x392xf32>
    %c0_10 = arith.constant 0 : index
    %c0_11 = arith.constant 0 : index
    %95 = vector.load %arg4[%c0_10, %c0_11] : memref<392x32xf32, #tpu.memory_space<vmem>>, vector<392x32xf32>
    %cst_12 = arith.constant dense<0.000000e+00> : vector<512x32xf32>
    %96 = tpu.matmul %94, %95, %cst_12 {dimension_numbers = #tpu.dot_dimension_numbers<[1], [0], [0], [1], [0, 0, 1, 1], [], []>} : vector<512x392xf32>, vector<392x32xf32>, vector<512x32xf32> -> vector<512x32xf32>
    %97 = vector.shape_cast %72 : vector<2x16x16x32xf32> to vector<512x32xf32>
    %98 = tpu.iota {dimensions = array<i32: 1>} : vector<1x32xi32>
    %c8_i32 = arith.constant 8 : i32
    %99 = vector.broadcast %c8_i32 : i32 to vector<1x32xi32>
    %100 = arith.cmpi slt, %98, %99 : vector<1x32xi32>
    %101 = vector.shape_cast %100 : vector<1x32xi1> to vector<1x32xi1>
    %102 = vector.broadcast %101 : vector<1x32xi1> to vector<512x32xi1>
    %103 = arith.select %102, %96, %97 : vector<512x32xi1>, vector<512x32xf32>
    %cst_13 = arith.constant dense<0.000000e+00> : vector<512xf32>
    %104 = vector.multi_reduction <add>, %103, %cst_13 [1] : vector<512x32xf32> to vector<512xf32>
    %105 = vector.shape_cast %104 : vector<512xf32> to vector<512x1xf32>
    %cst_14 = arith.constant 3.200000e+01 : f32
    %106 = vector.broadcast %cst_14 : f32 to vector<512x1xf32>
    %107 = arith.divf %105, %106 : vector<512x1xf32>
    %108 = vector.broadcast %107 : vector<512x1xf32> to vector<512x32xf32>
    %109 = arith.subf %103, %108 : vector<512x32xf32>
    %110 = arith.mulf %109, %109 : vector<512x32xf32>
    %cst_15 = arith.constant dense<0.000000e+00> : vector<512xf32>
    %111 = vector.multi_reduction <add>, %110, %cst_15 [1] : vector<512x32xf32> to vector<512xf32>
    %112 = vector.shape_cast %111 : vector<512xf32> to vector<512x1xf32>
    %cst_16 = arith.constant 3.200000e+01 : f32
    %113 = vector.broadcast %cst_16 : f32 to vector<512x1xf32>
    %114 = arith.divf %112, %113 : vector<512x1xf32>
    %115 = vector.broadcast %107 : vector<512x1xf32> to vector<512x32xf32>
    %116 = arith.subf %103, %115 : vector<512x32xf32>
    %cst_17 = arith.constant 9.99999997E-7 : f32
    %117 = vector.broadcast %cst_17 : f32 to vector<512x1xf32>
    %118 = arith.addf %114, %117 : vector<512x1xf32>
    %119 = math.rsqrt %118 : vector<512x1xf32>
    %120 = vector.broadcast %119 : vector<512x1xf32> to vector<512x32xf32>
    %121 = arith.mulf %116, %120 : vector<512x32xf32>
    %c0_18 = arith.constant 0 : index
    %c0_19 = arith.constant 0 : index
    %122 = vector.load %arg5[%c0_18, %c0_19] : memref<1x32xf32, #tpu.memory_space<vmem>>, vector<1x32xf32>
    %123 = vector.broadcast %122 : vector<1x32xf32> to vector<512x32xf32>
    %124 = arith.mulf %121, %123 : vector<512x32xf32>
    %c0_20 = arith.constant 0 : index
    %c0_21 = arith.constant 0 : index
    %125 = vector.load %arg6[%c0_20, %c0_21] : memref<1x32xf32, #tpu.memory_space<vmem>>, vector<1x32xf32>
    %126 = vector.broadcast %125 : vector<1x32xf32> to vector<512x32xf32>
    %127 = arith.addf %124, %126 : vector<512x32xf32>
    %c0_22 = arith.constant 0 : index
    %c0_23 = arith.constant 0 : index
    %128 = vector.load %arg7[%c0_22, %c0_23] : memref<32x128xf32, #tpu.memory_space<vmem>>, vector<32x128xf32>
    %cst_24 = arith.constant dense<0.000000e+00> : vector<512x128xf32>
    %129 = tpu.matmul %127, %128, %cst_24 {dimension_numbers = #tpu.dot_dimension_numbers<[1], [0], [0], [1], [0, 0, 1, 1], [], []>} : vector<512x32xf32>, vector<32x128xf32>, vector<512x128xf32> -> vector<512x128xf32>
    %c0_25 = arith.constant 0 : index
    %c0_26 = arith.constant 0 : index
    %130 = vector.load %arg8[%c0_25, %c0_26] : memref<1x128xf32, #tpu.memory_space<vmem>>, vector<1x128xf32>
    %131 = vector.broadcast %130 : vector<1x128xf32> to vector<512x128xf32>
    %132 = arith.addf %129, %131 : vector<512x128xf32>
    %cst_27 = arith.constant 5.000000e-01 : f32
    %133 = vector.broadcast %cst_27 : f32 to vector<512x128xf32>
    %134 = arith.mulf %133, %132 : vector<512x128xf32>
    %cst_28 = arith.constant 0.707106769 : f32
    %135 = vector.broadcast %cst_28 : f32 to vector<512x128xf32>
    %136 = arith.mulf %132, %135 : vector<512x128xf32>
    %cst_29 = arith.constant 0.000000e+00 : f32
    %137 = vector.broadcast %cst_29 : f32 to vector<512x128xf32>
    %138 = arith.cmpf oge, %136, %137 : vector<512x128xf32>
    %cst_30 = arith.constant 1.000000e+00 : f32
    %cst_31 = arith.constant -1.000000e+00 : f32
    %139 = vector.broadcast %cst_30 : f32 to vector<512x128xf32>
    %140 = vector.broadcast %cst_31 : f32 to vector<512x128xf32>
    %141 = arith.select %138, %139, %140 : vector<512x128xi1>, vector<512x128xf32>
    %142 = math.absf %136 : vector<512x128xf32>
    %cst_32 = arith.constant 0.327591091 : f32
    %143 = vector.broadcast %cst_32 : f32 to vector<512x128xf32>
    %144 = arith.mulf %143, %142 : vector<512x128xf32>
    %cst_33 = arith.constant 1.000000e+00 : f32
    %145 = vector.broadcast %cst_33 : f32 to vector<512x128xf32>
    %146 = arith.addf %145, %144 : vector<512x128xf32>
    %cst_34 = arith.constant 1.000000e+00 : f32
    %147 = vector.broadcast %cst_34 : f32 to vector<512x128xf32>
    %148 = arith.divf %147, %146 : vector<512x128xf32>
    %cst_35 = arith.constant 1.06140542 : f32
    %149 = vector.broadcast %cst_35 : f32 to vector<512x128xf32>
    %150 = arith.mulf %149, %148 : vector<512x128xf32>
    %cst_36 = arith.constant -1.45315206 : f32
    %151 = vector.broadcast %cst_36 : f32 to vector<512x128xf32>
    %152 = arith.addf %150, %151 : vector<512x128xf32>
    %153 = arith.mulf %152, %148 : vector<512x128xf32>
    %cst_37 = arith.constant 1.42141378 : f32
    %154 = vector.broadcast %cst_37 : f32 to vector<512x128xf32>
    %155 = arith.addf %153, %154 : vector<512x128xf32>
    %156 = arith.mulf %155, %148 : vector<512x128xf32>
    %cst_38 = arith.constant -0.284496725 : f32
    %157 = vector.broadcast %cst_38 : f32 to vector<512x128xf32>
    %158 = arith.addf %156, %157 : vector<512x128xf32>
    %159 = arith.mulf %158, %148 : vector<512x128xf32>
    %cst_39 = arith.constant 0.254829586 : f32
    %160 = vector.broadcast %cst_39 : f32 to vector<512x128xf32>
    %161 = arith.addf %159, %160 : vector<512x128xf32>
    %162 = arith.mulf %161, %148 : vector<512x128xf32>
    %cst_40 = arith.constant 0.000000e+00 : f32
    %163 = vector.broadcast %cst_40 : f32 to vector<512x128xf32>
    %164 = arith.subf %163, %142 : vector<512x128xf32>
    %165 = arith.mulf %164, %142 : vector<512x128xf32>
    %166 = math.exp %165 : vector<512x128xf32>
    %167 = arith.mulf %162, %166 : vector<512x128xf32>
    %cst_41 = arith.constant 1.000000e+00 : f32
    %168 = vector.broadcast %cst_41 : f32 to vector<512x128xf32>
    %169 = arith.subf %168, %167 : vector<512x128xf32>
    %170 = arith.mulf %141, %169 : vector<512x128xf32>
    %cst_42 = arith.constant 1.000000e+00 : f32
    %171 = vector.broadcast %cst_42 : f32 to vector<512x128xf32>
    %172 = arith.addf %171, %170 : vector<512x128xf32>
    %173 = arith.mulf %134, %172 : vector<512x128xf32>
    %c0_43 = arith.constant 0 : index
    %c0_44 = arith.constant 0 : index
    %174 = vector.load %arg9[%c0_43, %c0_44] : memref<128x32xf32, #tpu.memory_space<vmem>>, vector<128x32xf32>
    %cst_45 = arith.constant dense<0.000000e+00> : vector<512x32xf32>
    %175 = tpu.matmul %173, %174, %cst_45 {dimension_numbers = #tpu.dot_dimension_numbers<[1], [0], [0], [1], [0, 0, 1, 1], [], []>} : vector<512x128xf32>, vector<128x32xf32>, vector<512x32xf32> -> vector<512x32xf32>
    %c0_46 = arith.constant 0 : index
    %c0_47 = arith.constant 0 : index
    %176 = vector.load %arg10[%c0_46, %c0_47] : memref<1x32xf32, #tpu.memory_space<vmem>>, vector<1x32xf32>
    %177 = vector.broadcast %176 : vector<1x32xf32> to vector<512x32xf32>
    %178 = arith.addf %175, %177 : vector<512x32xf32>
    %179 = vector.shape_cast %0 : vector<2x16x16x32xf32> to vector<2x256x32xf32>
    %180 = vector.shape_cast %178 : vector<512x32xf32> to vector<2x256x32xf32>
    %181 = arith.addf %179, %180 : vector<2x256x32xf32>
    %cst_48 = arith.constant dense<0.000000e+00> : vector<2x32xf32>
    %182 = vector.multi_reduction <add>, %181, %cst_48 [1] : vector<2x256x32xf32> to vector<2x32xf32>
    %cst_49 = arith.constant 2.560000e+02 : f32
    %183 = vector.broadcast %cst_49 : f32 to vector<2x32xf32>
    %184 = arith.divf %182, %183 : vector<2x32xf32>
    %c0_50 = arith.constant 0 : index
    %c0_51 = arith.constant 0 : index
    %185 = vector.load %arg11[%c0_50, %c0_51] : memref<2x32xf32, #tpu.memory_space<vmem>>, vector<2x32xf32>
    %c0_52 = arith.constant 0 : index
    %c0_53 = arith.constant 0 : index
    %186 = vector.load %arg12[%c0_52, %c0_53] : memref<2x32xf32, #tpu.memory_space<vmem>>, vector<2x32xf32>
    %cst_54 = arith.constant 0.000000e+00 : f32
    %187 = vector.broadcast %cst_54 : f32 to vector<2x32xf32>
    %188 = vector.extract_strided_slice %185 {offsets = [0, 0], sizes = [1, 32], strides = [1, 1]} : vector<2x32xf32> to vector<1x32xf32>
    %189 = vector.shape_cast %188 : vector<1x32xf32> to vector<32xf32>
    %190 = vector.shape_cast %189 : vector<32xf32> to vector<1x32xf32>
    %191 = vector.broadcast %190 : vector<1x32xf32> to vector<2x32xf32>
    %192 = arith.mulf %184, %191 : vector<2x32xf32>
    %cst_55 = arith.constant dense<0.000000e+00> : vector<2xf32>
    %193 = vector.multi_reduction <add>, %192, %cst_55 [1] : vector<2x32xf32> to vector<2xf32>
    %194 = vector.shape_cast %193 : vector<2xf32> to vector<2x1xf32>
    %cst_56 = arith.constant 0.000000e+00 : f32
    %195 = vector.broadcast %cst_56 : f32 to vector<2x1xf32>
    %196 = arith.maximumf %194, %195 : vector<2x1xf32>
    %197 = vector.extract_strided_slice %186 {offsets = [0, 0], sizes = [1, 32], strides = [1, 1]} : vector<2x32xf32> to vector<1x32xf32>
    %198 = vector.shape_cast %197 : vector<1x32xf32> to vector<32xf32>
    %199 = vector.shape_cast %198 : vector<32xf32> to vector<1x32xf32>
    %200 = vector.broadcast %196 : vector<2x1xf32> to vector<2x32xf32>
    %201 = vector.broadcast %199 : vector<1x32xf32> to vector<2x32xf32>
    %202 = arith.mulf %200, %201 : vector<2x32xf32>
    %203 = arith.addf %187, %202 : vector<2x32xf32>
    %204 = vector.extract_strided_slice %185 {offsets = [1, 0], sizes = [1, 32], strides = [1, 1]} : vector<2x32xf32> to vector<1x32xf32>
    %205 = vector.shape_cast %204 : vector<1x32xf32> to vector<32xf32>
    %206 = vector.shape_cast %205 : vector<32xf32> to vector<1x32xf32>
    %207 = vector.broadcast %206 : vector<1x32xf32> to vector<2x32xf32>
    %208 = arith.mulf %184, %207 : vector<2x32xf32>
    %cst_57 = arith.constant dense<0.000000e+00> : vector<2xf32>
    %209 = vector.multi_reduction <add>, %208, %cst_57 [1] : vector<2x32xf32> to vector<2xf32>
    %210 = vector.shape_cast %209 : vector<2xf32> to vector<2x1xf32>
    %cst_58 = arith.constant 0.000000e+00 : f32
    %211 = vector.broadcast %cst_58 : f32 to vector<2x1xf32>
    %212 = arith.maximumf %210, %211 : vector<2x1xf32>
    %213 = vector.extract_strided_slice %186 {offsets = [1, 0], sizes = [1, 32], strides = [1, 1]} : vector<2x32xf32> to vector<1x32xf32>
    %214 = vector.shape_cast %213 : vector<1x32xf32> to vector<32xf32>
    %215 = vector.shape_cast %214 : vector<32xf32> to vector<1x32xf32>
    %216 = vector.broadcast %212 : vector<2x1xf32> to vector<2x32xf32>
    %217 = vector.broadcast %215 : vector<1x32xf32> to vector<2x32xf32>
    %218 = arith.mulf %216, %217 : vector<2x32xf32>
    %219 = arith.addf %203, %218 : vector<2x32xf32>
    %220 = arith.negf %219 : vector<2x32xf32>
    %221 = math.exp %220 : vector<2x32xf32>
    %cst_59 = arith.constant 1.000000e+00 : f32
    %222 = vector.broadcast %cst_59 : f32 to vector<2x32xf32>
    %223 = arith.addf %222, %221 : vector<2x32xf32>
    %224 = arith.divf %222, %223 : vector<2x32xf32>
    %225 = vector.shape_cast %224 : vector<2x32xf32> to vector<2x1x32xf32>
    %226 = vector.broadcast %225 : vector<2x1x32xf32> to vector<2x256x32xf32>
    %227 = arith.mulf %181, %226 : vector<2x256x32xf32>
    %228 = arith.addf %227, %179 : vector<2x256x32xf32>
    %229 = vector.shape_cast %228 : vector<2x256x32xf32> to vector<2x16x16x32xf32>
    %c0_60 = arith.constant 0 : index
    %c0_61 = arith.constant 0 : index
    %c0_62 = arith.constant 0 : index
    %c0_63 = arith.constant 0 : index
    %230 = vector.load %arg13[%c0_60, %c0_61, %c0_62, %c0_63] : memref<2x16x16x32xf32, #tpu.memory_space<vmem>>, vector<2x16x16x32xf32>
    tpu.vector_store %arg13[%c0_60, %c0_61, %c0_62, %c0_63], %229 {strides = array<i32>} : memref<2x16x16x32xf32, #tpu.memory_space<vmem>>, vector<2x16x16x32xf32>,
    return
  }
  func.func @transform_0(%arg0: i32) -> (i32, i32, i32, i32) {
    %c0_i32 = arith.constant 0 : i32
    %c0_i32_0 = arith.constant 0 : i32
    %c0_i32_1 = arith.constant 0 : i32
    %c0_i32_2 = arith.constant 0 : i32
    return %arg0, %c0_i32, %c0_i32_0, %c0_i32_1 : i32, i32, i32, i32
  }
  func.func @transform_1(%arg0: i32) -> (i32, i32) {
    %c0_i32 = arith.constant 0 : i32
    %c0_i32_0 = arith.constant 0 : i32
    %c0_i32_1 = arith.constant 0 : i32
    return %c0_i32, %c0_i32_0 : i32, i32
  }
  func.func @transform_2(%arg0: i32) -> (i32, i32) {
    %c0_i32 = arith.constant 0 : i32
    %c0_i32_0 = arith.constant 0 : i32
    %c0_i32_1 = arith.constant 0 : i32
    return %c0_i32, %c0_i32_0 : i32, i32
  }
  func.func @transform_3(%arg0: i32) -> (i32, i32) {
    %c0_i32 = arith.constant 0 : i32
    %c0_i32_0 = arith.constant 0 : i32
    %c0_i32_1 = arith.constant 0 : i32
    return %c0_i32, %c0_i32_0 : i32, i32
  }
  func.func @transform_4(%arg0: i32) -> (i32, i32) {
    %c0_i32 = arith.constant 0 : i32
    %c0_i32_0 = arith.constant 0 : i32
    %c0_i32_1 = arith.constant 0 : i32
    return %c0_i32, %c0_i32_0 : i32, i32
  }
  func.func @transform_5(%arg0: i32) -> (i32, i32) {
    %c0_i32 = arith.constant 0 : i32
    %c0_i32_0 = arith.constant 0 : i32
    %c0_i32_1 = arith.constant 0 : i32
    return %c0_i32, %c0_i32_0 : i32, i32
  }
  func.func @transform_6(%arg0: i32) -> (i32, i32) {
    %c0_i32 = arith.constant 0 : i32
    %c0_i32_0 = arith.constant 0 : i32
    %c0_i32_1 = arith.constant 0 : i32
    return %c0_i32, %c0_i32_0 : i32, i32
  }
  func.func @transform_7(%arg0: i32) -> (i32, i32) {
    %c0_i32 = arith.constant 0 : i32
    %c0_i32_0 = arith.constant 0 : i32
    %c0_i32_1 = arith.constant 0 : i32
    return %c0_i32, %c0_i32_0 : i32, i32
  }
  func.func @transform_8(%arg0: i32) -> (i32, i32) {
    %c0_i32 = arith.constant 0 : i32
    %c0_i32_0 = arith.constant 0 : i32
    %c0_i32_1 = arith.constant 0 : i32
    return %c0_i32, %c0_i32_0 : i32, i32
  }
  func.func @transform_9(%arg0: i32) -> (i32, i32) {
    %c0_i32 = arith.constant 0 : i32
    %c0_i32_0 = arith.constant 0 : i32
    %c0_i32_1 = arith.constant 0 : i32
    return %c0_i32, %c0_i32_0 : i32, i32
  }
  func.func @transform_10(%arg0: i32) -> (i32, i32) {
    %c0_i32 = arith.constant 0 : i32
    %c0_i32_0 = arith.constant 0 : i32
    %c0_i32_1 = arith.constant 0 : i32
    return %c0_i32, %c0_i32_0 : i32, i32
  }
  func.func @transform_11(%arg0: i32) -> (i32, i32) {
    %c0_i32 = arith.constant 0 : i32
    %c0_i32_0 = arith.constant 0 : i32
    %c0_i32_1 = arith.constant 0 : i32
    return %c0_i32, %c0_i32_0 : i32, i32
  }
  func.func @transform_12(%arg0: i32) -> (i32, i32, i32, i32) {
    %c0_i32 = arith.constant 0 : i32
    %c0_i32_0 = arith.constant 0 : i32
    %c0_i32_1 = arith.constant 0 : i32
    %c0_i32_2 = arith.constant 0 : i32
    return %arg0, %c0_i32, %c0_i32_0, %c0_i32_1 : i32, i32, i32, i32
  }
}

</mosaic_0001>

<llo_original>
// kernel: lfa_encoder_forward.1
$region0: #{lfa_encoder_forward.1}
  #allocation0 [shape = 'u32[]', space=smem, size = 0x4, offset = 0x4, fixed_abs, tag = 'smem constant byte address 0x4 - core index']
  #allocation1 [shape = 'u32[144,128]{1,0:T(1,128)}', space=vmem, size = 0x12000, scoped, tag = 'internal scratch']
  %s0 = inlined_call_operand.vmem [shape: f32[2,16,16,32], index: 0, kind: input, shape index: {}]
  %s1 = inlined_call_operand.vmem [shape: f32[9,32], index: 1, kind: input, shape index: {}]
  %s2 = inlined_call_operand.vmem [shape: f32[1,32], index: 2, kind: input, shape index: {}]
  %s3 = inlined_call_operand.vmem [shape: f32[392,32], index: 3, kind: input, shape index: {}]
  %s4 = inlined_call_operand.vmem [shape: f32[1,32], index: 4, kind: input, shape index: {}]
  %s5 = inlined_call_operand.vmem [shape: f32[1,32], index: 5, kind: input, shape index: {}]
  %s6 = inlined_call_operand.vmem [shape: f32[32,128], index: 6, kind: input, shape index: {}]
  %s7 = inlined_call_operand.vmem [shape: f32[1,128], index: 7, kind: input, shape index: {}]
  %s8 = inlined_call_operand.vmem [shape: f32[128,32], index: 8, kind: input, shape index: {}]
  %s9 = inlined_call_operand.vmem [shape: f32[1,32], index: 9, kind: input, shape index: {}]
  %s10 = inlined_call_operand.vmem [shape: f32[2,32], index: 10, kind: input, shape index: {}]
  %s11 = inlined_call_operand.vmem [shape: f32[2,32], index: 11, kind: input, shape index: {}]
  %s12 = inlined_call_operand.hbm [shape: f32[2,16,16,32], index: 12, kind: output, shape index: {}]
  %s13 = sld [smem:[#allocation0]]
  $region58: #{lfa_encoder_forward.1} parent=0
    _
  %s15 = ssub.s32 1, %s13
  %s16 = scalar_select 0, %s15, %s13
  $region1: #{lfa_encoder_forward.1} parent=0
    #allocation2 [shape = 'u8[262144]{0}', space=vmem, size = 0x40000, scoped, tag = 'output window, operand 0, single buffered']
    #allocation3 [shape = 's32[1]{0}', space=sflag, size = 0x4, scoped, tag = 'scoped memory for lfa_encoder_forward.1']
    %17 = vsyncpa [#allocation3], 0
    // Predicated region
    $region2: #{lfa_encoder_forward.1} parent=1 // pred_check
      _
    $region3: #{lfa_encoder_forward.1} parent=1 // pred_check_branch
      %19 = sbr.rel (0) target = $region5
    $region4: #{lfa_encoder_forward.1} parent=1 // pred_region
      _
    $region5: #{lfa_encoder_forward.1} parent=1 // pred_fallthru
      _
    // Predicated region
    $region6: #{lfa_encoder_forward.1} parent=1 // pred_check
      _
    $region7: #{lfa_encoder_forward.1} parent=1 // pred_check_branch
      %21 = sbr.rel (0) target = $region9
    $region8: #{lfa_encoder_forward.1} parent=1 // pred_region
      _
    $region9: #{lfa_encoder_forward.1} parent=1 // pred_fallthru
      _
    // Predicated region
    $region10: #{lfa_encoder_forward.1} parent=1 // pred_check
      _
    $region11: #{lfa_encoder_forward.1} parent=1 // pred_check_branch
      %23 = sbr.rel (0) target = $region13
    $region12: #{lfa_encoder_forward.1} parent=1 // pred_region
      _
    $region13: #{lfa_encoder_forward.1} parent=1 // pred_fallthru
      _
    // Predicated region
    $region14: #{lfa_encoder_forward.1} parent=1 // pred_check
      _
    $region15: #{lfa_encoder_forward.1} parent=1 // pred_check_branch
      %25 = sbr.rel (0) target = $region17
    $region16: #{lfa_encoder_forward.1} parent=1 // pred_region
      _
    $region17: #{lfa_encoder_forward.1} parent=1 // pred_fallthru
      _
    // Predicated region
    $region18: #{lfa_encoder_forward.1} parent=1 // pred_check
      _
    $region19: #{lfa_encoder_forward.1} parent=1 // pred_check_branch
      %27 = sbr.rel (0) target = $region21
    $region20: #{lfa_encoder_forward.1} parent=1 // pred_region
      _
    $region21: #{lfa_encoder_forward.1} parent=1 // pred_fallthru
      _
    // Predicated region
    $region22: #{lfa_encoder_forward.1} parent=1 // pred_check
      _
    $region23: #{lfa_encoder_forward.1} parent=1 // pred_check_branch
      %29 = sbr.rel (0) target = $region25
    $region24: #{lfa_encoder_forward.1} parent=1 // pred_region
      _
    $region25: #{lfa_encoder_forward.1} parent=1 // pred_fallthru
      _
    // Predicated region
    $region26: #{lfa_encoder_forward.1} parent=1 // pred_check
      _
    $region27: #{lfa_encoder_forward.1} parent=1 // pred_check_branch
      %31 = sbr.rel (0) target = $region29
    $region28: #{lfa_encoder_forward.1} parent=1 // pred_region
      _
    $region29: #{lfa_encoder_forward.1} parent=1 // pred_fallthru
      _
    // Predicated region
    $region30: #{lfa_encoder_forward.1} parent=1 // pred_check
      _
    $region31: #{lfa_encoder_forward.1} parent=1 // pred_check_branch
      %33 = sbr.rel (0) target = $region33
    $region32: #{lfa_encoder_forward.1} parent=1 // pred_region
      _
    $region33: #{lfa_encoder_forward.1} parent=1 // pred_fallthru
      _
    // Predicated region
    $region34: #{lfa_encoder_forward.1} parent=1 // pred_check
      _
    $region35: #{lfa_encoder_forward.1} parent=1 // pred_check_branch
      %35 = sbr.rel (0) target = $region37
    $region36: #{lfa_encoder_forward.1} parent=1 // pred_region
      _
    $region37: #{lfa_encoder_forward.1} parent=1 // pred_fallthru
      _
    // Predicated region
    $region38: #{lfa_encoder_forward.1} parent=1 // pred_check
      _
    $region39: #{lfa_encoder_forward.1} parent=1 // pred_check_branch
      %37 = sbr.rel (0) target = $region41
    $region40: #{lfa_encoder_forward.1} parent=1 // pred_region
      _
    $region41: #{lfa_encoder_forward.1} parent=1 // pred_fallthru
      _
    // Predicated region
    $region42: #{lfa_encoder_forward.1} parent=1 // pred_check
      _
    $region43: #{lfa_encoder_forward.1} parent=1 // pred_check_branch
      %39 = sbr.rel (0) target = $region45
    $region44: #{lfa_encoder_forward.1} parent=1 // pred_region
      _
    $region45: #{lfa_encoder_forward.1} parent=1 // pred_fallthru
      _
    // Predicated region
    $region46: #{lfa_encoder_forward.1} parent=1 // pred_check
      _
    $region47: #{lfa_encoder_forward.1} parent=1 // pred_check_branch
      %41 = sbr.rel (0) target = $region49
    $region48: #{lfa_encoder_forward.1} parent=1 // pred_region
      _
    $region49: #{lfa_encoder_forward.1} parent=1 // pred_fallthru
      _
    %v42 = vld [vmem:[%s0] sm:$0xff]
    %v43 = vld [vmem:[%s0 + $0x8] sm:$0xff]
    %v44 = vld [vmem:[%s0 + $0x10] sm:$0xff]
    %v45 = vld [vmem:[%s0 + $0x18] sm:$0xff]
    %v46 = vld [vmem:[%s0 + $0x20] sm:$0xff]
    %v47 = vld [vmem:[%s0 + $0x28] sm:$0xff]
    %v48 = vld [vmem:[%s0 + $0x30] sm:$0xff]
    %v49 = vld [vmem:[%s0 + $0x38] sm:$0xff]
    %v50 = vld [vmem:[%s0 + $0x40] sm:$0xff]
    %v51 = vld [vmem:[%s0 + $0x48] sm:$0xff]
    %v52 = vld [vmem:[%s0 + $0x50] sm:$0xff]
    %v53 = vld [vmem:[%s0 + $0x58] sm:$0xff]
    %v54 = vld [vmem:[%s0 + $0x60] sm:$0xff]
    %v55 = vld [vmem:[%s0 + $0x68] sm:$0xff]
    %v56 = vld [vmem:[%s0 + $0x70] sm:$0xff]
    %v57 = vld [vmem:[%s0 + $0x78] sm:$0xff]
    %v58 = vld [vmem:[%s0 + $0x80] sm:$0xff]
    %v59 = vld [vmem:[%s0 + $0x88] sm:$0xff]
    %v60 = vld [vmem:[%s0 + $0x90] sm:$0xff]
    %v61 = vld [vmem:[%s0 + $0x98] sm:$0xff]
    %v62 = vld [vmem:[%s0 + $0xa0] sm:$0xff]
    %v63 = vld [vmem:[%s0 + $0xa8] sm:$0xff]
    %v64 = vld [vmem:[%s0 + $0xb0] sm:$0xff]
    %v65 = vld [vmem:[%s0 + $0xb8] sm:$0xff]
    %v66 = vld [vmem:[%s0 + $0xc0] sm:$0xff]
    %v67 = vld [vmem:[%s0 + $0xc8] sm:$0xff]
    %v68 = vld [vmem:[%s0 + $0xd0] sm:$0xff]
    %v69 = vld [vmem:[%s0 + $0xd8] sm:$0xff]
    %v70 = vld [vmem:[%s0 + $0xe0] sm:$0xff]
    %v71 = vld [vmem:[%s0 + $0xe8] sm:$0xff]
    %v72 = vld [vmem:[%s0 + $0xf0] sm:$0xff]
    %v73 = vld [vmem:[%s0 + $0xf8] sm:$0xff]
    %v74 = vld [vmem:[%s0 + $0x100] sm:$0xff]
    %v75 = vld [vmem:[%s0 + $0x108] sm:$0xff]
    %v76 = vld [vmem:[%s0 + $0x110] sm:$0xff]
    %v77 = vld [vmem:[%s0 + $0x118] sm:$0xff]
    %v78 = vld [vmem:[%s0 + $0x120] sm:$0xff]
    %v79 = vld [vmem:[%s0 + $0x128] sm:$0xff]
    %v80 = vld [vmem:[%s0 + $0x130] sm:$0xff]
    %v81 = vld [vmem:[%s0 + $0x138] sm:$0xff]
    %v82 = vld [vmem:[%s0 + $0x140] sm:$0xff]
    %v83 = vld [vmem:[%s0 + $0x148] sm:$0xff]
    %v84 = vld [vmem:[%s0 + $0x150] sm:$0xff]
    %v85 = vld [vmem:[%s0 + $0x158] sm:$0xff]
    %v86 = vld [vmem:[%s0 + $0x160] sm:$0xff]
    %v87 = vld [vmem:[%s0 + $0x168] sm:$0xff]
    %v88 = vld [vmem:[%s0 + $0x170] sm:$0xff]
    %v89 = vld [vmem:[%s0 + $0x178] sm:$0xff]
    %v90 = vld [vmem:[%s0 + $0x180] sm:$0xff]
    %v91 = vld [vmem:[%s0 + $0x188] sm:$0xff]
    %v92 = vld [vmem:[%s0 + $0x190] sm:$0xff]
    %v93 = vld [vmem:[%s0 + $0x198] sm:$0xff]
    %v94 = vld [vmem:[%s0 + $0x1a0] sm:$0xff]
    %v95 = vld [vmem:[%s0 + $0x1a8] sm:$0xff]
    %v96 = vld [vmem:[%s0 + $0x1b0] sm:$0xff]
    %v97 = vld [vmem:[%s0 + $0x1b8] sm:$0xff]
    %v98 = vld [vmem:[%s0 + $0x1c0] sm:$0xff]
    %v99 = vld [vmem:[%s0 + $0x1c8] sm:$0xff]
    %v100 = vld [vmem:[%s0 + $0x1d0] sm:$0xff]
    %v101 = vld [vmem:[%s0 + $0x1d8] sm:$0xff]
    %v102 = vld [vmem:[%s0 + $0x1e0] sm:$0xff]
    %v103 = vld [vmem:[%s0 + $0x1e8] sm:$0xff]
    %v104 = vld [vmem:[%s0 + $0x1f0] sm:$0xff]
    %v105 = vld [vmem:[%s0 + $0x1f8] sm:$0xff]
    %v106 = vld [vmem:[%s1] sm:$0xff]
    %v107 = vld [vmem:[%s1 + $0x8] sm:$0x1]
    %vm172 = vcmask 1040384
    %v173 = vrot.slane %v42, 7
    %v174 = vrot.slane %v43, 7
    %v175 = vsel %vm172, %v173, %v174
    %v176 = vrot.slane %v44, 7
    %v177 = vrot.slane %v45, 7
    %v178 = vsel %vm172, %v176, %v177
    %v179 = vrot.slane %v46, 7
    %v180 = vrot.slane %v47, 7
    %v181 = vsel %vm172, %v179, %v180
    %v182 = vrot.slane %v48, 7
    %v183 = vrot.slane %v49, 7
    %v184 = vsel %vm172, %v182, %v183
    %v185 = vrot.slane %v50, 7
    %v186 = vrot.slane %v51, 7
    %v187 = vsel %vm172, %v185, %v186
    %v188 = vrot.slane %v52, 7
    %v189 = vrot.slane %v53, 7
    %v190 = vsel %vm172, %v188, %v189
    %v191 = vrot.slane %v54, 7
    %v192 = vrot.slane %v55, 7
    %v193 = vsel %vm172, %v191, %v192
    %v194 = vrot.slane %v56, 7
    %v195 = vrot.slane %v57, 7
    %v196 = vsel %vm172, %v194, %v195
    %v197 = vrot.slane %v58, 7
    %v198 = vrot.slane %v59, 7
    %v199 = vsel %vm172, %v197, %v198
    %v200 = vrot.slane %v60, 7
    %v201 = vrot.slane %v61, 7
    %v202 = vsel %vm172, %v200, %v201
    %v203 = vrot.slane %v62, 7
    %v204 = vrot.slane %v63, 7
    %v205 = vsel %vm172, %v203, %v204
    %v206 = vrot.slane %v64, 7
    %v207 = vrot.slane %v65, 7
    %v208 = vsel %vm172, %v206, %v207
    %v209 = vrot.slane %v66, 7
    %v210 = vrot.slane %v67, 7
    %v211 = vsel %vm172, %v209, %v210
    %v212 = vrot.slane %v68, 7
    %v213 = vrot.slane %v69, 7
    %v214 = vsel %vm172, %v212, %v213
    %v215 = vrot.slane %v70, 7
    %v216 = vrot.slane %v71, 7
    %v217 = vsel %vm172, %v215, %v216
    %v218 = vrot.slane %v72, 7
    %v219 = vrot.slane %v73, 7
    %v220 = vsel %vm172, %v218, %v219
    %v221 = vrot.slane %v74, 7
    %v222 = vrot.slane %v75, 7
    %v223 = vsel %vm172, %v221, %v222
    %v224 = vrot.slane %v76, 7
    %v225 = vrot.slane %v77, 7
    %v226 = vsel %vm172, %v224, %v225
    %v227 = vrot.slane %v78, 7
    %v228 = vrot.slane %v79, 7
    %v229 = vsel %vm172, %v227, %v228
    %v230 = vrot.slane %v80, 7
    %v231 = vrot.slane %v81, 7
    %v232 = vsel %vm172, %v230, %v231
    %v233 = vrot.slane %v82, 7
    %v234 = vrot.slane %v83, 7
    %v235 = vsel %vm172, %v233, %v234
    %v236 = vrot.slane %v84, 7
    %v237 = vrot.slane %v85, 7
    %v238 = vsel %vm172, %v236, %v237
    %v239 = vrot.slane %v86, 7
    %v240 = vrot.slane %v87, 7
    %v241 = vsel %vm172, %v239, %v240
    %v242 = vrot.slane %v88, 7
    %v243 = vrot.slane %v89, 7
    %v244 = vsel %vm172, %v242, %v243
    %v245 = vrot.slane %v90, 7
    %v246 = vrot.slane %v91, 7
    %v247 = vsel %vm172, %v245, %v246
    %v248 = vrot.slane %v92, 7
    %v249 = vrot.slane %v93, 7
    %v250 = vsel %vm172, %v248, %v249
    %v251 = vrot.slane %v94, 7
    %v252 = vrot.slane %v95, 7
    %v253 = vsel %vm172, %v251, %v252
    %v254 = vrot.slane %v96, 7
    %v255 = vrot.slane %v97, 7
    %v256 = vsel %vm172, %v254, %v255
    %v257 = vrot.slane %v98, 7
    %v258 = vrot.slane %v99, 7
    %v259 = vsel %vm172, %v257, %v258
    %v260 = vrot.slane %v100, 7
    %v261 = vrot.slane %v101, 7
    %v262 = vsel %vm172, %v260, %v261
    %v263 = vrot.slane %v102, 7
    %v264 = vrot.slane %v103, 7
    %v265 = vsel %vm172, %v263, %v264
    %v266 = vrot.slane %v104, 7
    %v267 = vrot.slane %v105, 7
    %v268 = vsel %vm172, %v266, %v267
    %v365 = vsel %vm172, 0.0, %v173
    %v366 = vsel %vm172, 0.0, %v176
    %v367 = vsel %vm172, 0.0, %v179
    %v368 = vsel %vm172, 0.0, %v182
    %v369 = vsel %vm172, 0.0, %v185
    %v370 = vsel %vm172, 0.0, %v188
    %v371 = vsel %vm172, 0.0, %v191
    %v372 = vsel %vm172, 0.0, %v194
    %v373 = vsel %vm172, 0.0, %v197
    %v374 = vsel %vm172, 0.0, %v200
    %v375 = vsel %vm172, 0.0, %v203
    %v376 = vsel %vm172, 0.0, %v206
    %v377 = vsel %vm172, 0.0, %v209
    %v378 = vsel %vm172, 0.0, %v212
    %v379 = vsel %vm172, 0.0, %v215
    %v380 = vsel %vm172, 0.0, %v218
    %v381 = vsel %vm172, 0.0, %v221
    %v382 = vsel %vm172, 0.0, %v224
    %v383 = vsel %vm172, 0.0, %v227
    %v384 = vsel %vm172, 0.0, %v230
    %v385 = vsel %vm172, 0.0, %v233
    %v386 = vsel %vm172, 0.0, %v236
    %v387 = vsel %vm172, 0.0, %v239
    %v388 = vsel %vm172, 0.0, %v242
    %v389 = vsel %vm172, 0.0, %v245
    %v390 = vsel %vm172, 0.0, %v248
    %v391 = vsel %vm172, 0.0, %v251
    %v392 = vsel %vm172, 0.0, %v254
    %v393 = vsel %vm172, 0.0, %v257
    %v394 = vsel %vm172, 0.0, %v260
    %v395 = vsel %vm172, 0.0, %v263
    %v396 = vsel %vm172, 0.0, %v266
    %v397 = vsel %vm172, %v174, 0.0
    %v398 = vsel %vm172, %v177, 0.0
    %v399 = vsel %vm172, %v180, 0.0
    %v400 = vsel %vm172, %v183, 0.0
    %v401 = vsel %vm172, %v186, 0.0
    %v402 = vsel %vm172, %v189, 0.0
    %v403 = vsel %vm172, %v192, 0.0
    %v404 = vsel %vm172, %v195, 0.0
    %v405 = vsel %vm172, %v198, 0.0
    %v406 = vsel %vm172, %v201, 0.0
    %v407 = vsel %vm172, %v204, 0.0
    %v408 = vsel %vm172, %v207, 0.0
    %v409 = vsel %vm172, %v210, 0.0
    %v410 = vsel %vm172, %v213, 0.0
    %v411 = vsel %vm172, %v216, 0.0
    %v412 = vsel %vm172, %v219, 0.0
    %v413 = vsel %vm172, %v222, 0.0
    %v414 = vsel %vm172, %v225, 0.0
    %v415 = vsel %vm172, %v228, 0.0
    %v416 = vsel %vm172, %v231, 0.0
    %v417 = vsel %vm172, %v234, 0.0
    %v418 = vsel %vm172, %v237, 0.0
    %v419 = vsel %vm172, %v240, 0.0
    %v420 = vsel %vm172, %v243, 0.0
    %v421 = vsel %vm172, %v246, 0.0
    %v422 = vsel %vm172, %v249, 0.0
    %v423 = vsel %vm172, %v252, 0.0
    %v424 = vsel %vm172, %v255, 0.0
    %v425 = vsel %vm172, %v258, 0.0
    %v426 = vsel %vm172, %v261, 0.0
    %v427 = vsel %vm172, %v264, 0.0
    %v428 = vsel %vm172, %v267, 0.0
    %v429 = vld [vmem:[%s2] sm:$0x1]
    %v431 = vlaneseq
    %v432 = vshrl.u32 %v431, 7
    %v433 = vsub.s32 0, %v432
    %v434 = vrot.slane %v429, %v433
    %v436 = vadd.f32 %v42, %v434
    %v437 = vadd.f32 %v43, %v434
    %v438 = vadd.f32 %v44, %v434
    %v439 = vadd.f32 %v45, %v434
    %v440 = vadd.f32 %v46, %v434
    %v441 = vadd.f32 %v47, %v434
    %v442 = vadd.f32 %v48, %v434
    %v443 = vadd.f32 %v49, %v434
    %v444 = vadd.f32 %v50, %v434
    %v445 = vadd.f32 %v51, %v434
    %v446 = vadd.f32 %v52, %v434
    %v447 = vadd.f32 %v53, %v434
    %v448 = vadd.f32 %v54, %v434
    %v449 = vadd.f32 %v55, %v434
    %v450 = vadd.f32 %v56, %v434
    %v451 = vadd.f32 %v57, %v434
    %v452 = vadd.f32 %v58, %v434
    %v453 = vadd.f32 %v59, %v434
    %v454 = vadd.f32 %v60, %v434
    %v455 = vadd.f32 %v61, %v434
    %v456 = vadd.f32 %v62, %v434
    %v457 = vadd.f32 %v63, %v434
    %v458 = vadd.f32 %v64, %v434
    %v459 = vadd.f32 %v65, %v434
    %v460 = vadd.f32 %v66, %v434
    %v461 = vadd.f32 %v67, %v434
    %v462 = vadd.f32 %v68, %v434
    %v463 = vadd.f32 %v69, %v434
    %v464 = vadd.f32 %v70, %v434
    %v465 = vadd.f32 %v71, %v434
    %v466 = vadd.f32 %v72, %v434
    %v467 = vadd.f32 %v73, %v434
    %v468 = vadd.f32 %v74, %v434
    %v469 = vadd.f32 %v75, %v434
    %v470 = vadd.f32 %v76, %v434
    %v471 = vadd.f32 %v77, %v434
    %v472 = vadd.f32 %v78, %v434
    %v473 = vadd.f32 %v79, %v434
    %v474 = vadd.f32 %v80, %v434
    %v475 = vadd.f32 %v81, %v434
    %v476 = vadd.f32 %v82, %v434
    %v477 = vadd.f32 %v83, %v434
    %v478 = vadd.f32 %v84, %v434
    %v479 = vadd.f32 %v85, %v434
    %v480 = vadd.f32 %v86, %v434
    %v481 = vadd.f32 %v87, %v434
    %v482 = vadd.f32 %v88, %v434
    %v483 = vadd.f32 %v89, %v434
    %v484 = vadd.f32 %v90, %v434
    %v485 = vadd.f32 %v91, %v434
    %v486 = vadd.f32 %v92, %v434
    %v487 = vadd.f32 %v93, %v434
    %v488 = vadd.f32 %v94, %v434
    %v489 = vadd.f32 %v95, %v434
    %v490 = vadd.f32 %v96, %v434
    %v491 = vadd.f32 %v97, %v434
    %v492 = vadd.f32 %v98, %v434
    %v493 = vadd.f32 %v99, %v434
    %v494 = vadd.f32 %v100, %v434
    %v495 = vadd.f32 %v101, %v434
    %v496 = vadd.f32 %v102, %v434
    %v497 = vadd.f32 %v103, %v434
    %v498 = vadd.f32 %v104, %v434
    %v499 = vadd.f32 %v105, %v434
    %v500 = vlaneseq
    %v501 = vshrl.u32 %v500, 7
    %v502 = vsub.s32 0, %v501
    %v503 = vrot.slane %v106, %v502
    %v504 = vmul.f32 %v503, 0.0
    %v505 = vmul.f32 %v365, %v503
    %v506 = vmul.f32 %v175, %v503
    %v507 = vmul.f32 %v366, %v503
    %v508 = vmul.f32 %v178, %v503
    %v509 = vmul.f32 %v367, %v503
    %v510 = vmul.f32 %v181, %v503
    %v511 = vmul.f32 %v368, %v503
    %v512 = vmul.f32 %v184, %v503
    %v513 = vmul.f32 %v369, %v503
    %v514 = vmul.f32 %v187, %v503
    %v515 = vmul.f32 %v370, %v503
    %v516 = vmul.f32 %v190, %v503
    %v517 = vmul.f32 %v371, %v503
    %v518 = vmul.f32 %v193, %v503
    %v519 = vmul.f32 %v372, %v503
    %v520 = vmul.f32 %v196, %v503
    %v521 = vmul.f32 %v373, %v503
    %v522 = vmul.f32 %v199, %v503
    %v523 = vmul.f32 %v374, %v503
    %v524 = vmul.f32 %v202, %v503
    %v525 = vmul.f32 %v375, %v503
    %v526 = vmul.f32 %v205, %v503
    %v527 = vmul.f32 %v376, %v503
    %v528 = vmul.f32 %v208, %v503
    %v529 = vmul.f32 %v377, %v503
    %v530 = vmul.f32 %v211, %v503
    %v531 = vmul.f32 %v378, %v503
    %v532 = vmul.f32 %v214, %v503
    %v533 = vmul.f32 %v379, %v503
    %v534 = vmul.f32 %v217, %v503
    %v535 = vmul.f32 %v381, %v503
    %v536 = vmul.f32 %v223, %v503
    %v537 = vmul.f32 %v382, %v503
    %v538 = vmul.f32 %v226, %v503
    %v539 = vmul.f32 %v383, %v503
    %v540 = vmul.f32 %v229, %v503
    %v541 = vmul.f32 %v384, %v503
    %v542 = vmul.f32 %v232, %v503
    %v543 = vmul.f32 %v385, %v503
    %v544 = vmul.f32 %v235, %v503
    %v545 = vmul.f32 %v386, %v503
    %v546 = vmul.f32 %v238, %v503
    %v547 = vmul.f32 %v387, %v503
    %v548 = vmul.f32 %v241, %v503
    %v549 = vmul.f32 %v388, %v503
    %v550 = vmul.f32 %v244, %v503
    %v551 = vmul.f32 %v389, %v503
    %v552 = vmul.f32 %v247, %v503
    %v553 = vmul.f32 %v390, %v503
    %v554 = vmul.f32 %v250, %v503
    %v555 = vmul.f32 %v391, %v503
    %v556 = vmul.f32 %v253, %v503
    %v557 = vmul.f32 %v392, %v503
    %v558 = vmul.f32 %v256, %v503
    %v559 = vmul.f32 %v393, %v503
    %v560 = vmul.f32 %v259, %v503
    %v561 = vmul.f32 %v394, %v503
    %v562 = vmul.f32 %v262, %v503
    %v563 = vmul.f32 %v395, %v503
    %v564 = vmul.f32 %v265, %v503
    %v565 = vadd.f32 %v436, %v504
    %v566 = vadd.f32 %v437, %v504
    %v567 = vadd.f32 %v438, %v505
    %v568 = vadd.f32 %v439, %v506
    %v569 = vadd.f32 %v440, %v507
    %v570 = vadd.f32 %v441, %v508
    %v571 = vadd.f32 %v442, %v509
    %v572 = vadd.f32 %v443, %v510
    %v573 = vadd.f32 %v444, %v511
    %v574 = vadd.f32 %v445, %v512
    %v575 = vadd.f32 %v446, %v513
    %v576 = vadd.f32 %v447, %v514
    %v577 = vadd.f32 %v448, %v515
    %v578 = vadd.f32 %v449, %v516
    %v579 = vadd.f32 %v450, %v517
    %v580 = vadd.f32 %v451, %v518
    %v581 = vadd.f32 %v452, %v519
    %v582 = vadd.f32 %v453, %v520
    %v583 = vadd.f32 %v454, %v521
    %v584 = vadd.f32 %v455, %v522
    %v585 = vadd.f32 %v456, %v523
    %v586 = vadd.f32 %v457, %v524
    %v587 = vadd.f32 %v458, %v525
    %v588 = vadd.f32 %v459, %v526
    %v589 = vadd.f32 %v460, %v527
    %v590 = vadd.f32 %v461, %v528
    %v591 = vadd.f32 %v462, %v529
    %v592 = vadd.f32 %v463, %v530
    %v593 = vadd.f32 %v464, %v531
    %v594 = vadd.f32 %v465, %v532
    %v595 = vadd.f32 %v466, %v533
    %v596 = vadd.f32 %v467, %v534
    %v597 = vadd.f32 %v468, %v504
    %v598 = vadd.f32 %v469, %v504
    %v599 = vadd.f32 %v470, %v535
    %v600 = vadd.f32 %v471, %v536
    %v601 = vadd.f32 %v472, %v537
    %v602 = vadd.f32 %v473, %v538
    %v603 = vadd.f32 %v474, %v539
    %v604 = vadd.f32 %v475, %v540
    %v605 = vadd.f32 %v476, %v541
    %v606 = vadd.f32 %v477, %v542
    %v607 = vadd.f32 %v478, %v543
    %v608 = vadd.f32 %v479, %v544
    %v609 = vadd.f32 %v480, %v545
    %v610 = vadd.f32 %v481, %v546
    %v611 = vadd.f32 %v482, %v547
    %v612 = vadd.f32 %v483, %v548
    %v613 = vadd.f32 %v484, %v549
    %v614 = vadd.f32 %v485, %v550
    %v615 = vadd.f32 %v486, %v551
    %v616 = vadd.f32 %v487, %v552
    %v617 = vadd.f32 %v488, %v553
    %v618 = vadd.f32 %v489, %v554
    %v619 = vadd.f32 %v490, %v555
    %v620 = vadd.f32 %v491, %v556
    %v621 = vadd.f32 %v492, %v557
    %v622 = vadd.f32 %v493, %v558
    %v623 = vadd.f32 %v494, %v559
    %v624 = vadd.f32 %v495, %v560
    %v625 = vadd.f32 %v496, %v561
    %v626 = vadd.f32 %v497, %v562
    %v627 = vadd.f32 %v498, %v563
    %v628 = vadd.f32 %v499, %v564
    %v629 = vlaneseq
    %v630 = vshrl.u32 %v629, 7
    %v631 = vsub.s32 1, %v630
    %v632 = vrot.slane %v106, %v631
    %v633 = vmul.f32 %v632, 0.0
    %v634 = vmul.f32 %v365, %v632
    %v635 = vmul.f32 %v175, %v632
    %v636 = vmul.f32 %v397, %v632
    %v637 = vmul.f32 %v366, %v632
    %v638 = vmul.f32 %v178, %v632
    %v639 = vmul.f32 %v398, %v632
    %v640 = vmul.f32 %v367, %v632
    %v641 = vmul.f32 %v181, %v632
    %v642 = vmul.f32 %v399, %v632
    %v643 = vmul.f32 %v368, %v632
    %v644 = vmul.f32 %v184, %v632
    %v645 = vmul.f32 %v400, %v632
    %v646 = vmul.f32 %v369, %v632
    %v647 = vmul.f32 %v187, %v632
    %v648 = vmul.f32 %v401, %v632
    %v649 = vmul.f32 %v370, %v632
    %v650 = vmul.f32 %v190, %v632
    %v651 = vmul.f32 %v402, %v632
    %v652 = vmul.f32 %v371, %v632
    %v653 = vmul.f32 %v193, %v632
    %v654 = vmul.f32 %v403, %v632
    %v655 = vmul.f32 %v372, %v632
    %v656 = vmul.f32 %v196, %v632
    %v657 = vmul.f32 %v404, %v632
    %v658 = vmul.f32 %v373, %v632
    %v659 = vmul.f32 %v199, %v632
    %v660 = vmul.f32 %v405, %v632
    %v661 = vmul.f32 %v374, %v632
    %v662 = vmul.f32 %v202, %v632
    %v663 = vmul.f32 %v406, %v632
    %v664 = vmul.f32 %v375, %v632
    %v665 = vmul.f32 %v205, %v632
    %v666 = vmul.f32 %v407, %v632
    %v667 = vmul.f32 %v376, %v632
    %v668 = vmul.f32 %v208, %v632
    %v669 = vmul.f32 %v408, %v632
    %v670 = vmul.f32 %v377, %v632
    %v671 = vmul.f32 %v211, %v632
    %v672 = vmul.f32 %v409, %v632
    %v673 = vmul.f32 %v378, %v632
    %v674 = vmul.f32 %v214, %v632
    %v675 = vmul.f32 %v410, %v632
    %v676 = vmul.f32 %v379, %v632
    %v677 = vmul.f32 %v217, %v632
    %v678 = vmul.f32 %v411, %v632
    %v679 = vmul.f32 %v381, %v632
    %v680 = vmul.f32 %v223, %v632
    %v681 = vmul.f32 %v413, %v632
    %v682 = vmul.f32 %v382, %v632
    %v683 = vmul.f32 %v226, %v632
    %v684 = vmul.f32 %v414, %v632
    %v685 = vmul.f32 %v383, %v632
    %v686 = vmul.f32 %v229, %v632
    %v687 = vmul.f32 %v415, %v632
    %v688 = vmul.f32 %v384, %v632
    %v689 = vmul.f32 %v232, %v632
    %v690 = vmul.f32 %v416, %v632
    %v691 = vmul.f32 %v385, %v632
    %v692 = vmul.f32 %v235, %v632
    %v693 = vmul.f32 %v417, %v632
    %v694 = vmul.f32 %v386, %v632
    %v695 = vmul.f32 %v238, %v632
    %v696 = vmul.f32 %v418, %v632
    %v697 = vmul.f32 %v387, %v632
    %v698 = vmul.f32 %v241, %v632
    %v699 = vmul.f32 %v419, %v632
    %v700 = vmul.f32 %v388, %v632
    %v701 = vmul.f32 %v244, %v632
    %v702 = vmul.f32 %v420, %v632
    %v703 = vmul.f32 %v389, %v632
    %v704 = vmul.f32 %v247, %v632
    %v705 = vmul.f32 %v421, %v632
    %v706 = vmul.f32 %v390, %v632
    %v707 = vmul.f32 %v250, %v632
    %v708 = vmul.f32 %v422, %v632
    %v709 = vmul.f32 %v391, %v632
    %v710 = vmul.f32 %v253, %v632
    %v711 = vmul.f32 %v423, %v632
    %v712 = vmul.f32 %v392, %v632
    %v713 = vmul.f32 %v256, %v632
    %v714 = vmul.f32 %v424, %v632
    %v715 = vmul.f32 %v393, %v632
    %v716 = vmul.f32 %v259, %v632
    %v717 = vmul.f32 %v425, %v632
    %v718 = vmul.f32 %v394, %v632
    %v719 = vmul.f32 %v262, %v632
    %v720 = vmul.f32 %v426, %v632
    %v721 = vmul.f32 %v395, %v632
    %v722 = vmul.f32 %v265, %v632
    %v723 = vmul.f32 %v427, %v632
    %vm815 = vcmask 1046528
    %v816 = vrot.slane %v633, 1
    %v817 = vsel %vm815, %v816, %v816
    %v818 = vrot.slane %v634, 1
    %v819 = vrot.slane %v635, 1
    %v820 = vsel %vm815, %v818, %v819
    %v821 = vrot.slane %v636, 1
    %v822 = vsel %vm815, %v819, %v821
    %v823 = vrot.slane %v637, 1
    %v824 = vrot.slane %v638, 1
    %v825 = vsel %vm815, %v823, %v824
    %v826 = vrot.slane %v639, 1
    %v827 = vsel %vm815, %v824, %v826
    %v828 = vrot.slane %v640, 1
    %v829 = vrot.slane %v641, 1
    %v830 = vsel %vm815, %v828, %v829
    %v831 = vrot.slane %v642, 1
    %v832 = vsel %vm815, %v829, %v831
    %v833 = vrot.slane %v643, 1
    %v834 = vrot.slane %v644, 1
    %v835 = vsel %vm815, %v833, %v834
    %v836 = vrot.slane %v645, 1
    %v837 = vsel %vm815, %v834, %v836
    %v838 = vrot.slane %v646, 1
    %v839 = vrot.slane %v647, 1
    %v840 = vsel %vm815, %v838, %v839
    %v841 = vrot.slane %v648, 1
    %v842 = vsel %vm815, %v839, %v841
    %v843 = vrot.slane %v649, 1
    %v844 = vrot.slane %v650, 1
    %v845 = vsel %vm815, %v843, %v844
    %v846 = vrot.slane %v651, 1
    %v847 = vsel %vm815, %v844, %v846
    %v848 = vrot.slane %v652, 1
    %v849 = vrot.slane %v653, 1
    %v850 = vsel %vm815, %v848, %v849
    %v851 = vrot.slane %v654, 1
    %v852 = vsel %vm815, %v849, %v851
    %v853 = vrot.slane %v655, 1
    %v854 = vrot.slane %v656, 1
    %v855 = vsel %vm815, %v853, %v854
    %v856 = vrot.slane %v657, 1
    %v857 = vsel %vm815, %v854, %v856
    %v858 = vrot.slane %v658, 1
    %v859 = vrot.slane %v659, 1
    %v860 = vsel %vm815, %v858, %v859
    %v861 = vrot.slane %v660, 1
    %v862 = vsel %vm815, %v859, %v861
    %v863 = vrot.slane %v661, 1
    %v864 = vrot.slane %v662, 1
    %v865 = vsel %vm815, %v863, %v864
    %v866 = vrot.slane %v663, 1
    %v867 = vsel %vm815, %v864, %v866
    %v868 = vrot.slane %v664, 1
    %v869 = vrot.slane %v665, 1
    %v870 = vsel %vm815, %v868, %v869
    %v871 = vrot.slane %v666, 1
    %v872 = vsel %vm815, %v869, %v871
    %v873 = vrot.slane %v667, 1
    %v874 = vrot.slane %v668, 1
    %v875 = vsel %vm815, %v873, %v874
    %v876 = vrot.slane %v669, 1
    %v877 = vsel %vm815, %v874, %v876
    %v878 = vrot.slane %v670, 1
    %v879 = vrot.slane %v671, 1
    %v880 = vsel %vm815, %v878, %v879
    %v881 = vrot.slane %v672, 1
    %v882 = vsel %vm815, %v879, %v881
    %v883 = vrot.slane %v673, 1
    %v884 = vrot.slane %v674, 1
    %v885 = vsel %vm815, %v883, %v884
    %v886 = vrot.slane %v675, 1
    %v887 = vsel %vm815, %v884, %v886
    %v888 = vrot.slane %v676, 1
    %v889 = vrot.slane %v677, 1
    %v890 = vsel %vm815, %v888, %v889
    %v891 = vrot.slane %v678, 1
    %v892 = vsel %vm815, %v889, %v891
    %v893 = vrot.slane %v679, 1
    %v894 = vrot.slane %v680, 1
    %v895 = vsel %vm815, %v893, %v894
    %v896 = vrot.slane %v681, 1
    %v897 = vsel %vm815, %v894, %v896
    %v898 = vrot.slane %v682, 1
    %v899 = vrot.slane %v683, 1
    %v900 = vsel %vm815, %v898, %v899
    %v901 = vrot.slane %v684, 1
    %v902 = vsel %vm815, %v899, %v901
    %v903 = vrot.slane %v685, 1
    %v904 = vrot.slane %v686, 1
    %v905 = vsel %vm815, %v903, %v904
    %v906 = vrot.slane %v687, 1
    %v907 = vsel %vm815, %v904, %v906
    %v908 = vrot.slane %v688, 1
    %v909 = vrot.slane %v689, 1
    %v910 = vsel %vm815, %v908, %v909
    %v911 = vrot.slane %v690, 1
    %v912 = vsel %vm815, %v909, %v911
    %v913 = vrot.slane %v691, 1
    %v914 = vrot.slane %v692, 1
    %v915 = vsel %vm815, %v913, %v914
    %v916 = vrot.slane %v693, 1
    %v917 = vsel %vm815, %v914, %v916
    %v918 = vrot.slane %v694, 1
    %v919 = vrot.slane %v695, 1
    %v920 = vsel %vm815, %v918, %v919
    %v921 = vrot.slane %v696, 1
    %v922 = vsel %vm815, %v919, %v921
    %v923 = vrot.slane %v697, 1
    %v924 = vrot.slane %v698, 1
    %v925 = vsel %vm815, %v923, %v924
    %v926 = vrot.slane %v699, 1
    %v927 = vsel %vm815, %v924, %v926
    %v928 = vrot.slane %v700, 1
    %v929 = vrot.slane %v701, 1
    %v930 = vsel %vm815, %v928, %v929
    %v931 = vrot.slane %v702, 1
    %v932 = vsel %vm815, %v929, %v931
    %v933 = vrot.slane %v703, 1
    %v934 = vrot.slane %v704, 1
    %v935 = vsel %vm815, %v933, %v934
    %v936 = vrot.slane %v705, 1
    %v937 = vsel %vm815, %v934, %v936
    %v938 = vrot.slane %v706, 1
    %v939 = vrot.slane %v707, 1
    %v940 = vsel %vm815, %v938, %v939
    %v941 = vrot.slane %v708, 1
    %v942 = vsel %vm815, %v939, %v941
    %v943 = vrot.slane %v709, 1
    %v944 = vrot.slane %v710, 1
    %v945 = vsel %vm815, %v943, %v944
    %v946 = vrot.slane %v711, 1
    %v947 = vsel %vm815, %v944, %v946
    %v948 = vrot.slane %v712, 1
    %v949 = vrot.slane %v713, 1
    %v950 = vsel %vm815, %v948, %v949
    %v951 = vrot.slane %v714, 1
    %v952 = vsel %vm815, %v949, %v951
    %v953 = vrot.slane %v715, 1
    %v954 = vrot.slane %v716, 1
    %v955 = vsel %vm815, %v953, %v954
    %v956 = vrot.slane %v717, 1
    %v957 = vsel %vm815, %v954, %v956
    %v958 = vrot.slane %v718, 1
    %v959 = vrot.slane %v719, 1
    %v960 = vsel %vm815, %v958, %v959
    %v961 = vrot.slane %v720, 1
    %v962 = vsel %vm815, %v959, %v961
    %v963 = vrot.slane %v721, 1
    %v964 = vrot.slane %v722, 1
    %v965 = vsel %vm815, %v963, %v964
    %v966 = vrot.slane %v723, 1
    %v967 = vsel %vm815, %v964, %v966
    %v1029 = vadd.f32 %v565, %v817
    %v1030 = vadd.f32 %v566, %v817
    %v1031 = vadd.f32 %v567, %v820
    %v1032 = vadd.f32 %v568, %v822
    %v1033 = vadd.f32 %v569, %v825
    %v1034 = vadd.f32 %v570, %v827
    %v1035 = vadd.f32 %v571, %v830
    %v1036 = vadd.f32 %v572, %v832
    %v1037 = vadd.f32 %v573, %v835
    %v1038 = vadd.f32 %v574, %v837
    %v1039 = vadd.f32 %v575, %v840
    %v1040 = vadd.f32 %v576, %v842
    %v1041 = vadd.f32 %v577, %v845
    %v1042 = vadd.f32 %v578, %v847
    %v1043 = vadd.f32 %v579, %v850
    %v1044 = vadd.f32 %v580, %v852
    %v1045 = vadd.f32 %v581, %v855
    %v1046 = vadd.f32 %v582, %v857
    %v1047 = vadd.f32 %v583, %v860
    %v1048 = vadd.f32 %v584, %v862
    %v1049 = vadd.f32 %v585, %v865
    %v1050 = vadd.f32 %v586, %v867
    %v1051 = vadd.f32 %v587, %v870
    %v1052 = vadd.f32 %v588, %v872
    %v1053 = vadd.f32 %v589, %v875
    %v1054 = vadd.f32 %v590, %v877
    %v1055 = vadd.f32 %v591, %v880
    %v1056 = vadd.f32 %v592, %v882
    %v1057 = vadd.f32 %v593, %v885
    %v1058 = vadd.f32 %v594, %v887
    %v1059 = vadd.f32 %v595, %v890
    %v1060 = vadd.f32 %v596, %v892
    %v1061 = vadd.f32 %v597, %v817
    %v1062 = vadd.f32 %v598, %v817
    %v1063 = vadd.f32 %v599, %v895
    %v1064 = vadd.f32 %v600, %v897
    %v1065 = vadd.f32 %v601, %v900
    %v1066 = vadd.f32 %v602, %v902
    %v1067 = vadd.f32 %v603, %v905
    %v1068 = vadd.f32 %v604, %v907
    %v1069 = vadd.f32 %v605, %v910
    %v1070 = vadd.f32 %v606, %v912
    %v1071 = vadd.f32 %v607, %v915
    %v1072 = vadd.f32 %v608, %v917
    %v1073 = vadd.f32 %v609, %v920
    %v1074 = vadd.f32 %v610, %v922
    %v1075 = vadd.f32 %v611, %v925
    %v1076 = vadd.f32 %v612, %v927
    %v1077 = vadd.f32 %v613, %v930
    %v1078 = vadd.f32 %v614, %v932
    %v1079 = vadd.f32 %v615, %v935
    %v1080 = vadd.f32 %v616, %v937
    %v1081 = vadd.f32 %v617, %v940
    %v1082 = vadd.f32 %v618, %v942
    %v1083 = vadd.f32 %v619, %v945
    %v1084 = vadd.f32 %v620, %v947
    %v1085 = vadd.f32 %v621, %v950
    %v1086 = vadd.f32 %v622, %v952
    %v1087 = vadd.f32 %v623, %v955
    %v1088 = vadd.f32 %v624, %v957
    %v1089 = vadd.f32 %v625, %v960
    %v1090 = vadd.f32 %v626, %v962
    %v1091 = vadd.f32 %v627, %v965
    %v1092 = vadd.f32 %v628, %v967
    %v1093 = vlaneseq
    %v1094 = vshrl.u32 %v1093, 7
    %v1095 = vsub.s32 2, %v1094
    %v1096 = vrot.slane %v106, %v1095
    %v1097 = vmul.f32 %v1096, 0.0
    %v1098 = vmul.f32 %v365, %v1096
    %v1099 = vmul.f32 %v175, %v1096
    %v1100 = vmul.f32 %v397, %v1096
    %v1101 = vmul.f32 %v366, %v1096
    %v1102 = vmul.f32 %v178, %v1096
    %v1103 = vmul.f32 %v398, %v1096
    %v1104 = vmul.f32 %v367, %v1096
    %v1105 = vmul.f32 %v181, %v1096
    %v1106 = vmul.f32 %v399, %v1096
    %v1107 = vmul.f32 %v368, %v1096
    %v1108 = vmul.f32 %v184, %v1096
    %v1109 = vmul.f32 %v400, %v1096
    %v1110 = vmul.f32 %v369, %v1096
    %v1111 = vmul.f32 %v187, %v1096
    %v1112 = vmul.f32 %v401, %v1096
    %v1113 = vmul.f32 %v370, %v1096
    %v1114 = vmul.f32 %v190, %v1096
    %v1115 = vmul.f32 %v402, %v1096
    %v1116 = vmul.f32 %v371, %v1096
    %v1117 = vmul.f32 %v193, %v1096
    %v1118 = vmul.f32 %v403, %v1096
    %v1119 = vmul.f32 %v372, %v1096
    %v1120 = vmul.f32 %v196, %v1096
    %v1121 = vmul.f32 %v404, %v1096
    %v1122 = vmul.f32 %v373, %v1096
    %v1123 = vmul.f32 %v199, %v1096
    %v1124 = vmul.f32 %v405, %v1096
    %v1125 = vmul.f32 %v374, %v1096
    %v1126 = vmul.f32 %v202, %v1096
    %v1127 = vmul.f32 %v406, %v1096
    %v1128 = vmul.f32 %v375, %v1096
    %v1129 = vmul.f32 %v205, %v1096
    %v1130 = vmul.f32 %v407, %v1096
    %v1131 = vmul.f32 %v376, %v1096
    %v1132 = vmul.f32 %v208, %v1096
    %v1133 = vmul.f32 %v408, %v1096
    %v1134 = vmul.f32 %v377, %v1096
    %v1135 = vmul.f32 %v211, %v1096
    %v1136 = vmul.f32 %v409, %v1096
    %v1137 = vmul.f32 %v378, %v1096
    %v1138 = vmul.f32 %v214, %v1096
    %v1139 = vmul.f32 %v410, %v1096
    %v1140 = vmul.f32 %v379, %v1096
    %v1141 = vmul.f32 %v217, %v1096
    %v1142 = vmul.f32 %v411, %v1096
    %v1143 = vmul.f32 %v381, %v1096
    %v1144 = vmul.f32 %v223, %v1096
    %v1145 = vmul.f32 %v413, %v1096
    %v1146 = vmul.f32 %v382, %v1096
    %v1147 = vmul.f32 %v226, %v1096
    %v1148 = vmul.f32 %v414, %v1096
    %v1149 = vmul.f32 %v383, %v1096
    %v1150 = vmul.f32 %v229, %v1096
    %v1151 = vmul.f32 %v415, %v1096
    %v1152 = vmul.f32 %v384, %v1096
    %v1153 = vmul.f32 %v232, %v1096
    %v1154 = vmul.f32 %v416, %v1096
    %v1155 = vmul.f32 %v385, %v1096
    %v1156 = vmul.f32 %v235, %v1096
    %v1157 = vmul.f32 %v417, %v1096
    %v1158 = vmul.f32 %v386, %v1096
    %v1159 = vmul.f32 %v238, %v1096
    %v1160 = vmul.f32 %v418, %v1096
    %v1161 = vmul.f32 %v387, %v1096
    %v1162 = vmul.f32 %v241, %v1096
    %v1163 = vmul.f32 %v419, %v1096
    %v1164 = vmul.f32 %v388, %v1096
    %v1165 = vmul.f32 %v244, %v1096
    %v1166 = vmul.f32 %v420, %v1096
    %v1167 = vmul.f32 %v389, %v1096
    %v1168 = vmul.f32 %v247, %v1096
    %v1169 = vmul.f32 %v421, %v1096
    %v1170 = vmul.f32 %v390, %v1096
    %v1171 = vmul.f32 %v250, %v1096
    %v1172 = vmul.f32 %v422, %v1096
    %v1173 = vmul.f32 %v391, %v1096
    %v1174 = vmul.f32 %v253, %v1096
    %v1175 = vmul.f32 %v423, %v1096
    %v1176 = vmul.f32 %v392, %v1096
    %v1177 = vmul.f32 %v256, %v1096
    %v1178 = vmul.f32 %v424, %v1096
    %v1179 = vmul.f32 %v393, %v1096
    %v1180 = vmul.f32 %v259, %v1096
    %v1181 = vmul.f32 %v425, %v1096
    %v1182 = vmul.f32 %v394, %v1096
    %v1183 = vmul.f32 %v262, %v1096
    %v1184 = vmul.f32 %v426, %v1096
    %v1185 = vmul.f32 %v395, %v1096
    %v1186 = vmul.f32 %v265, %v1096
    %v1187 = vmul.f32 %v427, %v1096
    %vm1279 = vcmask 1045504
    %v1280 = vrot.slane %v1097, 2
    %v1281 = vsel %vm1279, %v1280, %v1280
    %v1282 = vrot.slane %v1098, 2
    %v1283 = vrot.slane %v1099, 2
    %v1284 = vsel %vm1279, %v1282, %v1283
    %v1285 = vrot.slane %v1100, 2
    %v1286 = vsel %vm1279, %v1283, %v1285
    %v1287 = vrot.slane %v1101, 2
    %v1288 = vrot.slane %v1102, 2
    %v1289 = vsel %vm1279, %v1287, %v1288
    %v1290 = vrot.slane %v1103, 2
    %v1291 = vsel %vm1279, %v1288, %v1290
    %v1292 = vrot.slane %v1104, 2
    %v1293 = vrot.slane %v1105, 2
    %v1294 = vsel %vm1279, %v1292, %v1293
    %v1295 = vrot.slane %v1106, 2
    %v1296 = vsel %vm1279, %v1293, %v1295
    %v1297 = vrot.slane %v1107, 2
    %v1298 = vrot.slane %v1108, 2
    %v1299 = vsel %vm1279, %v1297, %v1298
    %v1300 = vrot.slane %v1109, 2
    %v1301 = vsel %vm1279, %v1298, %v1300
    %v1302 = vrot.slane %v1110, 2
    %v1303 = vrot.slane %v1111, 2
    %v1304 = vsel %vm1279, %v1302, %v1303
    %v1305 = vrot.slane %v1112, 2
    %v1306 = vsel %vm1279, %v1303, %v1305
    %v1307 = vrot.slane %v1113, 2
    %v1308 = vrot.slane %v1114, 2
    %v1309 = vsel %vm1279, %v1307, %v1308
    %v1310 = vrot.slane %v1115, 2
    %v1311 = vsel %vm1279, %v1308, %v1310
    %v1312 = vrot.slane %v1116, 2
    %v1313 = vrot.slane %v1117, 2
    %v1314 = vsel %vm1279, %v1312, %v1313
    %v1315 = vrot.slane %v1118, 2
    %v1316 = vsel %vm1279, %v1313, %v1315
    %v1317 = vrot.slane %v1119, 2
    %v1318 = vrot.slane %v1120, 2
    %v1319 = vsel %vm1279, %v1317, %v1318
    %v1320 = vrot.slane %v1121, 2
    %v1321 = vsel %vm1279, %v1318, %v1320
    %v1322 = vrot.slane %v1122, 2
    %v1323 = vrot.slane %v1123, 2
    %v1324 = vsel %vm1279, %v1322, %v1323
    %v1325 = vrot.slane %v1124, 2
    %v1326 = vsel %vm1279, %v1323, %v1325
    %v1327 = vrot.slane %v1125, 2
    %v1328 = vrot.slane %v1126, 2
    %v1329 = vsel %vm1279, %v1327, %v1328
    %v1330 = vrot.slane %v1127, 2
    %v1331 = vsel %vm1279, %v1328, %v1330
    %v1332 = vrot.slane %v1128, 2
    %v1333 = vrot.slane %v1129, 2
    %v1334 = vsel %vm1279, %v1332, %v1333
    %v1335 = vrot.slane %v1130, 2
    %v1336 = vsel %vm1279, %v1333, %v1335
    %v1337 = vrot.slane %v1131, 2
    %v1338 = vrot.slane %v1132, 2
    %v1339 = vsel %vm1279, %v1337, %v1338
    %v1340 = vrot.slane %v1133, 2
    %v1341 = vsel %vm1279, %v1338, %v1340
    %v1342 = vrot.slane %v1134, 2
    %v1343 = vrot.slane %v1135, 2
    %v1344 = vsel %vm1279, %v1342, %v1343
    %v1345 = vrot.slane %v1136, 2
    %v1346 = vsel %vm1279, %v1343, %v1345
    %v1347 = vrot.slane %v1137, 2
    %v1348 = vrot.slane %v1138, 2
    %v1349 = vsel %vm1279, %v1347, %v1348
    %v1350 = vrot.slane %v1139, 2
    %v1351 = vsel %vm1279, %v1348, %v1350
    %v1352 = vrot.slane %v1140, 2
    %v1353 = vrot.slane %v1141, 2
    %v1354 = vsel %vm1279, %v1352, %v1353
    %v1355 = vrot.slane %v1142, 2
    %v1356 = vsel %vm1279, %v1353, %v1355
    %v1357 = vrot.slane %v1143, 2
    %v1358 = vrot.slane %v1144, 2
    %v1359 = vsel %vm1279, %v1357, %v1358
    %v1360 = vrot.slane %v1145, 2
    %v1361 = vsel %vm1279, %v1358, %v1360
    %v1362 = vrot.slane %v1146, 2
    %v1363 = vrot.slane %v1147, 2
    %v1364 = vsel %vm1279, %v1362, %v1363
    %v1365 = vrot.slane %v1148, 2
    %v1366 = vsel %vm1279, %v1363, %v1365
    %v1367 = vrot.slane %v1149, 2
    %v1368 = vrot.slane %v1150, 2
    %v1369 = vsel %vm1279, %v1367, %v1368
    %v1370 = vrot.slane %v1151, 2
    %v1371 = vsel %vm1279, %v1368, %v1370
    %v1372 = vrot.slane %v1152, 2
    %v1373 = vrot.slane %v1153, 2
    %v1374 = vsel %vm1279, %v1372, %v1373
    %v1375 = vrot.slane %v1154, 2
    %v1376 = vsel %vm1279, %v1373, %v1375
    %v1377 = vrot.slane %v1155, 2
    %v1378 = vrot.slane %v1156, 2
    %v1379 = vsel %vm1279, %v1377, %v1378
    %v1380 = vrot.slane %v1157, 2
    %v1381 = vsel %vm1279, %v1378, %v1380
    %v1382 = vrot.slane %v1158, 2
    %v1383 = vrot.slane %v1159, 2
    %v1384 = vsel %vm1279, %v1382, %v1383
    %v1385 = vrot.slane %v1160, 2
    %v1386 = vsel %vm1279, %v1383, %v1385
    %v1387 = vrot.slane %v1161, 2
    %v1388 = vrot.slane %v1162, 2
    %v1389 = vsel %vm1279, %v1387, %v1388
    %v1390 = vrot.slane %v1163, 2
    %v1391 = vsel %vm1279, %v1388, %v1390
    %v1392 = vrot.slane %v1164, 2
    %v1393 = vrot.slane %v1165, 2
    %v1394 = vsel %vm1279, %v1392, %v1393
    %v1395 = vrot.slane %v1166, 2
    %v1396 = vsel %vm1279, %v1393, %v1395
    %v1397 = vrot.slane %v1167, 2
    %v1398 = vrot.slane %v1168, 2
    %v1399 = vsel %vm1279, %v1397, %v1398
    %v1400 = vrot.slane %v1169, 2
    %v1401 = vsel %vm1279, %v1398, %v1400
    %v1402 = vrot.slane %v1170, 2
    %v1403 = vrot.slane %v1171, 2
    %v1404 = vsel %vm1279, %v1402, %v1403
    %v1405 = vrot.slane %v1172, 2
    %v1406 = vsel %vm1279, %v1403, %v1405
    %v1407 = vrot.slane %v1173, 2
    %v1408 = vrot.slane %v1174, 2
    %v1409 = vsel %vm1279, %v1407, %v1408
    %v1410 = vrot.slane %v1175, 2
    %v1411 = vsel %vm1279, %v1408, %v1410
    %v1412 = vrot.slane %v1176, 2
    %v1413 = vrot.slane %v1177, 2
    %v1414 = vsel %vm1279, %v1412, %v1413
    %v1415 = vrot.slane %v1178, 2
    %v1416 = vsel %vm1279, %v1413, %v1415
    %v1417 = vrot.slane %v1179, 2
    %v1418 = vrot.slane %v1180, 2
    %v1419 = vsel %vm1279, %v1417, %v1418
    %v1420 = vrot.slane %v1181, 2
    %v1421 = vsel %vm1279, %v1418, %v1420
    %v1422 = vrot.slane %v1182, 2
    %v1423 = vrot.slane %v1183, 2
    %v1424 = vsel %vm1279, %v1422, %v1423
    %v1425 = vrot.slane %v1184, 2
    %v1426 = vsel %vm1279, %v1423, %v1425
    %v1427 = vrot.slane %v1185, 2
    %v1428 = vrot.slane %v1186, 2
    %v1429 = vsel %vm1279, %v1427, %v1428
    %v1430 = vrot.slane %v1187, 2
    %v1431 = vsel %vm1279, %v1428, %v1430
    %v1493 = vadd.f32 %v1029, %v1281
    %v1494 = vadd.f32 %v1030, %v1281
    %v1495 = vadd.f32 %v1031, %v1284
    %v1496 = vadd.f32 %v1032, %v1286
    %v1497 = vadd.f32 %v1033, %v1289
    %v1498 = vadd.f32 %v1034, %v1291
    %v1499 = vadd.f32 %v1035, %v1294
    %v1500 = vadd.f32 %v1036, %v1296
    %v1501 = vadd.f32 %v1037, %v1299
    %v1502 = vadd.f32 %v1038, %v1301
    %v1503 = vadd.f32 %v1039, %v1304
    %v1504 = vadd.f32 %v1040, %v1306
    %v1505 = vadd.f32 %v1041, %v1309
    %v1506 = vadd.f32 %v1042, %v1311
    %v1507 = vadd.f32 %v1043, %v1314
    %v1508 = vadd.f32 %v1044, %v1316
    %v1509 = vadd.f32 %v1045, %v1319
    %v1510 = vadd.f32 %v1046, %v1321
    %v1511 = vadd.f32 %v1047, %v1324
    %v1512 = vadd.f32 %v1048, %v1326
    %v1513 = vadd.f32 %v1049, %v1329
    %v1514 = vadd.f32 %v1050, %v1331
    %v1515 = vadd.f32 %v1051, %v1334
    %v1516 = vadd.f32 %v1052, %v1336
    %v1517 = vadd.f32 %v1053, %v1339
    %v1518 = vadd.f32 %v1054, %v1341
    %v1519 = vadd.f32 %v1055, %v1344
    %v1520 = vadd.f32 %v1056, %v1346
    %v1521 = vadd.f32 %v1057, %v1349
    %v1522 = vadd.f32 %v1058, %v1351
    %v1523 = vadd.f32 %v1059, %v1354
    %v1524 = vadd.f32 %v1060, %v1356
    %v1525 = vadd.f32 %v1061, %v1281
    %v1526 = vadd.f32 %v1062, %v1281
    %v1527 = vadd.f32 %v1063, %v1359
    %v1528 = vadd.f32 %v1064, %v1361
    %v1529 = vadd.f32 %v1065, %v1364
    %v1530 = vadd.f32 %v1066, %v1366
    %v1531 = vadd.f32 %v1067, %v1369
    %v1532 = vadd.f32 %v1068, %v1371
    %v1533 = vadd.f32 %v1069, %v1374
    %v1534 = vadd.f32 %v1070, %v1376
    %v1535 = vadd.f32 %v1071, %v1379
    %v1536 = vadd.f32 %v1072, %v1381
    %v1537 = vadd.f32 %v1073, %v1384
    %v1538 = vadd.f32 %v1074, %v1386
    %v1539 = vadd.f32 %v1075, %v1389
    %v1540 = vadd.f32 %v1076, %v1391
    %v1541 = vadd.f32 %v1077, %v1394
    %v1542 = vadd.f32 %v1078, %v1396
    %v1543 = vadd.f32 %v1079, %v1399
    %v1544 = vadd.f32 %v1080, %v1401
    %v1545 = vadd.f32 %v1081, %v1404
    %v1546 = vadd.f32 %v1082, %v1406
    %v1547 = vadd.f32 %v1083, %v1409
    %v1548 = vadd.f32 %v1084, %v1411
    %v1549 = vadd.f32 %v1085, %v1414
    %v1550 = vadd.f32 %v1086, %v1416
    %v1551 = vadd.f32 %v1087, %v1419
    %v1552 = vadd.f32 %v1088, %v1421
    %v1553 = vadd.f32 %v1089, %v1424
    %v1554 = vadd.f32 %v1090, %v1426
    %v1555 = vadd.f32 %v1091, %v1429
    %v1556 = vadd.f32 %v1092, %v1431
    %v1557 = vlaneseq
    %v1558 = vshrl.u32 %v1557, 7
    %v1559 = vsub.s32 3, %v1558
    %v1560 = vrot.slane %v106, %v1559
    %v1561 = vmul.f32 %v365, %v1560
    %v1562 = vmul.f32 %v175, %v1560
    %v1563 = vmul.f32 %v366, %v1560
    %v1564 = vmul.f32 %v178, %v1560
    %v1565 = vmul.f32 %v367, %v1560
    %v1566 = vmul.f32 %v181, %v1560
    %v1567 = vmul.f32 %v368, %v1560
    %v1568 = vmul.f32 %v184, %v1560
    %v1569 = vmul.f32 %v369, %v1560
    %v1570 = vmul.f32 %v187, %v1560
    %v1571 = vmul.f32 %v370, %v1560
    %v1572 = vmul.f32 %v190, %v1560
    %v1573 = vmul.f32 %v371, %v1560
    %v1574 = vmul.f32 %v193, %v1560
    %v1575 = vmul.f32 %v372, %v1560
    %v1576 = vmul.f32 %v196, %v1560
    %v1577 = vmul.f32 %v373, %v1560
    %v1578 = vmul.f32 %v199, %v1560
    %v1579 = vmul.f32 %v374, %v1560
    %v1580 = vmul.f32 %v202, %v1560
    %v1581 = vmul.f32 %v375, %v1560
    %v1582 = vmul.f32 %v205, %v1560
    %v1583 = vmul.f32 %v376, %v1560
    %v1584 = vmul.f32 %v208, %v1560
    %v1585 = vmul.f32 %v377, %v1560
    %v1586 = vmul.f32 %v211, %v1560
    %v1587 = vmul.f32 %v378, %v1560
    %v1588 = vmul.f32 %v214, %v1560
    %v1589 = vmul.f32 %v379, %v1560
    %v1590 = vmul.f32 %v217, %v1560
    %v1591 = vmul.f32 %v380, %v1560
    %v1592 = vmul.f32 %v220, %v1560
    %v1593 = vmul.f32 %v381, %v1560
    %v1594 = vmul.f32 %v223, %v1560
    %v1595 = vmul.f32 %v382, %v1560
    %v1596 = vmul.f32 %v226, %v1560
    %v1597 = vmul.f32 %v383, %v1560
    %v1598 = vmul.f32 %v229, %v1560
    %v1599 = vmul.f32 %v384, %v1560
    %v1600 = vmul.f32 %v232, %v1560
    %v1601 = vmul.f32 %v385, %v1560
    %v1602 = vmul.f32 %v235, %v1560
    %v1603 = vmul.f32 %v386, %v1560
    %v1604 = vmul.f32 %v238, %v1560
    %v1605 = vmul.f32 %v387, %v1560
    %v1606 = vmul.f32 %v241, %v1560
    %v1607 = vmul.f32 %v388, %v1560
    %v1608 = vmul.f32 %v244, %v1560
    %v1609 = vmul.f32 %v389, %v1560
    %v1610 = vmul.f32 %v247, %v1560
    %v1611 = vmul.f32 %v390, %v1560
    %v1612 = vmul.f32 %v250, %v1560
    %v1613 = vmul.f32 %v391, %v1560
    %v1614 = vmul.f32 %v253, %v1560
    %v1615 = vmul.f32 %v392, %v1560
    %v1616 = vmul.f32 %v256, %v1560
    %v1617 = vmul.f32 %v393, %v1560
    %v1618 = vmul.f32 %v259, %v1560
    %v1619 = vmul.f32 %v394, %v1560
    %v1620 = vmul.f32 %v262, %v1560
    %v1621 = vmul.f32 %v395, %v1560
    %v1622 = vmul.f32 %v265, %v1560
    %v1623 = vmul.f32 %v396, %v1560
    %v1624 = vmul.f32 %v268, %v1560
    %v1625 = vadd.f32 %v1493, %v1561
    %v1626 = vadd.f32 %v1494, %v1562
    %v1627 = vadd.f32 %v1495, %v1563
    %v1628 = vadd.f32 %v1496, %v1564
    %v1629 = vadd.f32 %v1497, %v1565
    %v1630 = vadd.f32 %v1498, %v1566
    %v1631 = vadd.f32 %v1499, %v1567
    %v1632 = vadd.f32 %v1500, %v1568
    %v1633 = vadd.f32 %v1501, %v1569
    %v1634 = vadd.f32 %v1502, %v1570
    %v1635 = vadd.f32 %v1503, %v1571
    %v1636 = vadd.f32 %v1504, %v1572
    %v1637 = vadd.f32 %v1505, %v1573
    %v1638 = vadd.f32 %v1506, %v1574
    %v1639 = vadd.f32 %v1507, %v1575
    %v1640 = vadd.f32 %v1508, %v1576
    %v1641 = vadd.f32 %v1509, %v1577
    %v1642 = vadd.f32 %v1510, %v1578
    %v1643 = vadd.f32 %v1511, %v1579
    %v1644 = vadd.f32 %v1512, %v1580
    %v1645 = vadd.f32 %v1513, %v1581
    %v1646 = vadd.f32 %v1514, %v1582
    %v1647 = vadd.f32 %v1515, %v1583
    %v1648 = vadd.f32 %v1516, %v1584
    %v1649 = vadd.f32 %v1517, %v1585
    %v1650 = vadd.f32 %v1518, %v1586
    %v1651 = vadd.f32 %v1519, %v1587
    %v1652 = vadd.f32 %v1520, %v1588
    %v1653 = vadd.f32 %v1521, %v1589
    %v1654 = vadd.f32 %v1522, %v1590
    %v1655 = vadd.f32 %v1523, %v1591
    %v1656 = vadd.f32 %v1524, %v1592
    %v1657 = vadd.f32 %v1525, %v1593
    %v1658 = vadd.f32 %v1526, %v1594
    %v1659 = vadd.f32 %v1527, %v1595
    %v1660 = vadd.f32 %v1528, %v1596
    %v1661 = vadd.f32 %v1529, %v1597
    %v1662 = vadd.f32 %v1530, %v1598
    %v1663 = vadd.f32 %v1531, %v1599
    %v1664 = vadd.f32 %v1532, %v1600
    %v1665 = vadd.f32 %v1533, %v1601
    %v1666 = vadd.f32 %v1534, %v1602
    %v1667 = vadd.f32 %v1535, %v1603
    %v1668 = vadd.f32 %v1536, %v1604
    %v1669 = vadd.f32 %v1537, %v1605
    %v1670 = vadd.f32 %v1538, %v1606
    %v1671 = vadd.f32 %v1539, %v1607
    %v1672 = vadd.f32 %v1540, %v1608
    %v1673 = vadd.f32 %v1541, %v1609
    %v1674 = vadd.f32 %v1542, %v1610
    %v1675 = vadd.f32 %v1543, %v1611
    %v1676 = vadd.f32 %v1544, %v1612
    %v1677 = vadd.f32 %v1545, %v1613
    %v1678 = vadd.f32 %v1546, %v1614
    %v1679 = vadd.f32 %v1547, %v1615
    %v1680 = vadd.f32 %v1548, %v1616
    %v1681 = vadd.f32 %v1549, %v1617
    %v1682 = vadd.f32 %v1550, %v1618
    %v1683 = vadd.f32 %v1551, %v1619
    %v1684 = vadd.f32 %v1552, %v1620
    %v1685 = vadd.f32 %v1553, %v1621
    %v1686 = vadd.f32 %v1554, %v1622
    %v1687 = vadd.f32 %v1555, %v1623
    %v1688 = vadd.f32 %v1556, %v1624
    %v1689 = vlaneseq
    %v1690 = vshrl.u32 %v1689, 7
    %v1691 = vsub.s32 4, %v1690
    %v1692 = vrot.slane %v106, %v1691
    %v1693 = vmul.f32 %v365, %v1692
    %v1694 = vmul.f32 %v175, %v1692
    %v1695 = vmul.f32 %v397, %v1692
    %v1696 = vmul.f32 %v366, %v1692
    %v1697 = vmul.f32 %v178, %v1692
    %v1698 = vmul.f32 %v398, %v1692
    %v1699 = vmul.f32 %v367, %v1692
    %v1700 = vmul.f32 %v181, %v1692
    %v1701 = vmul.f32 %v399, %v1692
    %v1702 = vmul.f32 %v368, %v1692
    %v1703 = vmul.f32 %v184, %v1692
    %v1704 = vmul.f32 %v400, %v1692
    %v1705 = vmul.f32 %v369, %v1692
    %v1706 = vmul.f32 %v187, %v1692
    %v1707 = vmul.f32 %v401, %v1692
    %v1708 = vmul.f32 %v370, %v1692
    %v1709 = vmul.f32 %v190, %v1692
    %v1710 = vmul.f32 %v402, %v1692
    %v1711 = vmul.f32 %v371, %v1692
    %v1712 = vmul.f32 %v193, %v1692
    %v1713 = vmul.f32 %v403, %v1692
    %v1714 = vmul.f32 %v372, %v1692
    %v1715 = vmul.f32 %v196, %v1692
    %v1716 = vmul.f32 %v404, %v1692
    %v1717 = vmul.f32 %v373, %v1692
    %v1718 = vmul.f32 %v199, %v1692
    %v1719 = vmul.f32 %v405, %v1692
    %v1720 = vmul.f32 %v374, %v1692
    %v1721 = vmul.f32 %v202, %v1692
    %v1722 = vmul.f32 %v406, %v1692
    %v1723 = vmul.f32 %v375, %v1692
    %v1724 = vmul.f32 %v205, %v1692
    %v1725 = vmul.f32 %v407, %v1692
    %v1726 = vmul.f32 %v376, %v1692
    %v1727 = vmul.f32 %v208, %v1692
    %v1728 = vmul.f32 %v408, %v1692
    %v1729 = vmul.f32 %v377, %v1692
    %v1730 = vmul.f32 %v211, %v1692
    %v1731 = vmul.f32 %v409, %v1692
    %v1732 = vmul.f32 %v378, %v1692
    %v1733 = vmul.f32 %v214, %v1692
    %v1734 = vmul.f32 %v410, %v1692
    %v1735 = vmul.f32 %v379, %v1692
    %v1736 = vmul.f32 %v217, %v1692
    %v1737 = vmul.f32 %v411, %v1692
    %v1738 = vmul.f32 %v380, %v1692
    %v1739 = vmul.f32 %v220, %v1692
    %v1740 = vmul.f32 %v412, %v1692
    %v1741 = vmul.f32 %v381, %v1692
    %v1742 = vmul.f32 %v223, %v1692
    %v1743 = vmul.f32 %v413, %v1692
    %v1744 = vmul.f32 %v382, %v1692
    %v1745 = vmul.f32 %v226, %v1692
    %v1746 = vmul.f32 %v414, %v1692
    %v1747 = vmul.f32 %v383, %v1692
    %v1748 = vmul.f32 %v229, %v1692
    %v1749 = vmul.f32 %v415, %v1692
    %v1750 = vmul.f32 %v384, %v1692
    %v1751 = vmul.f32 %v232, %v1692
    %v1752 = vmul.f32 %v416, %v1692
    %v1753 = vmul.f32 %v385, %v1692
    %v1754 = vmul.f32 %v235, %v1692
    %v1755 = vmul.f32 %v417, %v1692
    %v1756 = vmul.f32 %v386, %v1692
    %v1757 = vmul.f32 %v238, %v1692
    %v1758 = vmul.f32 %v418, %v1692
    %v1759 = vmul.f32 %v387, %v1692
    %v1760 = vmul.f32 %v241, %v1692
    %v1761 = vmul.f32 %v419, %v1692
    %v1762 = vmul.f32 %v388, %v1692
    %v1763 = vmul.f32 %v244, %v1692
    %v1764 = vmul.f32 %v420, %v1692
    %v1765 = vmul.f32 %v389, %v1692
    %v1766 = vmul.f32 %v247, %v1692
    %v1767 = vmul.f32 %v421, %v1692
    %v1768 = vmul.f32 %v390, %v1692
    %v1769 = vmul.f32 %v250, %v1692
    %v1770 = vmul.f32 %v422, %v1692
    %v1771 = vmul.f32 %v391, %v1692
    %v1772 = vmul.f32 %v253, %v1692
    %v1773 = vmul.f32 %v423, %v1692
    %v1774 = vmul.f32 %v392, %v1692
    %v1775 = vmul.f32 %v256, %v1692
    %v1776 = vmul.f32 %v424, %v1692
    %v1777 = vmul.f32 %v393, %v1692
    %v1778 = vmul.f32 %v259, %v1692
    %v1779 = vmul.f32 %v425, %v1692
    %v1780 = vmul.f32 %v394, %v1692
    %v1781 = vmul.f32 %v262, %v1692
    %v1782 = vmul.f32 %v426, %v1692
    %v1783 = vmul.f32 %v395, %v1692
    %v1784 = vmul.f32 %v265, %v1692
    %v1785 = vmul.f32 %v427, %v1692
    %v1786 = vmul.f32 %v396, %v1692
    %v1787 = vmul.f32 %v268, %v1692
    %v1788 = vmul.f32 %v428, %v1692
    %v1885 = vrot.slane %v1693, 1
    %v1886 = vrot.slane %v1694, 1
    %v1887 = vsel %vm815, %v1885, %v1886
    %v1888 = vrot.slane %v1695, 1
    %v1889 = vsel %vm815, %v1886, %v1888
    %v1890 = vrot.slane %v1696, 1
    %v1891 = vrot.slane %v1697, 1
    %v1892 = vsel %vm815, %v1890, %v1891
    %v1893 = vrot.slane %v1698, 1
    %v1894 = vsel %vm815, %v1891, %v1893
    %v1895 = vrot.slane %v1699, 1
    %v1896 = vrot.slane %v1700, 1
    %v1897 = vsel %vm815, %v1895, %v1896
    %v1898 = vrot.slane %v1701, 1
    %v1899 = vsel %vm815, %v1896, %v1898
    %v1900 = vrot.slane %v1702, 1
    %v1901 = vrot.slane %v1703, 1
    %v1902 = vsel %vm815, %v1900, %v1901
    %v1903 = vrot.slane %v1704, 1
    %v1904 = vsel %vm815, %v1901, %v1903
    %v1905 = vrot.slane %v1705, 1
    %v1906 = vrot.slane %v1706, 1
    %v1907 = vsel %vm815, %v1905, %v1906
    %v1908 = vrot.slane %v1707, 1
    %v1909 = vsel %vm815, %v1906, %v1908
    %v1910 = vrot.slane %v1708, 1
    %v1911 = vrot.slane %v1709, 1
    %v1912 = vsel %vm815, %v1910, %v1911
    %v1913 = vrot.slane %v1710, 1
    %v1914 = vsel %vm815, %v1911, %v1913
    %v1915 = vrot.slane %v1711, 1
    %v1916 = vrot.slane %v1712, 1
    %v1917 = vsel %vm815, %v1915, %v1916
    %v1918 = vrot.slane %v1713, 1
    %v1919 = vsel %vm815, %v1916, %v1918
    %v1920 = vrot.slane %v1714, 1
    %v1921 = vrot.slane %v1715, 1
    %v1922 = vsel %vm815, %v1920, %v1921
    %v1923 = vrot.slane %v1716, 1
    %v1924 = vsel %vm815, %v1921, %v1923
    %v1925 = vrot.slane %v1717, 1
    %v1926 = vrot.slane %v1718, 1
    %v1927 = vsel %vm815, %v1925, %v1926
    %v1928 = vrot.slane %v1719, 1
    %v1929 = vsel %vm815, %v1926, %v1928
    %v1930 = vrot.slane %v1720, 1
    %v1931 = vrot.slane %v1721, 1
    %v1932 = vsel %vm815, %v1930, %v1931
    %v1933 = vrot.slane %v1722, 1
    %v1934 = vsel %vm815, %v1931, %v1933
    %v1935 = vrot.slane %v1723, 1
    %v1936 = vrot.slane %v1724, 1
    %v1937 = vsel %vm815, %v1935, %v1936
    %v1938 = vrot.slane %v1725, 1
    %v1939 = vsel %vm815, %v1936, %v1938
    %v1940 = vrot.slane %v1726, 1
    %v1941 = vrot.slane %v1727, 1
    %v1942 = vsel %vm815, %v1940, %v1941
    %v1943 = vrot.slane %v1728, 1
    %v1944 = vsel %vm815, %v1941, %v1943
    %v1945 = vrot.slane %v1729, 1
    %v1946 = vrot.slane %v1730, 1
    %v1947 = vsel %vm815, %v1945, %v1946
    %v1948 = vrot.slane %v1731, 1
    %v1949 = vsel %vm815, %v1946, %v1948
    %v1950 = vrot.slane %v1732, 1
    %v1951 = vrot.slane %v1733, 1
    %v1952 = vsel %vm815, %v1950, %v1951
    %v1953 = vrot.slane %v1734, 1
    %v1954 = vsel %vm815, %v1951, %v1953
    %v1955 = vrot.slane %v1735, 1
    %v1956 = vrot.slane %v1736, 1
    %v1957 = vsel %vm815, %v1955, %v1956
    %v1958 = vrot.slane %v1737, 1
    %v1959 = vsel %vm815, %v1956, %v1958
    %v1960 = vrot.slane %v1738, 1
    %v1961 = vrot.slane %v1739, 1
    %v1962 = vsel %vm815, %v1960, %v1961
    %v1963 = vrot.slane %v1740, 1
    %v1964 = vsel %vm815, %v1961, %v1963
    %v1965 = vrot.slane %v1741, 1
    %v1966 = vrot.slane %v1742, 1
    %v1967 = vsel %vm815, %v1965, %v1966
    %v1968 = vrot.slane %v1743, 1
    %v1969 = vsel %vm815, %v1966, %v1968
    %v1970 = vrot.slane %v1744, 1
    %v1971 = vrot.slane %v1745, 1
    %v1972 = vsel %vm815, %v1970, %v1971
    %v1973 = vrot.slane %v1746, 1
    %v1974 = vsel %vm815, %v1971, %v1973
    %v1975 = vrot.slane %v1747, 1
    %v1976 = vrot.slane %v1748, 1
    %v1977 = vsel %vm815, %v1975, %v1976
    %v1978 = vrot.slane %v1749, 1
    %v1979 = vsel %vm815, %v1976, %v1978
    %v1980 = vrot.slane %v1750, 1
    %v1981 = vrot.slane %v1751, 1
    %v1982 = vsel %vm815, %v1980, %v1981
    %v1983 = vrot.slane %v1752, 1
    %v1984 = vsel %vm815, %v1981, %v1983
    %v1985 = vrot.slane %v1753, 1
    %v1986 = vrot.slane %v1754, 1
    %v1987 = vsel %vm815, %v1985, %v1986
    %v1988 = vrot.slane %v1755, 1
    %v1989 = vsel %vm815, %v1986, %v1988
    %v1990 = vrot.slane %v1756, 1
    %v1991 = vrot.slane %v1757, 1
    %v1992 = vsel %vm815, %v1990, %v1991
    %v1993 = vrot.slane %v1758, 1
    %v1994 = vsel %vm815, %v1991, %v1993
    %v1995 = vrot.slane %v1759, 1
    %v1996 = vrot.slane %v1760, 1
    %v1997 = vsel %vm815, %v1995, %v1996
    %v1998 = vrot.slane %v1761, 1
    %v1999 = vsel %vm815, %v1996, %v1998
    %v2000 = vrot.slane %v1762, 1
    %v2001 = vrot.slane %v1763, 1
    %v2002 = vsel %vm815, %v2000, %v2001
    %v2003 = vrot.slane %v1764, 1
    %v2004 = vsel %vm815, %v2001, %v2003
    %v2005 = vrot.slane %v1765, 1
    %v2006 = vrot.slane %v1766, 1
    %v2007 = vsel %vm815, %v2005, %v2006
    %v2008 = vrot.slane %v1767, 1
    %v2009 = vsel %vm815, %v2006, %v2008
    %v2010 = vrot.slane %v1768, 1
    %v2011 = vrot.slane %v1769, 1
    %v2012 = vsel %vm815, %v2010, %v2011
    %v2013 = vrot.slane %v1770, 1
    %v2014 = vsel %vm815, %v2011, %v2013
    %v2015 = vrot.slane %v1771, 1
    %v2016 = vrot.slane %v1772, 1
    %v2017 = vsel %vm815, %v2015, %v2016
    %v2018 = vrot.slane %v1773, 1
    %v2019 = vsel %vm815, %v2016, %v2018
    %v2020 = vrot.slane %v1774, 1
    %v2021 = vrot.slane %v1775, 1
    %v2022 = vsel %vm815, %v2020, %v2021
    %v2023 = vrot.slane %v1776, 1
    %v2024 = vsel %vm815, %v2021, %v2023
    %v2025 = vrot.slane %v1777, 1
    %v2026 = vrot.slane %v1778, 1
    %v2027 = vsel %vm815, %v2025, %v2026
    %v2028 = vrot.slane %v1779, 1
    %v2029 = vsel %vm815, %v2026, %v2028
    %v2030 = vrot.slane %v1780, 1
    %v2031 = vrot.slane %v1781, 1
    %v2032 = vsel %vm815, %v2030, %v2031
    %v2033 = vrot.slane %v1782, 1
    %v2034 = vsel %vm815, %v2031, %v2033
    %v2035 = vrot.slane %v1783, 1
    %v2036 = vrot.slane %v1784, 1
    %v2037 = vsel %vm815, %v2035, %v2036
    %v2038 = vrot.slane %v1785, 1
    %v2039 = vsel %vm815, %v2036, %v2038
    %v2040 = vrot.slane %v1786, 1
    %v2041 = vrot.slane %v1787, 1
    %v2042 = vsel %vm815, %v2040, %v2041
    %v2043 = vrot.slane %v1788, 1
    %v2044 = vsel %vm815, %v2041, %v2043
    %v2109 = vadd.f32 %v1625, %v1887
    %v2110 = vadd.f32 %v1626, %v1889
    %v2111 = vadd.f32 %v1627, %v1892
    %v2112 = vadd.f32 %v1628, %v1894
    %v2113 = vadd.f32 %v1629, %v1897
    %v2114 = vadd.f32 %v1630, %v1899
    %v2115 = vadd.f32 %v1631, %v1902
    %v2116 = vadd.f32 %v1632, %v1904
    %v2117 = vadd.f32 %v1633, %v1907
    %v2118 = vadd.f32 %v1634, %v1909
    %v2119 = vadd.f32 %v1635, %v1912
    %v2120 = vadd.f32 %v1636, %v1914
    %v2121 = vadd.f32 %v1637, %v1917
    %v2122 = vadd.f32 %v1638, %v1919
    %v2123 = vadd.f32 %v1639, %v1922
    %v2124 = vadd.f32 %v1640, %v1924
    %v2125 = vadd.f32 %v1641, %v1927
    %v2126 = vadd.f32 %v1642, %v1929
    %v2127 = vadd.f32 %v1643, %v1932
    %v2128 = vadd.f32 %v1644, %v1934
    %v2129 = vadd.f32 %v1645, %v1937
    %v2130 = vadd.f32 %v1646, %v1939
    %v2131 = vadd.f32 %v1647, %v1942
    %v2132 = vadd.f32 %v1648, %v1944
    %v2133 = vadd.f32 %v1649, %v1947
    %v2134 = vadd.f32 %v1650, %v1949
    %v2135 = vadd.f32 %v1651, %v1952
    %v2136 = vadd.f32 %v1652, %v1954
    %v2137 = vadd.f32 %v1653, %v1957
    %v2138 = vadd.f32 %v1654, %v1959
    %v2139 = vadd.f32 %v1655, %v1962
    %v2140 = vadd.f32 %v1656, %v1964
    %v2141 = vadd.f32 %v1657, %v1967
    %v2142 = vadd.f32 %v1658, %v1969
    %v2143 = vadd.f32 %v1659, %v1972
    %v2144 = vadd.f32 %v1660, %v1974
    %v2145 = vadd.f32 %v1661, %v1977
    %v2146 = vadd.f32 %v1662, %v1979
    %v2147 = vadd.f32 %v1663, %v1982
    %v2148 = vadd.f32 %v1664, %v1984
    %v2149 = vadd.f32 %v1665, %v1987
    %v2150 = vadd.f32 %v1666, %v1989
    %v2151 = vadd.f32 %v1667, %v1992
    %v2152 = vadd.f32 %v1668, %v1994
    %v2153 = vadd.f32 %v1669, %v1997
    %v2154 = vadd.f32 %v1670, %v1999
    %v2155 = vadd.f32 %v1671, %v2002
    %v2156 = vadd.f32 %v1672, %v2004
    %v2157 = vadd.f32 %v1673, %v2007
    %v2158 = vadd.f32 %v1674, %v2009
    %v2159 = vadd.f32 %v1675, %v2012
    %v2160 = vadd.f32 %v1676, %v2014
    %v2161 = vadd.f32 %v1677, %v2017
    %v2162 = vadd.f32 %v1678, %v2019
    %v2163 = vadd.f32 %v1679, %v2022
    %v2164 = vadd.f32 %v1680, %v2024
    %v2165 = vadd.f32 %v1681, %v2027
    %v2166 = vadd.f32 %v1682, %v2029
    %v2167 = vadd.f32 %v1683, %v2032
    %v2168 = vadd.f32 %v1684, %v2034
    %v2169 = vadd.f32 %v1685, %v2037
    %v2170 = vadd.f32 %v1686, %v2039
    %v2171 = vadd.f32 %v1687, %v2042
    %v2172 = vadd.f32 %v1688, %v2044
    %v2173 = vlaneseq
    %v2174 = vshrl.u32 %v2173, 7
    %v2175 = vsub.s32 5, %v2174
    %v2176 = vrot.slane %v106, %v2175
    %v2177 = vmul.f32 %v365, %v2176
    %v2178 = vmul.f32 %v175, %v2176
    %v2179 = vmul.f32 %v397, %v2176
    %v2180 = vmul.f32 %v366, %v2176
    %v2181 = vmul.f32 %v178, %v2176
    %v2182 = vmul.f32 %v398, %v2176
    %v2183 = vmul.f32 %v367, %v2176
    %v2184 = vmul.f32 %v181, %v2176
    %v2185 = vmul.f32 %v399, %v2176
    %v2186 = vmul.f32 %v368, %v2176
    %v2187 = vmul.f32 %v184, %v2176
    %v2188 = vmul.f32 %v400, %v2176
    %v2189 = vmul.f32 %v369, %v2176
    %v2190 = vmul.f32 %v187, %v2176
    %v2191 = vmul.f32 %v401, %v2176
    %v2192 = vmul.f32 %v370, %v2176
    %v2193 = vmul.f32 %v190, %v2176
    %v2194 = vmul.f32 %v402, %v2176
    %v2195 = vmul.f32 %v371, %v2176
    %v2196 = vmul.f32 %v193, %v2176
    %v2197 = vmul.f32 %v403, %v2176
    %v2198 = vmul.f32 %v372, %v2176
    %v2199 = vmul.f32 %v196, %v2176
    %v2200 = vmul.f32 %v404, %v2176
    %v2201 = vmul.f32 %v373, %v2176
    %v2202 = vmul.f32 %v199, %v2176
    %v2203 = vmul.f32 %v405, %v2176
    %v2204 = vmul.f32 %v374, %v2176
    %v2205 = vmul.f32 %v202, %v2176
    %v2206 = vmul.f32 %v406, %v2176
    %v2207 = vmul.f32 %v375, %v2176
    %v2208 = vmul.f32 %v205, %v2176
    %v2209 = vmul.f32 %v407, %v2176
    %v2210 = vmul.f32 %v376, %v2176
    %v2211 = vmul.f32 %v208, %v2176
    %v2212 = vmul.f32 %v408, %v2176
    %v2213 = vmul.f32 %v377, %v2176
    %v2214 = vmul.f32 %v211, %v2176
    %v2215 = vmul.f32 %v409, %v2176
    %v2216 = vmul.f32 %v378, %v2176
    %v2217 = vmul.f32 %v214, %v2176
    %v2218 = vmul.f32 %v410, %v2176
    %v2219 = vmul.f32 %v379, %v2176
    %v2220 = vmul.f32 %v217, %v2176
    %v2221 = vmul.f32 %v411, %v2176
    %v2222 = vmul.f32 %v380, %v2176
    %v2223 = vmul.f32 %v220, %v2176
    %v2224 = vmul.f32 %v412, %v2176
    %v2225 = vmul.f32 %v381, %v2176
    %v2226 = vmul.f32 %v223, %v2176
    %v2227 = vmul.f32 %v413, %v2176
    %v2228 = vmul.f32 %v382, %v2176
    %v2229 = vmul.f32 %v226, %v2176
    %v2230 = vmul.f32 %v414, %v2176
    %v2231 = vmul.f32 %v383, %v2176
    %v2232 = vmul.f32 %v229, %v2176
    %v2233 = vmul.f32 %v415, %v2176
    %v2234 = vmul.f32 %v384, %v2176
    %v2235 = vmul.f32 %v232, %v2176
    %v2236 = vmul.f32 %v416, %v2176
    %v2237 = vmul.f32 %v385, %v2176
    %v2238 = vmul.f32 %v235, %v2176
    %v2239 = vmul.f32 %v417, %v2176
    %v2240 = vmul.f32 %v386, %v2176
    %v2241 = vmul.f32 %v238, %v2176
    %v2242 = vmul.f32 %v418, %v2176
    %v2243 = vmul.f32 %v387, %v2176
    %v2244 = vmul.f32 %v241, %v2176
    %v2245 = vmul.f32 %v419, %v2176
    %v2246 = vmul.f32 %v388, %v2176
    %v2247 = vmul.f32 %v244, %v2176
    %v2248 = vmul.f32 %v420, %v2176
    %v2249 = vmul.f32 %v389, %v2176
    %v2250 = vmul.f32 %v247, %v2176
    %v2251 = vmul.f32 %v421, %v2176
    %v2252 = vmul.f32 %v390, %v2176
    %v2253 = vmul.f32 %v250, %v2176
    %v2254 = vmul.f32 %v422, %v2176
    %v2255 = vmul.f32 %v391, %v2176
    %v2256 = vmul.f32 %v253, %v2176
    %v2257 = vmul.f32 %v423, %v2176
    %v2258 = vmul.f32 %v392, %v2176
    %v2259 = vmul.f32 %v256, %v2176
    %v2260 = vmul.f32 %v424, %v2176
    %v2261 = vmul.f32 %v393, %v2176
    %v2262 = vmul.f32 %v259, %v2176
    %v2263 = vmul.f32 %v425, %v2176
    %v2264 = vmul.f32 %v394, %v2176
    %v2265 = vmul.f32 %v262, %v2176
    %v2266 = vmul.f32 %v426, %v2176
    %v2267 = vmul.f32 %v395, %v2176
    %v2268 = vmul.f32 %v265, %v2176
    %v2269 = vmul.f32 %v427, %v2176
    %v2270 = vmul.f32 %v396, %v2176
    %v2271 = vmul.f32 %v268, %v2176
    %v2272 = vmul.f32 %v428, %v2176
    %v2369 = vrot.slane %v2177, 2
    %v2370 = vrot.slane %v2178, 2
    %v2371 = vsel %vm1279, %v2369, %v2370
    %v2372 = vrot.slane %v2179, 2
    %v2373 = vsel %vm1279, %v2370, %v2372
    %v2374 = vrot.slane %v2180, 2
    %v2375 = vrot.slane %v2181, 2
    %v2376 = vsel %vm1279, %v2374, %v2375
    %v2377 = vrot.slane %v2182, 2
    %v2378 = vsel %vm1279, %v2375, %v2377
    %v2379 = vrot.slane %v2183, 2
    %v2380 = vrot.slane %v2184, 2
    %v2381 = vsel %vm1279, %v2379, %v2380
    %v2382 = vrot.slane %v2185, 2
    %v2383 = vsel %vm1279, %v2380, %v2382
    %v2384 = vrot.slane %v2186, 2
    %v2385 = vrot.slane %v2187, 2
    %v2386 = vsel %vm1279, %v2384, %v2385
    %v2387 = vrot.slane %v2188, 2
    %v2388 = vsel %vm1279, %v2385, %v2387
    %v2389 = vrot.slane %v2189, 2
    %v2390 = vrot.slane %v2190, 2
    %v2391 = vsel %vm1279, %v2389, %v2390
    %v2392 = vrot.slane %v2191, 2
    %v2393 = vsel %vm1279, %v2390, %v2392
    %v2394 = vrot.slane %v2192, 2
    %v2395 = vrot.slane %v2193, 2
    %v2396 = vsel %vm1279, %v2394, %v2395
    %v2397 = vrot.slane %v2194, 2
    %v2398 = vsel %vm1279, %v2395, %v2397
    %v2399 = vrot.slane %v2195, 2
    %v2400 = vrot.slane %v2196, 2
    %v2401 = vsel %vm1279, %v2399, %v2400
    %v2402 = vrot.slane %v2197, 2
    %v2403 = vsel %vm1279, %v2400, %v2402
    %v2404 = vrot.slane %v2198, 2
    %v2405 = vrot.slane %v2199, 2
    %v2406 = vsel %vm1279, %v2404, %v2405
    %v2407 = vrot.slane %v2200, 2
    %v2408 = vsel %vm1279, %v2405, %v2407
    %v2409 = vrot.slane %v2201, 2
    %v2410 = vrot.slane %v2202, 2
    %v2411 = vsel %vm1279, %v2409, %v2410
    %v2412 = vrot.slane %v2203, 2
    %v2413 = vsel %vm1279, %v2410, %v2412
    %v2414 = vrot.slane %v2204, 2
    %v2415 = vrot.slane %v2205, 2
    %v2416 = vsel %vm1279, %v2414, %v2415
    %v2417 = vrot.slane %v2206, 2
    %v2418 = vsel %vm1279, %v2415, %v2417
    %v2419 = vrot.slane %v2207, 2
    %v2420 = vrot.slane %v2208, 2
    %v2421 = vsel %vm1279, %v2419, %v2420
    %v2422 = vrot.slane %v2209, 2
    %v2423 = vsel %vm1279, %v2420, %v2422
    %v2424 = vrot.slane %v2210, 2
    %v2425 = vrot.slane %v2211, 2
    %v2426 = vsel %vm1279, %v2424, %v2425
    %v2427 = vrot.slane %v2212, 2
    %v2428 = vsel %vm1279, %v2425, %v2427
    %v2429 = vrot.slane %v2213, 2
    %v2430 = vrot.slane %v2214, 2
    %v2431 = vsel %vm1279, %v2429, %v2430
    %v2432 = vrot.slane %v2215, 2
    %v2433 = vsel %vm1279, %v2430, %v2432
    %v2434 = vrot.slane %v2216, 2
    %v2435 = vrot.slane %v2217, 2
    %v2436 = vsel %vm1279, %v2434, %v2435
    %v2437 = vrot.slane %v2218, 2
    %v2438 = vsel %vm1279, %v2435, %v2437
    %v2439 = vrot.slane %v2219, 2
    %v2440 = vrot.slane %v2220, 2
    %v2441 = vsel %vm1279, %v2439, %v2440
    %v2442 = vrot.slane %v2221, 2
    %v2443 = vsel %vm1279, %v2440, %v2442
    %v2444 = vrot.slane %v2222, 2
    %v2445 = vrot.slane %v2223, 2
    %v2446 = vsel %vm1279, %v2444, %v2445
    %v2447 = vrot.slane %v2224, 2
    %v2448 = vsel %vm1279, %v2445, %v2447
    %v2449 = vrot.slane %v2225, 2
    %v2450 = vrot.slane %v2226, 2
    %v2451 = vsel %vm1279, %v2449, %v2450
    %v2452 = vrot.slane %v2227, 2
    %v2453 = vsel %vm1279, %v2450, %v2452
    %v2454 = vrot.slane %v2228, 2
    %v2455 = vrot.slane %v2229, 2
    %v2456 = vsel %vm1279, %v2454, %v2455
    %v2457 = vrot.slane %v2230, 2
    %v2458 = vsel %vm1279, %v2455, %v2457
    %v2459 = vrot.slane %v2231, 2
    %v2460 = vrot.slane %v2232, 2
    %v2461 = vsel %vm1279, %v2459, %v2460
    %v2462 = vrot.slane %v2233, 2
    %v2463 = vsel %vm1279, %v2460, %v2462
    %v2464 = vrot.slane %v2234, 2
    %v2465 = vrot.slane %v2235, 2
    %v2466 = vsel %vm1279, %v2464, %v2465
    %v2467 = vrot.slane %v2236, 2
    %v2468 = vsel %vm1279, %v2465, %v2467
    %v2469 = vrot.slane %v2237, 2
    %v2470 = vrot.slane %v2238, 2
    %v2471 = vsel %vm1279, %v2469, %v2470
    %v2472 = vrot.slane %v2239, 2
    %v2473 = vsel %vm1279, %v2470, %v2472
    %v2474 = vrot.slane %v2240, 2
    %v2475 = vrot.slane %v2241, 2
    %v2476 = vsel %vm1279, %v2474, %v2475
    %v2477 = vrot.slane %v2242, 2
    %v2478 = vsel %vm1279, %v2475, %v2477
    %v2479 = vrot.slane %v2243, 2
    %v2480 = vrot.slane %v2244, 2
    %v2481 = vsel %vm1279, %v2479, %v2480
    %v2482 = vrot.slane %v2245, 2
    %v2483 = vsel %vm1279, %v2480, %v2482
    %v2484 = vrot.slane %v2246, 2
    %v2485 = vrot.slane %v2247, 2
    %v2486 = vsel %vm1279, %v2484, %v2485
    %v2487 = vrot.slane %v2248, 2
    %v2488 = vsel %vm1279, %v2485, %v2487
    %v2489 = vrot.slane %v2249, 2
    %v2490 = vrot.slane %v2250, 2
    %v2491 = vsel %vm1279, %v2489, %v2490
    %v2492 = vrot.slane %v2251, 2
    %v2493 = vsel %vm1279, %v2490, %v2492
    %v2494 = vrot.slane %v2252, 2
    %v2495 = vrot.slane %v2253, 2
    %v2496 = vsel %vm1279, %v2494, %v2495
    %v2497 = vrot.slane %v2254, 2
    %v2498 = vsel %vm1279, %v2495, %v2497
    %v2499 = vrot.slane %v2255, 2
    %v2500 = vrot.slane %v2256, 2
    %v2501 = vsel %vm1279, %v2499, %v2500
    %v2502 = vrot.slane %v2257, 2
    %v2503 = vsel %vm1279, %v2500, %v2502
    %v2504 = vrot.slane %v2258, 2
    %v2505 = vrot.slane %v2259, 2
    %v2506 = vsel %vm1279, %v2504, %v2505
    %v2507 = vrot.slane %v2260, 2
    %v2508 = vsel %vm1279, %v2505, %v2507
    %v2509 = vrot.slane %v2261, 2
    %v2510 = vrot.slane %v2262, 2
    %v2511 = vsel %vm1279, %v2509, %v2510
    %v2512 = vrot.slane %v2263, 2
    %v2513 = vsel %vm1279, %v2510, %v2512
    %v2514 = vrot.slane %v2264, 2
    %v2515 = vrot.slane %v2265, 2
    %v2516 = vsel %vm1279, %v2514, %v2515
    %v2517 = vrot.slane %v2266, 2
    %v2518 = vsel %vm1279, %v2515, %v2517
    %v2519 = vrot.slane %v2267, 2
    %v2520 = vrot.slane %v2268, 2
    %v2521 = vsel %vm1279, %v2519, %v2520
    %v2522 = vrot.slane %v2269, 2
    %v2523 = vsel %vm1279, %v2520, %v2522
    %v2524 = vrot.slane %v2270, 2
    %v2525 = vrot.slane %v2271, 2
    %v2526 = vsel %vm1279, %v2524, %v2525
    %v2527 = vrot.slane %v2272, 2
    %v2528 = vsel %vm1279, %v2525, %v2527
    %v2593 = vadd.f32 %v2109, %v2371
    %v2594 = vadd.f32 %v2110, %v2373
    %v2595 = vadd.f32 %v2111, %v2376
    %v2596 = vadd.f32 %v2112, %v2378
    %v2597 = vadd.f32 %v2113, %v2381
    %v2598 = vadd.f32 %v2114, %v2383
    %v2599 = vadd.f32 %v2115, %v2386
    %v2600 = vadd.f32 %v2116, %v2388
    %v2601 = vadd.f32 %v2117, %v2391
    %v2602 = vadd.f32 %v2118, %v2393
    %v2603 = vadd.f32 %v2119, %v2396
    %v2604 = vadd.f32 %v2120, %v2398
    %v2605 = vadd.f32 %v2121, %v2401
    %v2606 = vadd.f32 %v2122, %v2403
    %v2607 = vadd.f32 %v2123, %v2406
    %v2608 = vadd.f32 %v2124, %v2408
    %v2609 = vadd.f32 %v2125, %v2411
    %v2610 = vadd.f32 %v2126, %v2413
    %v2611 = vadd.f32 %v2127, %v2416
    %v2612 = vadd.f32 %v2128, %v2418
    %v2613 = vadd.f32 %v2129, %v2421
    %v2614 = vadd.f32 %v2130, %v2423
    %v2615 = vadd.f32 %v2131, %v2426
    %v2616 = vadd.f32 %v2132, %v2428
    %v2617 = vadd.f32 %v2133, %v2431
    %v2618 = vadd.f32 %v2134, %v2433
    %v2619 = vadd.f32 %v2135, %v2436
    %v2620 = vadd.f32 %v2136, %v2438
    %v2621 = vadd.f32 %v2137, %v2441
    %v2622 = vadd.f32 %v2138, %v2443
    %v2623 = vadd.f32 %v2139, %v2446
    %v2624 = vadd.f32 %v2140, %v2448
    %v2625 = vadd.f32 %v2141, %v2451
    %v2626 = vadd.f32 %v2142, %v2453
    %v2627 = vadd.f32 %v2143, %v2456
    %v2628 = vadd.f32 %v2144, %v2458
    %v2629 = vadd.f32 %v2145, %v2461
    %v2630 = vadd.f32 %v2146, %v2463
    %v2631 = vadd.f32 %v2147, %v2466
    %v2632 = vadd.f32 %v2148, %v2468
    %v2633 = vadd.f32 %v2149, %v2471
    %v2634 = vadd.f32 %v2150, %v2473
    %v2635 = vadd.f32 %v2151, %v2476
    %v2636 = vadd.f32 %v2152, %v2478
    %v2637 = vadd.f32 %v2153, %v2481
    %v2638 = vadd.f32 %v2154, %v2483
    %v2639 = vadd.f32 %v2155, %v2486
    %v2640 = vadd.f32 %v2156, %v2488
    %v2641 = vadd.f32 %v2157, %v2491
    %v2642 = vadd.f32 %v2158, %v2493
    %v2643 = vadd.f32 %v2159, %v2496
    %v2644 = vadd.f32 %v2160, %v2498
    %v2645 = vadd.f32 %v2161, %v2501
    %v2646 = vadd.f32 %v2162, %v2503
    %v2647 = vadd.f32 %v2163, %v2506
    %v2648 = vadd.f32 %v2164, %v2508
    %v2649 = vadd.f32 %v2165, %v2511
    %v2650 = vadd.f32 %v2166, %v2513
    %v2651 = vadd.f32 %v2167, %v2516
    %v2652 = vadd.f32 %v2168, %v2518
    %v2653 = vadd.f32 %v2169, %v2521
    %v2654 = vadd.f32 %v2170, %v2523
    %v2655 = vadd.f32 %v2171, %v2526
    %v2656 = vadd.f32 %v2172, %v2528
    %v2657 = vlaneseq
    %v2658 = vshrl.u32 %v2657, 7
    %v2659 = vsub.s32 6, %v2658
    %v2660 = vrot.slane %v106, %v2659
    %v2661 = vmul.f32 %v366, %v2660
    %v2662 = vmul.f32 %v178, %v2660
    %v2663 = vmul.f32 %v367, %v2660
    %v2664 = vmul.f32 %v181, %v2660
    %v2665 = vmul.f32 %v368, %v2660
    %v2666 = vmul.f32 %v184, %v2660
    %v2667 = vmul.f32 %v369, %v2660
    %v2668 = vmul.f32 %v187, %v2660
    %v2669 = vmul.f32 %v370, %v2660
    %v2670 = vmul.f32 %v190, %v2660
    %v2671 = vmul.f32 %v371, %v2660
    %v2672 = vmul.f32 %v193, %v2660
    %v2673 = vmul.f32 %v372, %v2660
    %v2674 = vmul.f32 %v196, %v2660
    %v2675 = vmul.f32 %v373, %v2660
    %v2676 = vmul.f32 %v199, %v2660
    %v2677 = vmul.f32 %v374, %v2660
    %v2678 = vmul.f32 %v202, %v2660
    %v2679 = vmul.f32 %v375, %v2660
    %v2680 = vmul.f32 %v205, %v2660
    %v2681 = vmul.f32 %v376, %v2660
    %v2682 = vmul.f32 %v208, %v2660
    %v2683 = vmul.f32 %v377, %v2660
    %v2684 = vmul.f32 %v211, %v2660
    %v2685 = vmul.f32 %v378, %v2660
    %v2686 = vmul.f32 %v214, %v2660
    %v2687 = vmul.f32 %v379, %v2660
    %v2688 = vmul.f32 %v217, %v2660
    %v2689 = vmul.f32 %v380, %v2660
    %v2690 = vmul.f32 %v220, %v2660
    %v2691 = vmul.f32 %v2660, 0.0
    %v2692 = vmul.f32 %v382, %v2660
    %v2693 = vmul.f32 %v226, %v2660
    %v2694 = vmul.f32 %v383, %v2660
    %v2695 = vmul.f32 %v229, %v2660
    %v2696 = vmul.f32 %v384, %v2660
    %v2697 = vmul.f32 %v232, %v2660
    %v2698 = vmul.f32 %v385, %v2660
    %v2699 = vmul.f32 %v235, %v2660
    %v2700 = vmul.f32 %v386, %v2660
    %v2701 = vmul.f32 %v238, %v2660
    %v2702 = vmul.f32 %v387, %v2660
    %v2703 = vmul.f32 %v241, %v2660
    %v2704 = vmul.f32 %v388, %v2660
    %v2705 = vmul.f32 %v244, %v2660
    %v2706 = vmul.f32 %v389, %v2660
    %v2707 = vmul.f32 %v247, %v2660
    %v2708 = vmul.f32 %v390, %v2660
    %v2709 = vmul.f32 %v250, %v2660
    %v2710 = vmul.f32 %v391, %v2660
    %v2711 = vmul.f32 %v253, %v2660
    %v2712 = vmul.f32 %v392, %v2660
    %v2713 = vmul.f32 %v256, %v2660
    %v2714 = vmul.f32 %v393, %v2660
    %v2715 = vmul.f32 %v259, %v2660
    %v2716 = vmul.f32 %v394, %v2660
    %v2717 = vmul.f32 %v262, %v2660
    %v2718 = vmul.f32 %v395, %v2660
    %v2719 = vmul.f32 %v265, %v2660
    %v2720 = vmul.f32 %v396, %v2660
    %v2721 = vmul.f32 %v268, %v2660
    %v2722 = vadd.f32 %v2593, %v2661
    %v2723 = vadd.f32 %v2594, %v2662
    %v2724 = vadd.f32 %v2595, %v2663
    %v2725 = vadd.f32 %v2596, %v2664
    %v2726 = vadd.f32 %v2597, %v2665
    %v2727 = vadd.f32 %v2598, %v2666
    %v2728 = vadd.f32 %v2599, %v2667
    %v2729 = vadd.f32 %v2600, %v2668
    %v2730 = vadd.f32 %v2601, %v2669
    %v2731 = vadd.f32 %v2602, %v2670
    %v2732 = vadd.f32 %v2603, %v2671
    %v2733 = vadd.f32 %v2604, %v2672
    %v2734 = vadd.f32 %v2605, %v2673
    %v2735 = vadd.f32 %v2606, %v2674
    %v2736 = vadd.f32 %v2607, %v2675
    %v2737 = vadd.f32 %v2608, %v2676
    %v2738 = vadd.f32 %v2609, %v2677
    %v2739 = vadd.f32 %v2610, %v2678
    %v2740 = vadd.f32 %v2611, %v2679
    %v2741 = vadd.f32 %v2612, %v2680
    %v2742 = vadd.f32 %v2613, %v2681
    %v2743 = vadd.f32 %v2614, %v2682
    %v2744 = vadd.f32 %v2615, %v2683
    %v2745 = vadd.f32 %v2616, %v2684
    %v2746 = vadd.f32 %v2617, %v2685
    %v2747 = vadd.f32 %v2618, %v2686
    %v2748 = vadd.f32 %v2619, %v2687
    %v2749 = vadd.f32 %v2620, %v2688
    %v2750 = vadd.f32 %v2621, %v2689
    %v2751 = vadd.f32 %v2622, %v2690
    %v2752 = vadd.f32 %v2623, %v2691
    %v2753 = vadd.f32 %v2624, %v2691
    %v2754 = vadd.f32 %v2625, %v2692
    %v2755 = vadd.f32 %v2626, %v2693
    %v2756 = vadd.f32 %v2627, %v2694
    %v2757 = vadd.f32 %v2628, %v2695
    %v2758 = vadd.f32 %v2629, %v2696
    %v2759 = vadd.f32 %v2630, %v2697
    %v2760 = vadd.f32 %v2631, %v2698
    %v2761 = vadd.f32 %v2632, %v2699
    %v2762 = vadd.f32 %v2633, %v2700
    %v2763 = vadd.f32 %v2634, %v2701
    %v2764 = vadd.f32 %v2635, %v2702
    %v2765 = vadd.f32 %v2636, %v2703
    %v2766 = vadd.f32 %v2637, %v2704
    %v2767 = vadd.f32 %v2638, %v2705
    %v2768 = vadd.f32 %v2639, %v2706
    %v2769 = vadd.f32 %v2640, %v2707
    %v2770 = vadd.f32 %v2641, %v2708
    %v2771 = vadd.f32 %v2642, %v2709
    %v2772 = vadd.f32 %v2643, %v2710
    %v2773 = vadd.f32 %v2644, %v2711
    %v2774 = vadd.f32 %v2645, %v2712
    %v2775 = vadd.f32 %v2646, %v2713
    %v2776 = vadd.f32 %v2647, %v2714
    %v2777 = vadd.f32 %v2648, %v2715
    %v2778 = vadd.f32 %v2649, %v2716
    %v2779 = vadd.f32 %v2650, %v2717
    %v2780 = vadd.f32 %v2651, %v2718
    %v2781 = vadd.f32 %v2652, %v2719
    %v2782 = vadd.f32 %v2653, %v2720
    %v2783 = vadd.f32 %v2654, %v2721
    %v2784 = vadd.f32 %v2655, %v2691
    %v2785 = vadd.f32 %v2656, %v2691
    %v2786 = vlaneseq
    %v2787 = vshrl.u32 %v2786, 7
    %v2788 = vsub.s32 7, %v2787
    %v2789 = vrot.slane %v106, %v2788
    %v2790 = vmul.f32 %v366, %v2789
    %v2791 = vmul.f32 %v178, %v2789
    %v2792 = vmul.f32 %v398, %v2789
    %v2793 = vmul.f32 %v367, %v2789
    %v2794 = vmul.f32 %v181, %v2789
    %v2795 = vmul.f32 %v399, %v2789
    %v2796 = vmul.f32 %v368, %v2789
    %v2797 = vmul.f32 %v184, %v2789
    %v2798 = vmul.f32 %v400, %v2789
    %v2799 = vmul.f32 %v369, %v2789
    %v2800 = vmul.f32 %v187, %v2789
    %v2801 = vmul.f32 %v401, %v2789
    %v2802 = vmul.f32 %v370, %v2789
    %v2803 = vmul.f32 %v190, %v2789
    %v2804 = vmul.f32 %v402, %v2789
    %v2805 = vmul.f32 %v371, %v2789
    %v2806 = vmul.f32 %v193, %v2789
    %v2807 = vmul.f32 %v403, %v2789
    %v2808 = vmul.f32 %v372, %v2789
    %v2809 = vmul.f32 %v196, %v2789
    %v2810 = vmul.f32 %v404, %v2789
    %v2811 = vmul.f32 %v373, %v2789
    %v2812 = vmul.f32 %v199, %v2789
    %v2813 = vmul.f32 %v405, %v2789
    %v2814 = vmul.f32 %v374, %v2789
    %v2815 = vmul.f32 %v202, %v2789
    %v2816 = vmul.f32 %v406, %v2789
    %v2817 = vmul.f32 %v375, %v2789
    %v2818 = vmul.f32 %v205, %v2789
    %v2819 = vmul.f32 %v407, %v2789
    %v2820 = vmul.f32 %v376, %v2789
    %v2821 = vmul.f32 %v208, %v2789
    %v2822 = vmul.f32 %v408, %v2789
    %v2823 = vmul.f32 %v377, %v2789
    %v2824 = vmul.f32 %v211, %v2789
    %v2825 = vmul.f32 %v409, %v2789
    %v2826 = vmul.f32 %v378, %v2789
    %v2827 = vmul.f32 %v214, %v2789
    %v2828 = vmul.f32 %v410, %v2789
    %v2829 = vmul.f32 %v379, %v2789
    %v2830 = vmul.f32 %v217, %v2789
    %v2831 = vmul.f32 %v411, %v2789
    %v2832 = vmul.f32 %v380, %v2789
    %v2833 = vmul.f32 %v220, %v2789
    %v2834 = vmul.f32 %v412, %v2789
    %v2835 = vmul.f32 %v2789, 0.0
    %v2836 = vmul.f32 %v382, %v2789
    %v2837 = vmul.f32 %v226, %v2789
    %v2838 = vmul.f32 %v414, %v2789
    %v2839 = vmul.f32 %v383, %v2789
    %v2840 = vmul.f32 %v229, %v2789
    %v2841 = vmul.f32 %v415, %v2789
    %v2842 = vmul.f32 %v384, %v2789
    %v2843 = vmul.f32 %v232, %v2789
    %v2844 = vmul.f32 %v416, %v2789
    %v2845 = vmul.f32 %v385, %v2789
    %v2846 = vmul.f32 %v235, %v2789
    %v2847 = vmul.f32 %v417, %v2789
    %v2848 = vmul.f32 %v386, %v2789
    %v2849 = vmul.f32 %v238, %v2789
    %v2850 = vmul.f32 %v418, %v2789
    %v2851 = vmul.f32 %v387, %v2789
    %v2852 = vmul.f32 %v241, %v2789
    %v2853 = vmul.f32 %v419, %v2789
    %v2854 = vmul.f32 %v388, %v2789
    %v2855 = vmul.f32 %v244, %v2789
    %v2856 = vmul.f32 %v420, %v2789
    %v2857 = vmul.f32 %v389, %v2789
    %v2858 = vmul.f32 %v247, %v2789
    %v2859 = vmul.f32 %v421, %v2789
    %v2860 = vmul.f32 %v390, %v2789
    %v2861 = vmul.f32 %v250, %v2789
    %v2862 = vmul.f32 %v422, %v2789
    %v2863 = vmul.f32 %v391, %v2789
    %v2864 = vmul.f32 %v253, %v2789
    %v2865 = vmul.f32 %v423, %v2789
    %v2866 = vmul.f32 %v392, %v2789
    %v2867 = vmul.f32 %v256, %v2789
    %v2868 = vmul.f32 %v424, %v2789
    %v2869 = vmul.f32 %v393, %v2789
    %v2870 = vmul.f32 %v259, %v2789
    %v2871 = vmul.f32 %v425, %v2789
    %v2872 = vmul.f32 %v394, %v2789
    %v2873 = vmul.f32 %v262, %v2789
    %v2874 = vmul.f32 %v426, %v2789
    %v2875 = vmul.f32 %v395, %v2789
    %v2876 = vmul.f32 %v265, %v2789
    %v2877 = vmul.f32 %v427, %v2789
    %v2878 = vmul.f32 %v396, %v2789
    %v2879 = vmul.f32 %v268, %v2789
    %v2880 = vmul.f32 %v428, %v2789
    %v2972 = vrot.slane %v2790, 1
    %v2973 = vrot.slane %v2791, 1
    %v2974 = vsel %vm815, %v2972, %v2973
    %v2975 = vrot.slane %v2792, 1
    %v2976 = vsel %vm815, %v2973, %v2975
    %v2977 = vrot.slane %v2793, 1
    %v2978 = vrot.slane %v2794, 1
    %v2979 = vsel %vm815, %v2977, %v2978
    %v2980 = vrot.slane %v2795, 1
    %v2981 = vsel %vm815, %v2978, %v2980
    %v2982 = vrot.slane %v2796, 1
    %v2983 = vrot.slane %v2797, 1
    %v2984 = vsel %vm815, %v2982, %v2983
    %v2985 = vrot.slane %v2798, 1
    %v2986 = vsel %vm815, %v2983, %v2985
    %v2987 = vrot.slane %v2799, 1
    %v2988 = vrot.slane %v2800, 1
    %v2989 = vsel %vm815, %v2987, %v2988
    %v2990 = vrot.slane %v2801, 1
    %v2991 = vsel %vm815, %v2988, %v2990
    %v2992 = vrot.slane %v2802, 1
    %v2993 = vrot.slane %v2803, 1
    %v2994 = vsel %vm815, %v2992, %v2993
    %v2995 = vrot.slane %v2804, 1
    %v2996 = vsel %vm815, %v2993, %v2995
    %v2997 = vrot.slane %v2805, 1
    %v2998 = vrot.slane %v2806, 1
    %v2999 = vsel %vm815, %v2997, %v2998
    %v3000 = vrot.slane %v2807, 1
    %v3001 = vsel %vm815, %v2998, %v3000
    %v3002 = vrot.slane %v2808, 1
    %v3003 = vrot.slane %v2809, 1
    %v3004 = vsel %vm815, %v3002, %v3003
    %v3005 = vrot.slane %v2810, 1
    %v3006 = vsel %vm815, %v3003, %v3005
    %v3007 = vrot.slane %v2811, 1
    %v3008 = vrot.slane %v2812, 1
    %v3009 = vsel %vm815, %v3007, %v3008
    %v3010 = vrot.slane %v2813, 1
    %v3011 = vsel %vm815, %v3008, %v3010
    %v3012 = vrot.slane %v2814, 1
    %v3013 = vrot.slane %v2815, 1
    %v3014 = vsel %vm815, %v3012, %v3013
    %v3015 = vrot.slane %v2816, 1
    %v3016 = vsel %vm815, %v3013, %v3015
    %v3017 = vrot.slane %v2817, 1
    %v3018 = vrot.slane %v2818, 1
    %v3019 = vsel %vm815, %v3017, %v3018
    %v3020 = vrot.slane %v2819, 1
    %v3021 = vsel %vm815, %v3018, %v3020
    %v3022 = vrot.slane %v2820, 1
    %v3023 = vrot.slane %v2821, 1
    %v3024 = vsel %vm815, %v3022, %v3023
    %v3025 = vrot.slane %v2822, 1
    %v3026 = vsel %vm815, %v3023, %v3025
    %v3027 = vrot.slane %v2823, 1
    %v3028 = vrot.slane %v2824, 1
    %v3029 = vsel %vm815, %v3027, %v3028
    %v3030 = vrot.slane %v2825, 1
    %v3031 = vsel %vm815, %v3028, %v3030
    %v3032 = vrot.slane %v2826, 1
    %v3033 = vrot.slane %v2827, 1
    %v3034 = vsel %vm815, %v3032, %v3033
    %v3035 = vrot.slane %v2828, 1
    %v3036 = vsel %vm815, %v3033, %v3035
    %v3037 = vrot.slane %v2829, 1
    %v3038 = vrot.slane %v2830, 1
    %v3039 = vsel %vm815, %v3037, %v3038
    %v3040 = vrot.slane %v2831, 1
    %v3041 = vsel %vm815, %v3038, %v3040
    %v3042 = vrot.slane %v2832, 1
    %v3043 = vrot.slane %v2833, 1
    %v3044 = vsel %vm815, %v3042, %v3043
    %v3045 = vrot.slane %v2834, 1
    %v3046 = vsel %vm815, %v3043, %v3045
    %v3047 = vrot.slane %v2835, 1
    %v3048 = vsel %vm815, %v3047, %v3047
    %v3049 = vrot.slane %v2836, 1
    %v3050 = vrot.slane %v2837, 1
    %v3051 = vsel %vm815, %v3049, %v3050
    %v3052 = vrot.slane %v2838, 1
    %v3053 = vsel %vm815, %v3050, %v3052
    %v3054 = vrot.slane %v2839, 1
    %v3055 = vrot.slane %v2840, 1
    %v3056 = vsel %vm815, %v3054, %v3055
    %v3057 = vrot.slane %v2841, 1
    %v3058 = vsel %vm815, %v3055, %v3057
    %v3059 = vrot.slane %v2842, 1
    %v3060 = vrot.slane %v2843, 1
    %v3061 = vsel %vm815, %v3059, %v3060
    %v3062 = vrot.slane %v2844, 1
    %v3063 = vsel %vm815, %v3060, %v3062
    %v3064 = vrot.slane %v2845, 1
    %v3065 = vrot.slane %v2846, 1
    %v3066 = vsel %vm815, %v3064, %v3065
    %v3067 = vrot.slane %v2847, 1
    %v3068 = vsel %vm815, %v3065, %v3067
    %v3069 = vrot.slane %v2848, 1
    %v3070 = vrot.slane %v2849, 1
    %v3071 = vsel %vm815, %v3069, %v3070
    %v3072 = vrot.slane %v2850, 1
    %v3073 = vsel %vm815, %v3070, %v3072
    %v3074 = vrot.slane %v2851, 1
    %v3075 = vrot.slane %v2852, 1
    %v3076 = vsel %vm815, %v3074, %v3075
    %v3077 = vrot.slane %v2853, 1
    %v3078 = vsel %vm815, %v3075, %v3077
    %v3079 = vrot.slane %v2854, 1
    %v3080 = vrot.slane %v2855, 1
    %v3081 = vsel %vm815, %v3079, %v3080
    %v3082 = vrot.slane %v2856, 1
    %v3083 = vsel %vm815, %v3080, %v3082
    %v3084 = vrot.slane %v2857, 1
    %v3085 = vrot.slane %v2858, 1
    %v3086 = vsel %vm815, %v3084, %v3085
    %v3087 = vrot.slane %v2859, 1
    %v3088 = vsel %vm815, %v3085, %v3087
    %v3089 = vrot.slane %v2860, 1
    %v3090 = vrot.slane %v2861, 1
    %v3091 = vsel %vm815, %v3089, %v3090
    %v3092 = vrot.slane %v2862, 1
    %v3093 = vsel %vm815, %v3090, %v3092
    %v3094 = vrot.slane %v2863, 1
    %v3095 = vrot.slane %v2864, 1
    %v3096 = vsel %vm815, %v3094, %v3095
    %v3097 = vrot.slane %v2865, 1
    %v3098 = vsel %vm815, %v3095, %v3097
    %v3099 = vrot.slane %v2866, 1
    %v3100 = vrot.slane %v2867, 1
    %v3101 = vsel %vm815, %v3099, %v3100
    %v3102 = vrot.slane %v2868, 1
    %v3103 = vsel %vm815, %v3100, %v3102
    %v3104 = vrot.slane %v2869, 1
    %v3105 = vrot.slane %v2870, 1
    %v3106 = vsel %vm815, %v3104, %v3105
    %v3107 = vrot.slane %v2871, 1
    %v3108 = vsel %vm815, %v3105, %v3107
    %v3109 = vrot.slane %v2872, 1
    %v3110 = vrot.slane %v2873, 1
    %v3111 = vsel %vm815, %v3109, %v3110
    %v3112 = vrot.slane %v2874, 1
    %v3113 = vsel %vm815, %v3110, %v3112
    %v3114 = vrot.slane %v2875, 1
    %v3115 = vrot.slane %v2876, 1
    %v3116 = vsel %vm815, %v3114, %v3115
    %v3117 = vrot.slane %v2877, 1
    %v3118 = vsel %vm815, %v3115, %v3117
    %v3119 = vrot.slane %v2878, 1
    %v3120 = vrot.slane %v2879, 1
    %v3121 = vsel %vm815, %v3119, %v3120
    %v3122 = vrot.slane %v2880, 1
    %v3123 = vsel %vm815, %v3120, %v3122
    %v3185 = vadd.f32 %v2722, %v2974
    %v3186 = vadd.f32 %v2723, %v2976
    %v3187 = vadd.f32 %v2724, %v2979
    %v3188 = vadd.f32 %v2725, %v2981
    %v3189 = vadd.f32 %v2726, %v2984
    %v3190 = vadd.f32 %v2727, %v2986
    %v3191 = vadd.f32 %v2728, %v2989
    %v3192 = vadd.f32 %v2729, %v2991
    %v3193 = vadd.f32 %v2730, %v2994
    %v3194 = vadd.f32 %v2731, %v2996
    %v3195 = vadd.f32 %v2732, %v2999
    %v3196 = vadd.f32 %v2733, %v3001
    %v3197 = vadd.f32 %v2734, %v3004
    %v3198 = vadd.f32 %v2735, %v3006
    %v3199 = vadd.f32 %v2736, %v3009
    %v3200 = vadd.f32 %v2737, %v3011
    %v3201 = vadd.f32 %v2738, %v3014
    %v3202 = vadd.f32 %v2739, %v3016
    %v3203 = vadd.f32 %v2740, %v3019
    %v3204 = vadd.f32 %v2741, %v3021
    %v3205 = vadd.f32 %v2742, %v3024
    %v3206 = vadd.f32 %v2743, %v3026
    %v3207 = vadd.f32 %v2744, %v3029
    %v3208 = vadd.f32 %v2745, %v3031
    %v3209 = vadd.f32 %v2746, %v3034
    %v3210 = vadd.f32 %v2747, %v3036
    %v3211 = vadd.f32 %v2748, %v3039
    %v3212 = vadd.f32 %v2749, %v3041
    %v3213 = vadd.f32 %v2750, %v3044
    %v3214 = vadd.f32 %v2751, %v3046
    %v3215 = vadd.f32 %v2752, %v3048
    %v3216 = vadd.f32 %v2753, %v3048
    %v3217 = vadd.f32 %v2754, %v3051
    %v3218 = vadd.f32 %v2755, %v3053
    %v3219 = vadd.f32 %v2756, %v3056
    %v3220 = vadd.f32 %v2757, %v3058
    %v3221 = vadd.f32 %v2758, %v3061
    %v3222 = vadd.f32 %v2759, %v3063
    %v3223 = vadd.f32 %v2760, %v3066
    %v3224 = vadd.f32 %v2761, %v3068
    %v3225 = vadd.f32 %v2762, %v3071
    %v3226 = vadd.f32 %v2763, %v3073
    %v3227 = vadd.f32 %v2764, %v3076
    %v3228 = vadd.f32 %v2765, %v3078
    %v3229 = vadd.f32 %v2766, %v3081
    %v3230 = vadd.f32 %v2767, %v3083
    %v3231 = vadd.f32 %v2768, %v3086
    %v3232 = vadd.f32 %v2769, %v3088
    %v3233 = vadd.f32 %v2770, %v3091
    %v3234 = vadd.f32 %v2771, %v3093
    %v3235 = vadd.f32 %v2772, %v3096
    %v3236 = vadd.f32 %v2773, %v3098
    %v3237 = vadd.f32 %v2774, %v3101
    %v3238 = vadd.f32 %v2775, %v3103
    %v3239 = vadd.f32 %v2776, %v3106
    %v3240 = vadd.f32 %v2777, %v3108
    %v3241 = vadd.f32 %v2778, %v3111
    %v3242 = vadd.f32 %v2779, %v3113
    %v3243 = vadd.f32 %v2780, %v3116
    %v3244 = vadd.f32 %v2781, %v3118
    %v3245 = vadd.f32 %v2782, %v3121
    %v3246 = vadd.f32 %v2783, %v3123
    %v3247 = vadd.f32 %v2784, %v3048
    %v3248 = vadd.f32 %v2785, %v3048
    %v3249 = vlaneseq
    %v3250 = vshrl.u32 %v3249, 7
    %v3251 = vsub.s32 0, %v3250
    %v3252 = vrot.slane %v107, %v3251
    %v3253 = vmul.f32 %v366, %v3252
    %v3254 = vmul.f32 %v178, %v3252
    %v3255 = vmul.f32 %v398, %v3252
    %v3256 = vmul.f32 %v367, %v3252
    %v3257 = vmul.f32 %v181, %v3252
    %v3258 = vmul.f32 %v399, %v3252
    %v3259 = vmul.f32 %v368, %v3252
    %v3260 = vmul.f32 %v184, %v3252
    %v3261 = vmul.f32 %v400, %v3252
    %v3262 = vmul.f32 %v369, %v3252
    %v3263 = vmul.f32 %v187, %v3252
    %v3264 = vmul.f32 %v401, %v3252
    %v3265 = vmul.f32 %v370, %v3252
    %v3266 = vmul.f32 %v190, %v3252
    %v3267 = vmul.f32 %v402, %v3252
    %v3268 = vmul.f32 %v371, %v3252
    %v3269 = vmul.f32 %v193, %v3252
    %v3270 = vmul.f32 %v403, %v3252
    %v3271 = vmul.f32 %v372, %v3252
    %v3272 = vmul.f32 %v196, %v3252
    %v3273 = vmul.f32 %v404, %v3252
    %v3274 = vmul.f32 %v373, %v3252
    %v3275 = vmul.f32 %v199, %v3252
    %v3276 = vmul.f32 %v405, %v3252
    %v3277 = vmul.f32 %v374, %v3252
    %v3278 = vmul.f32 %v202, %v3252
    %v3279 = vmul.f32 %v406, %v3252
    %v3280 = vmul.f32 %v375, %v3252
    %v3281 = vmul.f32 %v205, %v3252
    %v3282 = vmul.f32 %v407, %v3252
    %v3283 = vmul.f32 %v376, %v3252
    %v3284 = vmul.f32 %v208, %v3252
    %v3285 = vmul.f32 %v408, %v3252
    %v3286 = vmul.f32 %v377, %v3252
    %v3287 = vmul.f32 %v211, %v3252
    %v3288 = vmul.f32 %v409, %v3252
    %v3289 = vmul.f32 %v378, %v3252
    %v3290 = vmul.f32 %v214, %v3252
    %v3291 = vmul.f32 %v410, %v3252
    %v3292 = vmul.f32 %v379, %v3252
    %v3293 = vmul.f32 %v217, %v3252
    %v3294 = vmul.f32 %v411, %v3252
    %v3295 = vmul.f32 %v380, %v3252
    %v3296 = vmul.f32 %v220, %v3252
    %v3297 = vmul.f32 %v412, %v3252
    %v3298 = vmul.f32 %v3252, 0.0
    %v3299 = vmul.f32 %v382, %v3252
    %v3300 = vmul.f32 %v226, %v3252
    %v3301 = vmul.f32 %v414, %v3252
    %v3302 = vmul.f32 %v383, %v3252
    %v3303 = vmul.f32 %v229, %v3252
    %v3304 = vmul.f32 %v415, %v3252
    %v3305 = vmul.f32 %v384, %v3252
    %v3306 = vmul.f32 %v232, %v3252
    %v3307 = vmul.f32 %v416, %v3252
    %v3308 = vmul.f32 %v385, %v3252
    %v3309 = vmul.f32 %v235, %v3252
    %v3310 = vmul.f32 %v417, %v3252
    %v3311 = vmul.f32 %v386, %v3252
    %v3312 = vmul.f32 %v238, %v3252
    %v3313 = vmul.f32 %v418, %v3252
    %v3314 = vmul.f32 %v387, %v3252
    %v3315 = vmul.f32 %v241, %v3252
    %v3316 = vmul.f32 %v419, %v3252
    %v3317 = vmul.f32 %v388, %v3252
    %v3318 = vmul.f32 %v244, %v3252
    %v3319 = vmul.f32 %v420, %v3252
    %v3320 = vmul.f32 %v389, %v3252
    %v3321 = vmul.f32 %v247, %v3252
    %v3322 = vmul.f32 %v421, %v3252
    %v3323 = vmul.f32 %v390, %v3252
    %v3324 = vmul.f32 %v250, %v3252
    %v3325 = vmul.f32 %v422, %v3252
    %v3326 = vmul.f32 %v391, %v3252
    %v3327 = vmul.f32 %v253, %v3252
    %v3328 = vmul.f32 %v423, %v3252
    %v3329 = vmul.f32 %v392, %v3252
    %v3330 = vmul.f32 %v256, %v3252
    %v3331 = vmul.f32 %v424, %v3252
    %v3332 = vmul.f32 %v393, %v3252
    %v3333 = vmul.f32 %v259, %v3252
    %v3334 = vmul.f32 %v425, %v3252
    %v3335 = vmul.f32 %v394, %v3252
    %v3336 = vmul.f32 %v262, %v3252
    %v3337 = vmul.f32 %v426, %v3252
    %v3338 = vmul.f32 %v395, %v3252
    %v3339 = vmul.f32 %v265, %v3252
    %v3340 = vmul.f32 %v427, %v3252
    %v3341 = vmul.f32 %v396, %v3252
    %v3342 = vmul.f32 %v268, %v3252
    %v3343 = vmul.f32 %v428, %v3252
    %v3435 = vrot.slane %v3253, 2
    %v3436 = vrot.slane %v3254, 2
    %v3437 = vsel %vm1279, %v3435, %v3436
    %v3438 = vrot.slane %v3255, 2
    %v3439 = vsel %vm1279, %v3436, %v3438
    %v3440 = vrot.slane %v3256, 2
    %v3441 = vrot.slane %v3257, 2
    %v3442 = vsel %vm1279, %v3440, %v3441
    %v3443 = vrot.slane %v3258, 2
    %v3444 = vsel %vm1279, %v3441, %v3443
    %v3445 = vrot.slane %v3259, 2
    %v3446 = vrot.slane %v3260, 2
    %v3447 = vsel %vm1279, %v3445, %v3446
    %v3448 = vrot.slane %v3261, 2
    %v3449 = vsel %vm1279, %v3446, %v3448
    %v3450 = vrot.slane %v3262, 2
    %v3451 = vrot.slane %v3263, 2
    %v3452 = vsel %vm1279, %v3450, %v3451
    %v3453 = vrot.slane %v3264, 2
    %v3454 = vsel %vm1279, %v3451, %v3453
    %v3455 = vrot.slane %v3265, 2
    %v3456 = vrot.slane %v3266, 2
    %v3457 = vsel %vm1279, %v3455, %v3456
    %v3458 = vrot.slane %v3267, 2
    %v3459 = vsel %vm1279, %v3456, %v3458
    %v3460 = vrot.slane %v3268, 2
    %v3461 = vrot.slane %v3269, 2
    %v3462 = vsel %vm1279, %v3460, %v3461
    %v3463 = vrot.slane %v3270, 2
    %v3464 = vsel %vm1279, %v3461, %v3463
    %v3465 = vrot.slane %v3271, 2
    %v3466 = vrot.slane %v3272, 2
    %v3467 = vsel %vm1279, %v3465, %v3466
    %v3468 = vrot.slane %v3273, 2
    %v3469 = vsel %vm1279, %v3466, %v3468
    %v3470 = vrot.slane %v3274, 2
    %v3471 = vrot.slane %v3275, 2
    %v3472 = vsel %vm1279, %v3470, %v3471
    %v3473 = vrot.slane %v3276, 2
    %v3474 = vsel %vm1279, %v3471, %v3473
    %v3475 = vrot.slane %v3277, 2
    %v3476 = vrot.slane %v3278, 2
    %v3477 = vsel %vm1279, %v3475, %v3476
    %v3478 = vrot.slane %v3279, 2
    %v3479 = vsel %vm1279, %v3476, %v3478
    %v3480 = vrot.slane %v3280, 2
    %v3481 = vrot.slane %v3281, 2
    %v3482 = vsel %vm1279, %v3480, %v3481
    %v3483 = vrot.slane %v3282, 2
    %v3484 = vsel %vm1279, %v3481, %v3483
    %v3485 = vrot.slane %v3283, 2
    %v3486 = vrot.slane %v3284, 2
    %v3487 = vsel %vm1279, %v3485, %v3486
    %v3488 = vrot.slane %v3285, 2
    %v3489 = vsel %vm1279, %v3486, %v3488
    %v3490 = vrot.slane %v3286, 2
    %v3491 = vrot.slane %v3287, 2
    %v3492 = vsel %vm1279, %v3490, %v3491
    %v3493 = vrot.slane %v3288, 2
    %v3494 = vsel %vm1279, %v3491, %v3493
    %v3495 = vrot.slane %v3289, 2
    %v3496 = vrot.slane %v3290, 2
    %v3497 = vsel %vm1279, %v3495, %v3496
    %v3498 = vrot.slane %v3291, 2
    %v3499 = vsel %vm1279, %v3496, %v3498
    %v3500 = vrot.slane %v3292, 2
    %v3501 = vrot.slane %v3293, 2
    %v3502 = vsel %vm1279, %v3500, %v3501
    %v3503 = vrot.slane %v3294, 2
    %v3504 = vsel %vm1279, %v3501, %v3503
    %v3505 = vrot.slane %v3295, 2
    %v3506 = vrot.slane %v3296, 2
    %v3507 = vsel %vm1279, %v3505, %v3506
    %v3508 = vrot.slane %v3297, 2
    %v3509 = vsel %vm1279, %v3506, %v3508
    %v3510 = vrot.slane %v3298, 2
    %v3511 = vsel %vm1279, %v3510, %v3510
    %v3512 = vrot.slane %v3299, 2
    %v3513 = vrot.slane %v3300, 2
    %v3514 = vsel %vm1279, %v3512, %v3513
    %v3515 = vrot.slane %v3301, 2
    %v3516 = vsel %vm1279, %v3513, %v3515
    %v3517 = vrot.slane %v3302, 2
    %v3518 = vrot.slane %v3303, 2
    %v3519 = vsel %vm1279, %v3517, %v3518
    %v3520 = vrot.slane %v3304, 2
    %v3521 = vsel %vm1279, %v3518, %v3520
    %v3522 = vrot.slane %v3305, 2
    %v3523 = vrot.slane %v3306, 2
    %v3524 = vsel %vm1279, %v3522, %v3523
    %v3525 = vrot.slane %v3307, 2
    %v3526 = vsel %vm1279, %v3523, %v3525
    %v3527 = vrot.slane %v3308, 2
    %v3528 = vrot.slane %v3309, 2
    %v3529 = vsel %vm1279, %v3527, %v3528
    %v3530 = vrot.slane %v3310, 2
    %v3531 = vsel %vm1279, %v3528, %v3530
    %v3532 = vrot.slane %v3311, 2
    %v3533 = vrot.slane %v3312, 2
    %v3534 = vsel %vm1279, %v3532, %v3533
    %v3535 = vrot.slane %v3313, 2
    %v3536 = vsel %vm1279, %v3533, %v3535
    %v3537 = vrot.slane %v3314, 2
    %v3538 = vrot.slane %v3315, 2
    %v3539 = vsel %vm1279, %v3537, %v3538
    %v3540 = vrot.slane %v3316, 2
    %v3541 = vsel %vm1279, %v3538, %v3540
    %v3542 = vrot.slane %v3317, 2
    %v3543 = vrot.slane %v3318, 2
    %v3544 = vsel %vm1279, %v3542, %v3543
    %v3545 = vrot.slane %v3319, 2
    %v3546 = vsel %vm1279, %v3543, %v3545
    %v3547 = vrot.slane %v3320, 2
    %v3548 = vrot.slane %v3321, 2
    %v3549 = vsel %vm1279, %v3547, %v3548
    %v3550 = vrot.slane %v3322, 2
    %v3551 = vsel %vm1279, %v3548, %v3550
    %v3552 = vrot.slane %v3323, 2
    %v3553 = vrot.slane %v3324, 2
    %v3554 = vsel %vm1279, %v3552, %v3553
    %v3555 = vrot.slane %v3325, 2
    %v3556 = vsel %vm1279, %v3553, %v3555
    %v3557 = vrot.slane %v3326, 2
    %v3558 = vrot.slane %v3327, 2
    %v3559 = vsel %vm1279, %v3557, %v3558
    %v3560 = vrot.slane %v3328, 2
    %v3561 = vsel %vm1279, %v3558, %v3560
    %v3562 = vrot.slane %v3329, 2
    %v3563 = vrot.slane %v3330, 2
    %v3564 = vsel %vm1279, %v3562, %v3563
    %v3565 = vrot.slane %v3331, 2
    %v3566 = vsel %vm1279, %v3563, %v3565
    %v3567 = vrot.slane %v3332, 2
    %v3568 = vrot.slane %v3333, 2
    %v3569 = vsel %vm1279, %v3567, %v3568
    %v3570 = vrot.slane %v3334, 2
    %v3571 = vsel %vm1279, %v3568, %v3570
    %v3572 = vrot.slane %v3335, 2
    %v3573 = vrot.slane %v3336, 2
    %v3574 = vsel %vm1279, %v3572, %v3573
    %v3575 = vrot.slane %v3337, 2
    %v3576 = vsel %vm1279, %v3573, %v3575
    %v3577 = vrot.slane %v3338, 2
    %v3578 = vrot.slane %v3339, 2
    %v3579 = vsel %vm1279, %v3577, %v3578
    %v3580 = vrot.slane %v3340, 2
    %v3581 = vsel %vm1279, %v3578, %v3580
    %v3582 = vrot.slane %v3341, 2
    %v3583 = vrot.slane %v3342, 2
    %v3584 = vsel %vm1279, %v3582, %v3583
    %v3585 = vrot.slane %v3343, 2
    %v3586 = vsel %vm1279, %v3583, %v3585
    %v3648 = vadd.f32 %v3185, %v3437
    %v3649 = vadd.f32 %v3186, %v3439
    %v3650 = vadd.f32 %v3187, %v3442
    %v3651 = vadd.f32 %v3188, %v3444
    %v3652 = vadd.f32 %v3189, %v3447
    %v3653 = vadd.f32 %v3190, %v3449
    %v3654 = vadd.f32 %v3191, %v3452
    %v3655 = vadd.f32 %v3192, %v3454
    %v3656 = vadd.f32 %v3193, %v3457
    %v3657 = vadd.f32 %v3194, %v3459
    %v3658 = vadd.f32 %v3195, %v3462
    %v3659 = vadd.f32 %v3196, %v3464
    %v3660 = vadd.f32 %v3197, %v3467
    %v3661 = vadd.f32 %v3198, %v3469
    %v3662 = vadd.f32 %v3199, %v3472
    %v3663 = vadd.f32 %v3200, %v3474
    %v3664 = vadd.f32 %v3201, %v3477
    %v3665 = vadd.f32 %v3202, %v3479
    %v3666 = vadd.f32 %v3203, %v3482
    %v3667 = vadd.f32 %v3204, %v3484
    %v3668 = vadd.f32 %v3205, %v3487
    %v3669 = vadd.f32 %v3206, %v3489
    %v3670 = vadd.f32 %v3207, %v3492
    %v3671 = vadd.f32 %v3208, %v3494
    %v3672 = vadd.f32 %v3209, %v3497
    %v3673 = vadd.f32 %v3210, %v3499
    %v3674 = vadd.f32 %v3211, %v3502
    %v3675 = vadd.f32 %v3212, %v3504
    %v3676 = vadd.f32 %v3213, %v3507
    %v3677 = vadd.f32 %v3214, %v3509
    %v3678 = vadd.f32 %v3215, %v3511
    %v3679 = vadd.f32 %v3216, %v3511
    %v3680 = vadd.f32 %v3217, %v3514
    %v3681 = vadd.f32 %v3218, %v3516
    %v3682 = vadd.f32 %v3219, %v3519
    %v3683 = vadd.f32 %v3220, %v3521
    %v3684 = vadd.f32 %v3221, %v3524
    %v3685 = vadd.f32 %v3222, %v3526
    %v3686 = vadd.f32 %v3223, %v3529
    %v3687 = vadd.f32 %v3224, %v3531
    %v3688 = vadd.f32 %v3225, %v3534
    %v3689 = vadd.f32 %v3226, %v3536
    %v3690 = vadd.f32 %v3227, %v3539
    %v3691 = vadd.f32 %v3228, %v3541
    %v3692 = vadd.f32 %v3229, %v3544
    %v3693 = vadd.f32 %v3230, %v3546
    %v3694 = vadd.f32 %v3231, %v3549
    %v3695 = vadd.f32 %v3232, %v3551
    %v3696 = vadd.f32 %v3233, %v3554
    %v3697 = vadd.f32 %v3234, %v3556
    %v3698 = vadd.f32 %v3235, %v3559
    %v3699 = vadd.f32 %v3236, %v3561
    %v3700 = vadd.f32 %v3237, %v3564
    %v3701 = vadd.f32 %v3238, %v3566
    %v3702 = vadd.f32 %v3239, %v3569
    %v3703 = vadd.f32 %v3240, %v3571
    %v3704 = vadd.f32 %v3241, %v3574
    %v3705 = vadd.f32 %v3242, %v3576
    %v3706 = vadd.f32 %v3243, %v3579
    %v3707 = vadd.f32 %v3244, %v3581
    %v3708 = vadd.f32 %v3245, %v3584
    %v3709 = vadd.f32 %v3246, %v3586
    %v3710 = vadd.f32 %v3247, %v3511
    %v3711 = vadd.f32 %v3248, %v3511
    %vm3776 = vcmask 1042432
    %v3777 = vrot.slane %v3648, 5
    %v3778 = vrot.slane %v3649, 5
    %v3779 = vsel %vm3776, %v3777, %v3778
    %v3780 = vrot.slane %v3650, 5
    %v3781 = vrot.slane %v3651, 5
    %v3782 = vsel %vm3776, %v3780, %v3781
    %v3783 = vrot.slane %v3652, 5
    %v3784 = vrot.slane %v3653, 5
    %v3785 = vsel %vm3776, %v3783, %v3784
    %v3786 = vrot.slane %v3654, 5
    %v3787 = vrot.slane %v3655, 5
    %v3788 = vsel %vm3776, %v3786, %v3787
    %v3789 = vrot.slane %v3656, 5
    %v3790 = vrot.slane %v3657, 5
    %v3791 = vsel %vm3776, %v3789, %v3790
    %v3792 = vrot.slane %v3658, 5
    %v3793 = vrot.slane %v3659, 5
    %v3794 = vsel %vm3776, %v3792, %v3793
    %v3795 = vrot.slane %v3660, 5
    %v3796 = vrot.slane %v3661, 5
    %v3797 = vsel %vm3776, %v3795, %v3796
    %v3798 = vrot.slane %v3662, 5
    %v3799 = vrot.slane %v3663, 5
    %v3800 = vsel %vm3776, %v3798, %v3799
    %v3801 = vrot.slane %v3664, 5
    %v3802 = vrot.slane %v3665, 5
    %v3803 = vsel %vm3776, %v3801, %v3802
    %v3804 = vrot.slane %v3666, 5
    %v3805 = vrot.slane %v3667, 5
    %v3806 = vsel %vm3776, %v3804, %v3805
    %v3807 = vrot.slane %v3668, 5
    %v3808 = vrot.slane %v3669, 5
    %v3809 = vsel %vm3776, %v3807, %v3808
    %v3810 = vrot.slane %v3670, 5
    %v3811 = vrot.slane %v3671, 5
    %v3812 = vsel %vm3776, %v3810, %v3811
    %v3813 = vrot.slane %v3672, 5
    %v3814 = vrot.slane %v3673, 5
    %v3815 = vsel %vm3776, %v3813, %v3814
    %v3816 = vrot.slane %v3674, 5
    %v3817 = vrot.slane %v3675, 5
    %v3818 = vsel %vm3776, %v3816, %v3817
    %v3819 = vrot.slane %v3676, 5
    %v3820 = vrot.slane %v3677, 5
    %v3821 = vsel %vm3776, %v3819, %v3820
    %v3822 = vrot.slane %v3678, 5
    %v3823 = vrot.slane %v3679, 5
    %v3824 = vsel %vm3776, %v3822, %v3823
    %v3825 = vrot.slane %v3680, 5
    %v3826 = vrot.slane %v3681, 5
    %v3827 = vsel %vm3776, %v3825, %v3826
    %v3828 = vrot.slane %v3682, 5
    %v3829 = vrot.slane %v3683, 5
    %v3830 = vsel %vm3776, %v3828, %v3829
    %v3831 = vrot.slane %v3684, 5
    %v3832 = vrot.slane %v3685, 5
    %v3833 = vsel %vm3776, %v3831, %v3832
    %v3834 = vrot.slane %v3686, 5
    %v3835 = vrot.slane %v3687, 5
    %v3836 = vsel %vm3776, %v3834, %v3835
    %v3837 = vrot.slane %v3688, 5
    %v3838 = vrot.slane %v3689, 5
    %v3839 = vsel %vm3776, %v3837, %v3838
    %v3840 = vrot.slane %v3690, 5
    %v3841 = vrot.slane %v3691, 5
    %v3842 = vsel %vm3776, %v3840, %v3841
    %v3843 = vrot.slane %v3692, 5
    %v3844 = vrot.slane %v3693, 5
    %v3845 = vsel %vm3776, %v3843, %v3844
    %v3846 = vrot.slane %v3694, 5
    %v3847 = vrot.slane %v3695, 5
    %v3848 = vsel %vm3776, %v3846, %v3847
    %v3849 = vrot.slane %v3696, 5
    %v3850 = vrot.slane %v3697, 5
    %v3851 = vsel %vm3776, %v3849, %v3850
    %v3852 = vrot.slane %v3698, 5
    %v3853 = vrot.slane %v3699, 5
    %v3854 = vsel %vm3776, %v3852, %v3853
    %v3855 = vrot.slane %v3700, 5
    %v3856 = vrot.slane %v3701, 5
    %v3857 = vsel %vm3776, %v3855, %v3856
    %v3858 = vrot.slane %v3702, 5
    %v3859 = vrot.slane %v3703, 5
    %v3860 = vsel %vm3776, %v3858, %v3859
    %v3861 = vrot.slane %v3704, 5
    %v3862 = vrot.slane %v3705, 5
    %v3863 = vsel %vm3776, %v3861, %v3862
    %v3864 = vrot.slane %v3706, 5
    %v3865 = vrot.slane %v3707, 5
    %v3866 = vsel %vm3776, %v3864, %v3865
    %v3867 = vrot.slane %v3708, 5
    %v3868 = vrot.slane %v3709, 5
    %v3869 = vsel %vm3776, %v3867, %v3868
    %v3870 = vrot.slane %v3710, 5
    %v3871 = vrot.slane %v3711, 5
    %v3872 = vsel %vm3776, %v3870, %v3871
    %v3969 = vsel %vm3776, 0.0, %v3777
    %v3970 = vsel %vm3776, 0.0, %v3780
    %v3971 = vsel %vm3776, 0.0, %v3783
    %v3972 = vsel %vm3776, 0.0, %v3786
    %v3973 = vsel %vm3776, 0.0, %v3789
    %v3974 = vsel %vm3776, 0.0, %v3792
    %v3975 = vsel %vm3776, 0.0, %v3795
    %v3976 = vsel %vm3776, 0.0, %v3798
    %v3977 = vsel %vm3776, 0.0, %v3801
    %v3978 = vsel %vm3776, 0.0, %v3804
    %v3979 = vsel %vm3776, 0.0, %v3807
    %v3980 = vsel %vm3776, 0.0, %v3810
    %v3981 = vsel %vm3776, 0.0, %v3813
    %v3982 = vsel %vm3776, 0.0, %v3816
    %v3983 = vsel %vm3776, 0.0, %v3819
    %v3984 = vsel %vm3776, 0.0, %v3822
    %v3985 = vsel %vm3776, 0.0, %v3825
    %v3986 = vsel %vm3776, 0.0, %v3828
    %v3987 = vsel %vm3776, 0.0, %v3831
    %v3988 = vsel %vm3776, 0.0, %v3834
    %v3989 = vsel %vm3776, 0.0, %v3837
    %v3990 = vsel %vm3776, 0.0, %v3840
    %v3991 = vsel %vm3776, 0.0, %v3843
    %v3992 = vsel %vm3776, 0.0, %v3846
    %v3993 = vsel %vm3776, 0.0, %v3849
    %v3994 = vsel %vm3776, 0.0, %v3852
    %v3995 = vsel %vm3776, 0.0, %v3855
    %v3996 = vsel %vm3776, 0.0, %v3858
    %v3997 = vsel %vm3776, 0.0, %v3861
    %v3998 = vsel %vm3776, 0.0, %v3864
    %v3999 = vsel %vm3776, 0.0, %v3867
    %v4000 = vsel %vm3776, 0.0, %v3870
    %v4001 = vsel %vm3776, %v3778, 0.0
    %v4002 = vsel %vm3776, %v3781, 0.0
    %v4003 = vsel %vm3776, %v3784, 0.0
    %v4004 = vsel %vm3776, %v3787, 0.0
    %v4005 = vsel %vm3776, %v3790, 0.0
    %v4006 = vsel %vm3776, %v3793, 0.0
    %v4007 = vsel %vm3776, %v3796, 0.0
    %v4008 = vsel %vm3776, %v3799, 0.0
    %v4009 = vsel %vm3776, %v3802, 0.0
    %v4010 = vsel %vm3776, %v3805, 0.0
    %v4011 = vsel %vm3776, %v3808, 0.0
    %v4012 = vsel %vm3776, %v3811, 0.0
    %v4013 = vsel %vm3776, %v3814, 0.0
    %v4014 = vsel %vm3776, %v3817, 0.0
    %v4015 = vsel %vm3776, %v3820, 0.0
    %v4016 = vsel %vm3776, %v3823, 0.0
    %v4017 = vsel %vm3776, %v3826, 0.0
    %v4018 = vsel %vm3776, %v3829, 0.0
    %v4019 = vsel %vm3776, %v3832, 0.0
    %v4020 = vsel %vm3776, %v3835, 0.0
    %v4021 = vsel %vm3776, %v3838, 0.0
    %v4022 = vsel %vm3776, %v3841, 0.0
    %v4023 = vsel %vm3776, %v3844, 0.0
    %v4024 = vsel %vm3776, %v3847, 0.0
    %v4025 = vsel %vm3776, %v3850, 0.0
    %v4026 = vsel %vm3776, %v3853, 0.0
    %v4027 = vsel %vm3776, %v3856, 0.0
    %v4028 = vsel %vm3776, %v3859, 0.0
    %v4029 = vsel %vm3776, %v3862, 0.0
    %v4030 = vsel %vm3776, %v3865, 0.0
    %v4031 = vsel %vm3776, %v3868, 0.0
    %v4032 = vsel %vm3776, %v3871, 0.0
    %v4097 = vrot.slane %v3969, 1
    %v4098 = vrot.slane %v3779, 1
    %v4099 = vsel %vm815, %v4097, %v4098
    %v4100 = vrot.slane %v4001, 1
    %v4101 = vsel %vm815, %v4098, %v4100
    %v4102 = vrot.slane %v3970, 1
    %v4103 = vrot.slane %v3782, 1
    %v4104 = vsel %vm815, %v4102, %v4103
    %v4105 = vrot.slane %v4002, 1
    %v4106 = vsel %vm815, %v4103, %v4105
    %v4107 = vrot.slane %v3971, 1
    %v4108 = vrot.slane %v3785, 1
    %v4109 = vsel %vm815, %v4107, %v4108
    %v4110 = vrot.slane %v4003, 1
    %v4111 = vsel %vm815, %v4108, %v4110
    %v4112 = vrot.slane %v3972, 1
    %v4113 = vrot.slane %v3788, 1
    %v4114 = vsel %vm815, %v4112, %v4113
    %v4115 = vrot.slane %v4004, 1
    %v4116 = vsel %vm815, %v4113, %v4115
    %v4117 = vrot.slane %v3973, 1
    %v4118 = vrot.slane %v3791, 1
    %v4119 = vsel %vm815, %v4117, %v4118
    %v4120 = vrot.slane %v4005, 1
    %v4121 = vsel %vm815, %v4118, %v4120
    %v4122 = vrot.slane %v3974, 1
    %v4123 = vrot.slane %v3794, 1
    %v4124 = vsel %vm815, %v4122, %v4123
    %v4125 = vrot.slane %v4006, 1
    %v4126 = vsel %vm815, %v4123, %v4125
    %v4127 = vrot.slane %v3975, 1
    %v4128 = vrot.slane %v3797, 1
    %v4129 = vsel %vm815, %v4127, %v4128
    %v4130 = vrot.slane %v4007, 1
    %v4131 = vsel %vm815, %v4128, %v4130
    %v4132 = vrot.slane %v3976, 1
    %v4133 = vrot.slane %v3800, 1
    %v4134 = vsel %vm815, %v4132, %v4133
    %v4135 = vrot.slane %v4008, 1
    %v4136 = vsel %vm815, %v4133, %v4135
    %v4137 = vrot.slane %v3977, 1
    %v4138 = vrot.slane %v3803, 1
    %v4139 = vsel %vm815, %v4137, %v4138
    %v4140 = vrot.slane %v4009, 1
    %v4141 = vsel %vm815, %v4138, %v4140
    %v4142 = vrot.slane %v3978, 1
    %v4143 = vrot.slane %v3806, 1
    %v4144 = vsel %vm815, %v4142, %v4143
    %v4145 = vrot.slane %v4010, 1
    %v4146 = vsel %vm815, %v4143, %v4145
    %v4147 = vrot.slane %v3979, 1
    %v4148 = vrot.slane %v3809, 1
    %v4149 = vsel %vm815, %v4147, %v4148
    %v4150 = vrot.slane %v4011, 1
    %v4151 = vsel %vm815, %v4148, %v4150
    %v4152 = vrot.slane %v3980, 1
    %v4153 = vrot.slane %v3812, 1
    %v4154 = vsel %vm815, %v4152, %v4153
    %v4155 = vrot.slane %v4012, 1
    %v4156 = vsel %vm815, %v4153, %v4155
    %v4157 = vrot.slane %v3981, 1
    %v4158 = vrot.slane %v3815, 1
    %v4159 = vsel %vm815, %v4157, %v4158
    %v4160 = vrot.slane %v4013, 1
    %v4161 = vsel %vm815, %v4158, %v4160
    %v4162 = vrot.slane %v3982, 1
    %v4163 = vrot.slane %v3818, 1
    %v4164 = vsel %vm815, %v4162, %v4163
    %v4165 = vrot.slane %v4014, 1
    %v4166 = vsel %vm815, %v4163, %v4165
    %v4167 = vrot.slane %v3983, 1
    %v4168 = vrot.slane %v3821, 1
    %v4169 = vsel %vm815, %v4167, %v4168
    %v4170 = vrot.slane %v4015, 1
    %v4171 = vsel %vm815, %v4168, %v4170
    %v4172 = vrot.slane %v3984, 1
    %v4173 = vrot.slane %v3824, 1
    %v4174 = vsel %vm815, %v4172, %v4173
    %v4175 = vrot.slane %v4016, 1
    %v4176 = vsel %vm815, %v4173, %v4175
    %v4177 = vrot.slane %v3985, 1
    %v4178 = vrot.slane %v3827, 1
    %v4179 = vsel %vm815, %v4177, %v4178
    %v4180 = vrot.slane %v4017, 1
    %v4181 = vsel %vm815, %v4178, %v4180
    %v4182 = vrot.slane %v3986, 1
    %v4183 = vrot.slane %v3830, 1
    %v4184 = vsel %vm815, %v4182, %v4183
    %v4185 = vrot.slane %v4018, 1
    %v4186 = vsel %vm815, %v4183, %v4185
    %v4187 = vrot.slane %v3987, 1
    %v4188 = vrot.slane %v3833, 1
    %v4189 = vsel %vm815, %v4187, %v4188
    %v4190 = vrot.slane %v4019, 1
    %v4191 = vsel %vm815, %v4188, %v4190
    %v4192 = vrot.slane %v3988, 1
    %v4193 = vrot.slane %v3836, 1
    %v4194 = vsel %vm815, %v4192, %v4193
    %v4195 = vrot.slane %v4020, 1
    %v4196 = vsel %vm815, %v4193, %v4195
    %v4197 = vrot.slane %v3989, 1
    %v4198 = vrot.slane %v3839, 1
    %v4199 = vsel %vm815, %v4197, %v4198
    %v4200 = vrot.slane %v4021, 1
    %v4201 = vsel %vm815, %v4198, %v4200
    %v4202 = vrot.slane %v3990, 1
    %v4203 = vrot.slane %v3842, 1
    %v4204 = vsel %vm815, %v4202, %v4203
    %v4205 = vrot.slane %v4022, 1
    %v4206 = vsel %vm815, %v4203, %v4205
    %v4207 = vrot.slane %v3991, 1
    %v4208 = vrot.slane %v3845, 1
    %v4209 = vsel %vm815, %v4207, %v4208
    %v4210 = vrot.slane %v4023, 1
    %v4211 = vsel %vm815, %v4208, %v4210
    %v4212 = vrot.slane %v3992, 1
    %v4213 = vrot.slane %v3848, 1
    %v4214 = vsel %vm815, %v4212, %v4213
    %v4215 = vrot.slane %v4024, 1
    %v4216 = vsel %vm815, %v4213, %v4215
    %v4217 = vrot.slane %v3993, 1
    %v4218 = vrot.slane %v3851, 1
    %v4219 = vsel %vm815, %v4217, %v4218
    %v4220 = vrot.slane %v4025, 1
    %v4221 = vsel %vm815, %v4218, %v4220
    %v4222 = vrot.slane %v3994, 1
    %v4223 = vrot.slane %v3854, 1
    %v4224 = vsel %vm815, %v4222, %v4223
    %v4225 = vrot.slane %v4026, 1
    %v4226 = vsel %vm815, %v4223, %v4225
    %v4227 = vrot.slane %v3995, 1
    %v4228 = vrot.slane %v3857, 1
    %v4229 = vsel %vm815, %v4227, %v4228
    %v4230 = vrot.slane %v4027, 1
    %v4231 = vsel %vm815, %v4228, %v4230
    %v4232 = vrot.slane %v3996, 1
    %v4233 = vrot.slane %v3860, 1
    %v4234 = vsel %vm815, %v4232, %v4233
    %v4235 = vrot.slane %v4028, 1
    %v4236 = vsel %vm815, %v4233, %v4235
    %v4237 = vrot.slane %v3997, 1
    %v4238 = vrot.slane %v3863, 1
    %v4239 = vsel %vm815, %v4237, %v4238
    %v4240 = vrot.slane %v4029, 1
    %v4241 = vsel %vm815, %v4238, %v4240
    %v4242 = vrot.slane %v3998, 1
    %v4243 = vrot.slane %v3866, 1
    %v4244 = vsel %vm815, %v4242, %v4243
    %v4245 = vrot.slane %v4030, 1
    %v4246 = vsel %vm815, %v4243, %v4245
    %v4247 = vrot.slane %v3999, 1
    %v4248 = vrot.slane %v3869, 1
    %v4249 = vsel %vm815, %v4247, %v4248
    %v4250 = vrot.slane %v4031, 1
    %v4251 = vsel %vm815, %v4248, %v4250
    %v4252 = vrot.slane %v4000, 1
    %v4253 = vrot.slane %v3872, 1
    %v4254 = vsel %vm815, %v4252, %v4253
    %v4255 = vrot.slane %v4032, 1
    %v4256 = vsel %vm815, %v4253, %v4255
    %4257 = vrot.lane.b32.xlu0 %v4099, 8
    %v4258 = vpop.permute.xlu0 %4257
    %4259 = vrot.lane.b32.xlu0 %v4101, 8
    %v4260 = vpop.permute.xlu0 %4259
    %4261 = vrot.lane.b32.xlu0 %v4104, 8
    %v4262 = vpop.permute.xlu0 %4261
    %4263 = vrot.lane.b32.xlu0 %v4106, 8
    %v4264 = vpop.permute.xlu0 %4263
    %4265 = vrot.lane.b32.xlu0 %v4109, 8
    %v4266 = vpop.permute.xlu0 %4265
    %4267 = vrot.lane.b32.xlu0 %v4111, 8
    %v4268 = vpop.permute.xlu0 %4267
    %4269 = vrot.lane.b32.xlu0 %v4114, 8
    %v4270 = vpop.permute.xlu0 %4269
    %4271 = vrot.lane.b32.xlu0 %v4116, 8
    %v4272 = vpop.permute.xlu0 %4271
    %4273 = vrot.lane.b32.xlu0 %v4119, 8
    %v4274 = vpop.permute.xlu0 %4273
    %4275 = vrot.lane.b32.xlu0 %v4121, 8
    %v4276 = vpop.permute.xlu0 %4275
    %4277 = vrot.lane.b32.xlu0 %v4124, 8
    %v4278 = vpop.permute.xlu0 %4277
    %4279 = vrot.lane.b32.xlu0 %v4126, 8
    %v4280 = vpop.permute.xlu0 %4279
    %4281 = vrot.lane.b32.xlu0 %v4129, 8
    %v4282 = vpop.permute.xlu0 %4281
    %4283 = vrot.lane.b32.xlu0 %v4131, 8
    %v4284 = vpop.permute.xlu0 %4283
    %4285 = vrot.lane.b32.xlu0 %v4134, 8
    %v4286 = vpop.permute.xlu0 %4285
    %4287 = vrot.lane.b32.xlu0 %v4136, 8
    %v4288 = vpop.permute.xlu0 %4287
    %4289 = vrot.lane.b32.xlu0 %v4139, 8
    %v4290 = vpop.permute.xlu0 %4289
    %4291 = vrot.lane.b32.xlu0 %v4141, 8
    %v4292 = vpop.permute.xlu0 %4291
    %4293 = vrot.lane.b32.xlu0 %v4144, 8
    %v4294 = vpop.permute.xlu0 %4293
    %4295 = vrot.lane.b32.xlu0 %v4146, 8
    %v4296 = vpop.permute.xlu0 %4295
    %4297 = vrot.lane.b32.xlu0 %v4149, 8
    %v4298 = vpop.permute.xlu0 %4297
    %4299 = vrot.lane.b32.xlu0 %v4151, 8
    %v4300 = vpop.permute.xlu0 %4299
    %4301 = vrot.lane.b32.xlu0 %v4154, 8
    %v4302 = vpop.permute.xlu0 %4301
    %4303 = vrot.lane.b32.xlu0 %v4156, 8
    %v4304 = vpop.permute.xlu0 %4303
    %4305 = vrot.lane.b32.xlu0 %v4159, 8
    %v4306 = vpop.permute.xlu0 %4305
    %4307 = vrot.lane.b32.xlu0 %v4161, 8
    %v4308 = vpop.permute.xlu0 %4307
    %4309 = vrot.lane.b32.xlu0 %v4164, 8
    %v4310 = vpop.permute.xlu0 %4309
    %4311 = vrot.lane.b32.xlu0 %v4166, 8
    %v4312 = vpop.permute.xlu0 %4311
    %4313 = vrot.lane.b32.xlu0 %v4169, 8
    %v4314 = vpop.permute.xlu0 %4313
    %4315 = vrot.lane.b32.xlu0 %v4171, 8
    %v4316 = vpop.permute.xlu0 %4315
    %4317 = vrot.lane.b32.xlu0 %v4174, 8
    %v4318 = vpop.permute.xlu0 %4317
    %4319 = vrot.lane.b32.xlu0 %v4176, 8
    %v4320 = vpop.permute.xlu0 %4319
    %4321 = vrot.lane.b32.xlu0 %v4179, 8
    %v4322 = vpop.permute.xlu0 %4321
    %4323 = vrot.lane.b32.xlu0 %v4181, 8
    %v4324 = vpop.permute.xlu0 %4323
    %4325 = vrot.lane.b32.xlu0 %v4184, 8
    %v4326 = vpop.permute.xlu0 %4325
    %4327 = vrot.lane.b32.xlu0 %v4186, 8
    %v4328 = vpop.permute.xlu0 %4327
    %4329 = vrot.lane.b32.xlu0 %v4189, 8
    %v4330 = vpop.permute.xlu0 %4329
    %4331 = vrot.lane.b32.xlu0 %v4191, 8
    %v4332 = vpop.permute.xlu0 %4331
    %4333 = vrot.lane.b32.xlu0 %v4194, 8
    %v4334 = vpop.permute.xlu0 %4333
    %4335 = vrot.lane.b32.xlu0 %v4196, 8
    %v4336 = vpop.permute.xlu0 %4335
    %4337 = vrot.lane.b32.xlu0 %v4199, 8
    %v4338 = vpop.permute.xlu0 %4337
    %4339 = vrot.lane.b32.xlu0 %v4201, 8
    %v4340 = vpop.permute.xlu0 %4339
    %4341 = vrot.lane.b32.xlu0 %v4204, 8
    %v4342 = vpop.permute.xlu0 %4341
    %4343 = vrot.lane.b32.xlu0 %v4206, 8
    %v4344 = vpop.permute.xlu0 %4343
    %4345 = vrot.lane.b32.xlu0 %v4209, 8
    %v4346 = vpop.permute.xlu0 %4345
    %4347 = vrot.lane.b32.xlu0 %v4211, 8
    %v4348 = vpop.permute.xlu0 %4347
    %4349 = vrot.lane.b32.xlu0 %v4214, 8
    %v4350 = vpop.permute.xlu0 %4349
    %4351 = vrot.lane.b32.xlu0 %v4216, 8
    %v4352 = vpop.permute.xlu0 %4351
    %4353 = vrot.lane.b32.xlu0 %v4219, 8
    %v4354 = vpop.permute.xlu0 %4353
    %4355 = vrot.lane.b32.xlu0 %v4221, 8
    %v4356 = vpop.permute.xlu0 %4355
    %4357 = vrot.lane.b32.xlu0 %v4224, 8
    %v4358 = vpop.permute.xlu0 %4357
    %4359 = vrot.lane.b32.xlu0 %v4226, 8
    %v4360 = vpop.permute.xlu0 %4359
    %4361 = vrot.lane.b32.xlu0 %v4229, 8
    %v4362 = vpop.permute.xlu0 %4361
    %4363 = vrot.lane.b32.xlu0 %v4231, 8
    %v4364 = vpop.permute.xlu0 %4363
    %4365 = vrot.lane.b32.xlu0 %v4234, 8
    %v4366 = vpop.permute.xlu0 %4365
    %4367 = vrot.lane.b32.xlu0 %v4236, 8
    %v4368 = vpop.permute.xlu0 %4367
    %4369 = vrot.lane.b32.xlu0 %v4239, 8
    %v4370 = vpop.permute.xlu0 %4369
    %4371 = vrot.lane.b32.xlu0 %v4241, 8
    %v4372 = vpop.permute.xlu0 %4371
    %4373 = vrot.lane.b32.xlu0 %v4244, 8
    %v4374 = vpop.permute.xlu0 %4373
    %4375 = vrot.lane.b32.xlu0 %v4246, 8
    %v4376 = vpop.permute.xlu0 %4375
    %4377 = vrot.lane.b32.xlu0 %v4249, 8
    %v4378 = vpop.permute.xlu0 %4377
    %4379 = vrot.lane.b32.xlu0 %v4251, 8
    %v4380 = vpop.permute.xlu0 %4379
    %4381 = vrot.lane.b32.xlu0 %v4254, 8
    %v4382 = vpop.permute.xlu0 %4381
    %4383 = vrot.lane.b32.xlu0 %v4256, 8
    %v4384 = vpop.permute.xlu0 %4383
    %v4449 = vrot.slane %v3969, 2
    %v4450 = vrot.slane %v3779, 2
    %v4451 = vsel %vm1279, %v4449, %v4450
    %v4452 = vrot.slane %v4001, 2
    %v4453 = vsel %vm1279, %v4450, %v4452
    %v4454 = vrot.slane %v3970, 2
    %v4455 = vrot.slane %v3782, 2
    %v4456 = vsel %vm1279, %v4454, %v4455
    %v4457 = vrot.slane %v4002, 2
    %v4458 = vsel %vm1279, %v4455, %v4457
    %v4459 = vrot.slane %v3971, 2
    %v4460 = vrot.slane %v3785, 2
    %v4461 = vsel %vm1279, %v4459, %v4460
    %v4462 = vrot.slane %v4003, 2
    %v4463 = vsel %vm1279, %v4460, %v4462
    %v4464 = vrot.slane %v3972, 2
    %v4465 = vrot.slane %v3788, 2
    %v4466 = vsel %vm1279, %v4464, %v4465
    %v4467 = vrot.slane %v4004, 2
    %v4468 = vsel %vm1279, %v4465, %v4467
    %v4469 = vrot.slane %v3973, 2
    %v4470 = vrot.slane %v3791, 2
    %v4471 = vsel %vm1279, %v4469, %v4470
    %v4472 = vrot.slane %v4005, 2
    %v4473 = vsel %vm1279, %v4470, %v4472
    %v4474 = vrot.slane %v3974, 2
    %v4475 = vrot.slane %v3794, 2
    %v4476 = vsel %vm1279, %v4474, %v4475
    %v4477 = vrot.slane %v4006, 2
    %v4478 = vsel %vm1279, %v4475, %v4477
    %v4479 = vrot.slane %v3975, 2
    %v4480 = vrot.slane %v3797, 2
    %v4481 = vsel %vm1279, %v4479, %v4480
    %v4482 = vrot.slane %v4007, 2
    %v4483 = vsel %vm1279, %v4480, %v4482
    %v4484 = vrot.slane %v3976, 2
    %v4485 = vrot.slane %v3800, 2
    %v4486 = vsel %vm1279, %v4484, %v4485
    %v4487 = vrot.slane %v4008, 2
    %v4488 = vsel %vm1279, %v4485, %v4487
    %v4489 = vrot.slane %v3977, 2
    %v4490 = vrot.slane %v3803, 2
    %v4491 = vsel %vm1279, %v4489, %v4490
    %v4492 = vrot.slane %v4009, 2
    %v4493 = vsel %vm1279, %v4490, %v4492
    %v4494 = vrot.slane %v3978, 2
    %v4495 = vrot.slane %v3806, 2
    %v4496 = vsel %vm1279, %v4494, %v4495
    %v4497 = vrot.slane %v4010, 2
    %v4498 = vsel %vm1279, %v4495, %v4497
    %v4499 = vrot.slane %v3979, 2
    %v4500 = vrot.slane %v3809, 2
    %v4501 = vsel %vm1279, %v4499, %v4500
    %v4502 = vrot.slane %v4011, 2
    %v4503 = vsel %vm1279, %v4500, %v4502
    %v4504 = vrot.slane %v3980, 2
    %v4505 = vrot.slane %v3812, 2
    %v4506 = vsel %vm1279, %v4504, %v4505
    %v4507 = vrot.slane %v4012, 2
    %v4508 = vsel %vm1279, %v4505, %v4507
    %v4509 = vrot.slane %v3981, 2
    %v4510 = vrot.slane %v3815, 2
    %v4511 = vsel %vm1279, %v4509, %v4510
    %v4512 = vrot.slane %v4013, 2
    %v4513 = vsel %vm1279, %v4510, %v4512
    %v4514 = vrot.slane %v3982, 2
    %v4515 = vrot.slane %v3818, 2
    %v4516 = vsel %vm1279, %v4514, %v4515
    %v4517 = vrot.slane %v4014, 2
    %v4518 = vsel %vm1279, %v4515, %v4517
    %v4519 = vrot.slane %v3983, 2
    %v4520 = vrot.slane %v3821, 2
    %v4521 = vsel %vm1279, %v4519, %v4520
    %v4522 = vrot.slane %v4015, 2
    %v4523 = vsel %vm1279, %v4520, %v4522
    %v4524 = vrot.slane %v3984, 2
    %v4525 = vrot.slane %v3824, 2
    %v4526 = vsel %vm1279, %v4524, %v4525
    %v4527 = vrot.slane %v4016, 2
    %v4528 = vsel %vm1279, %v4525, %v4527
    %v4529 = vrot.slane %v3985, 2
    %v4530 = vrot.slane %v3827, 2
    %v4531 = vsel %vm1279, %v4529, %v4530
    %v4532 = vrot.slane %v4017, 2
    %v4533 = vsel %vm1279, %v4530, %v4532
    %v4534 = vrot.slane %v3986, 2
    %v4535 = vrot.slane %v3830, 2
    %v4536 = vsel %vm1279, %v4534, %v4535
    %v4537 = vrot.slane %v4018, 2
    %v4538 = vsel %vm1279, %v4535, %v4537
    %v4539 = vrot.slane %v3987, 2
    %v4540 = vrot.slane %v3833, 2
    %v4541 = vsel %vm1279, %v4539, %v4540
    %v4542 = vrot.slane %v4019, 2
    %v4543 = vsel %vm1279, %v4540, %v4542
    %v4544 = vrot.slane %v3988, 2
    %v4545 = vrot.slane %v3836, 2
    %v4546 = vsel %vm1279, %v4544, %v4545
    %v4547 = vrot.slane %v4020, 2
    %v4548 = vsel %vm1279, %v4545, %v4547
    %v4549 = vrot.slane %v3989, 2
    %v4550 = vrot.slane %v3839, 2
    %v4551 = vsel %vm1279, %v4549, %v4550
    %v4552 = vrot.slane %v4021, 2
    %v4553 = vsel %vm1279, %v4550, %v4552
    %v4554 = vrot.slane %v3990, 2
    %v4555 = vrot.slane %v3842, 2
    %v4556 = vsel %vm1279, %v4554, %v4555
    %v4557 = vrot.slane %v4022, 2
    %v4558 = vsel %vm1279, %v4555, %v4557
    %v4559 = vrot.slane %v3991, 2
    %v4560 = vrot.slane %v3845, 2
    %v4561 = vsel %vm1279, %v4559, %v4560
    %v4562 = vrot.slane %v4023, 2
    %v4563 = vsel %vm1279, %v4560, %v4562
    %v4564 = vrot.slane %v3992, 2
    %v4565 = vrot.slane %v3848, 2
    %v4566 = vsel %vm1279, %v4564, %v4565
    %v4567 = vrot.slane %v4024, 2
    %v4568 = vsel %vm1279, %v4565, %v4567
    %v4569 = vrot.slane %v3993, 2
    %v4570 = vrot.slane %v3851, 2
    %v4571 = vsel %vm1279, %v4569, %v4570
    %v4572 = vrot.slane %v4025, 2
    %v4573 = vsel %vm1279, %v4570, %v4572
    %v4574 = vrot.slane %v3994, 2
    %v4575 = vrot.slane %v3854, 2
    %v4576 = vsel %vm1279, %v4574, %v4575
    %v4577 = vrot.slane %v4026, 2
    %v4578 = vsel %vm1279, %v4575, %v4577
    %v4579 = vrot.slane %v3995, 2
    %v4580 = vrot.slane %v3857, 2
    %v4581 = vsel %vm1279, %v4579, %v4580
    %v4582 = vrot.slane %v4027, 2
    %v4583 = vsel %vm1279, %v4580, %v4582
    %v4584 = vrot.slane %v3996, 2
    %v4585 = vrot.slane %v3860, 2
    %v4586 = vsel %vm1279, %v4584, %v4585
    %v4587 = vrot.slane %v4028, 2
    %v4588 = vsel %vm1279, %v4585, %v4587
    %v4589 = vrot.slane %v3997, 2
    %v4590 = vrot.slane %v3863, 2
    %v4591 = vsel %vm1279, %v4589, %v4590
    %v4592 = vrot.slane %v4029, 2
    %v4593 = vsel %vm1279, %v4590, %v4592
    %v4594 = vrot.slane %v3998, 2
    %v4595 = vrot.slane %v3866, 2
    %v4596 = vsel %vm1279, %v4594, %v4595
    %v4597 = vrot.slane %v4030, 2
    %v4598 = vsel %vm1279, %v4595, %v4597
    %v4599 = vrot.slane %v3999, 2
    %v4600 = vrot.slane %v3869, 2
    %v4601 = vsel %vm1279, %v4599, %v4600
    %v4602 = vrot.slane %v4031, 2
    %v4603 = vsel %vm1279, %v4600, %v4602
    %v4604 = vrot.slane %v4000, 2
    %v4605 = vrot.slane %v3872, 2
    %v4606 = vsel %vm1279, %v4604, %v4605
    %v4607 = vrot.slane %v4032, 2
    %v4608 = vsel %vm1279, %v4605, %v4607
    %4609 = vrot.lane.b32.xlu0 %v4451, 16
    %v4610 = vpop.permute.xlu0 %4609
    %4611 = vrot.lane.b32.xlu0 %v4453, 16
    %v4612 = vpop.permute.xlu0 %4611
    %4613 = vrot.lane.b32.xlu0 %v4456, 16
    %v4614 = vpop.permute.xlu0 %4613
    %4615 = vrot.lane.b32.xlu0 %v4458, 16
    %v4616 = vpop.permute.xlu0 %4615
    %4617 = vrot.lane.b32.xlu0 %v4461, 16
    %v4618 = vpop.permute.xlu0 %4617
    %4619 = vrot.lane.b32.xlu0 %v4463, 16
    %v4620 = vpop.permute.xlu0 %4619
    %4621 = vrot.lane.b32.xlu0 %v4466, 16
    %v4622 = vpop.permute.xlu0 %4621
    %4623 = vrot.lane.b32.xlu0 %v4468, 16
    %v4624 = vpop.permute.xlu0 %4623
    %4625 = vrot.lane.b32.xlu0 %v4471, 16
    %v4626 = vpop.permute.xlu0 %4625
    %4627 = vrot.lane.b32.xlu0 %v4473, 16
    %v4628 = vpop.permute.xlu0 %4627
    %4629 = vrot.lane.b32.xlu0 %v4476, 16
    %v4630 = vpop.permute.xlu0 %4629
    %4631 = vrot.lane.b32.xlu0 %v4478, 16
    %v4632 = vpop.permute.xlu0 %4631
    %4633 = vrot.lane.b32.xlu0 %v4481, 16
    %v4634 = vpop.permute.xlu0 %4633
    %4635 = vrot.lane.b32.xlu0 %v4483, 16
    %v4636 = vpop.permute.xlu0 %4635
    %4637 = vrot.lane.b32.xlu0 %v4486, 16
    %v4638 = vpop.permute.xlu0 %4637
    %4639 = vrot.lane.b32.xlu0 %v4488, 16
    %v4640 = vpop.permute.xlu0 %4639
    %4641 = vrot.lane.b32.xlu0 %v4491, 16
    %v4642 = vpop.permute.xlu0 %4641
    %4643 = vrot.lane.b32.xlu0 %v4493, 16
    %v4644 = vpop.permute.xlu0 %4643
    %4645 = vrot.lane.b32.xlu0 %v4496, 16
    %v4646 = vpop.permute.xlu0 %4645
    %4647 = vrot.lane.b32.xlu0 %v4498, 16
    %v4648 = vpop.permute.xlu0 %4647
    %4649 = vrot.lane.b32.xlu0 %v4501, 16
    %v4650 = vpop.permute.xlu0 %4649
    %4651 = vrot.lane.b32.xlu0 %v4503, 16
    %v4652 = vpop.permute.xlu0 %4651
    %4653 = vrot.lane.b32.xlu0 %v4506, 16
    %v4654 = vpop.permute.xlu0 %4653
    %4655 = vrot.lane.b32.xlu0 %v4508, 16
    %v4656 = vpop.permute.xlu0 %4655
    %4657 = vrot.lane.b32.xlu0 %v4511, 16
    %v4658 = vpop.permute.xlu0 %4657
    %4659 = vrot.lane.b32.xlu0 %v4513, 16
    %v4660 = vpop.permute.xlu0 %4659
    %4661 = vrot.lane.b32.xlu0 %v4516, 16
    %v4662 = vpop.permute.xlu0 %4661
    %4663 = vrot.lane.b32.xlu0 %v4518, 16
    %v4664 = vpop.permute.xlu0 %4663
    %4665 = vrot.lane.b32.xlu0 %v4521, 16
    %v4666 = vpop.permute.xlu0 %4665
    %4667 = vrot.lane.b32.xlu0 %v4523, 16
    %v4668 = vpop.permute.xlu0 %4667
    %4669 = vrot.lane.b32.xlu0 %v4526, 16
    %v4670 = vpop.permute.xlu0 %4669
    %4671 = vrot.lane.b32.xlu0 %v4528, 16
    %v4672 = vpop.permute.xlu0 %4671
    %4673 = vrot.lane.b32.xlu0 %v4531, 16
    %v4674 = vpop.permute.xlu0 %4673
    %4675 = vrot.lane.b32.xlu0 %v4533, 16
    %v4676 = vpop.permute.xlu0 %4675
    %4677 = vrot.lane.b32.xlu0 %v4536, 16
    %v4678 = vpop.permute.xlu0 %4677
    %4679 = vrot.lane.b32.xlu0 %v4538, 16
    %v4680 = vpop.permute.xlu0 %4679
    %4681 = vrot.lane.b32.xlu0 %v4541, 16
    %v4682 = vpop.permute.xlu0 %4681
    %4683 = vrot.lane.b32.xlu0 %v4543, 16
    %v4684 = vpop.permute.xlu0 %4683
    %4685 = vrot.lane.b32.xlu0 %v4546, 16
    %v4686 = vpop.permute.xlu0 %4685
    %4687 = vrot.lane.b32.xlu0 %v4548, 16
    %v4688 = vpop.permute.xlu0 %4687
    %4689 = vrot.lane.b32.xlu0 %v4551, 16
    %v4690 = vpop.permute.xlu0 %4689
    %4691 = vrot.lane.b32.xlu0 %v4553, 16
    %v4692 = vpop.permute.xlu0 %4691
    %4693 = vrot.lane.b32.xlu0 %v4556, 16
    %v4694 = vpop.permute.xlu0 %4693
    %4695 = vrot.lane.b32.xlu0 %v4558, 16
    %v4696 = vpop.permute.xlu0 %4695
    %4697 = vrot.lane.b32.xlu0 %v4561, 16
    %v4698 = vpop.permute.xlu0 %4697
    %4699 = vrot.lane.b32.xlu0 %v4563, 16
    %v4700 = vpop.permute.xlu0 %4699
    %4701 = vrot.lane.b32.xlu0 %v4566, 16
    %v4702 = vpop.permute.xlu0 %4701
    %4703 = vrot.lane.b32.xlu0 %v4568, 16
    %v4704 = vpop.permute.xlu0 %4703
    %4705 = vrot.lane.b32.xlu0 %v4571, 16
    %v4706 = vpop.permute.xlu0 %4705
    %4707 = vrot.lane.b32.xlu0 %v4573, 16
    %v4708 = vpop.permute.xlu0 %4707
    %4709 = vrot.lane.b32.xlu0 %v4576, 16
    %v4710 = vpop.permute.xlu0 %4709
    %4711 = vrot.lane.b32.xlu0 %v4578, 16
    %v4712 = vpop.permute.xlu0 %4711
    %4713 = vrot.lane.b32.xlu0 %v4581, 16
    %v4714 = vpop.permute.xlu0 %4713
    %4715 = vrot.lane.b32.xlu0 %v4583, 16
    %v4716 = vpop.permute.xlu0 %4715
    %4717 = vrot.lane.b32.xlu0 %v4586, 16
    %v4718 = vpop.permute.xlu0 %4717
    %4719 = vrot.lane.b32.xlu0 %v4588, 16
    %v4720 = vpop.permute.xlu0 %4719
    %4721 = vrot.lane.b32.xlu0 %v4591, 16
    %v4722 = vpop.permute.xlu0 %4721
    %4723 = vrot.lane.b32.xlu0 %v4593, 16
    %v4724 = vpop.permute.xlu0 %4723
    %4725 = vrot.lane.b32.xlu0 %v4596, 16
    %v4726 = vpop.permute.xlu0 %4725
    %4727 = vrot.lane.b32.xlu0 %v4598, 16
    %v4728 = vpop.permute.xlu0 %4727
    %4729 = vrot.lane.b32.xlu0 %v4601, 16
    %v4730 = vpop.permute.xlu0 %4729
    %4731 = vrot.lane.b32.xlu0 %v4603, 16
    %v4732 = vpop.permute.xlu0 %4731
    %4733 = vrot.lane.b32.xlu0 %v4606, 16
    %v4734 = vpop.permute.xlu0 %4733
    %4735 = vrot.lane.b32.xlu0 %v4608, 16
    %v4736 = vpop.permute.xlu0 %4735
    %vm4801 = vcmask 1044480
    %v4802 = vrot.slane %v3969, 3
    %v4803 = vrot.slane %v3779, 3
    %v4804 = vsel %vm4801, %v4802, %v4803
    %v4805 = vrot.slane %v4001, 3
    %v4806 = vsel %vm4801, %v4803, %v4805
    %v4807 = vrot.slane %v3970, 3
    %v4808 = vrot.slane %v3782, 3
    %v4809 = vsel %vm4801, %v4807, %v4808
    %v4810 = vrot.slane %v4002, 3
    %v4811 = vsel %vm4801, %v4808, %v4810
    %v4812 = vrot.slane %v3971, 3
    %v4813 = vrot.slane %v3785, 3
    %v4814 = vsel %vm4801, %v4812, %v4813
    %v4815 = vrot.slane %v4003, 3
    %v4816 = vsel %vm4801, %v4813, %v4815
    %v4817 = vrot.slane %v3972, 3
    %v4818 = vrot.slane %v3788, 3
    %v4819 = vsel %vm4801, %v4817, %v4818
    %v4820 = vrot.slane %v4004, 3
    %v4821 = vsel %vm4801, %v4818, %v4820
    %v4822 = vrot.slane %v3973, 3
    %v4823 = vrot.slane %v3791, 3
    %v4824 = vsel %vm4801, %v4822, %v4823
    %v4825 = vrot.slane %v4005, 3
    %v4826 = vsel %vm4801, %v4823, %v4825
    %v4827 = vrot.slane %v3974, 3
    %v4828 = vrot.slane %v3794, 3
    %v4829 = vsel %vm4801, %v4827, %v4828
    %v4830 = vrot.slane %v4006, 3
    %v4831 = vsel %vm4801, %v4828, %v4830
    %v4832 = vrot.slane %v3975, 3
    %v4833 = vrot.slane %v3797, 3
    %v4834 = vsel %vm4801, %v4832, %v4833
    %v4835 = vrot.slane %v4007, 3
    %v4836 = vsel %vm4801, %v4833, %v4835
    %v4837 = vrot.slane %v3976, 3
    %v4838 = vrot.slane %v3800, 3
    %v4839 = vsel %vm4801, %v4837, %v4838
    %v4840 = vrot.slane %v4008, 3
    %v4841 = vsel %vm4801, %v4838, %v4840
    %v4842 = vrot.slane %v3977, 3
    %v4843 = vrot.slane %v3803, 3
    %v4844 = vsel %vm4801, %v4842, %v4843
    %v4845 = vrot.slane %v4009, 3
    %v4846 = vsel %vm4801, %v4843, %v4845
    %v4847 = vrot.slane %v3978, 3
    %v4848 = vrot.slane %v3806, 3
    %v4849 = vsel %vm4801, %v4847, %v4848
    %v4850 = vrot.slane %v4010, 3
    %v4851 = vsel %vm4801, %v4848, %v4850
    %v4852 = vrot.slane %v3979, 3
    %v4853 = vrot.slane %v3809, 3
    %v4854 = vsel %vm4801, %v4852, %v4853
    %v4855 = vrot.slane %v4011, 3
    %v4856 = vsel %vm4801, %v4853, %v4855
    %v4857 = vrot.slane %v3980, 3
    %v4858 = vrot.slane %v3812, 3
    %v4859 = vsel %vm4801, %v4857, %v4858
    %v4860 = vrot.slane %v4012, 3
    %v4861 = vsel %vm4801, %v4858, %v4860
    %v4862 = vrot.slane %v3981, 3
    %v4863 = vrot.slane %v3815, 3
    %v4864 = vsel %vm4801, %v4862, %v4863
    %v4865 = vrot.slane %v4013, 3
    %v4866 = vsel %vm4801, %v4863, %v4865
    %v4867 = vrot.slane %v3982, 3
    %v4868 = vrot.slane %v3818, 3
    %v4869 = vsel %vm4801, %v4867, %v4868
    %v4870 = vrot.slane %v4014, 3
    %v4871 = vsel %vm4801, %v4868, %v4870
    %v4872 = vrot.slane %v3983, 3
    %v4873 = vrot.slane %v3821, 3
    %v4874 = vsel %vm4801, %v4872, %v4873
    %v4875 = vrot.slane %v4015, 3
    %v4876 = vsel %vm4801, %v4873, %v4875
    %v4877 = vrot.slane %v3984, 3
    %v4878 = vrot.slane %v3824, 3
    %v4879 = vsel %vm4801, %v4877, %v4878
    %v4880 = vrot.slane %v4016, 3
    %v4881 = vsel %vm4801, %v4878, %v4880
    %v4882 = vrot.slane %v3985, 3
    %v4883 = vrot.slane %v3827, 3
    %v4884 = vsel %vm4801, %v4882, %v4883
    %v4885 = vrot.slane %v4017, 3
    %v4886 = vsel %vm4801, %v4883, %v4885
    %v4887 = vrot.slane %v3986, 3
    %v4888 = vrot.slane %v3830, 3
    %v4889 = vsel %vm4801, %v4887, %v4888
    %v4890 = vrot.slane %v4018, 3
    %v4891 = vsel %vm4801, %v4888, %v4890
    %v4892 = vrot.slane %v3987, 3
    %v4893 = vrot.slane %v3833, 3
    %v4894 = vsel %vm4801, %v4892, %v4893
    %v4895 = vrot.slane %v4019, 3
    %v4896 = vsel %vm4801, %v4893, %v4895
    %v4897 = vrot.slane %v3988, 3
    %v4898 = vrot.slane %v3836, 3
    %v4899 = vsel %vm4801, %v4897, %v4898
    %v4900 = vrot.slane %v4020, 3
    %v4901 = vsel %vm4801, %v4898, %v4900
    %v4902 = vrot.slane %v3989, 3
    %v4903 = vrot.slane %v3839, 3
    %v4904 = vsel %vm4801, %v4902, %v4903
    %v4905 = vrot.slane %v4021, 3
    %v4906 = vsel %vm4801, %v4903, %v4905
    %v4907 = vrot.slane %v3990, 3
    %v4908 = vrot.slane %v3842, 3
    %v4909 = vsel %vm4801, %v4907, %v4908
    %v4910 = vrot.slane %v4022, 3
    %v4911 = vsel %vm4801, %v4908, %v4910
    %v4912 = vrot.slane %v3991, 3
    %v4913 = vrot.slane %v3845, 3
    %v4914 = vsel %vm4801, %v4912, %v4913
    %v4915 = vrot.slane %v4023, 3
    %v4916 = vsel %vm4801, %v4913, %v4915
    %v4917 = vrot.slane %v3992, 3
    %v4918 = vrot.slane %v3848, 3
    %v4919 = vsel %vm4801, %v4917, %v4918
    %v4920 = vrot.slane %v4024, 3
    %v4921 = vsel %vm4801, %v4918, %v4920
    %v4922 = vrot.slane %v3993, 3
    %v4923 = vrot.slane %v3851, 3
    %v4924 = vsel %vm4801, %v4922, %v4923
    %v4925 = vrot.slane %v4025, 3
    %v4926 = vsel %vm4801, %v4923, %v4925
    %v4927 = vrot.slane %v3994, 3
    %v4928 = vrot.slane %v3854, 3
    %v4929 = vsel %vm4801, %v4927, %v4928
    %v4930 = vrot.slane %v4026, 3
    %v4931 = vsel %vm4801, %v4928, %v4930
    %v4932 = vrot.slane %v3995, 3
    %v4933 = vrot.slane %v3857, 3
    %v4934 = vsel %vm4801, %v4932, %v4933
    %v4935 = vrot.slane %v4027, 3
    %v4936 = vsel %vm4801, %v4933, %v4935
    %v4937 = vrot.slane %v3996, 3
    %v4938 = vrot.slane %v3860, 3
    %v4939 = vsel %vm4801, %v4937, %v4938
    %v4940 = vrot.slane %v4028, 3
    %v4941 = vsel %vm4801, %v4938, %v4940
    %v4942 = vrot.slane %v3997, 3
    %v4943 = vrot.slane %v3863, 3
    %v4944 = vsel %vm4801, %v4942, %v4943
    %v4945 = vrot.slane %v4029, 3
    %v4946 = vsel %vm4801, %v4943, %v4945
    %v4947 = vrot.slane %v3998, 3
    %v4948 = vrot.slane %v3866, 3
    %v4949 = vsel %vm4801, %v4947, %v4948
    %v4950 = vrot.slane %v4030, 3
    %v4951 = vsel %vm4801, %v4948, %v4950
    %v4952 = vrot.slane %v3999, 3
    %v4953 = vrot.slane %v3869, 3
    %v4954 = vsel %vm4801, %v4952, %v4953
    %v4955 = vrot.slane %v4031, 3
    %v4956 = vsel %vm4801, %v4953, %v4955
    %v4957 = vrot.slane %v4000, 3
    %v4958 = vrot.slane %v3872, 3
    %v4959 = vsel %vm4801, %v4957, %v4958
    %v4960 = vrot.slane %v4032, 3
    %v4961 = vsel %vm4801, %v4958, %v4960
    %4962 = vrot.lane.b32.xlu0 %v4804, 24
    %v4963 = vpop.permute.xlu0 %4962
    %4964 = vrot.lane.b32.xlu0 %v4806, 24
    %v4965 = vpop.permute.xlu0 %4964
    %4966 = vrot.lane.b32.xlu0 %v4809, 24
    %v4967 = vpop.permute.xlu0 %4966
    %4968 = vrot.lane.b32.xlu0 %v4811, 24
    %v4969 = vpop.permute.xlu0 %4968
    %4970 = vrot.lane.b32.xlu0 %v4814, 24
    %v4971 = vpop.permute.xlu0 %4970
    %4972 = vrot.lane.b32.xlu0 %v4816, 24
    %v4973 = vpop.permute.xlu0 %4972
    %4974 = vrot.lane.b32.xlu0 %v4819, 24
    %v4975 = vpop.permute.xlu0 %4974
    %4976 = vrot.lane.b32.xlu0 %v4821, 24
    %v4977 = vpop.permute.xlu0 %4976
    %4978 = vrot.lane.b32.xlu0 %v4824, 24
    %v4979 = vpop.permute.xlu0 %4978
    %4980 = vrot.lane.b32.xlu0 %v4826, 24
    %v4981 = vpop.permute.xlu0 %4980
    %4982 = vrot.lane.b32.xlu0 %v4829, 24
    %v4983 = vpop.permute.xlu0 %4982
    %4984 = vrot.lane.b32.xlu0 %v4831, 24
    %v4985 = vpop.permute.xlu0 %4984
    %4986 = vrot.lane.b32.xlu0 %v4834, 24
    %v4987 = vpop.permute.xlu0 %4986
    %4988 = vrot.lane.b32.xlu0 %v4836, 24
    %v4989 = vpop.permute.xlu0 %4988
    %4990 = vrot.lane.b32.xlu0 %v4839, 24
    %v4991 = vpop.permute.xlu0 %4990
    %4992 = vrot.lane.b32.xlu0 %v4841, 24
    %v4993 = vpop.permute.xlu0 %4992
    %4994 = vrot.lane.b32.xlu0 %v4844, 24
    %v4995 = vpop.permute.xlu0 %4994
    %4996 = vrot.lane.b32.xlu0 %v4846, 24
    %v4997 = vpop.permute.xlu0 %4996
    %4998 = vrot.lane.b32.xlu0 %v4849, 24
    %v4999 = vpop.permute.xlu0 %4998
    %5000 = vrot.lane.b32.xlu0 %v4851, 24
    %v5001 = vpop.permute.xlu0 %5000
    %5002 = vrot.lane.b32.xlu0 %v4854, 24
    %v5003 = vpop.permute.xlu0 %5002
    %5004 = vrot.lane.b32.xlu0 %v4856, 24
    %v5005 = vpop.permute.xlu0 %5004
    %5006 = vrot.lane.b32.xlu0 %v4859, 24
    %v5007 = vpop.permute.xlu0 %5006
    %5008 = vrot.lane.b32.xlu0 %v4861, 24
    %v5009 = vpop.permute.xlu0 %5008
    %5010 = vrot.lane.b32.xlu0 %v4864, 24
    %v5011 = vpop.permute.xlu0 %5010
    %5012 = vrot.lane.b32.xlu0 %v4866, 24
    %v5013 = vpop.permute.xlu0 %5012
    %5014 = vrot.lane.b32.xlu0 %v4869, 24
    %v5015 = vpop.permute.xlu0 %5014
    %5016 = vrot.lane.b32.xlu0 %v4871, 24
    %v5017 = vpop.permute.xlu0 %5016
    %5018 = vrot.lane.b32.xlu0 %v4874, 24
    %v5019 = vpop.permute.xlu0 %5018
    %5020 = vrot.lane.b32.xlu0 %v4876, 24
    %v5021 = vpop.permute.xlu0 %5020
    %5022 = vrot.lane.b32.xlu0 %v4879, 24
    %v5023 = vpop.permute.xlu0 %5022
    %5024 = vrot.lane.b32.xlu0 %v4881, 24
    %v5025 = vpop.permute.xlu0 %5024
    %5026 = vrot.lane.b32.xlu0 %v4884, 24
    %v5027 = vpop.permute.xlu0 %5026
    %5028 = vrot.lane.b32.xlu0 %v4886, 24
    %v5029 = vpop.permute.xlu0 %5028
    %5030 = vrot.lane.b32.xlu0 %v4889, 24
    %v5031 = vpop.permute.xlu0 %5030
    %5032 = vrot.lane.b32.xlu0 %v4891, 24
    %v5033 = vpop.permute.xlu0 %5032
    %5034 = vrot.lane.b32.xlu0 %v4894, 24
    %v5035 = vpop.permute.xlu0 %5034
    %5036 = vrot.lane.b32.xlu0 %v4896, 24
    %v5037 = vpop.permute.xlu0 %5036
    %5038 = vrot.lane.b32.xlu0 %v4899, 24
    %v5039 = vpop.permute.xlu0 %5038
    %5040 = vrot.lane.b32.xlu0 %v4901, 24
    %v5041 = vpop.permute.xlu0 %5040
    %5042 = vrot.lane.b32.xlu0 %v4904, 24
    %v5043 = vpop.permute.xlu0 %5042
    %5044 = vrot.lane.b32.xlu0 %v4906, 24
    %v5045 = vpop.permute.xlu0 %5044
    %5046 = vrot.lane.b32.xlu0 %v4909, 24
    %v5047 = vpop.permute.xlu0 %5046
    %5048 = vrot.lane.b32.xlu0 %v4911, 24
    %v5049 = vpop.permute.xlu0 %5048
    %5050 = vrot.lane.b32.xlu0 %v4914, 24
    %v5051 = vpop.permute.xlu0 %5050
    %5052 = vrot.lane.b32.xlu0 %v4916, 24
    %v5053 = vpop.permute.xlu0 %5052
    %5054 = vrot.lane.b32.xlu0 %v4919, 24
    %v5055 = vpop.permute.xlu0 %5054
    %5056 = vrot.lane.b32.xlu0 %v4921, 24
    %v5057 = vpop.permute.xlu0 %5056
    %5058 = vrot.lane.b32.xlu0 %v4924, 24
    %v5059 = vpop.permute.xlu0 %5058
    %5060 = vrot.lane.b32.xlu0 %v4926, 24
    %v5061 = vpop.permute.xlu0 %5060
    %5062 = vrot.lane.b32.xlu0 %v4929, 24
    %v5063 = vpop.permute.xlu0 %5062
    %5064 = vrot.lane.b32.xlu0 %v4931, 24
    %v5065 = vpop.permute.xlu0 %5064
    %5066 = vrot.lane.b32.xlu0 %v4934, 24
    %v5067 = vpop.permute.xlu0 %5066
    %5068 = vrot.lane.b32.xlu0 %v4936, 24
    %v5069 = vpop.permute.xlu0 %5068
    %5070 = vrot.lane.b32.xlu0 %v4939, 24
    %v5071 = vpop.permute.xlu0 %5070
    %5072 = vrot.lane.b32.xlu0 %v4941, 24
    %v5073 = vpop.permute.xlu0 %5072
    %5074 = vrot.lane.b32.xlu0 %v4944, 24
    %v5075 = vpop.permute.xlu0 %5074
    %5076 = vrot.lane.b32.xlu0 %v4946, 24
    %v5077 = vpop.permute.xlu0 %5076
    %5078 = vrot.lane.b32.xlu0 %v4949, 24
    %v5079 = vpop.permute.xlu0 %5078
    %5080 = vrot.lane.b32.xlu0 %v4951, 24
    %v5081 = vpop.permute.xlu0 %5080
    %5082 = vrot.lane.b32.xlu0 %v4954, 24
    %v5083 = vpop.permute.xlu0 %5082
    %5084 = vrot.lane.b32.xlu0 %v4956, 24
    %v5085 = vpop.permute.xlu0 %5084
    %5086 = vrot.lane.b32.xlu0 %v4959, 24
    %v5087 = vpop.permute.xlu0 %5086
    %5088 = vrot.lane.b32.xlu0 %v4961, 24
    %v5089 = vpop.permute.xlu0 %5088
    %vm5154 = vcmask 1043456
    %v5155 = vrot.slane %v3969, 4
    %v5156 = vrot.slane %v3779, 4
    %v5157 = vsel %vm5154, %v5155, %v5156
    %v5158 = vrot.slane %v4001, 4
    %v5159 = vsel %vm5154, %v5156, %v5158
    %v5160 = vrot.slane %v3970, 4
    %v5161 = vrot.slane %v3782, 4
    %v5162 = vsel %vm5154, %v5160, %v5161
    %v5163 = vrot.slane %v4002, 4
    %v5164 = vsel %vm5154, %v5161, %v5163
    %v5165 = vrot.slane %v3971, 4
    %v5166 = vrot.slane %v3785, 4
    %v5167 = vsel %vm5154, %v5165, %v5166
    %v5168 = vrot.slane %v4003, 4
    %v5169 = vsel %vm5154, %v5166, %v5168
    %v5170 = vrot.slane %v3972, 4
    %v5171 = vrot.slane %v3788, 4
    %v5172 = vsel %vm5154, %v5170, %v5171
    %v5173 = vrot.slane %v4004, 4
    %v5174 = vsel %vm5154, %v5171, %v5173
    %v5175 = vrot.slane %v3973, 4
    %v5176 = vrot.slane %v3791, 4
    %v5177 = vsel %vm5154, %v5175, %v5176
    %v5178 = vrot.slane %v4005, 4
    %v5179 = vsel %vm5154, %v5176, %v5178
    %v5180 = vrot.slane %v3974, 4
    %v5181 = vrot.slane %v3794, 4
    %v5182 = vsel %vm5154, %v5180, %v5181
    %v5183 = vrot.slane %v4006, 4
    %v5184 = vsel %vm5154, %v5181, %v5183
    %v5185 = vrot.slane %v3975, 4
    %v5186 = vrot.slane %v3797, 4
    %v5187 = vsel %vm5154, %v5185, %v5186
    %v5188 = vrot.slane %v4007, 4
    %v5189 = vsel %vm5154, %v5186, %v5188
    %v5190 = vrot.slane %v3976, 4
    %v5191 = vrot.slane %v3800, 4
    %v5192 = vsel %vm5154, %v5190, %v5191
    %v5193 = vrot.slane %v4008, 4
    %v5194 = vsel %vm5154, %v5191, %v5193
    %v5195 = vrot.slane %v3977, 4
    %v5196 = vrot.slane %v3803, 4
    %v5197 = vsel %vm5154, %v5195, %v5196
    %v5198 = vrot.slane %v4009, 4
    %v5199 = vsel %vm5154, %v5196, %v5198
    %v5200 = vrot.slane %v3978, 4
    %v5201 = vrot.slane %v3806, 4
    %v5202 = vsel %vm5154, %v5200, %v5201
    %v5203 = vrot.slane %v4010, 4
    %v5204 = vsel %vm5154, %v5201, %v5203
    %v5205 = vrot.slane %v3979, 4
    %v5206 = vrot.slane %v3809, 4
    %v5207 = vsel %vm5154, %v5205, %v5206
    %v5208 = vrot.slane %v4011, 4
    %v5209 = vsel %vm5154, %v5206, %v5208
    %v5210 = vrot.slane %v3980, 4
    %v5211 = vrot.slane %v3812, 4
    %v5212 = vsel %vm5154, %v5210, %v5211
    %v5213 = vrot.slane %v4012, 4
    %v5214 = vsel %vm5154, %v5211, %v5213
    %v5215 = vrot.slane %v3981, 4
    %v5216 = vrot.slane %v3815, 4
    %v5217 = vsel %vm5154, %v5215, %v5216
    %v5218 = vrot.slane %v4013, 4
    %v5219 = vsel %vm5154, %v5216, %v5218
    %v5220 = vrot.slane %v3982, 4
    %v5221 = vrot.slane %v3818, 4
    %v5222 = vsel %vm5154, %v5220, %v5221
    %v5223 = vrot.slane %v4014, 4
    %v5224 = vsel %vm5154, %v5221, %v5223
    %v5225 = vrot.slane %v3983, 4
    %v5226 = vrot.slane %v3821, 4
    %v5227 = vsel %vm5154, %v5225, %v5226
    %v5228 = vrot.slane %v4015, 4
    %v5229 = vsel %vm5154, %v5226, %v5228
    %v5230 = vrot.slane %v3984, 4
    %v5231 = vrot.slane %v3824, 4
    %v5232 = vsel %vm5154, %v5230, %v5231
    %v5233 = vrot.slane %v4016, 4
    %v5234 = vsel %vm5154, %v5231, %v5233
    %v5235 = vrot.slane %v3985, 4
    %v5236 = vrot.slane %v3827, 4
    %v5237 = vsel %vm5154, %v5235, %v5236
    %v5238 = vrot.slane %v4017, 4
    %v5239 = vsel %vm5154, %v5236, %v5238
    %v5240 = vrot.slane %v3986, 4
    %v5241 = vrot.slane %v3830, 4
    %v5242 = vsel %vm5154, %v5240, %v5241
    %v5243 = vrot.slane %v4018, 4
    %v5244 = vsel %vm5154, %v5241, %v5243
    %v5245 = vrot.slane %v3987, 4
    %v5246 = vrot.slane %v3833, 4
    %v5247 = vsel %vm5154, %v5245, %v5246
    %v5248 = vrot.slane %v4019, 4
    %v5249 = vsel %vm5154, %v5246, %v5248
    %v5250 = vrot.slane %v3988, 4
    %v5251 = vrot.slane %v3836, 4
    %v5252 = vsel %vm5154, %v5250, %v5251
    %v5253 = vrot.slane %v4020, 4
    %v5254 = vsel %vm5154, %v5251, %v5253
    %v5255 = vrot.slane %v3989, 4
    %v5256 = vrot.slane %v3839, 4
    %v5257 = vsel %vm5154, %v5255, %v5256
    %v5258 = vrot.slane %v4021, 4
    %v5259 = vsel %vm5154, %v5256, %v5258
    %v5260 = vrot.slane %v3990, 4
    %v5261 = vrot.slane %v3842, 4
    %v5262 = vsel %vm5154, %v5260, %v5261
    %v5263 = vrot.slane %v4022, 4
    %v5264 = vsel %vm5154, %v5261, %v5263
    %v5265 = vrot.slane %v3991, 4
    %v5266 = vrot.slane %v3845, 4
    %v5267 = vsel %vm5154, %v5265, %v5266
    %v5268 = vrot.slane %v4023, 4
    %v5269 = vsel %vm5154, %v5266, %v5268
    %v5270 = vrot.slane %v3992, 4
    %v5271 = vrot.slane %v3848, 4
    %v5272 = vsel %vm5154, %v5270, %v5271
    %v5273 = vrot.slane %v4024, 4
    %v5274 = vsel %vm5154, %v5271, %v5273
    %v5275 = vrot.slane %v3993, 4
    %v5276 = vrot.slane %v3851, 4
    %v5277 = vsel %vm5154, %v5275, %v5276
    %v5278 = vrot.slane %v4025, 4
    %v5279 = vsel %vm5154, %v5276, %v5278
    %v5280 = vrot.slane %v3994, 4
    %v5281 = vrot.slane %v3854, 4
    %v5282 = vsel %vm5154, %v5280, %v5281
    %v5283 = vrot.slane %v4026, 4
    %v5284 = vsel %vm5154, %v5281, %v5283
    %v5285 = vrot.slane %v3995, 4
    %v5286 = vrot.slane %v3857, 4
    %v5287 = vsel %vm5154, %v5285, %v5286
    %v5288 = vrot.slane %v4027, 4
    %v5289 = vsel %vm5154, %v5286, %v5288
    %v5290 = vrot.slane %v3996, 4
    %v5291 = vrot.slane %v3860, 4
    %v5292 = vsel %vm5154, %v5290, %v5291
    %v5293 = vrot.slane %v4028, 4
    %v5294 = vsel %vm5154, %v5291, %v5293
    %v5295 = vrot.slane %v3997, 4
    %v5296 = vrot.slane %v3863, 4
    %v5297 = vsel %vm5154, %v5295, %v5296
    %v5298 = vrot.slane %v4029, 4
    %v5299 = vsel %vm5154, %v5296, %v5298
    %v5300 = vrot.slane %v3998, 4
    %v5301 = vrot.slane %v3866, 4
    %v5302 = vsel %vm5154, %v5300, %v5301
    %v5303 = vrot.slane %v4030, 4
    %v5304 = vsel %vm5154, %v5301, %v5303
    %v5305 = vrot.slane %v3999, 4
    %v5306 = vrot.slane %v3869, 4
    %v5307 = vsel %vm5154, %v5305, %v5306
    %v5308 = vrot.slane %v4031, 4
    %v5309 = vsel %vm5154, %v5306, %v5308
    %v5310 = vrot.slane %v4000, 4
    %v5311 = vrot.slane %v3872, 4
    %v5312 = vsel %vm5154, %v5310, %v5311
    %v5313 = vrot.slane %v4032, 4
    %v5314 = vsel %vm5154, %v5311, %v5313
    %5315 = vrot.lane.b32.xlu0 %v5157, 32
    %v5316 = vpop.permute.xlu0 %5315
    %5317 = vrot.lane.b32.xlu0 %v5159, 32
    %v5318 = vpop.permute.xlu0 %5317
    %5319 = vrot.lane.b32.xlu0 %v5162, 32
    %v5320 = vpop.permute.xlu0 %5319
    %5321 = vrot.lane.b32.xlu0 %v5164, 32
    %v5322 = vpop.permute.xlu0 %5321
    %5323 = vrot.lane.b32.xlu0 %v5167, 32
    %v5324 = vpop.permute.xlu0 %5323
    %5325 = vrot.lane.b32.xlu0 %v5169, 32
    %v5326 = vpop.permute.xlu0 %5325
    %5327 = vrot.lane.b32.xlu0 %v5172, 32
    %v5328 = vpop.permute.xlu0 %5327
    %5329 = vrot.lane.b32.xlu0 %v5174, 32
    %v5330 = vpop.permute.xlu0 %5329
    %5331 = vrot.lane.b32.xlu0 %v5177, 32
    %v5332 = vpop.permute.xlu0 %5331
    %5333 = vrot.lane.b32.xlu0 %v5179, 32
    %v5334 = vpop.permute.xlu0 %5333
    %5335 = vrot.lane.b32.xlu0 %v5182, 32
    %v5336 = vpop.permute.xlu0 %5335
    %5337 = vrot.lane.b32.xlu0 %v5184, 32
    %v5338 = vpop.permute.xlu0 %5337
    %5339 = vrot.lane.b32.xlu0 %v5187, 32
    %v5340 = vpop.permute.xlu0 %5339
    %5341 = vrot.lane.b32.xlu0 %v5189, 32
    %v5342 = vpop.permute.xlu0 %5341
    %5343 = vrot.lane.b32.xlu0 %v5192, 32
    %v5344 = vpop.permute.xlu0 %5343
    %5345 = vrot.lane.b32.xlu0 %v5194, 32
    %v5346 = vpop.permute.xlu0 %5345
    %5347 = vrot.lane.b32.xlu0 %v5197, 32
    %v5348 = vpop.permute.xlu0 %5347
    %5349 = vrot.lane.b32.xlu0 %v5199, 32
    %v5350 = vpop.permute.xlu0 %5349
    %5351 = vrot.lane.b32.xlu0 %v5202, 32
    %v5352 = vpop.permute.xlu0 %5351
    %5353 = vrot.lane.b32.xlu0 %v5204, 32
    %v5354 = vpop.permute.xlu0 %5353
    %5355 = vrot.lane.b32.xlu0 %v5207, 32
    %v5356 = vpop.permute.xlu0 %5355
    %5357 = vrot.lane.b32.xlu0 %v5209, 32
    %v5358 = vpop.permute.xlu0 %5357
    %5359 = vrot.lane.b32.xlu0 %v5212, 32
    %v5360 = vpop.permute.xlu0 %5359
    %5361 = vrot.lane.b32.xlu0 %v5214, 32
    %v5362 = vpop.permute.xlu0 %5361
    %5363 = vrot.lane.b32.xlu0 %v5217, 32
    %v5364 = vpop.permute.xlu0 %5363
    %5365 = vrot.lane.b32.xlu0 %v5219, 32
    %v5366 = vpop.permute.xlu0 %5365
    %5367 = vrot.lane.b32.xlu0 %v5222, 32
    %v5368 = vpop.permute.xlu0 %5367
    %5369 = vrot.lane.b32.xlu0 %v5224, 32
    %v5370 = vpop.permute.xlu0 %5369
    %5371 = vrot.lane.b32.xlu0 %v5227, 32
    %v5372 = vpop.permute.xlu0 %5371
    %5373 = vrot.lane.b32.xlu0 %v5229, 32
    %v5374 = vpop.permute.xlu0 %5373
    %5375 = vrot.lane.b32.xlu0 %v5232, 32
    %v5376 = vpop.permute.xlu0 %5375
    %5377 = vrot.lane.b32.xlu0 %v5234, 32
    %v5378 = vpop.permute.xlu0 %5377
    %5379 = vrot.lane.b32.xlu0 %v5237, 32
    %v5380 = vpop.permute.xlu0 %5379
    %5381 = vrot.lane.b32.xlu0 %v5239, 32
    %v5382 = vpop.permute.xlu0 %5381
    %5383 = vrot.lane.b32.xlu0 %v5242, 32
    %v5384 = vpop.permute.xlu0 %5383
    %5385 = vrot.lane.b32.xlu0 %v5244, 32
    %v5386 = vpop.permute.xlu0 %5385
    %5387 = vrot.lane.b32.xlu0 %v5247, 32
    %v5388 = vpop.permute.xlu0 %5387
    %5389 = vrot.lane.b32.xlu0 %v5249, 32
    %v5390 = vpop.permute.xlu0 %5389
    %5391 = vrot.lane.b32.xlu0 %v5252, 32
    %v5392 = vpop.permute.xlu0 %5391
    %5393 = vrot.lane.b32.xlu0 %v5254, 32
    %v5394 = vpop.permute.xlu0 %5393
    %5395 = vrot.lane.b32.xlu0 %v5257, 32
    %v5396 = vpop.permute.xlu0 %5395
    %5397 = vrot.lane.b32.xlu0 %v5259, 32
    %v5398 = vpop.permute.xlu0 %5397
    %5399 = vrot.lane.b32.xlu0 %v5262, 32
    %v5400 = vpop.permute.xlu0 %5399
    %5401 = vrot.lane.b32.xlu0 %v5264, 32
    %v5402 = vpop.permute.xlu0 %5401
    %5403 = vrot.lane.b32.xlu0 %v5267, 32
    %v5404 = vpop.permute.xlu0 %5403
    %5405 = vrot.lane.b32.xlu0 %v5269, 32
    %v5406 = vpop.permute.xlu0 %5405
    %5407 = vrot.lane.b32.xlu0 %v5272, 32
    %v5408 = vpop.permute.xlu0 %5407
    %5409 = vrot.lane.b32.xlu0 %v5274, 32
    %v5410 = vpop.permute.xlu0 %5409
    %5411 = vrot.lane.b32.xlu0 %v5277, 32
    %v5412 = vpop.permute.xlu0 %5411
    %5413 = vrot.lane.b32.xlu0 %v5279, 32
    %v5414 = vpop.permute.xlu0 %5413
    %5415 = vrot.lane.b32.xlu0 %v5282, 32
    %v5416 = vpop.permute.xlu0 %5415
    %5417 = vrot.lane.b32.xlu0 %v5284, 32
    %v5418 = vpop.permute.xlu0 %5417
    %5419 = vrot.lane.b32.xlu0 %v5287, 32
    %v5420 = vpop.permute.xlu0 %5419
    %5421 = vrot.lane.b32.xlu0 %v5289, 32
    %v5422 = vpop.permute.xlu0 %5421
    %5423 = vrot.lane.b32.xlu0 %v5292, 32
    %v5424 = vpop.permute.xlu0 %5423
    %5425 = vrot.lane.b32.xlu0 %v5294, 32
    %v5426 = vpop.permute.xlu0 %5425
    %5427 = vrot.lane.b32.xlu0 %v5297, 32
    %v5428 = vpop.permute.xlu0 %5427
    %5429 = vrot.lane.b32.xlu0 %v5299, 32
    %v5430 = vpop.permute.xlu0 %5429
    %5431 = vrot.lane.b32.xlu0 %v5302, 32
    %v5432 = vpop.permute.xlu0 %5431
    %5433 = vrot.lane.b32.xlu0 %v5304, 32
    %v5434 = vpop.permute.xlu0 %5433
    %5435 = vrot.lane.b32.xlu0 %v5307, 32
    %v5436 = vpop.permute.xlu0 %5435
    %5437 = vrot.lane.b32.xlu0 %v5309, 32
    %v5438 = vpop.permute.xlu0 %5437
    %5439 = vrot.lane.b32.xlu0 %v5312, 32
    %v5440 = vpop.permute.xlu0 %5439
    %5441 = vrot.lane.b32.xlu0 %v5314, 32
    %v5442 = vpop.permute.xlu0 %5441
    %v5507 = vrot.slane %v3969, 5
    %v5508 = vrot.slane %v3779, 5
    %v5509 = vsel %vm3776, %v5507, %v5508
    %v5510 = vrot.slane %v4001, 5
    %v5511 = vsel %vm3776, %v5508, %v5510
    %v5512 = vrot.slane %v3970, 5
    %v5513 = vrot.slane %v3782, 5
    %v5514 = vsel %vm3776, %v5512, %v5513
    %v5515 = vrot.slane %v4002, 5
    %v5516 = vsel %vm3776, %v5513, %v5515
    %v5517 = vrot.slane %v3971, 5
    %v5518 = vrot.slane %v3785, 5
    %v5519 = vsel %vm3776, %v5517, %v5518
    %v5520 = vrot.slane %v4003, 5
    %v5521 = vsel %vm3776, %v5518, %v5520
    %v5522 = vrot.slane %v3972, 5
    %v5523 = vrot.slane %v3788, 5
    %v5524 = vsel %vm3776, %v5522, %v5523
    %v5525 = vrot.slane %v4004, 5
    %v5526 = vsel %vm3776, %v5523, %v5525
    %v5527 = vrot.slane %v3973, 5
    %v5528 = vrot.slane %v3791, 5
    %v5529 = vsel %vm3776, %v5527, %v5528
    %v5530 = vrot.slane %v4005, 5
    %v5531 = vsel %vm3776, %v5528, %v5530
    %v5532 = vrot.slane %v3974, 5
    %v5533 = vrot.slane %v3794, 5
    %v5534 = vsel %vm3776, %v5532, %v5533
    %v5535 = vrot.slane %v4006, 5
    %v5536 = vsel %vm3776, %v5533, %v5535
    %v5537 = vrot.slane %v3975, 5
    %v5538 = vrot.slane %v3797, 5
    %v5539 = vsel %vm3776, %v5537, %v5538
    %v5540 = vrot.slane %v4007, 5
    %v5541 = vsel %vm3776, %v5538, %v5540
    %v5542 = vrot.slane %v3976, 5
    %v5543 = vrot.slane %v3800, 5
    %v5544 = vsel %vm3776, %v5542, %v5543
    %v5545 = vrot.slane %v4008, 5
    %v5546 = vsel %vm3776, %v5543, %v5545
    %v5547 = vrot.slane %v3977, 5
    %v5548 = vrot.slane %v3803, 5
    %v5549 = vsel %vm3776, %v5547, %v5548
    %v5550 = vrot.slane %v4009, 5
    %v5551 = vsel %vm3776, %v5548, %v5550
    %v5552 = vrot.slane %v3978, 5
    %v5553 = vrot.slane %v3806, 5
    %v5554 = vsel %vm3776, %v5552, %v5553
    %v5555 = vrot.slane %v4010, 5
    %v5556 = vsel %vm3776, %v5553, %v5555
    %v5557 = vrot.slane %v3979, 5
    %v5558 = vrot.slane %v3809, 5
    %v5559 = vsel %vm3776, %v5557, %v5558
    %v5560 = vrot.slane %v4011, 5
    %v5561 = vsel %vm3776, %v5558, %v5560
    %v5562 = vrot.slane %v3980, 5
    %v5563 = vrot.slane %v3812, 5
    %v5564 = vsel %vm3776, %v5562, %v5563
    %v5565 = vrot.slane %v4012, 5
    %v5566 = vsel %vm3776, %v5563, %v5565
    %v5567 = vrot.slane %v3981, 5
    %v5568 = vrot.slane %v3815, 5
    %v5569 = vsel %vm3776, %v5567, %v5568
    %v5570 = vrot.slane %v4013, 5
    %v5571 = vsel %vm3776, %v5568, %v5570
    %v5572 = vrot.slane %v3982, 5
    %v5573 = vrot.slane %v3818, 5
    %v5574 = vsel %vm3776, %v5572, %v5573
    %v5575 = vrot.slane %v4014, 5
    %v5576 = vsel %vm3776, %v5573, %v5575
    %v5577 = vrot.slane %v3983, 5
    %v5578 = vrot.slane %v3821, 5
    %v5579 = vsel %vm3776, %v5577, %v5578
    %v5580 = vrot.slane %v4015, 5
    %v5581 = vsel %vm3776, %v5578, %v5580
    %v5582 = vrot.slane %v3984, 5
    %v5583 = vrot.slane %v3824, 5
    %v5584 = vsel %vm3776, %v5582, %v5583
    %v5585 = vrot.slane %v4016, 5
    %v5586 = vsel %vm3776, %v5583, %v5585
    %v5587 = vrot.slane %v3985, 5
    %v5588 = vrot.slane %v3827, 5
    %v5589 = vsel %vm3776, %v5587, %v5588
    %v5590 = vrot.slane %v4017, 5
    %v5591 = vsel %vm3776, %v5588, %v5590
    %v5592 = vrot.slane %v3986, 5
    %v5593 = vrot.slane %v3830, 5
    %v5594 = vsel %vm3776, %v5592, %v5593
    %v5595 = vrot.slane %v4018, 5
    %v5596 = vsel %vm3776, %v5593, %v5595
    %v5597 = vrot.slane %v3987, 5
    %v5598 = vrot.slane %v3833, 5
    %v5599 = vsel %vm3776, %v5597, %v5598
    %v5600 = vrot.slane %v4019, 5
    %v5601 = vsel %vm3776, %v5598, %v5600
    %v5602 = vrot.slane %v3988, 5
    %v5603 = vrot.slane %v3836, 5
    %v5604 = vsel %vm3776, %v5602, %v5603
    %v5605 = vrot.slane %v4020, 5
    %v5606 = vsel %vm3776, %v5603, %v5605
    %v5607 = vrot.slane %v3989, 5
    %v5608 = vrot.slane %v3839, 5
    %v5609 = vsel %vm3776, %v5607, %v5608
    %v5610 = vrot.slane %v4021, 5
    %v5611 = vsel %vm3776, %v5608, %v5610
    %v5612 = vrot.slane %v3990, 5
    %v5613 = vrot.slane %v3842, 5
    %v5614 = vsel %vm3776, %v5612, %v5613
    %v5615 = vrot.slane %v4022, 5
    %v5616 = vsel %vm3776, %v5613, %v5615
    %v5617 = vrot.slane %v3991, 5
    %v5618 = vrot.slane %v3845, 5
    %v5619 = vsel %vm3776, %v5617, %v5618
    %v5620 = vrot.slane %v4023, 5
    %v5621 = vsel %vm3776, %v5618, %v5620
    %v5622 = vrot.slane %v3992, 5
    %v5623 = vrot.slane %v3848, 5
    %v5624 = vsel %vm3776, %v5622, %v5623
    %v5625 = vrot.slane %v4024, 5
    %v5626 = vsel %vm3776, %v5623, %v5625
    %v5627 = vrot.slane %v3993, 5
    %v5628 = vrot.slane %v3851, 5
    %v5629 = vsel %vm3776, %v5627, %v5628
    %v5630 = vrot.slane %v4025, 5
    %v5631 = vsel %vm3776, %v5628, %v5630
    %v5632 = vrot.slane %v3994, 5
    %v5633 = vrot.slane %v3854, 5
    %v5634 = vsel %vm3776, %v5632, %v5633
    %v5635 = vrot.slane %v4026, 5
    %v5636 = vsel %vm3776, %v5633, %v5635
    %v5637 = vrot.slane %v3995, 5
    %v5638 = vrot.slane %v3857, 5
    %v5639 = vsel %vm3776, %v5637, %v5638
    %v5640 = vrot.slane %v4027, 5
    %v5641 = vsel %vm3776, %v5638, %v5640
    %v5642 = vrot.slane %v3996, 5
    %v5643 = vrot.slane %v3860, 5
    %v5644 = vsel %vm3776, %v5642, %v5643
    %v5645 = vrot.slane %v4028, 5
    %v5646 = vsel %vm3776, %v5643, %v5645
    %v5647 = vrot.slane %v3997, 5
    %v5648 = vrot.slane %v3863, 5
    %v5649 = vsel %vm3776, %v5647, %v5648
    %v5650 = vrot.slane %v4029, 5
    %v5651 = vsel %vm3776, %v5648, %v5650
    %v5652 = vrot.slane %v3998, 5
    %v5653 = vrot.slane %v3866, 5
    %v5654 = vsel %vm3776, %v5652, %v5653
    %v5655 = vrot.slane %v4030, 5
    %v5656 = vsel %vm3776, %v5653, %v5655
    %v5657 = vrot.slane %v3999, 5
    %v5658 = vrot.slane %v3869, 5
    %v5659 = vsel %vm3776, %v5657, %v5658
    %v5660 = vrot.slane %v4031, 5
    %v5661 = vsel %vm3776, %v5658, %v5660
    %v5662 = vrot.slane %v4000, 5
    %v5663 = vrot.slane %v3872, 5
    %v5664 = vsel %vm3776, %v5662, %v5663
    %v5665 = vrot.slane %v4032, 5
    %v5666 = vsel %vm3776, %v5663, %v5665
    %5667 = vrot.lane.b32.xlu0 %v5509, 40
    %v5668 = vpop.permute.xlu0 %5667
    %5669 = vrot.lane.b32.xlu0 %v5511, 40
    %v5670 = vpop.permute.xlu0 %5669
    %5671 = vrot.lane.b32.xlu0 %v5514, 40
    %v5672 = vpop.permute.xlu0 %5671
    %5673 = vrot.lane.b32.xlu0 %v5516, 40
    %v5674 = vpop.permute.xlu0 %5673
    %5675 = vrot.lane.b32.xlu0 %v5519, 40
    %v5676 = vpop.permute.xlu0 %5675
    %5677 = vrot.lane.b32.xlu0 %v5521, 40
    %v5678 = vpop.permute.xlu0 %5677
    %5679 = vrot.lane.b32.xlu0 %v5524, 40
    %v5680 = vpop.permute.xlu0 %5679
    %5681 = vrot.lane.b32.xlu0 %v5526, 40
    %v5682 = vpop.permute.xlu0 %5681
    %5683 = vrot.lane.b32.xlu0 %v5529, 40
    %v5684 = vpop.permute.xlu0 %5683
    %5685 = vrot.lane.b32.xlu0 %v5531, 40
    %v5686 = vpop.permute.xlu0 %5685
    %5687 = vrot.lane.b32.xlu0 %v5534, 40
    %v5688 = vpop.permute.xlu0 %5687
    %5689 = vrot.lane.b32.xlu0 %v5536, 40
    %v5690 = vpop.permute.xlu0 %5689
    %5691 = vrot.lane.b32.xlu0 %v5539, 40
    %v5692 = vpop.permute.xlu0 %5691
    %5693 = vrot.lane.b32.xlu0 %v5541, 40
    %v5694 = vpop.permute.xlu0 %5693
    %5695 = vrot.lane.b32.xlu0 %v5544, 40
    %v5696 = vpop.permute.xlu0 %5695
    %5697 = vrot.lane.b32.xlu0 %v5546, 40
    %v5698 = vpop.permute.xlu0 %5697
    %5699 = vrot.lane.b32.xlu0 %v5549, 40
    %v5700 = vpop.permute.xlu0 %5699
    %5701 = vrot.lane.b32.xlu0 %v5551, 40
    %v5702 = vpop.permute.xlu0 %5701
    %5703 = vrot.lane.b32.xlu0 %v5554, 40
    %v5704 = vpop.permute.xlu0 %5703
    %5705 = vrot.lane.b32.xlu0 %v5556, 40
    %v5706 = vpop.permute.xlu0 %5705
    %5707 = vrot.lane.b32.xlu0 %v5559, 40
    %v5708 = vpop.permute.xlu0 %5707
    %5709 = vrot.lane.b32.xlu0 %v5561, 40
    %v5710 = vpop.permute.xlu0 %5709
    %5711 = vrot.lane.b32.xlu0 %v5564, 40
    %v5712 = vpop.permute.xlu0 %5711
    %5713 = vrot.lane.b32.xlu0 %v5566, 40
    %v5714 = vpop.permute.xlu0 %5713
    %5715 = vrot.lane.b32.xlu0 %v5569, 40
    %v5716 = vpop.permute.xlu0 %5715
    %5717 = vrot.lane.b32.xlu0 %v5571, 40
    %v5718 = vpop.permute.xlu0 %5717
    %5719 = vrot.lane.b32.xlu0 %v5574, 40
    %v5720 = vpop.permute.xlu0 %5719
    %5721 = vrot.lane.b32.xlu0 %v5576, 40
    %v5722 = vpop.permute.xlu0 %5721
    %5723 = vrot.lane.b32.xlu0 %v5579, 40
    %v5724 = vpop.permute.xlu0 %5723
    %5725 = vrot.lane.b32.xlu0 %v5581, 40
    %v5726 = vpop.permute.xlu0 %5725
    %5727 = vrot.lane.b32.xlu0 %v5584, 40
    %v5728 = vpop.permute.xlu0 %5727
    %5729 = vrot.lane.b32.xlu0 %v5586, 40
    %v5730 = vpop.permute.xlu0 %5729
    %5731 = vrot.lane.b32.xlu0 %v5589, 40
    %v5732 = vpop.permute.xlu0 %5731
    %5733 = vrot.lane.b32.xlu0 %v5591, 40
    %v5734 = vpop.permute.xlu0 %5733
    %5735 = vrot.lane.b32.xlu0 %v5594, 40
    %v5736 = vpop.permute.xlu0 %5735
    %5737 = vrot.lane.b32.xlu0 %v5596, 40
    %v5738 = vpop.permute.xlu0 %5737
    %5739 = vrot.lane.b32.xlu0 %v5599, 40
    %v5740 = vpop.permute.xlu0 %5739
    %5741 = vrot.lane.b32.xlu0 %v5601, 40
    %v5742 = vpop.permute.xlu0 %5741
    %5743 = vrot.lane.b32.xlu0 %v5604, 40
    %v5744 = vpop.permute.xlu0 %5743
    %5745 = vrot.lane.b32.xlu0 %v5606, 40
    %v5746 = vpop.permute.xlu0 %5745
    %5747 = vrot.lane.b32.xlu0 %v5609, 40
    %v5748 = vpop.permute.xlu0 %5747
    %5749 = vrot.lane.b32.xlu0 %v5611, 40
    %v5750 = vpop.permute.xlu0 %5749
    %5751 = vrot.lane.b32.xlu0 %v5614, 40
    %v5752 = vpop.permute.xlu0 %5751
    %5753 = vrot.lane.b32.xlu0 %v5616, 40
    %v5754 = vpop.permute.xlu0 %5753
    %5755 = vrot.lane.b32.xlu0 %v5619, 40
    %v5756 = vpop.permute.xlu0 %5755
    %5757 = vrot.lane.b32.xlu0 %v5621, 40
    %v5758 = vpop.permute.xlu0 %5757
    %5759 = vrot.lane.b32.xlu0 %v5624, 40
    %v5760 = vpop.permute.xlu0 %5759
    %5761 = vrot.lane.b32.xlu0 %v5626, 40
    %v5762 = vpop.permute.xlu0 %5761
    %5763 = vrot.lane.b32.xlu0 %v5629, 40
    %v5764 = vpop.permute.xlu0 %5763
    %5765 = vrot.lane.b32.xlu0 %v5631, 40
    %v5766 = vpop.permute.xlu0 %5765
    %5767 = vrot.lane.b32.xlu0 %v5634, 40
    %v5768 = vpop.permute.xlu0 %5767
    %5769 = vrot.lane.b32.xlu0 %v5636, 40
    %v5770 = vpop.permute.xlu0 %5769
    %5771 = vrot.lane.b32.xlu0 %v5639, 40
    %v5772 = vpop.permute.xlu0 %5771
    %5773 = vrot.lane.b32.xlu0 %v5641, 40
    %v5774 = vpop.permute.xlu0 %5773
    %5775 = vrot.lane.b32.xlu0 %v5644, 40
    %v5776 = vpop.permute.xlu0 %5775
    %5777 = vrot.lane.b32.xlu0 %v5646, 40
    %v5778 = vpop.permute.xlu0 %5777
    %5779 = vrot.lane.b32.xlu0 %v5649, 40
    %v5780 = vpop.permute.xlu0 %5779
    %5781 = vrot.lane.b32.xlu0 %v5651, 40
    %v5782 = vpop.permute.xlu0 %5781
    %5783 = vrot.lane.b32.xlu0 %v5654, 40
    %v5784 = vpop.permute.xlu0 %5783
    %5785 = vrot.lane.b32.xlu0 %v5656, 40
    %v5786 = vpop.permute.xlu0 %5785
    %5787 = vrot.lane.b32.xlu0 %v5659, 40
    %v5788 = vpop.permute.xlu0 %5787
    %5789 = vrot.lane.b32.xlu0 %v5661, 40
    %v5790 = vpop.permute.xlu0 %5789
    %5791 = vrot.lane.b32.xlu0 %v5664, 40
    %v5792 = vpop.permute.xlu0 %5791
    %5793 = vrot.lane.b32.xlu0 %v5666, 40
    %v5794 = vpop.permute.xlu0 %5793
    %vm5859 = vcmask 1041408
    %v5860 = vrot.slane %v3969, 6
    %v5861 = vrot.slane %v3779, 6
    %v5862 = vsel %vm5859, %v5860, %v5861
    %v5863 = vrot.slane %v4001, 6
    %v5864 = vsel %vm5859, %v5861, %v5863
    %v5865 = vrot.slane %v3970, 6
    %v5866 = vrot.slane %v3782, 6
    %v5867 = vsel %vm5859, %v5865, %v5866
    %v5868 = vrot.slane %v4002, 6
    %v5869 = vsel %vm5859, %v5866, %v5868
    %v5870 = vrot.slane %v3971, 6
    %v5871 = vrot.slane %v3785, 6
    %v5872 = vsel %vm5859, %v5870, %v5871
    %v5873 = vrot.slane %v4003, 6
    %v5874 = vsel %vm5859, %v5871, %v5873
    %v5875 = vrot.slane %v3972, 6
    %v5876 = vrot.slane %v3788, 6
    %v5877 = vsel %vm5859, %v5875, %v5876
    %v5878 = vrot.slane %v4004, 6
    %v5879 = vsel %vm5859, %v5876, %v5878
    %v5880 = vrot.slane %v3973, 6
    %v5881 = vrot.slane %v3791, 6
    %v5882 = vsel %vm5859, %v5880, %v5881
    %v5883 = vrot.slane %v4005, 6
    %v5884 = vsel %vm5859, %v5881, %v5883
    %v5885 = vrot.slane %v3974, 6
    %v5886 = vrot.slane %v3794, 6
    %v5887 = vsel %vm5859, %v5885, %v5886
    %v5888 = vrot.slane %v4006, 6
    %v5889 = vsel %vm5859, %v5886, %v5888
    %v5890 = vrot.slane %v3975, 6
    %v5891 = vrot.slane %v3797, 6
    %v5892 = vsel %vm5859, %v5890, %v5891
    %v5893 = vrot.slane %v4007, 6
    %v5894 = vsel %vm5859, %v5891, %v5893
    %v5895 = vrot.slane %v3976, 6
    %v5896 = vrot.slane %v3800, 6
    %v5897 = vsel %vm5859, %v5895, %v5896
    %v5898 = vrot.slane %v4008, 6
    %v5899 = vsel %vm5859, %v5896, %v5898
    %v5900 = vrot.slane %v3977, 6
    %v5901 = vrot.slane %v3803, 6
    %v5902 = vsel %vm5859, %v5900, %v5901
    %v5903 = vrot.slane %v4009, 6
    %v5904 = vsel %vm5859, %v5901, %v5903
    %v5905 = vrot.slane %v3978, 6
    %v5906 = vrot.slane %v3806, 6
    %v5907 = vsel %vm5859, %v5905, %v5906
    %v5908 = vrot.slane %v4010, 6
    %v5909 = vsel %vm5859, %v5906, %v5908
    %v5910 = vrot.slane %v3979, 6
    %v5911 = vrot.slane %v3809, 6
    %v5912 = vsel %vm5859, %v5910, %v5911
    %v5913 = vrot.slane %v4011, 6
    %v5914 = vsel %vm5859, %v5911, %v5913
    %v5915 = vrot.slane %v3980, 6
    %v5916 = vrot.slane %v3812, 6
    %v5917 = vsel %vm5859, %v5915, %v5916
    %v5918 = vrot.slane %v4012, 6
    %v5919 = vsel %vm5859, %v5916, %v5918
    %v5920 = vrot.slane %v3981, 6
    %v5921 = vrot.slane %v3815, 6
    %v5922 = vsel %vm5859, %v5920, %v5921
    %v5923 = vrot.slane %v4013, 6
    %v5924 = vsel %vm5859, %v5921, %v5923
    %v5925 = vrot.slane %v3982, 6
    %v5926 = vrot.slane %v3818, 6
    %v5927 = vsel %vm5859, %v5925, %v5926
    %v5928 = vrot.slane %v4014, 6
    %v5929 = vsel %vm5859, %v5926, %v5928
    %v5930 = vrot.slane %v3983, 6
    %v5931 = vrot.slane %v3821, 6
    %v5932 = vsel %vm5859, %v5930, %v5931
    %v5933 = vrot.slane %v4015, 6
    %v5934 = vsel %vm5859, %v5931, %v5933
    %v5935 = vrot.slane %v3984, 6
    %v5936 = vrot.slane %v3824, 6
    %v5937 = vsel %vm5859, %v5935, %v5936
    %v5938 = vrot.slane %v4016, 6
    %v5939 = vsel %vm5859, %v5936, %v5938
    %v5940 = vrot.slane %v3985, 6
    %v5941 = vrot.slane %v3827, 6
    %v5942 = vsel %vm5859, %v5940, %v5941
    %v5943 = vrot.slane %v4017, 6
    %v5944 = vsel %vm5859, %v5941, %v5943
    %v5945 = vrot.slane %v3986, 6
    %v5946 = vrot.slane %v3830, 6
    %v5947 = vsel %vm5859, %v5945, %v5946
    %v5948 = vrot.slane %v4018, 6
    %v5949 = vsel %vm5859, %v5946, %v5948
    %v5950 = vrot.slane %v3987, 6
    %v5951 = vrot.slane %v3833, 6
    %v5952 = vsel %vm5859, %v5950, %v5951
    %v5953 = vrot.slane %v4019, 6
    %v5954 = vsel %vm5859, %v5951, %v5953
    %v5955 = vrot.slane %v3988, 6
    %v5956 = vrot.slane %v3836, 6
    %v5957 = vsel %vm5859, %v5955, %v5956
    %v5958 = vrot.slane %v4020, 6
    %v5959 = vsel %vm5859, %v5956, %v5958
    %v5960 = vrot.slane %v3989, 6
    %v5961 = vrot.slane %v3839, 6
    %v5962 = vsel %vm5859, %v5960, %v5961
    %v5963 = vrot.slane %v4021, 6
    %v5964 = vsel %vm5859, %v5961, %v5963
    %v5965 = vrot.slane %v3990, 6
    %v5966 = vrot.slane %v3842, 6
    %v5967 = vsel %vm5859, %v5965, %v5966
    %v5968 = vrot.slane %v4022, 6
    %v5969 = vsel %vm5859, %v5966, %v5968
    %v5970 = vrot.slane %v3991, 6
    %v5971 = vrot.slane %v3845, 6
    %v5972 = vsel %vm5859, %v5970, %v5971
    %v5973 = vrot.slane %v4023, 6
    %v5974 = vsel %vm5859, %v5971, %v5973
    %v5975 = vrot.slane %v3992, 6
    %v5976 = vrot.slane %v3848, 6
    %v5977 = vsel %vm5859, %v5975, %v5976
    %v5978 = vrot.slane %v4024, 6
    %v5979 = vsel %vm5859, %v5976, %v5978
    %v5980 = vrot.slane %v3993, 6
    %v5981 = vrot.slane %v3851, 6
    %v5982 = vsel %vm5859, %v5980, %v5981
    %v5983 = vrot.slane %v4025, 6
    %v5984 = vsel %vm5859, %v5981, %v5983
    %v5985 = vrot.slane %v3994, 6
    %v5986 = vrot.slane %v3854, 6
    %v5987 = vsel %vm5859, %v5985, %v5986
    %v5988 = vrot.slane %v4026, 6
    %v5989 = vsel %vm5859, %v5986, %v5988
    %v5990 = vrot.slane %v3995, 6
    %v5991 = vrot.slane %v3857, 6
    %v5992 = vsel %vm5859, %v5990, %v5991
    %v5993 = vrot.slane %v4027, 6
    %v5994 = vsel %vm5859, %v5991, %v5993
    %v5995 = vrot.slane %v3996, 6
    %v5996 = vrot.slane %v3860, 6
    %v5997 = vsel %vm5859, %v5995, %v5996
    %v5998 = vrot.slane %v4028, 6
    %v5999 = vsel %vm5859, %v5996, %v5998
    %v6000 = vrot.slane %v3997, 6
    %v6001 = vrot.slane %v3863, 6
    %v6002 = vsel %vm5859, %v6000, %v6001
    %v6003 = vrot.slane %v4029, 6
    %v6004 = vsel %vm5859, %v6001, %v6003
    %v6005 = vrot.slane %v3998, 6
    %v6006 = vrot.slane %v3866, 6
    %v6007 = vsel %vm5859, %v6005, %v6006
    %v6008 = vrot.slane %v4030, 6
    %v6009 = vsel %vm5859, %v6006, %v6008
    %v6010 = vrot.slane %v3999, 6
    %v6011 = vrot.slane %v3869, 6
    %v6012 = vsel %vm5859, %v6010, %v6011
    %v6013 = vrot.slane %v4031, 6
    %v6014 = vsel %vm5859, %v6011, %v6013
    %v6015 = vrot.slane %v4000, 6
    %v6016 = vrot.slane %v3872, 6
    %v6017 = vsel %vm5859, %v6015, %v6016
    %v6018 = vrot.slane %v4032, 6
    %v6019 = vsel %vm5859, %v6016, %v6018
    %6020 = vrot.lane.b32.xlu0 %v5862, 48
    %v6021 = vpop.permute.xlu0 %6020
    %6022 = vrot.lane.b32.xlu0 %v5864, 48
    %v6023 = vpop.permute.xlu0 %6022
    %6024 = vrot.lane.b32.xlu0 %v5867, 48
    %v6025 = vpop.permute.xlu0 %6024
    %6026 = vrot.lane.b32.xlu0 %v5869, 48
    %v6027 = vpop.permute.xlu0 %6026
    %6028 = vrot.lane.b32.xlu0 %v5872, 48
    %v6029 = vpop.permute.xlu0 %6028
    %6030 = vrot.lane.b32.xlu0 %v5874, 48
    %v6031 = vpop.permute.xlu0 %6030
    %6032 = vrot.lane.b32.xlu0 %v5877, 48
    %v6033 = vpop.permute.xlu0 %6032
    %6034 = vrot.lane.b32.xlu0 %v5879, 48
    %v6035 = vpop.permute.xlu0 %6034
    %6036 = vrot.lane.b32.xlu0 %v5882, 48
    %v6037 = vpop.permute.xlu0 %6036
    %6038 = vrot.lane.b32.xlu0 %v5884, 48
    %v6039 = vpop.permute.xlu0 %6038
    %6040 = vrot.lane.b32.xlu0 %v5887, 48
    %v6041 = vpop.permute.xlu0 %6040
    %6042 = vrot.lane.b32.xlu0 %v5889, 48
    %v6043 = vpop.permute.xlu0 %6042
    %6044 = vrot.lane.b32.xlu0 %v5892, 48
    %v6045 = vpop.permute.xlu0 %6044
    %6046 = vrot.lane.b32.xlu0 %v5894, 48
    %v6047 = vpop.permute.xlu0 %6046
    %6048 = vrot.lane.b32.xlu0 %v5897, 48
    %v6049 = vpop.permute.xlu0 %6048
    %6050 = vrot.lane.b32.xlu0 %v5899, 48
    %v6051 = vpop.permute.xlu0 %6050
    %6052 = vrot.lane.b32.xlu0 %v5902, 48
    %v6053 = vpop.permute.xlu0 %6052
    %6054 = vrot.lane.b32.xlu0 %v5904, 48
    %v6055 = vpop.permute.xlu0 %6054
    %6056 = vrot.lane.b32.xlu0 %v5907, 48
    %v6057 = vpop.permute.xlu0 %6056
    %6058 = vrot.lane.b32.xlu0 %v5909, 48
    %v6059 = vpop.permute.xlu0 %6058
    %6060 = vrot.lane.b32.xlu0 %v5912, 48
    %v6061 = vpop.permute.xlu0 %6060
    %6062 = vrot.lane.b32.xlu0 %v5914, 48
    %v6063 = vpop.permute.xlu0 %6062
    %6064 = vrot.lane.b32.xlu0 %v5917, 48
    %v6065 = vpop.permute.xlu0 %6064
    %6066 = vrot.lane.b32.xlu0 %v5919, 48
    %v6067 = vpop.permute.xlu0 %6066
    %6068 = vrot.lane.b32.xlu0 %v5922, 48
    %v6069 = vpop.permute.xlu0 %6068
    %6070 = vrot.lane.b32.xlu0 %v5924, 48
    %v6071 = vpop.permute.xlu0 %6070
    %6072 = vrot.lane.b32.xlu0 %v5927, 48
    %v6073 = vpop.permute.xlu0 %6072
    %6074 = vrot.lane.b32.xlu0 %v5929, 48
    %v6075 = vpop.permute.xlu0 %6074
    %6076 = vrot.lane.b32.xlu0 %v5932, 48
    %v6077 = vpop.permute.xlu0 %6076
    %6078 = vrot.lane.b32.xlu0 %v5934, 48
    %v6079 = vpop.permute.xlu0 %6078
    %6080 = vrot.lane.b32.xlu0 %v5937, 48
    %v6081 = vpop.permute.xlu0 %6080
    %6082 = vrot.lane.b32.xlu0 %v5939, 48
    %v6083 = vpop.permute.xlu0 %6082
    %6084 = vrot.lane.b32.xlu0 %v5942, 48
    %v6085 = vpop.permute.xlu0 %6084
    %6086 = vrot.lane.b32.xlu0 %v5944, 48
    %v6087 = vpop.permute.xlu0 %6086
    %6088 = vrot.lane.b32.xlu0 %v5947, 48
    %v6089 = vpop.permute.xlu0 %6088
    %6090 = vrot.lane.b32.xlu0 %v5949, 48
    %v6091 = vpop.permute.xlu0 %6090
    %6092 = vrot.lane.b32.xlu0 %v5952, 48
    %v6093 = vpop.permute.xlu0 %6092
    %6094 = vrot.lane.b32.xlu0 %v5954, 48
    %v6095 = vpop.permute.xlu0 %6094
    %6096 = vrot.lane.b32.xlu0 %v5957, 48
    %v6097 = vpop.permute.xlu0 %6096
    %6098 = vrot.lane.b32.xlu0 %v5959, 48
    %v6099 = vpop.permute.xlu0 %6098
    %6100 = vrot.lane.b32.xlu0 %v5962, 48
    %v6101 = vpop.permute.xlu0 %6100
    %6102 = vrot.lane.b32.xlu0 %v5964, 48
    %v6103 = vpop.permute.xlu0 %6102
    %6104 = vrot.lane.b32.xlu0 %v5967, 48
    %v6105 = vpop.permute.xlu0 %6104
    %6106 = vrot.lane.b32.xlu0 %v5969, 48
    %v6107 = vpop.permute.xlu0 %6106
    %6108 = vrot.lane.b32.xlu0 %v5972, 48
    %v6109 = vpop.permute.xlu0 %6108
    %6110 = vrot.lane.b32.xlu0 %v5974, 48
    %v6111 = vpop.permute.xlu0 %6110
    %6112 = vrot.lane.b32.xlu0 %v5977, 48
    %v6113 = vpop.permute.xlu0 %6112
    %6114 = vrot.lane.b32.xlu0 %v5979, 48
    %v6115 = vpop.permute.xlu0 %6114
    %6116 = vrot.lane.b32.xlu0 %v5982, 48
    %v6117 = vpop.permute.xlu0 %6116
    %6118 = vrot.lane.b32.xlu0 %v5984, 48
    %v6119 = vpop.permute.xlu0 %6118
    %6120 = vrot.lane.b32.xlu0 %v5987, 48
    %v6121 = vpop.permute.xlu0 %6120
    %6122 = vrot.lane.b32.xlu0 %v5989, 48
    %v6123 = vpop.permute.xlu0 %6122
    %6124 = vrot.lane.b32.xlu0 %v5992, 48
    %v6125 = vpop.permute.xlu0 %6124
    %6126 = vrot.lane.b32.xlu0 %v5994, 48
    %v6127 = vpop.permute.xlu0 %6126
    %6128 = vrot.lane.b32.xlu0 %v5997, 48
    %v6129 = vpop.permute.xlu0 %6128
    %6130 = vrot.lane.b32.xlu0 %v5999, 48
    %v6131 = vpop.permute.xlu0 %6130
    %6132 = vrot.lane.b32.xlu0 %v6002, 48
    %v6133 = vpop.permute.xlu0 %6132
    %6134 = vrot.lane.b32.xlu0 %v6004, 48
    %v6135 = vpop.permute.xlu0 %6134
    %6136 = vrot.lane.b32.xlu0 %v6007, 48
    %v6137 = vpop.permute.xlu0 %6136
    %6138 = vrot.lane.b32.xlu0 %v6009, 48
    %v6139 = vpop.permute.xlu0 %6138
    %6140 = vrot.lane.b32.xlu0 %v6012, 48
    %v6141 = vpop.permute.xlu0 %6140
    %6142 = vrot.lane.b32.xlu0 %v6014, 48
    %v6143 = vpop.permute.xlu0 %6142
    %6144 = vrot.lane.b32.xlu0 %v6017, 48
    %v6145 = vpop.permute.xlu0 %6144
    %6146 = vrot.lane.b32.xlu0 %v6019, 48
    %v6147 = vpop.permute.xlu0 %6146
    %vm6212 = vcmask 64512
    %v6213 = vsel %vm6212, %v3969, %v4258
    %v6214 = vsel %vm6212, %v3779, %v4260
    %v6215 = vsel %vm6212, %v3970, %v4262
    %v6216 = vsel %vm6212, %v3782, %v4264
    %v6217 = vsel %vm6212, %v3971, %v4266
    %v6218 = vsel %vm6212, %v3785, %v4268
    %v6219 = vsel %vm6212, %v3972, %v4270
    %v6220 = vsel %vm6212, %v3788, %v4272
    %v6221 = vsel %vm6212, %v3973, %v4274
    %v6222 = vsel %vm6212, %v3791, %v4276
    %v6223 = vsel %vm6212, %v3974, %v4278
    %v6224 = vsel %vm6212, %v3794, %v4280
    %v6225 = vsel %vm6212, %v3975, %v4282
    %v6226 = vsel %vm6212, %v3797, %v4284
    %v6227 = vsel %vm6212, %v3976, %v4286
    %v6228 = vsel %vm6212, %v3800, %v4288
    %v6229 = vsel %vm6212, %v3977, %v4290
    %v6230 = vsel %vm6212, %v3803, %v4292
    %v6231 = vsel %vm6212, %v3978, %v4294
    %v6232 = vsel %vm6212, %v3806, %v4296
    %v6233 = vsel %vm6212, %v3979, %v4298
    %v6234 = vsel %vm6212, %v3809, %v4300
    %v6235 = vsel %vm6212, %v3980, %v4302
    %v6236 = vsel %vm6212, %v3812, %v4304
    %v6237 = vsel %vm6212, %v3981, %v4306
    %v6238 = vsel %vm6212, %v3815, %v4308
    %v6239 = vsel %vm6212, %v3982, %v4310
    %v6240 = vsel %vm6212, %v3818, %v4312
    %v6241 = vsel %vm6212, %v3983, %v4314
    %v6242 = vsel %vm6212, %v3821, %v4316
    %v6243 = vsel %vm6212, %v3984, %v4318
    %v6244 = vsel %vm6212, %v3824, %v4320
    %v6245 = vsel %vm6212, %v3985, %v4322
    %v6246 = vsel %vm6212, %v3827, %v4324
    %v6247 = vsel %vm6212, %v3986, %v4326
    %v6248 = vsel %vm6212, %v3830, %v4328
    %v6249 = vsel %vm6212, %v3987, %v4330
    %v6250 = vsel %vm6212, %v3833, %v4332
    %v6251 = vsel %vm6212, %v3988, %v4334
    %v6252 = vsel %vm6212, %v3836, %v4336
    %v6253 = vsel %vm6212, %v3989, %v4338
    %v6254 = vsel %vm6212, %v3839, %v4340
    %v6255 = vsel %vm6212, %v3990, %v4342
    %v6256 = vsel %vm6212, %v3842, %v4344
    %v6257 = vsel %vm6212, %v3991, %v4346
    %v6258 = vsel %vm6212, %v3845, %v4348
    %v6259 = vsel %vm6212, %v3992, %v4350
    %v6260 = vsel %vm6212, %v3848, %v4352
    %v6261 = vsel %vm6212, %v3993, %v4354
    %v6262 = vsel %vm6212, %v3851, %v4356
    %v6263 = vsel %vm6212, %v3994, %v4358
    %v6264 = vsel %vm6212, %v3854, %v4360
    %v6265 = vsel %vm6212, %v3995, %v4362
    %v6266 = vsel %vm6212, %v3857, %v4364
    %v6267 = vsel %vm6212, %v3996, %v4366
    %v6268 = vsel %vm6212, %v3860, %v4368
    %v6269 = vsel %vm6212, %v3997, %v4370
    %v6270 = vsel %vm6212, %v3863, %v4372
    %v6271 = vsel %vm6212, %v3998, %v4374
    %v6272 = vsel %vm6212, %v3866, %v4376
    %v6273 = vsel %vm6212, %v3999, %v4378
    %v6274 = vsel %vm6212, %v3869, %v4380
    %v6275 = vsel %vm6212, %v4000, %v4382
    %v6276 = vsel %vm6212, %v3872, %v4384
    %vm6277 = vcmask 130048
    %v6278 = vsel %vm6277, %v6213, %v4610
    %v6279 = vsel %vm6277, %v6214, %v4612
    %v6280 = vsel %vm6277, %v6215, %v4614
    %v6281 = vsel %vm6277, %v6216, %v4616
    %v6282 = vsel %vm6277, %v6217, %v4618
    %v6283 = vsel %vm6277, %v6218, %v4620
    %v6284 = vsel %vm6277, %v6219, %v4622
    %v6285 = vsel %vm6277, %v6220, %v4624
    %v6286 = vsel %vm6277, %v6221, %v4626
    %v6287 = vsel %vm6277, %v6222, %v4628
    %v6288 = vsel %vm6277, %v6223, %v4630
    %v6289 = vsel %vm6277, %v6224, %v4632
    %v6290 = vsel %vm6277, %v6225, %v4634
    %v6291 = vsel %vm6277, %v6226, %v4636
    %v6292 = vsel %vm6277, %v6227, %v4638
    %v6293 = vsel %vm6277, %v6228, %v4640
    %v6294 = vsel %vm6277, %v6229, %v4642
    %v6295 = vsel %vm6277, %v6230, %v4644
    %v6296 = vsel %vm6277, %v6231, %v4646
    %v6297 = vsel %vm6277, %v6232, %v4648
    %v6298 = vsel %vm6277, %v6233, %v4650
    %v6299 = vsel %vm6277, %v6234, %v4652
    %v6300 = vsel %vm6277, %v6235, %v4654
    %v6301 = vsel %vm6277, %v6236, %v4656
    %v6302 = vsel %vm6277, %v6237, %v4658
    %v6303 = vsel %vm6277, %v6238, %v4660
    %v6304 = vsel %vm6277, %v6239, %v4662
    %v6305 = vsel %vm6277, %v6240, %v4664
    %v6306 = vsel %vm6277, %v6241, %v4666
    %v6307 = vsel %vm6277, %v6242, %v4668
    %v6308 = vsel %vm6277, %v6243, %v4670
    %v6309 = vsel %vm6277, %v6244, %v4672
    %v6310 = vsel %vm6277, %v6245, %v4674
    %v6311 = vsel %vm6277, %v6246, %v4676
    %v6312 = vsel %vm6277, %v6247, %v4678
    %v6313 = vsel %vm6277, %v6248, %v4680
    %v6314 = vsel %vm6277, %v6249, %v4682
    %v6315 = vsel %vm6277, %v6250, %v4684
    %v6316 = vsel %vm6277, %v6251, %v4686
    %v6317 = vsel %vm6277, %v6252, %v4688
    %v6318 = vsel %vm6277, %v6253, %v4690
    %v6319 = vsel %vm6277, %v6254, %v4692
    %v6320 = vsel %vm6277, %v6255, %v4694
    %v6321 = vsel %vm6277, %v6256, %v4696
    %v6322 = vsel %vm6277, %v6257, %v4698
    %v6323 = vsel %vm6277, %v6258, %v4700
    %v6324 = vsel %vm6277, %v6259, %v4702
    %v6325 = vsel %vm6277, %v6260, %v4704
    %v6326 = vsel %vm6277, %v6261, %v4706
    %v6327 = vsel %vm6277, %v6262, %v4708
    %v6328 = vsel %vm6277, %v6263, %v4710
    %v6329 = vsel %vm6277, %v6264, %v4712
    %v6330 = vsel %vm6277, %v6265, %v4714
    %v6331 = vsel %vm6277, %v6266, %v4716
    %v6332 = vsel %vm6277, %v6267, %v4718
    %v6333 = vsel %vm6277, %v6268, %v4720
    %v6334 = vsel %vm6277, %v6269, %v4722
    %v6335 = vsel %vm6277, %v6270, %v4724
    %v6336 = vsel %vm6277, %v6271, %v4726
    %v6337 = vsel %vm6277, %v6272, %v4728
    %v6338 = vsel %vm6277, %v6273, %v4730
    %v6339 = vsel %vm6277, %v6274, %v4732
    %v6340 = vsel %vm6277, %v6275, %v4734
    %v6341 = vsel %vm6277, %v6276, %v4736
    %vm6342 = vcmask 195584
    %v6343 = vsel %vm6342, %v6278, %v4963
    %v6344 = vsel %vm6342, %v6279, %v4965
    %v6345 = vsel %vm6342, %v6280, %v4967
    %v6346 = vsel %vm6342, %v6281, %v4969
    %v6347 = vsel %vm6342, %v6282, %v4971
    %v6348 = vsel %vm6342, %v6283, %v4973
    %v6349 = vsel %vm6342, %v6284, %v4975
    %v6350 = vsel %vm6342, %v6285, %v4977
    %v6351 = vsel %vm6342, %v6286, %v4979
    %v6352 = vsel %vm6342, %v6287, %v4981
    %v6353 = vsel %vm6342, %v6288, %v4983
    %v6354 = vsel %vm6342, %v6289, %v4985
    %v6355 = vsel %vm6342, %v6290, %v4987
    %v6356 = vsel %vm6342, %v6291, %v4989
    %v6357 = vsel %vm6342, %v6292, %v4991
    %v6358 = vsel %vm6342, %v6293, %v4993
    %v6359 = vsel %vm6342, %v6294, %v4995
    %v6360 = vsel %vm6342, %v6295, %v4997
    %v6361 = vsel %vm6342, %v6296, %v4999
    %v6362 = vsel %vm6342, %v6297, %v5001
    %v6363 = vsel %vm6342, %v6298, %v5003
    %v6364 = vsel %vm6342, %v6299, %v5005
    %v6365 = vsel %vm6342, %v6300, %v5007
    %v6366 = vsel %vm6342, %v6301, %v5009
    %v6367 = vsel %vm6342, %v6302, %v5011
    %v6368 = vsel %vm6342, %v6303, %v5013
    %v6369 = vsel %vm6342, %v6304, %v5015
    %v6370 = vsel %vm6342, %v6305, %v5017
    %v6371 = vsel %vm6342, %v6306, %v5019
    %v6372 = vsel %vm6342, %v6307, %v5021
    %v6373 = vsel %vm6342, %v6308, %v5023
    %v6374 = vsel %vm6342, %v6309, %v5025
    %v6375 = vsel %vm6342, %v6310, %v5027
    %v6376 = vsel %vm6342, %v6311, %v5029
    %v6377 = vsel %vm6342, %v6312, %v5031
    %v6378 = vsel %vm6342, %v6313, %v5033
    %v6379 = vsel %vm6342, %v6314, %v5035
    %v6380 = vsel %vm6342, %v6315, %v5037
    %v6381 = vsel %vm6342, %v6316, %v5039
    %v6382 = vsel %vm6342, %v6317, %v5041
    %v6383 = vsel %vm6342, %v6318, %v5043
    %v6384 = vsel %vm6342, %v6319, %v5045
    %v6385 = vsel %vm6342, %v6320, %v5047
    %v6386 = vsel %vm6342, %v6321, %v5049
    %v6387 = vsel %vm6342, %v6322, %v5051
    %v6388 = vsel %vm6342, %v6323, %v5053
    %v6389 = vsel %vm6342, %v6324, %v5055
    %v6390 = vsel %vm6342, %v6325, %v5057
    %v6391 = vsel %vm6342, %v6326, %v5059
    %v6392 = vsel %vm6342, %v6327, %v5061
    %v6393 = vsel %vm6342, %v6328, %v5063
    %v6394 = vsel %vm6342, %v6329, %v5065
    %v6395 = vsel %vm6342, %v6330, %v5067
    %v6396 = vsel %vm6342, %v6331, %v5069
    %v6397 = vsel %vm6342, %v6332, %v5071
    %v6398 = vsel %vm6342, %v6333, %v5073
    %v6399 = vsel %vm6342, %v6334, %v5075
    %v6400 = vsel %vm6342, %v6335, %v5077
    %v6401 = vsel %vm6342, %v6336, %v5079
    %v6402 = vsel %vm6342, %v6337, %v5081
    %v6403 = vsel %vm6342, %v6338, %v5083
    %v6404 = vsel %vm6342, %v6339, %v5085
    %v6405 = vsel %vm6342, %v6340, %v5087
    %v6406 = vsel %vm6342, %v6341, %v5089
    %vm6407 = vcmask 261120
    %v6408 = vsel %vm6407, %v6343, %v5316
    %v6409 = vsel %vm6407, %v6344, %v5318
    %v6410 = vsel %vm6407, %v6345, %v5320
    %v6411 = vsel %vm6407, %v6346, %v5322
    %v6412 = vsel %vm6407, %v6347, %v5324
    %v6413 = vsel %vm6407, %v6348, %v5326
    %v6414 = vsel %vm6407, %v6349, %v5328
    %v6415 = vsel %vm6407, %v6350, %v5330
    %v6416 = vsel %vm6407, %v6351, %v5332
    %v6417 = vsel %vm6407, %v6352, %v5334
    %v6418 = vsel %vm6407, %v6353, %v5336
    %v6419 = vsel %vm6407, %v6354, %v5338
    %v6420 = vsel %vm6407, %v6355, %v5340
    %v6421 = vsel %vm6407, %v6356, %v5342
    %v6422 = vsel %vm6407, %v6357, %v5344
    %v6423 = vsel %vm6407, %v6358, %v5346
    %v6424 = vsel %vm6407, %v6359, %v5348
    %v6425 = vsel %vm6407, %v6360, %v5350
    %v6426 = vsel %vm6407, %v6361, %v5352
    %v6427 = vsel %vm6407, %v6362, %v5354
    %v6428 = vsel %vm6407, %v6363, %v5356
    %v6429 = vsel %vm6407, %v6364, %v5358
    %v6430 = vsel %vm6407, %v6365, %v5360
    %v6431 = vsel %vm6407, %v6366, %v5362
    %v6432 = vsel %vm6407, %v6367, %v5364
    %v6433 = vsel %vm6407, %v6368, %v5366
    %v6434 = vsel %vm6407, %v6369, %v5368
    %v6435 = vsel %vm6407, %v6370, %v5370
    %v6436 = vsel %vm6407, %v6371, %v5372
    %v6437 = vsel %vm6407, %v6372, %v5374
    %v6438 = vsel %vm6407, %v6373, %v5376
    %v6439 = vsel %vm6407, %v6374, %v5378
    %v6440 = vsel %vm6407, %v6375, %v5380
    %v6441 = vsel %vm6407, %v6376, %v5382
    %v6442 = vsel %vm6407, %v6377, %v5384
    %v6443 = vsel %vm6407, %v6378, %v5386
    %v6444 = vsel %vm6407, %v6379, %v5388
    %v6445 = vsel %vm6407, %v6380, %v5390
    %v6446 = vsel %vm6407, %v6381, %v5392
    %v6447 = vsel %vm6407, %v6382, %v5394
    %v6448 = vsel %vm6407, %v6383, %v5396
    %v6449 = vsel %vm6407, %v6384, %v5398
    %v6450 = vsel %vm6407, %v6385, %v5400
    %v6451 = vsel %vm6407, %v6386, %v5402
    %v6452 = vsel %vm6407, %v6387, %v5404
    %v6453 = vsel %vm6407, %v6388, %v5406
    %v6454 = vsel %vm6407, %v6389, %v5408
    %v6455 = vsel %vm6407, %v6390, %v5410
    %v6456 = vsel %vm6407, %v6391, %v5412
    %v6457 = vsel %vm6407, %v6392, %v5414
    %v6458 = vsel %vm6407, %v6393, %v5416
    %v6459 = vsel %vm6407, %v6394, %v5418
    %v6460 = vsel %vm6407, %v6395, %v5420
    %v6461 = vsel %vm6407, %v6396, %v5422
    %v6462 = vsel %vm6407, %v6397, %v5424
    %v6463 = vsel %vm6407, %v6398, %v5426
    %v6464 = vsel %vm6407, %v6399, %v5428
    %v6465 = vsel %vm6407, %v6400, %v5430
    %v6466 = vsel %vm6407, %v6401, %v5432
    %v6467 = vsel %vm6407, %v6402, %v5434
    %v6468 = vsel %vm6407, %v6403, %v5436
    %v6469 = vsel %vm6407, %v6404, %v5438
    %v6470 = vsel %vm6407, %v6405, %v5440
    %v6471 = vsel %vm6407, %v6406, %v5442
    %vm6472 = vcmask 326656
    %v6473 = vsel %vm6472, %v6408, %v5668
    %v6474 = vsel %vm6472, %v6409, %v5670
    %v6475 = vsel %vm6472, %v6410, %v5672
    %v6476 = vsel %vm6472, %v6411, %v5674
    %v6477 = vsel %vm6472, %v6412, %v5676
    %v6478 = vsel %vm6472, %v6413, %v5678
    %v6479 = vsel %vm6472, %v6414, %v5680
    %v6480 = vsel %vm6472, %v6415, %v5682
    %v6481 = vsel %vm6472, %v6416, %v5684
    %v6482 = vsel %vm6472, %v6417, %v5686
    %v6483 = vsel %vm6472, %v6418, %v5688
    %v6484 = vsel %vm6472, %v6419, %v5690
    %v6485 = vsel %vm6472, %v6420, %v5692
    %v6486 = vsel %vm6472, %v6421, %v5694
    %v6487 = vsel %vm6472, %v6422, %v5696
    %v6488 = vsel %vm6472, %v6423, %v5698
    %v6489 = vsel %vm6472, %v6424, %v5700
    %v6490 = vsel %vm6472, %v6425, %v5702
    %v6491 = vsel %vm6472, %v6426, %v5704
    %v6492 = vsel %vm6472, %v6427, %v5706
    %v6493 = vsel %vm6472, %v6428, %v5708
    %v6494 = vsel %vm6472, %v6429, %v5710
    %v6495 = vsel %vm6472, %v6430, %v5712
    %v6496 = vsel %vm6472, %v6431, %v5714
    %v6497 = vsel %vm6472, %v6432, %v5716
    %v6498 = vsel %vm6472, %v6433, %v5718
    %v6499 = vsel %vm6472, %v6434, %v5720
    %v6500 = vsel %vm6472, %v6435, %v5722
    %v6501 = vsel %vm6472, %v6436, %v5724
    %v6502 = vsel %vm6472, %v6437, %v5726
    %v6503 = vsel %vm6472, %v6438, %v5728
    %v6504 = vsel %vm6472, %v6439, %v5730
    %v6505 = vsel %vm6472, %v6440, %v5732
    %v6506 = vsel %vm6472, %v6441, %v5734
    %v6507 = vsel %vm6472, %v6442, %v5736
    %v6508 = vsel %vm6472, %v6443, %v5738
    %v6509 = vsel %vm6472, %v6444, %v5740
    %v6510 = vsel %vm6472, %v6445, %v5742
    %v6511 = vsel %vm6472, %v6446, %v5744
    %v6512 = vsel %vm6472, %v6447, %v5746
    %v6513 = vsel %vm6472, %v6448, %v5748
    %v6514 = vsel %vm6472, %v6449, %v5750
    %v6515 = vsel %vm6472, %v6450, %v5752
    %v6516 = vsel %vm6472, %v6451, %v5754
    %v6517 = vsel %vm6472, %v6452, %v5756
    %v6518 = vsel %vm6472, %v6453, %v5758
    %v6519 = vsel %vm6472, %v6454, %v5760
    %v6520 = vsel %vm6472, %v6455, %v5762
    %v6521 = vsel %vm6472, %v6456, %v5764
    %v6522 = vsel %vm6472, %v6457, %v5766
    %v6523 = vsel %vm6472, %v6458, %v5768
    %v6524 = vsel %vm6472, %v6459, %v5770
    %v6525 = vsel %vm6472, %v6460, %v5772
    %v6526 = vsel %vm6472, %v6461, %v5774
    %v6527 = vsel %vm6472, %v6462, %v5776
    %v6528 = vsel %vm6472, %v6463, %v5778
    %v6529 = vsel %vm6472, %v6464, %v5780
    %v6530 = vsel %vm6472, %v6465, %v5782
    %v6531 = vsel %vm6472, %v6466, %v5784
    %v6532 = vsel %vm6472, %v6467, %v5786
    %v6533 = vsel %vm6472, %v6468, %v5788
    %v6534 = vsel %vm6472, %v6469, %v5790
    %v6535 = vsel %vm6472, %v6470, %v5792
    %v6536 = vsel %vm6472, %v6471, %v5794
    %vm6537 = vcmask 392192
    %v6538 = vsel %vm6537, %v6473, %v6021
    %v6539 = vsel %vm6537, %v6474, %v6023
    %v6540 = vsel %vm6537, %v6475, %v6025
    %v6541 = vsel %vm6537, %v6476, %v6027
    %v6542 = vsel %vm6537, %v6477, %v6029
    %v6543 = vsel %vm6537, %v6478, %v6031
    %v6544 = vsel %vm6537, %v6479, %v6033
    %v6545 = vsel %vm6537, %v6480, %v6035
    %v6546 = vsel %vm6537, %v6481, %v6037
    %v6547 = vsel %vm6537, %v6482, %v6039
    %v6548 = vsel %vm6537, %v6483, %v6041
    %v6549 = vsel %vm6537, %v6484, %v6043
    %v6550 = vsel %vm6537, %v6485, %v6045
    %v6551 = vsel %vm6537, %v6486, %v6047
    %v6552 = vsel %vm6537, %v6487, %v6049
    %v6553 = vsel %vm6537, %v6488, %v6051
    %v6554 = vsel %vm6537, %v6489, %v6053
    %v6555 = vsel %vm6537, %v6490, %v6055
    %v6556 = vsel %vm6537, %v6491, %v6057
    %v6557 = vsel %vm6537, %v6492, %v6059
    %v6558 = vsel %vm6537, %v6493, %v6061
    %v6559 = vsel %vm6537, %v6494, %v6063
    %v6560 = vsel %vm6537, %v6495, %v6065
    %v6561 = vsel %vm6537, %v6496, %v6067
    %v6562 = vsel %vm6537, %v6497, %v6069
    %v6563 = vsel %vm6537, %v6498, %v6071
    %v6564 = vsel %vm6537, %v6499, %v6073
    %v6565 = vsel %vm6537, %v6500, %v6075
    %v6566 = vsel %vm6537, %v6501, %v6077
    %v6567 = vsel %vm6537, %v6502, %v6079
    %v6568 = vsel %vm6537, %v6503, %v6081
    %v6569 = vsel %vm6537, %v6504, %v6083
    %v6570 = vsel %vm6537, %v6505, %v6085
    %v6571 = vsel %vm6537, %v6506, %v6087
    %v6572 = vsel %vm6537, %v6507, %v6089
    %v6573 = vsel %vm6537, %v6508, %v6091
    %v6574 = vsel %vm6537, %v6509, %v6093
    %v6575 = vsel %vm6537, %v6510, %v6095
    %v6576 = vsel %vm6537, %v6511, %v6097
    %v6577 = vsel %vm6537, %v6512, %v6099
    %v6578 = vsel %vm6537, %v6513, %v6101
    %v6579 = vsel %vm6537, %v6514, %v6103
    %v6580 = vsel %vm6537, %v6515, %v6105
    %v6581 = vsel %vm6537, %v6516, %v6107
    %v6582 = vsel %vm6537, %v6517, %v6109
    %v6583 = vsel %vm6537, %v6518, %v6111
    %v6584 = vsel %vm6537, %v6519, %v6113
    %v6585 = vsel %vm6537, %v6520, %v6115
    %v6586 = vsel %vm6537, %v6521, %v6117
    %v6587 = vsel %vm6537, %v6522, %v6119
    %v6588 = vsel %vm6537, %v6523, %v6121
    %v6589 = vsel %vm6537, %v6524, %v6123
    %v6590 = vsel %vm6537, %v6525, %v6125
    %v6591 = vsel %vm6537, %v6526, %v6127
    %v6592 = vsel %vm6537, %v6527, %v6129
    %v6593 = vsel %vm6537, %v6528, %v6131
    %v6594 = vsel %vm6537, %v6529, %v6133
    %v6595 = vsel %vm6537, %v6530, %v6135
    %v6596 = vsel %vm6537, %v6531, %v6137
    %v6597 = vsel %vm6537, %v6532, %v6139
    %v6598 = vsel %vm6537, %v6533, %v6141
    %v6599 = vsel %vm6537, %v6534, %v6143
    %v6600 = vsel %vm6537, %v6535, %v6145
    %v6601 = vsel %vm6537, %v6536, %v6147
    %6659 = vrot.lane.b32.xlu0 0.0, 56
    %v6660 = vpop.permute.xlu0 %6659
    %6661 = vrot.lane.b32.xlu0 %v6538, 56
    %v6662 = vpop.permute.xlu0 %6661
    %6663 = vrot.lane.b32.xlu0 %v6539, 56
    %v6664 = vpop.permute.xlu0 %6663
    %6665 = vrot.lane.b32.xlu0 %v6540, 56
    %v6666 = vpop.permute.xlu0 %6665
    %6667 = vrot.lane.b32.xlu0 %v6541, 56
    %v6668 = vpop.permute.xlu0 %6667
    %6669 = vrot.lane.b32.xlu0 %v6542, 56
    %v6670 = vpop.permute.xlu0 %6669
    %6671 = vrot.lane.b32.xlu0 %v6543, 56
    %v6672 = vpop.permute.xlu0 %6671
    %6673 = vrot.lane.b32.xlu0 %v6544, 56
    %v6674 = vpop.permute.xlu0 %6673
    %6675 = vrot.lane.b32.xlu0 %v6545, 56
    %v6676 = vpop.permute.xlu0 %6675
    %6677 = vrot.lane.b32.xlu0 %v6546, 56
    %v6678 = vpop.permute.xlu0 %6677
    %6679 = vrot.lane.b32.xlu0 %v6547, 56
    %v6680 = vpop.permute.xlu0 %6679
    %6681 = vrot.lane.b32.xlu0 %v6548, 56
    %v6682 = vpop.permute.xlu0 %6681
    %6683 = vrot.lane.b32.xlu0 %v6549, 56
    %v6684 = vpop.permute.xlu0 %6683
    %6685 = vrot.lane.b32.xlu0 %v6550, 56
    %v6686 = vpop.permute.xlu0 %6685
    %6687 = vrot.lane.b32.xlu0 %v6551, 56
    %v6688 = vpop.permute.xlu0 %6687
    %6689 = vrot.lane.b32.xlu0 %v6552, 56
    %v6690 = vpop.permute.xlu0 %6689
    %6691 = vrot.lane.b32.xlu0 %v6553, 56
    %v6692 = vpop.permute.xlu0 %6691
    %6693 = vrot.lane.b32.xlu0 %v6554, 56
    %v6694 = vpop.permute.xlu0 %6693
    %6695 = vrot.lane.b32.xlu0 %v6555, 56
    %v6696 = vpop.permute.xlu0 %6695
    %6697 = vrot.lane.b32.xlu0 %v6556, 56
    %v6698 = vpop.permute.xlu0 %6697
    %6699 = vrot.lane.b32.xlu0 %v6557, 56
    %v6700 = vpop.permute.xlu0 %6699
    %6701 = vrot.lane.b32.xlu0 %v6558, 56
    %v6702 = vpop.permute.xlu0 %6701
    %6703 = vrot.lane.b32.xlu0 %v6559, 56
    %v6704 = vpop.permute.xlu0 %6703
    %6705 = vrot.lane.b32.xlu0 %v6560, 56
    %v6706 = vpop.permute.xlu0 %6705
    %6707 = vrot.lane.b32.xlu0 %v6561, 56
    %v6708 = vpop.permute.xlu0 %6707
    %6709 = vrot.lane.b32.xlu0 %v6562, 56
    %v6710 = vpop.permute.xlu0 %6709
    %6711 = vrot.lane.b32.xlu0 %v6563, 56
    %v6712 = vpop.permute.xlu0 %6711
    %6713 = vrot.lane.b32.xlu0 %v6564, 56
    %v6714 = vpop.permute.xlu0 %6713
    %6715 = vrot.lane.b32.xlu0 %v6565, 56
    %v6716 = vpop.permute.xlu0 %6715
    %6717 = vrot.lane.b32.xlu0 %v6570, 56
    %v6718 = vpop.permute.xlu0 %6717
    %6719 = vrot.lane.b32.xlu0 %v6571, 56
    %v6720 = vpop.permute.xlu0 %6719
    %6721 = vrot.lane.b32.xlu0 %v6572, 56
    %v6722 = vpop.permute.xlu0 %6721
    %6723 = vrot.lane.b32.xlu0 %v6573, 56
    %v6724 = vpop.permute.xlu0 %6723
    %6725 = vrot.lane.b32.xlu0 %v6574, 56
    %v6726 = vpop.permute.xlu0 %6725
    %6727 = vrot.lane.b32.xlu0 %v6575, 56
    %v6728 = vpop.permute.xlu0 %6727
    %6729 = vrot.lane.b32.xlu0 %v6576, 56
    %v6730 = vpop.permute.xlu0 %6729
    %6731 = vrot.lane.b32.xlu0 %v6577, 56
    %v6732 = vpop.permute.xlu0 %6731
    %6733 = vrot.lane.b32.xlu0 %v6578, 56
    %v6734 = vpop.permute.xlu0 %6733
    %6735 = vrot.lane.b32.xlu0 %v6579, 56
    %v6736 = vpop.permute.xlu0 %6735
    %6737 = vrot.lane.b32.xlu0 %v6580, 56
    %v6738 = vpop.permute.xlu0 %6737
    %6739 = vrot.lane.b32.xlu0 %v6581, 56
    %v6740 = vpop.permute.xlu0 %6739
    %6741 = vrot.lane.b32.xlu0 %v6582, 56
    %v6742 = vpop.permute.xlu0 %6741
    %6743 = vrot.lane.b32.xlu0 %v6583, 56
    %v6744 = vpop.permute.xlu0 %6743
    %6745 = vrot.lane.b32.xlu0 %v6584, 56
    %v6746 = vpop.permute.xlu0 %6745
    %6747 = vrot.lane.b32.xlu0 %v6585, 56
    %v6748 = vpop.permute.xlu0 %6747
    %6749 = vrot.lane.b32.xlu0 %v6586, 56
    %v6750 = vpop.permute.xlu0 %6749
    %6751 = vrot.lane.b32.xlu0 %v6587, 56
    %v6752 = vpop.permute.xlu0 %6751
    %6753 = vrot.lane.b32.xlu0 %v6588, 56
    %v6754 = vpop.permute.xlu0 %6753
    %6755 = vrot.lane.b32.xlu0 %v6589, 56
    %v6756 = vpop.permute.xlu0 %6755
    %6757 = vrot.lane.b32.xlu0 %v6590, 56
    %v6758 = vpop.permute.xlu0 %6757
    %6759 = vrot.lane.b32.xlu0 %v6591, 56
    %v6760 = vpop.permute.xlu0 %6759
    %6761 = vrot.lane.b32.xlu0 %v6592, 56
    %v6762 = vpop.permute.xlu0 %6761
    %6763 = vrot.lane.b32.xlu0 %v6593, 56
    %v6764 = vpop.permute.xlu0 %6763
    %6765 = vrot.lane.b32.xlu0 %v6594, 56
    %v6766 = vpop.permute.xlu0 %6765
    %6767 = vrot.lane.b32.xlu0 %v6595, 56
    %v6768 = vpop.permute.xlu0 %6767
    %6769 = vrot.lane.b32.xlu0 %v6596, 56
    %v6770 = vpop.permute.xlu0 %6769
    %6771 = vrot.lane.b32.xlu0 %v6597, 56
    %v6772 = vpop.permute.xlu0 %6771
    %6834 = vrot.lane.b32.xlu0 0.0, 112
    %v6835 = vpop.permute.xlu0 %6834
    %6836 = vrot.lane.b32.xlu0 %v6538, 112
    %v6837 = vpop.permute.xlu0 %6836
    %6838 = vrot.lane.b32.xlu0 %v6539, 112
    %v6839 = vpop.permute.xlu0 %6838
    %6840 = vrot.lane.b32.xlu0 %v6540, 112
    %v6841 = vpop.permute.xlu0 %6840
    %6842 = vrot.lane.b32.xlu0 %v6541, 112
    %v6843 = vpop.permute.xlu0 %6842
    %6844 = vrot.lane.b32.xlu0 %v6542, 112
    %v6845 = vpop.permute.xlu0 %6844
    %6846 = vrot.lane.b32.xlu0 %v6543, 112
    %v6847 = vpop.permute.xlu0 %6846
    %6848 = vrot.lane.b32.xlu0 %v6544, 112
    %v6849 = vpop.permute.xlu0 %6848
    %6850 = vrot.lane.b32.xlu0 %v6545, 112
    %v6851 = vpop.permute.xlu0 %6850
    %6852 = vrot.lane.b32.xlu0 %v6546, 112
    %v6853 = vpop.permute.xlu0 %6852
    %6854 = vrot.lane.b32.xlu0 %v6547, 112
    %v6855 = vpop.permute.xlu0 %6854
    %6856 = vrot.lane.b32.xlu0 %v6548, 112
    %v6857 = vpop.permute.xlu0 %6856
    %6858 = vrot.lane.b32.xlu0 %v6549, 112
    %v6859 = vpop.permute.xlu0 %6858
    %6860 = vrot.lane.b32.xlu0 %v6550, 112
    %v6861 = vpop.permute.xlu0 %6860
    %6862 = vrot.lane.b32.xlu0 %v6551, 112
    %v6863 = vpop.permute.xlu0 %6862
    %6864 = vrot.lane.b32.xlu0 %v6552, 112
    %v6865 = vpop.permute.xlu0 %6864
    %6866 = vrot.lane.b32.xlu0 %v6553, 112
    %v6867 = vpop.permute.xlu0 %6866
    %6868 = vrot.lane.b32.xlu0 %v6554, 112
    %v6869 = vpop.permute.xlu0 %6868
    %6870 = vrot.lane.b32.xlu0 %v6555, 112
    %v6871 = vpop.permute.xlu0 %6870
    %6872 = vrot.lane.b32.xlu0 %v6556, 112
    %v6873 = vpop.permute.xlu0 %6872
    %6874 = vrot.lane.b32.xlu0 %v6557, 112
    %v6875 = vpop.permute.xlu0 %6874
    %6876 = vrot.lane.b32.xlu0 %v6558, 112
    %v6877 = vpop.permute.xlu0 %6876
    %6878 = vrot.lane.b32.xlu0 %v6559, 112
    %v6879 = vpop.permute.xlu0 %6878
    %6880 = vrot.lane.b32.xlu0 %v6560, 112
    %v6881 = vpop.permute.xlu0 %6880
    %6882 = vrot.lane.b32.xlu0 %v6561, 112
    %v6883 = vpop.permute.xlu0 %6882
    %6884 = vrot.lane.b32.xlu0 %v6562, 112
    %v6885 = vpop.permute.xlu0 %6884
    %6886 = vrot.lane.b32.xlu0 %v6563, 112
    %v6887 = vpop.permute.xlu0 %6886
    %6888 = vrot.lane.b32.xlu0 %v6564, 112
    %v6889 = vpop.permute.xlu0 %6888
    %6890 = vrot.lane.b32.xlu0 %v6565, 112
    %v6891 = vpop.permute.xlu0 %6890
    %6892 = vrot.lane.b32.xlu0 %v6566, 112
    %v6893 = vpop.permute.xlu0 %6892
    %6894 = vrot.lane.b32.xlu0 %v6567, 112
    %v6895 = vpop.permute.xlu0 %6894
    %6896 = vrot.lane.b32.xlu0 %v6570, 112
    %v6897 = vpop.permute.xlu0 %6896
    %6898 = vrot.lane.b32.xlu0 %v6571, 112
    %v6899 = vpop.permute.xlu0 %6898
    %6900 = vrot.lane.b32.xlu0 %v6572, 112
    %v6901 = vpop.permute.xlu0 %6900
    %6902 = vrot.lane.b32.xlu0 %v6573, 112
    %v6903 = vpop.permute.xlu0 %6902
    %6904 = vrot.lane.b32.xlu0 %v6574, 112
    %v6905 = vpop.permute.xlu0 %6904
    %6906 = vrot.lane.b32.xlu0 %v6575, 112
    %v6907 = vpop.permute.xlu0 %6906
    %6908 = vrot.lane.b32.xlu0 %v6576, 112
    %v6909 = vpop.permute.xlu0 %6908
    %6910 = vrot.lane.b32.xlu0 %v6577, 112
    %v6911 = vpop.permute.xlu0 %6910
    %6912 = vrot.lane.b32.xlu0 %v6578, 112
    %v6913 = vpop.permute.xlu0 %6912
    %6914 = vrot.lane.b32.xlu0 %v6579, 112
    %v6915 = vpop.permute.xlu0 %6914
    %6916 = vrot.lane.b32.xlu0 %v6580, 112
    %v6917 = vpop.permute.xlu0 %6916
    %6918 = vrot.lane.b32.xlu0 %v6581, 112
    %v6919 = vpop.permute.xlu0 %6918
    %6920 = vrot.lane.b32.xlu0 %v6582, 112
    %v6921 = vpop.permute.xlu0 %6920
    %6922 = vrot.lane.b32.xlu0 %v6583, 112
    %v6923 = vpop.permute.xlu0 %6922
    %6924 = vrot.lane.b32.xlu0 %v6584, 112
    %v6925 = vpop.permute.xlu0 %6924
    %6926 = vrot.lane.b32.xlu0 %v6585, 112
    %v6927 = vpop.permute.xlu0 %6926
    %6928 = vrot.lane.b32.xlu0 %v6586, 112
    %v6929 = vpop.permute.xlu0 %6928
    %6930 = vrot.lane.b32.xlu0 %v6587, 112
    %v6931 = vpop.permute.xlu0 %6930
    %6932 = vrot.lane.b32.xlu0 %v6588, 112
    %v6933 = vpop.permute.xlu0 %6932
    %6934 = vrot.lane.b32.xlu0 %v6589, 112
    %v6935 = vpop.permute.xlu0 %6934
    %6936 = vrot.lane.b32.xlu0 %v6590, 112
    %v6937 = vpop.permute.xlu0 %6936
    %6938 = vrot.lane.b32.xlu0 %v6591, 112
    %v6939 = vpop.permute.xlu0 %6938
    %6940 = vrot.lane.b32.xlu0 %v6592, 112
    %v6941 = vpop.permute.xlu0 %6940
    %6942 = vrot.lane.b32.xlu0 %v6593, 112
    %v6943 = vpop.permute.xlu0 %6942
    %6944 = vrot.lane.b32.xlu0 %v6594, 112
    %v6945 = vpop.permute.xlu0 %6944
    %6946 = vrot.lane.b32.xlu0 %v6595, 112
    %v6947 = vpop.permute.xlu0 %6946
    %6948 = vrot.lane.b32.xlu0 %v6596, 112
    %v6949 = vpop.permute.xlu0 %6948
    %6950 = vrot.lane.b32.xlu0 %v6597, 112
    %v6951 = vpop.permute.xlu0 %6950
    %6952 = vrot.lane.b32.xlu0 %v6598, 112
    %v6953 = vpop.permute.xlu0 %6952
    %6954 = vrot.lane.b32.xlu0 %v6599, 112
    %v6955 = vpop.permute.xlu0 %6954
    %7021 = vrot.lane.b32.xlu0 %v6538, 40
    %v7022 = vpop.permute.xlu0 %7021
    %7023 = vrot.lane.b32.xlu0 %v6539, 40
    %v7024 = vpop.permute.xlu0 %7023
    %7025 = vrot.lane.b32.xlu0 %v6540, 40
    %v7026 = vpop.permute.xlu0 %7025
    %7027 = vrot.lane.b32.xlu0 %v6541, 40
    %v7028 = vpop.permute.xlu0 %7027
    %7029 = vrot.lane.b32.xlu0 %v6542, 40
    %v7030 = vpop.permute.xlu0 %7029
    %7031 = vrot.lane.b32.xlu0 %v6543, 40
    %v7032 = vpop.permute.xlu0 %7031
    %7033 = vrot.lane.b32.xlu0 %v6544, 40
    %v7034 = vpop.permute.xlu0 %7033
    %7035 = vrot.lane.b32.xlu0 %v6545, 40
    %v7036 = vpop.permute.xlu0 %7035
    %7037 = vrot.lane.b32.xlu0 %v6546, 40
    %v7038 = vpop.permute.xlu0 %7037
    %7039 = vrot.lane.b32.xlu0 %v6547, 40
    %v7040 = vpop.permute.xlu0 %7039
    %7041 = vrot.lane.b32.xlu0 %v6548, 40
    %v7042 = vpop.permute.xlu0 %7041
    %7043 = vrot.lane.b32.xlu0 %v6549, 40
    %v7044 = vpop.permute.xlu0 %7043
    %7045 = vrot.lane.b32.xlu0 %v6550, 40
    %v7046 = vpop.permute.xlu0 %7045
    %7047 = vrot.lane.b32.xlu0 %v6551, 40
    %v7048 = vpop.permute.xlu0 %7047
    %7049 = vrot.lane.b32.xlu0 %v6552, 40
    %v7050 = vpop.permute.xlu0 %7049
    %7051 = vrot.lane.b32.xlu0 %v6553, 40
    %v7052 = vpop.permute.xlu0 %7051
    %7053 = vrot.lane.b32.xlu0 %v6554, 40
    %v7054 = vpop.permute.xlu0 %7053
    %7055 = vrot.lane.b32.xlu0 %v6555, 40
    %v7056 = vpop.permute.xlu0 %7055
    %7057 = vrot.lane.b32.xlu0 %v6556, 40
    %v7058 = vpop.permute.xlu0 %7057
    %7059 = vrot.lane.b32.xlu0 %v6557, 40
    %v7060 = vpop.permute.xlu0 %7059
    %7061 = vrot.lane.b32.xlu0 %v6558, 40
    %v7062 = vpop.permute.xlu0 %7061
    %7063 = vrot.lane.b32.xlu0 %v6559, 40
    %v7064 = vpop.permute.xlu0 %7063
    %7065 = vrot.lane.b32.xlu0 %v6560, 40
    %v7066 = vpop.permute.xlu0 %7065
    %7067 = vrot.lane.b32.xlu0 %v6561, 40
    %v7068 = vpop.permute.xlu0 %7067
    %7069 = vrot.lane.b32.xlu0 %v6562, 40
    %v7070 = vpop.permute.xlu0 %7069
    %7071 = vrot.lane.b32.xlu0 %v6563, 40
    %v7072 = vpop.permute.xlu0 %7071
    %7073 = vrot.lane.b32.xlu0 %v6564, 40
    %v7074 = vpop.permute.xlu0 %7073
    %7075 = vrot.lane.b32.xlu0 %v6565, 40
    %v7076 = vpop.permute.xlu0 %7075
    %7077 = vrot.lane.b32.xlu0 %v6566, 40
    %v7078 = vpop.permute.xlu0 %7077
    %7079 = vrot.lane.b32.xlu0 %v6567, 40
    %v7080 = vpop.permute.xlu0 %7079
    %7081 = vrot.lane.b32.xlu0 %v6568, 40
    %v7082 = vpop.permute.xlu0 %7081
    %7083 = vrot.lane.b32.xlu0 %v6569, 40
    %v7084 = vpop.permute.xlu0 %7083
    %7085 = vrot.lane.b32.xlu0 %v6570, 40
    %v7086 = vpop.permute.xlu0 %7085
    %7087 = vrot.lane.b32.xlu0 %v6571, 40
    %v7088 = vpop.permute.xlu0 %7087
    %7089 = vrot.lane.b32.xlu0 %v6572, 40
    %v7090 = vpop.permute.xlu0 %7089
    %7091 = vrot.lane.b32.xlu0 %v6573, 40
    %v7092 = vpop.permute.xlu0 %7091
    %7093 = vrot.lane.b32.xlu0 %v6574, 40
    %v7094 = vpop.permute.xlu0 %7093
    %7095 = vrot.lane.b32.xlu0 %v6575, 40
    %v7096 = vpop.permute.xlu0 %7095
    %7097 = vrot.lane.b32.xlu0 %v6576, 40
    %v7098 = vpop.permute.xlu0 %7097
    %7099 = vrot.lane.b32.xlu0 %v6577, 40
    %v7100 = vpop.permute.xlu0 %7099
    %7101 = vrot.lane.b32.xlu0 %v6578, 40
    %v7102 = vpop.permute.xlu0 %7101
    %7103 = vrot.lane.b32.xlu0 %v6579, 40
    %v7104 = vpop.permute.xlu0 %7103
    %7105 = vrot.lane.b32.xlu0 %v6580, 40
    %v7106 = vpop.permute.xlu0 %7105
    %7107 = vrot.lane.b32.xlu0 %v6581, 40
    %v7108 = vpop.permute.xlu0 %7107
    %7109 = vrot.lane.b32.xlu0 %v6582, 40
    %v7110 = vpop.permute.xlu0 %7109
    %7111 = vrot.lane.b32.xlu0 %v6583, 40
    %v7112 = vpop.permute.xlu0 %7111
    %7113 = vrot.lane.b32.xlu0 %v6584, 40
    %v7114 = vpop.permute.xlu0 %7113
    %7115 = vrot.lane.b32.xlu0 %v6585, 40
    %v7116 = vpop.permute.xlu0 %7115
    %7117 = vrot.lane.b32.xlu0 %v6586, 40
    %v7118 = vpop.permute.xlu0 %7117
    %7119 = vrot.lane.b32.xlu0 %v6587, 40
    %v7120 = vpop.permute.xlu0 %7119
    %7121 = vrot.lane.b32.xlu0 %v6588, 40
    %v7122 = vpop.permute.xlu0 %7121
    %7123 = vrot.lane.b32.xlu0 %v6589, 40
    %v7124 = vpop.permute.xlu0 %7123
    %7125 = vrot.lane.b32.xlu0 %v6590, 40
    %v7126 = vpop.permute.xlu0 %7125
    %7127 = vrot.lane.b32.xlu0 %v6591, 40
    %v7128 = vpop.permute.xlu0 %7127
    %7129 = vrot.lane.b32.xlu0 %v6592, 40
    %v7130 = vpop.permute.xlu0 %7129
    %7131 = vrot.lane.b32.xlu0 %v6593, 40
    %v7132 = vpop.permute.xlu0 %7131
    %7133 = vrot.lane.b32.xlu0 %v6594, 40
    %v7134 = vpop.permute.xlu0 %7133
    %7135 = vrot.lane.b32.xlu0 %v6595, 40
    %v7136 = vpop.permute.xlu0 %7135
    %7137 = vrot.lane.b32.xlu0 %v6596, 40
    %v7138 = vpop.permute.xlu0 %7137
    %7139 = vrot.lane.b32.xlu0 %v6597, 40
    %v7140 = vpop.permute.xlu0 %7139
    %7141 = vrot.lane.b32.xlu0 %v6598, 40
    %v7142 = vpop.permute.xlu0 %7141
    %7143 = vrot.lane.b32.xlu0 %v6599, 40
    %v7144 = vpop.permute.xlu0 %7143
    %7145 = vrot.lane.b32.xlu0 %v6600, 40
    %v7146 = vpop.permute.xlu0 %7145
    %7147 = vrot.lane.b32.xlu0 %v6601, 40
    %v7148 = vpop.permute.xlu0 %7147
    %7213 = vrot.lane.b32.xlu0 %v6540, 96
    %v7214 = vpop.permute.xlu0 %7213
    %7215 = vrot.lane.b32.xlu0 %v6541, 96
    %v7216 = vpop.permute.xlu0 %7215
    %7217 = vrot.lane.b32.xlu0 %v6542, 96
    %v7218 = vpop.permute.xlu0 %7217
    %7219 = vrot.lane.b32.xlu0 %v6543, 96
    %v7220 = vpop.permute.xlu0 %7219
    %7221 = vrot.lane.b32.xlu0 %v6544, 96
    %v7222 = vpop.permute.xlu0 %7221
    %7223 = vrot.lane.b32.xlu0 %v6545, 96
    %v7224 = vpop.permute.xlu0 %7223
    %7225 = vrot.lane.b32.xlu0 %v6546, 96
    %v7226 = vpop.permute.xlu0 %7225
    %7227 = vrot.lane.b32.xlu0 %v6547, 96
    %v7228 = vpop.permute.xlu0 %7227
    %7229 = vrot.lane.b32.xlu0 %v6548, 96
    %v7230 = vpop.permute.xlu0 %7229
    %7231 = vrot.lane.b32.xlu0 %v6549, 96
    %v7232 = vpop.permute.xlu0 %7231
    %7233 = vrot.lane.b32.xlu0 %v6550, 96
    %v7234 = vpop.permute.xlu0 %7233
    %7235 = vrot.lane.b32.xlu0 %v6551, 96
    %v7236 = vpop.permute.xlu0 %7235
    %7237 = vrot.lane.b32.xlu0 %v6552, 96
    %v7238 = vpop.permute.xlu0 %7237
    %7239 = vrot.lane.b32.xlu0 %v6553, 96
    %v7240 = vpop.permute.xlu0 %7239
    %7241 = vrot.lane.b32.xlu0 %v6554, 96
    %v7242 = vpop.permute.xlu0 %7241
    %7243 = vrot.lane.b32.xlu0 %v6555, 96
    %v7244 = vpop.permute.xlu0 %7243
    %7245 = vrot.lane.b32.xlu0 %v6556, 96
    %v7246 = vpop.permute.xlu0 %7245
    %7247 = vrot.lane.b32.xlu0 %v6557, 96
    %v7248 = vpop.permute.xlu0 %7247
    %7249 = vrot.lane.b32.xlu0 %v6558, 96
    %v7250 = vpop.permute.xlu0 %7249
    %7251 = vrot.lane.b32.xlu0 %v6559, 96
    %v7252 = vpop.permute.xlu0 %7251
    %7253 = vrot.lane.b32.xlu0 %v6560, 96
    %v7254 = vpop.permute.xlu0 %7253
    %7255 = vrot.lane.b32.xlu0 %v6561, 96
    %v7256 = vpop.permute.xlu0 %7255
    %7257 = vrot.lane.b32.xlu0 %v6562, 96
    %v7258 = vpop.permute.xlu0 %7257
    %7259 = vrot.lane.b32.xlu0 %v6563, 96
    %v7260 = vpop.permute.xlu0 %7259
    %7261 = vrot.lane.b32.xlu0 %v6564, 96
    %v7262 = vpop.permute.xlu0 %7261
    %7263 = vrot.lane.b32.xlu0 %v6565, 96
    %v7264 = vpop.permute.xlu0 %7263
    %7265 = vrot.lane.b32.xlu0 %v6566, 96
    %v7266 = vpop.permute.xlu0 %7265
    %7267 = vrot.lane.b32.xlu0 %v6567, 96
    %v7268 = vpop.permute.xlu0 %7267
    %7269 = vrot.lane.b32.xlu0 %v6568, 96
    %v7270 = vpop.permute.xlu0 %7269
    %7271 = vrot.lane.b32.xlu0 %v6569, 96
    %v7272 = vpop.permute.xlu0 %7271
    %7273 = vrot.lane.b32.xlu0 0.0, 96
    %v7274 = vpop.permute.xlu0 %7273
    %7275 = vrot.lane.b32.xlu0 %v6572, 96
    %v7276 = vpop.permute.xlu0 %7275
    %7277 = vrot.lane.b32.xlu0 %v6573, 96
    %v7278 = vpop.permute.xlu0 %7277
    %7279 = vrot.lane.b32.xlu0 %v6574, 96
    %v7280 = vpop.permute.xlu0 %7279
    %7281 = vrot.lane.b32.xlu0 %v6575, 96
    %v7282 = vpop.permute.xlu0 %7281
    %7283 = vrot.lane.b32.xlu0 %v6576, 96
    %v7284 = vpop.permute.xlu0 %7283
    %7285 = vrot.lane.b32.xlu0 %v6577, 96
    %v7286 = vpop.permute.xlu0 %7285
    %7287 = vrot.lane.b32.xlu0 %v6578, 96
    %v7288 = vpop.permute.xlu0 %7287
    %7289 = vrot.lane.b32.xlu0 %v6579, 96
    %v7290 = vpop.permute.xlu0 %7289
    %7291 = vrot.lane.b32.xlu0 %v6580, 96
    %v7292 = vpop.permute.xlu0 %7291
    %7293 = vrot.lane.b32.xlu0 %v6581, 96
    %v7294 = vpop.permute.xlu0 %7293
    %7295 = vrot.lane.b32.xlu0 %v6582, 96
    %v7296 = vpop.permute.xlu0 %7295
    %7297 = vrot.lane.b32.xlu0 %v6583, 96
    %v7298 = vpop.permute.xlu0 %7297
    %7299 = vrot.lane.b32.xlu0 %v6584, 96
    %v7300 = vpop.permute.xlu0 %7299
    %7301 = vrot.lane.b32.xlu0 %v6585, 96
    %v7302 = vpop.permute.xlu0 %7301
    %7303 = vrot.lane.b32.xlu0 %v6586, 96
    %v7304 = vpop.permute.xlu0 %7303
    %7305 = vrot.lane.b32.xlu0 %v6587, 96
    %v7306 = vpop.permute.xlu0 %7305
    %7307 = vrot.lane.b32.xlu0 %v6588, 96
    %v7308 = vpop.permute.xlu0 %7307
    %7309 = vrot.lane.b32.xlu0 %v6589, 96
    %v7310 = vpop.permute.xlu0 %7309
    %7311 = vrot.lane.b32.xlu0 %v6590, 96
    %v7312 = vpop.permute.xlu0 %7311
    %7313 = vrot.lane.b32.xlu0 %v6591, 96
    %v7314 = vpop.permute.xlu0 %7313
    %7315 = vrot.lane.b32.xlu0 %v6592, 96
    %v7316 = vpop.permute.xlu0 %7315
    %7317 = vrot.lane.b32.xlu0 %v6593, 96
    %v7318 = vpop.permute.xlu0 %7317
    %7319 = vrot.lane.b32.xlu0 %v6594, 96
    %v7320 = vpop.permute.xlu0 %7319
    %7321 = vrot.lane.b32.xlu0 %v6595, 96
    %v7322 = vpop.permute.xlu0 %7321
    %7323 = vrot.lane.b32.xlu0 %v6596, 96
    %v7324 = vpop.permute.xlu0 %7323
    %7325 = vrot.lane.b32.xlu0 %v6597, 96
    %v7326 = vpop.permute.xlu0 %7325
    %7327 = vrot.lane.b32.xlu0 %v6598, 96
    %v7328 = vpop.permute.xlu0 %7327
    %7329 = vrot.lane.b32.xlu0 %v6599, 96
    %v7330 = vpop.permute.xlu0 %7329
    %7331 = vrot.lane.b32.xlu0 %v6600, 96
    %v7332 = vpop.permute.xlu0 %7331
    %7333 = vrot.lane.b32.xlu0 %v6601, 96
    %v7334 = vpop.permute.xlu0 %7333
    %7396 = vrot.lane.b32.xlu0 %v6542, 24
    %v7397 = vpop.permute.xlu0 %7396
    %7398 = vrot.lane.b32.xlu0 %v6543, 24
    %v7399 = vpop.permute.xlu0 %7398
    %7400 = vrot.lane.b32.xlu0 %v6544, 24
    %v7401 = vpop.permute.xlu0 %7400
    %7402 = vrot.lane.b32.xlu0 %v6545, 24
    %v7403 = vpop.permute.xlu0 %7402
    %7404 = vrot.lane.b32.xlu0 %v6546, 24
    %v7405 = vpop.permute.xlu0 %7404
    %7406 = vrot.lane.b32.xlu0 %v6547, 24
    %v7407 = vpop.permute.xlu0 %7406
    %7408 = vrot.lane.b32.xlu0 %v6548, 24
    %v7409 = vpop.permute.xlu0 %7408
    %7410 = vrot.lane.b32.xlu0 %v6549, 24
    %v7411 = vpop.permute.xlu0 %7410
    %7412 = vrot.lane.b32.xlu0 %v6550, 24
    %v7413 = vpop.permute.xlu0 %7412
    %7414 = vrot.lane.b32.xlu0 %v6551, 24
    %v7415 = vpop.permute.xlu0 %7414
    %7416 = vrot.lane.b32.xlu0 %v6552, 24
    %v7417 = vpop.permute.xlu0 %7416
    %7418 = vrot.lane.b32.xlu0 %v6553, 24
    %v7419 = vpop.permute.xlu0 %7418
    %7420 = vrot.lane.b32.xlu0 %v6554, 24
    %v7421 = vpop.permute.xlu0 %7420
    %7422 = vrot.lane.b32.xlu0 %v6555, 24
    %v7423 = vpop.permute.xlu0 %7422
    %7424 = vrot.lane.b32.xlu0 %v6556, 24
    %v7425 = vpop.permute.xlu0 %7424
    %7426 = vrot.lane.b32.xlu0 %v6557, 24
    %v7427 = vpop.permute.xlu0 %7426
    %7428 = vrot.lane.b32.xlu0 %v6558, 24
    %v7429 = vpop.permute.xlu0 %7428
    %7430 = vrot.lane.b32.xlu0 %v6559, 24
    %v7431 = vpop.permute.xlu0 %7430
    %7432 = vrot.lane.b32.xlu0 %v6560, 24
    %v7433 = vpop.permute.xlu0 %7432
    %7434 = vrot.lane.b32.xlu0 %v6561, 24
    %v7435 = vpop.permute.xlu0 %7434
    %7436 = vrot.lane.b32.xlu0 %v6562, 24
    %v7437 = vpop.permute.xlu0 %7436
    %7438 = vrot.lane.b32.xlu0 %v6563, 24
    %v7439 = vpop.permute.xlu0 %7438
    %7440 = vrot.lane.b32.xlu0 %v6564, 24
    %v7441 = vpop.permute.xlu0 %7440
    %7442 = vrot.lane.b32.xlu0 %v6565, 24
    %v7443 = vpop.permute.xlu0 %7442
    %7444 = vrot.lane.b32.xlu0 %v6566, 24
    %v7445 = vpop.permute.xlu0 %7444
    %7446 = vrot.lane.b32.xlu0 %v6567, 24
    %v7447 = vpop.permute.xlu0 %7446
    %7448 = vrot.lane.b32.xlu0 %v6568, 24
    %v7449 = vpop.permute.xlu0 %7448
    %7450 = vrot.lane.b32.xlu0 %v6569, 24
    %v7451 = vpop.permute.xlu0 %7450
    %7452 = vrot.lane.b32.xlu0 0.0, 24
    %v7453 = vpop.permute.xlu0 %7452
    %7454 = vrot.lane.b32.xlu0 %v6574, 24
    %v7455 = vpop.permute.xlu0 %7454
    %7456 = vrot.lane.b32.xlu0 %v6575, 24
    %v7457 = vpop.permute.xlu0 %7456
    %7458 = vrot.lane.b32.xlu0 %v6576, 24
    %v7459 = vpop.permute.xlu0 %7458
    %7460 = vrot.lane.b32.xlu0 %v6577, 24
    %v7461 = vpop.permute.xlu0 %7460
    %7462 = vrot.lane.b32.xlu0 %v6578, 24
    %v7463 = vpop.permute.xlu0 %7462
    %7464 = vrot.lane.b32.xlu0 %v6579, 24
    %v7465 = vpop.permute.xlu0 %7464
    %7466 = vrot.lane.b32.xlu0 %v6580, 24
    %v7467 = vpop.permute.xlu0 %7466
    %7468 = vrot.lane.b32.xlu0 %v6581, 24
    %v7469 = vpop.permute.xlu0 %7468
    %7470 = vrot.lane.b32.xlu0 %v6582, 24
    %v7471 = vpop.permute.xlu0 %7470
    %7472 = vrot.lane.b32.xlu0 %v6583, 24
    %v7473 = vpop.permute.xlu0 %7472
    %7474 = vrot.lane.b32.xlu0 %v6584, 24
    %v7475 = vpop.permute.xlu0 %7474
    %7476 = vrot.lane.b32.xlu0 %v6585, 24
    %v7477 = vpop.permute.xlu0 %7476
    %7478 = vrot.lane.b32.xlu0 %v6586, 24
    %v7479 = vpop.permute.xlu0 %7478
    %7480 = vrot.lane.b32.xlu0 %v6587, 24
    %v7481 = vpop.permute.xlu0 %7480
    %7482 = vrot.lane.b32.xlu0 %v6588, 24
    %v7483 = vpop.permute.xlu0 %7482
    %7484 = vrot.lane.b32.xlu0 %v6589, 24
    %v7485 = vpop.permute.xlu0 %7484
    %7486 = vrot.lane.b32.xlu0 %v6590, 24
    %v7487 = vpop.permute.xlu0 %7486
    %7488 = vrot.lane.b32.xlu0 %v6591, 24
    %v7489 = vpop.permute.xlu0 %7488
    %7490 = vrot.lane.b32.xlu0 %v6592, 24
    %v7491 = vpop.permute.xlu0 %7490
    %7492 = vrot.lane.b32.xlu0 %v6593, 24
    %v7493 = vpop.permute.xlu0 %7492
    %7494 = vrot.lane.b32.xlu0 %v6594, 24
    %v7495 = vpop.permute.xlu0 %7494
    %7496 = vrot.lane.b32.xlu0 %v6595, 24
    %v7497 = vpop.permute.xlu0 %7496
    %7498 = vrot.lane.b32.xlu0 %v6596, 24
    %v7499 = vpop.permute.xlu0 %7498
    %7500 = vrot.lane.b32.xlu0 %v6597, 24
    %v7501 = vpop.permute.xlu0 %7500
    %7502 = vrot.lane.b32.xlu0 %v6598, 24
    %v7503 = vpop.permute.xlu0 %7502
    %7504 = vrot.lane.b32.xlu0 %v6599, 24
    %v7505 = vpop.permute.xlu0 %7504
    %7506 = vrot.lane.b32.xlu0 %v6600, 24
    %v7507 = vpop.permute.xlu0 %7506
    %7508 = vrot.lane.b32.xlu0 %v6601, 24
    %v7509 = vpop.permute.xlu0 %7508
    %7567 = vrot.lane.b32.xlu0 %v6544, 80
    %v7568 = vpop.permute.xlu0 %7567
    %7569 = vrot.lane.b32.xlu0 %v6545, 80
    %v7570 = vpop.permute.xlu0 %7569
    %7571 = vrot.lane.b32.xlu0 %v6546, 80
    %v7572 = vpop.permute.xlu0 %7571
    %7573 = vrot.lane.b32.xlu0 %v6547, 80
    %v7574 = vpop.permute.xlu0 %7573
    %7575 = vrot.lane.b32.xlu0 %v6548, 80
    %v7576 = vpop.permute.xlu0 %7575
    %7577 = vrot.lane.b32.xlu0 %v6549, 80
    %v7578 = vpop.permute.xlu0 %7577
    %7579 = vrot.lane.b32.xlu0 %v6550, 80
    %v7580 = vpop.permute.xlu0 %7579
    %7581 = vrot.lane.b32.xlu0 %v6551, 80
    %v7582 = vpop.permute.xlu0 %7581
    %7583 = vrot.lane.b32.xlu0 %v6552, 80
    %v7584 = vpop.permute.xlu0 %7583
    %7585 = vrot.lane.b32.xlu0 %v6553, 80
    %v7586 = vpop.permute.xlu0 %7585
    %7587 = vrot.lane.b32.xlu0 %v6554, 80
    %v7588 = vpop.permute.xlu0 %7587
    %7589 = vrot.lane.b32.xlu0 %v6555, 80
    %v7590 = vpop.permute.xlu0 %7589
    %7591 = vrot.lane.b32.xlu0 %v6556, 80
    %v7592 = vpop.permute.xlu0 %7591
    %7593 = vrot.lane.b32.xlu0 %v6557, 80
    %v7594 = vpop.permute.xlu0 %7593
    %7595 = vrot.lane.b32.xlu0 %v6558, 80
    %v7596 = vpop.permute.xlu0 %7595
    %7597 = vrot.lane.b32.xlu0 %v6559, 80
    %v7598 = vpop.permute.xlu0 %7597
    %7599 = vrot.lane.b32.xlu0 %v6560, 80
    %v7600 = vpop.permute.xlu0 %7599
    %7601 = vrot.lane.b32.xlu0 %v6561, 80
    %v7602 = vpop.permute.xlu0 %7601
    %7603 = vrot.lane.b32.xlu0 %v6562, 80
    %v7604 = vpop.permute.xlu0 %7603
    %7605 = vrot.lane.b32.xlu0 %v6563, 80
    %v7606 = vpop.permute.xlu0 %7605
    %7607 = vrot.lane.b32.xlu0 %v6564, 80
    %v7608 = vpop.permute.xlu0 %7607
    %7609 = vrot.lane.b32.xlu0 %v6565, 80
    %v7610 = vpop.permute.xlu0 %7609
    %7611 = vrot.lane.b32.xlu0 %v6566, 80
    %v7612 = vpop.permute.xlu0 %7611
    %7613 = vrot.lane.b32.xlu0 %v6567, 80
    %v7614 = vpop.permute.xlu0 %7613
    %7615 = vrot.lane.b32.xlu0 %v6568, 80
    %v7616 = vpop.permute.xlu0 %7615
    %7617 = vrot.lane.b32.xlu0 %v6569, 80
    %v7618 = vpop.permute.xlu0 %7617
    %7619 = vrot.lane.b32.xlu0 0.0, 80
    %v7620 = vpop.permute.xlu0 %7619
    %7621 = vrot.lane.b32.xlu0 %v6576, 80
    %v7622 = vpop.permute.xlu0 %7621
    %7623 = vrot.lane.b32.xlu0 %v6577, 80
    %v7624 = vpop.permute.xlu0 %7623
    %7625 = vrot.lane.b32.xlu0 %v6578, 80
    %v7626 = vpop.permute.xlu0 %7625
    %7627 = vrot.lane.b32.xlu0 %v6579, 80
    %v7628 = vpop.permute.xlu0 %7627
    %7629 = vrot.lane.b32.xlu0 %v6580, 80
    %v7630 = vpop.permute.xlu0 %7629
    %7631 = vrot.lane.b32.xlu0 %v6581, 80
    %v7632 = vpop.permute.xlu0 %7631
    %7633 = vrot.lane.b32.xlu0 %v6582, 80
    %v7634 = vpop.permute.xlu0 %7633
    %7635 = vrot.lane.b32.xlu0 %v6583, 80
    %v7636 = vpop.permute.xlu0 %7635
    %7637 = vrot.lane.b32.xlu0 %v6584, 80
    %v7638 = vpop.permute.xlu0 %7637
    %7639 = vrot.lane.b32.xlu0 %v6585, 80
    %v7640 = vpop.permute.xlu0 %7639
    %7641 = vrot.lane.b32.xlu0 %v6586, 80
    %v7642 = vpop.permute.xlu0 %7641
    %7643 = vrot.lane.b32.xlu0 %v6587, 80
    %v7644 = vpop.permute.xlu0 %7643
    %7645 = vrot.lane.b32.xlu0 %v6588, 80
    %v7646 = vpop.permute.xlu0 %7645
    %7647 = vrot.lane.b32.xlu0 %v6589, 80
    %v7648 = vpop.permute.xlu0 %7647
    %7649 = vrot.lane.b32.xlu0 %v6590, 80
    %v7650 = vpop.permute.xlu0 %7649
    %7651 = vrot.lane.b32.xlu0 %v6591, 80
    %v7652 = vpop.permute.xlu0 %7651
    %7653 = vrot.lane.b32.xlu0 %v6592, 80
    %v7654 = vpop.permute.xlu0 %7653
    %7655 = vrot.lane.b32.xlu0 %v6593, 80
    %v7656 = vpop.permute.xlu0 %7655
    %7657 = vrot.lane.b32.xlu0 %v6594, 80
    %v7658 = vpop.permute.xlu0 %7657
    %7659 = vrot.lane.b32.xlu0 %v6595, 80
    %v7660 = vpop.permute.xlu0 %7659
    %7661 = vrot.lane.b32.xlu0 %v6596, 80
    %v7662 = vpop.permute.xlu0 %7661
    %7663 = vrot.lane.b32.xlu0 %v6597, 80
    %v7664 = vpop.permute.xlu0 %7663
    %7665 = vrot.lane.b32.xlu0 %v6598, 80
    %v7666 = vpop.permute.xlu0 %7665
    %7667 = vrot.lane.b32.xlu0 %v6599, 80
    %v7668 = vpop.permute.xlu0 %7667
    %7669 = vrot.lane.b32.xlu0 %v6600, 80
    %v7670 = vpop.permute.xlu0 %7669
    %7671 = vrot.lane.b32.xlu0 %v6601, 80
    %v7672 = vpop.permute.xlu0 %7671
    %vm7726 = vcmask 457728
    %v7727 = vsel %vm7726, 0.0, %v6660
    %v7728 = vsel %vm7726, 0.0, %v6662
    %v7729 = vsel %vm7726, 0.0, %v6664
    %v7730 = vsel %vm7726, %v6538, %v6666
    %v7731 = vsel %vm7726, %v6539, %v6668
    %v7732 = vsel %vm7726, %v6540, %v6670
    %v7733 = vsel %vm7726, %v6541, %v6672
    %v7734 = vsel %vm7726, %v6542, %v6674
    %v7735 = vsel %vm7726, %v6543, %v6676
    %v7736 = vsel %vm7726, %v6544, %v6678
    %v7737 = vsel %vm7726, %v6545, %v6680
    %v7738 = vsel %vm7726, %v6546, %v6682
    %v7739 = vsel %vm7726, %v6547, %v6684
    %v7740 = vsel %vm7726, %v6548, %v6686
    %v7741 = vsel %vm7726, %v6549, %v6688
    %v7742 = vsel %vm7726, %v6550, %v6690
    %v7743 = vsel %vm7726, %v6551, %v6692
    %v7744 = vsel %vm7726, %v6552, %v6694
    %v7745 = vsel %vm7726, %v6553, %v6696
    %v7746 = vsel %vm7726, %v6554, %v6698
    %v7747 = vsel %vm7726, %v6555, %v6700
    %v7748 = vsel %vm7726, %v6556, %v6702
    %v7749 = vsel %vm7726, %v6557, %v6704
    %v7750 = vsel %vm7726, %v6558, %v6706
    %v7751 = vsel %vm7726, %v6559, %v6708
    %v7752 = vsel %vm7726, %v6560, %v6710
    %v7753 = vsel %vm7726, %v6561, %v6712
    %v7754 = vsel %vm7726, %v6562, %v6714
    %v7755 = vsel %vm7726, %v6563, %v6716
    %v7756 = vsel %vm7726, 0.0, %v6718
    %v7757 = vsel %vm7726, 0.0, %v6720
    %v7758 = vsel %vm7726, %v6570, %v6722
    %v7759 = vsel %vm7726, %v6571, %v6724
    %v7760 = vsel %vm7726, %v6572, %v6726
    %v7761 = vsel %vm7726, %v6573, %v6728
    %v7762 = vsel %vm7726, %v6574, %v6730
    %v7763 = vsel %vm7726, %v6575, %v6732
    %v7764 = vsel %vm7726, %v6576, %v6734
    %v7765 = vsel %vm7726, %v6577, %v6736
    %v7766 = vsel %vm7726, %v6578, %v6738
    %v7767 = vsel %vm7726, %v6579, %v6740
    %v7768 = vsel %vm7726, %v6580, %v6742
    %v7769 = vsel %vm7726, %v6581, %v6744
    %v7770 = vsel %vm7726, %v6582, %v6746
    %v7771 = vsel %vm7726, %v6583, %v6748
    %v7772 = vsel %vm7726, %v6584, %v6750
    %v7773 = vsel %vm7726, %v6585, %v6752
    %v7774 = vsel %vm7726, %v6586, %v6754
    %v7775 = vsel %vm7726, %v6587, %v6756
    %v7776 = vsel %vm7726, %v6588, %v6758
    %v7777 = vsel %vm7726, %v6589, %v6760
    %v7778 = vsel %vm7726, %v6590, %v6762
    %v7779 = vsel %vm7726, %v6591, %v6764
    %v7780 = vsel %vm7726, %v6592, %v6766
    %v7781 = vsel %vm7726, %v6593, %v6768
    %v7782 = vsel %vm7726, %v6594, %v6770
    %v7783 = vsel %vm7726, %v6595, %v6772
    %vm7784 = vcmask 916480
    %v7785 = vsel %vm7784, %v7727, %v6835
    %v7786 = vsel %vm7784, %v7727, %v6837
    %v7787 = vsel %vm7784, %v7727, %v6839
    %v7788 = vsel %vm7784, %v7728, %v6841
    %v7789 = vsel %vm7784, %v7729, %v6843
    %v7790 = vsel %vm7784, %v7730, %v6845
    %v7791 = vsel %vm7784, %v7731, %v6847
    %v7792 = vsel %vm7784, %v7732, %v6849
    %v7793 = vsel %vm7784, %v7733, %v6851
    %v7794 = vsel %vm7784, %v7734, %v6853
    %v7795 = vsel %vm7784, %v7735, %v6855
    %v7796 = vsel %vm7784, %v7736, %v6857
    %v7797 = vsel %vm7784, %v7737, %v6859
    %v7798 = vsel %vm7784, %v7738, %v6861
    %v7799 = vsel %vm7784, %v7739, %v6863
    %v7800 = vsel %vm7784, %v7740, %v6865
    %v7801 = vsel %vm7784, %v7741, %v6867
    %v7802 = vsel %vm7784, %v7742, %v6869
    %v7803 = vsel %vm7784, %v7743, %v6871
    %v7804 = vsel %vm7784, %v7744, %v6873
    %v7805 = vsel %vm7784, %v7745, %v6875
    %v7806 = vsel %vm7784, %v7746, %v6877
    %v7807 = vsel %vm7784, %v7747, %v6879
    %v7808 = vsel %vm7784, %v7748, %v6881
    %v7809 = vsel %vm7784, %v7749, %v6883
    %v7810 = vsel %vm7784, %v7750, %v6885
    %v7811 = vsel %vm7784, %v7751, %v6887
    %v7812 = vsel %vm7784, %v7752, %v6889
    %v7813 = vsel %vm7784, %v7753, %v6891
    %v7814 = vsel %vm7784, %v7754, %v6893
    %v7815 = vsel %vm7784, %v7755, %v6895
    %v7816 = vsel %vm7784, %v7727, %v6897
    %v7817 = vsel %vm7784, %v7727, %v6899
    %v7818 = vsel %vm7784, %v7756, %v6901
    %v7819 = vsel %vm7784, %v7757, %v6903
    %v7820 = vsel %vm7784, %v7758, %v6905
    %v7821 = vsel %vm7784, %v7759, %v6907
    %v7822 = vsel %vm7784, %v7760, %v6909
    %v7823 = vsel %vm7784, %v7761, %v6911
    %v7824 = vsel %vm7784, %v7762, %v6913
    %v7825 = vsel %vm7784, %v7763, %v6915
    %v7826 = vsel %vm7784, %v7764, %v6917
    %v7827 = vsel %vm7784, %v7765, %v6919
    %v7828 = vsel %vm7784, %v7766, %v6921
    %v7829 = vsel %vm7784, %v7767, %v6923
    %v7830 = vsel %vm7784, %v7768, %v6925
    %v7831 = vsel %vm7784, %v7769, %v6927
    %v7832 = vsel %vm7784, %v7770, %v6929
    %v7833 = vsel %vm7784, %v7771, %v6931
    %v7834 = vsel %vm7784, %v7772, %v6933
    %v7835 = vsel %vm7784, %v7773, %v6935
    %v7836 = vsel %vm7784, %v7774, %v6937
    %v7837 = vsel %vm7784, %v7775, %v6939
    %v7838 = vsel %vm7784, %v7776, %v6941
    %v7839 = vsel %vm7784, %v7777, %v6943
    %v7840 = vsel %vm7784, %v7778, %v6945
    %v7841 = vsel %vm7784, %v7779, %v6947
    %v7842 = vsel %vm7784, %v7780, %v6949
    %v7843 = vsel %vm7784, %v7781, %v6951
    %v7844 = vsel %vm7784, %v7782, %v6953
    %v7845 = vsel %vm7784, %v7783, %v6955
    %v7846 = vsel %vm6472, %v6835, %v7022
    %v7847 = vsel %vm6472, %v6835, %v7024
    %v7848 = vsel %vm6472, %v6837, %v7026
    %v7849 = vsel %vm6472, %v6839, %v7028
    %v7850 = vsel %vm6472, %v6841, %v7030
    %v7851 = vsel %vm6472, %v6843, %v7032
    %v7852 = vsel %vm6472, %v6845, %v7034
    %v7853 = vsel %vm6472, %v6847, %v7036
    %v7854 = vsel %vm6472, %v6849, %v7038
    %v7855 = vsel %vm6472, %v6851, %v7040
    %v7856 = vsel %vm6472, %v6853, %v7042
    %v7857 = vsel %vm6472, %v6855, %v7044
    %v7858 = vsel %vm6472, %v6857, %v7046
    %v7859 = vsel %vm6472, %v6859, %v7048
    %v7860 = vsel %vm6472, %v6861, %v7050
    %v7861 = vsel %vm6472, %v6863, %v7052
    %v7862 = vsel %vm6472, %v6865, %v7054
    %v7863 = vsel %vm6472, %v6867, %v7056
    %v7864 = vsel %vm6472, %v6869, %v7058
    %v7865 = vsel %vm6472, %v6871, %v7060
    %v7866 = vsel %vm6472, %v6873, %v7062
    %v7867 = vsel %vm6472, %v6875, %v7064
    %v7868 = vsel %vm6472, %v6877, %v7066
    %v7869 = vsel %vm6472, %v6879, %v7068
    %v7870 = vsel %vm6472, %v6881, %v7070
    %v7871 = vsel %vm6472, %v6883, %v7072
    %v7872 = vsel %vm6472, %v6885, %v7074
    %v7873 = vsel %vm6472, %v6887, %v7076
    %v7874 = vsel %vm6472, %v6889, %v7078
    %v7875 = vsel %vm6472, %v6891, %v7080
    %v7876 = vsel %vm6472, %v6893, %v7082
    %v7877 = vsel %vm6472, %v6895, %v7084
    %v7878 = vsel %vm6472, %v6835, %v7086
    %v7879 = vsel %vm6472, %v6835, %v7088
    %v7880 = vsel %vm6472, %v6897, %v7090
    %v7881 = vsel %vm6472, %v6899, %v7092
    %v7882 = vsel %vm6472, %v6901, %v7094
    %v7883 = vsel %vm6472, %v6903, %v7096
    %v7884 = vsel %vm6472, %v6905, %v7098
    %v7885 = vsel %vm6472, %v6907, %v7100
    %v7886 = vsel %vm6472, %v6909, %v7102
    %v7887 = vsel %vm6472, %v6911, %v7104
    %v7888 = vsel %vm6472, %v6913, %v7106
    %v7889 = vsel %vm6472, %v6915, %v7108
    %v7890 = vsel %vm6472, %v6917, %v7110
    %v7891 = vsel %vm6472, %v6919, %v7112
    %v7892 = vsel %vm6472, %v6921, %v7114
    %v7893 = vsel %vm6472, %v6923, %v7116
    %v7894 = vsel %vm6472, %v6925, %v7118
    %v7895 = vsel %vm6472, %v6927, %v7120
    %v7896 = vsel %vm6472, %v6929, %v7122
    %v7897 = vsel %vm6472, %v6931, %v7124
    %v7898 = vsel %vm6472, %v6933, %v7126
    %v7899 = vsel %vm6472, %v6935, %v7128
    %v7900 = vsel %vm6472, %v6937, %v7130
    %v7901 = vsel %vm6472, %v6939, %v7132
    %v7902 = vsel %vm6472, %v6941, %v7134
    %v7903 = vsel %vm6472, %v6943, %v7136
    %v7904 = vsel %vm6472, %v6945, %v7138
    %v7905 = vsel %vm6472, %v6947, %v7140
    %v7906 = vsel %vm6472, %v6949, %v7142
    %v7907 = vsel %vm6472, %v6951, %v7144
    %v7908 = vsel %vm6472, %v6953, %v7146
    %v7909 = vsel %vm6472, %v6955, %v7148
    %vm7910 = vcmask 785408
    %v7911 = vsel %vm7910, %v7846, %v7214
    %v7912 = vsel %vm7910, %v7847, %v7216
    %v7913 = vsel %vm7910, %v7848, %v7218
    %v7914 = vsel %vm7910, %v7849, %v7220
    %v7915 = vsel %vm7910, %v7850, %v7222
    %v7916 = vsel %vm7910, %v7851, %v7224
    %v7917 = vsel %vm7910, %v7852, %v7226
    %v7918 = vsel %vm7910, %v7853, %v7228
    %v7919 = vsel %vm7910, %v7854, %v7230
    %v7920 = vsel %vm7910, %v7855, %v7232
    %v7921 = vsel %vm7910, %v7856, %v7234
    %v7922 = vsel %vm7910, %v7857, %v7236
    %v7923 = vsel %vm7910, %v7858, %v7238
    %v7924 = vsel %vm7910, %v7859, %v7240
    %v7925 = vsel %vm7910, %v7860, %v7242
    %v7926 = vsel %vm7910, %v7861, %v7244
    %v7927 = vsel %vm7910, %v7862, %v7246
    %v7928 = vsel %vm7910, %v7863, %v7248
    %v7929 = vsel %vm7910, %v7864, %v7250
    %v7930 = vsel %vm7910, %v7865, %v7252
    %v7931 = vsel %vm7910, %v7866, %v7254
    %v7932 = vsel %vm7910, %v7867, %v7256
    %v7933 = vsel %vm7910, %v7868, %v7258
    %v7934 = vsel %vm7910, %v7869, %v7260
    %v7935 = vsel %vm7910, %v7870, %v7262
    %v7936 = vsel %vm7910, %v7871, %v7264
    %v7937 = vsel %vm7910, %v7872, %v7266
    %v7938 = vsel %vm7910, %v7873, %v7268
    %v7939 = vsel %vm7910, %v7874, %v7270
    %v7940 = vsel %vm7910, %v7875, %v7272
    %v7941 = vsel %vm7910, %v7876, %v7274
    %v7942 = vsel %vm7910, %v7877, %v7274
    %v7943 = vsel %vm7910, %v7878, %v7276
    %v7944 = vsel %vm7910, %v7879, %v7278
    %v7945 = vsel %vm7910, %v7880, %v7280
    %v7946 = vsel %vm7910, %v7881, %v7282
    %v7947 = vsel %vm7910, %v7882, %v7284
    %v7948 = vsel %vm7910, %v7883, %v7286
    %v7949 = vsel %vm7910, %v7884, %v7288
    %v7950 = vsel %vm7910, %v7885, %v7290
    %v7951 = vsel %vm7910, %v7886, %v7292
    %v7952 = vsel %vm7910, %v7887, %v7294
    %v7953 = vsel %vm7910, %v7888, %v7296
    %v7954 = vsel %vm7910, %v7889, %v7298
    %v7955 = vsel %vm7910, %v7890, %v7300
    %v7956 = vsel %vm7910, %v7891, %v7302
    %v7957 = vsel %vm7910, %v7892, %v7304
    %v7958 = vsel %vm7910, %v7893, %v7306
    %v7959 = vsel %vm7910, %v7894, %v7308
    %v7960 = vsel %vm7910, %v7895, %v7310
    %v7961 = vsel %vm7910, %v7896, %v7312
    %v7962 = vsel %vm7910, %v7897, %v7314
    %v7963 = vsel %vm7910, %v7898, %v7316
    %v7964 = vsel %vm7910, %v7899, %v7318
    %v7965 = vsel %vm7910, %v7900, %v7320
    %v7966 = vsel %vm7910, %v7901, %v7322
    %v7967 = vsel %vm7910, %v7902, %v7324
    %v7968 = vsel %vm7910, %v7903, %v7326
    %v7969 = vsel %vm7910, %v7904, %v7328
    %v7970 = vsel %vm7910, %v7905, %v7330
    %v7971 = vsel %vm7910, %v7906, %v7332
    %v7972 = vsel %vm7910, %v7907, %v7334
    %v7973 = vsel %vm7910, %v7908, %v7274
    %v7974 = vsel %vm7910, %v7909, %v7274
    %v7975 = vsel %vm6342, %v7214, %v7397
    %v7976 = vsel %vm6342, %v7216, %v7399
    %v7977 = vsel %vm6342, %v7218, %v7401
    %v7978 = vsel %vm6342, %v7220, %v7403
    %v7979 = vsel %vm6342, %v7222, %v7405
    %v7980 = vsel %vm6342, %v7224, %v7407
    %v7981 = vsel %vm6342, %v7226, %v7409
    %v7982 = vsel %vm6342, %v7228, %v7411
    %v7983 = vsel %vm6342, %v7230, %v7413
    %v7984 = vsel %vm6342, %v7232, %v7415
    %v7985 = vsel %vm6342, %v7234, %v7417
    %v7986 = vsel %vm6342, %v7236, %v7419
    %v7987 = vsel %vm6342, %v7238, %v7421
    %v7988 = vsel %vm6342, %v7240, %v7423
    %v7989 = vsel %vm6342, %v7242, %v7425
    %v7990 = vsel %vm6342, %v7244, %v7427
    %v7991 = vsel %vm6342, %v7246, %v7429
    %v7992 = vsel %vm6342, %v7248, %v7431
    %v7993 = vsel %vm6342, %v7250, %v7433
    %v7994 = vsel %vm6342, %v7252, %v7435
    %v7995 = vsel %vm6342, %v7254, %v7437
    %v7996 = vsel %vm6342, %v7256, %v7439
    %v7997 = vsel %vm6342, %v7258, %v7441
    %v7998 = vsel %vm6342, %v7260, %v7443
    %v7999 = vsel %vm6342, %v7262, %v7445
    %v8000 = vsel %vm6342, %v7264, %v7447
    %v8001 = vsel %vm6342, %v7266, %v7449
    %v8002 = vsel %vm6342, %v7268, %v7451
    %v8003 = vsel %vm6342, %v7270, %v7453
    %v8004 = vsel %vm6342, %v7272, %v7453
    %v8005 = vsel %vm6342, %v7274, %v7453
    %v8006 = vsel %vm6342, %v7276, %v7455
    %v8007 = vsel %vm6342, %v7278, %v7457
    %v8008 = vsel %vm6342, %v7280, %v7459
    %v8009 = vsel %vm6342, %v7282, %v7461
    %v8010 = vsel %vm6342, %v7284, %v7463
    %v8011 = vsel %vm6342, %v7286, %v7465
    %v8012 = vsel %vm6342, %v7288, %v7467
    %v8013 = vsel %vm6342, %v7290, %v7469
    %v8014 = vsel %vm6342, %v7292, %v7471
    %v8015 = vsel %vm6342, %v7294, %v7473
    %v8016 = vsel %vm6342, %v7296, %v7475
    %v8017 = vsel %vm6342, %v7298, %v7477
    %v8018 = vsel %vm6342, %v7300, %v7479
    %v8019 = vsel %vm6342, %v7302, %v7481
    %v8020 = vsel %vm6342, %v7304, %v7483
    %v8021 = vsel %vm6342, %v7306, %v7485
    %v8022 = vsel %vm6342, %v7308, %v7487
    %v8023 = vsel %vm6342, %v7310, %v7489
    %v8024 = vsel %vm6342, %v7312, %v7491
    %v8025 = vsel %vm6342, %v7314, %v7493
    %v8026 = vsel %vm6342, %v7316, %v7495
    %v8027 = vsel %vm6342, %v7318, %v7497
    %v8028 = vsel %vm6342, %v7320, %v7499
    %v8029 = vsel %vm6342, %v7322, %v7501
    %v8030 = vsel %vm6342, %v7324, %v7503
    %v8031 = vsel %vm6342, %v7326, %v7505
    %v8032 = vsel %vm6342, %v7328, %v7507
    %v8033 = vsel %vm6342, %v7330, %v7509
    %v8034 = vsel %vm6342, %v7332, %v7453
    %v8035 = vsel %vm6342, %v7334, %v7453
    %vm8036 = vcmask 654336
    %v8037 = vsel %vm8036, %v7975, %v7568
    %v8038 = vsel %vm8036, %v7976, %v7570
    %v8039 = vsel %vm8036, %v7977, %v7572
    %v8040 = vsel %vm8036, %v7978, %v7574
    %v8041 = vsel %vm8036, %v7979, %v7576
    %v8042 = vsel %vm8036, %v7980, %v7578
    %v8043 = vsel %vm8036, %v7981, %v7580
    %v8044 = vsel %vm8036, %v7982, %v7582
    %v8045 = vsel %vm8036, %v7983, %v7584
    %v8046 = vsel %vm8036, %v7984, %v7586
    %v8047 = vsel %vm8036, %v7985, %v7588
    %v8048 = vsel %vm8036, %v7986, %v7590
    %v8049 = vsel %vm8036, %v7987, %v7592
    %v8050 = vsel %vm8036, %v7988, %v7594
    %v8051 = vsel %vm8036, %v7989, %v7596
    %v8052 = vsel %vm8036, %v7990, %v7598
    %v8053 = vsel %vm8036, %v7991, %v7600
    %v8054 = vsel %vm8036, %v7992, %v7602
    %v8055 = vsel %vm8036, %v7993, %v7604
    %v8056 = vsel %vm8036, %v7994, %v7606
    %v8057 = vsel %vm8036, %v7995, %v7608
    %v8058 = vsel %vm8036, %v7996, %v7610
    %v8059 = vsel %vm8036, %v7997, %v7612
    %v8060 = vsel %vm8036, %v7998, %v7614
    %v8061 = vsel %vm8036, %v7999, %v7616
    %v8062 = vsel %vm8036, %v8000, %v7618
    %v8063 = vsel %vm8036, %v8001, %v7620
    %v8064 = vsel %vm8036, %v8002, %v7620
    %v8065 = vsel %vm8036, %v8003, %v7620
    %v8066 = vsel %vm8036, %v8004, %v7620
    %v8067 = vsel %vm8036, %v8005, %v7620
    %v8068 = vsel %vm8036, %v8006, %v7622
    %v8069 = vsel %vm8036, %v8007, %v7624
    %v8070 = vsel %vm8036, %v8008, %v7626
    %v8071 = vsel %vm8036, %v8009, %v7628
    %v8072 = vsel %vm8036, %v8010, %v7630
    %v8073 = vsel %vm8036, %v8011, %v7632
    %v8074 = vsel %vm8036, %v8012, %v7634
    %v8075 = vsel %vm8036, %v8013, %v7636
    %v8076 = vsel %vm8036, %v8014, %v7638
    %v8077 = vsel %vm8036, %v8015, %v7640
    %v8078 = vsel %vm8036, %v8016, %v7642
    %v8079 = vsel %vm8036, %v8017, %v7644
    %v8080 = vsel %vm8036, %v8018, %v7646
    %v8081 = vsel %vm8036, %v8019, %v7648
    %v8082 = vsel %vm8036, %v8020, %v7650
    %v8083 = vsel %vm8036, %v8021, %v7652
    %v8084 = vsel %vm8036, %v8022, %v7654
    %v8085 = vsel %vm8036, %v8023, %v7656
    %v8086 = vsel %vm8036, %v8024, %v7658
    %v8087 = vsel %vm8036, %v8025, %v7660
    %v8088 = vsel %vm8036, %v8026, %v7662
    %v8089 = vsel %vm8036, %v8027, %v7664
    %v8090 = vsel %vm8036, %v8028, %v7666
    %v8091 = vsel %vm8036, %v8029, %v7668
    %v8092 = vsel %vm8036, %v8030, %v7670
    %v8093 = vsel %vm8036, %v8031, %v7672
    %v8094 = vsel %vm8036, %v8032, %v7620
    %v8095 = vsel %vm8036, %v8033, %v7620
    %v8096 = vsel %vm8036, %v8034, %v7620
    %v8097 = vsel %vm8036, %v8035, %v7620
    %v8098 = vld [vmem:[%s3] sm:$0xff]
    %v8099 = vld [vmem:[%s3 + $0x8] sm:$0xff]
    %v8100 = vld [vmem:[%s3 + $0x10] sm:$0xff]
    %v8101 = vld [vmem:[%s3 + $0x18] sm:$0xff]
    %v8102 = vld [vmem:[%s3 + $0x20] sm:$0xff]
    %v8103 = vld [vmem:[%s3 + $0x28] sm:$0xff]
    %v8104 = vld [vmem:[%s3 + $0x30] sm:$0xff]
    %v8105 = vld [vmem:[%s3 + $0x38] sm:$0xff]
    %v8106 = vld [vmem:[%s3 + $0x40] sm:$0xff]
    %v8107 = vld [vmem:[%s3 + $0x48] sm:$0xff]
    %v8108 = vld [vmem:[%s3 + $0x50] sm:$0xff]
    %v8109 = vld [vmem:[%s3 + $0x58] sm:$0xff]
    %v8110 = vld [vmem:[%s3 + $0x60] sm:$0xff]
    %v8111 = vld [vmem:[%s3 + $0x68] sm:$0xff]
    %v8112 = vld [vmem:[%s3 + $0x70] sm:$0xff]
    %v8113 = vld [vmem:[%s3 + $0x78] sm:$0xff]
    %v8114 = vld [vmem:[%s3 + $0x80] sm:$0xff]
    %v8115 = vld [vmem:[%s3 + $0x88] sm:$0xff]
    %v8116 = vld [vmem:[%s3 + $0x90] sm:$0xff]
    %v8117 = vld [vmem:[%s3 + $0x98] sm:$0xff]
    %v8118 = vld [vmem:[%s3 + $0xa0] sm:$0xff]
    %v8119 = vld [vmem:[%s3 + $0xa8] sm:$0xff]
    %v8120 = vld [vmem:[%s3 + $0xb0] sm:$0xff]
    %v8121 = vld [vmem:[%s3 + $0xb8] sm:$0xff]
    %v8122 = vld [vmem:[%s3 + $0xc0] sm:$0xff]
    %v8123 = vld [vmem:[%s3 + $0xc8] sm:$0xff]
    %v8124 = vld [vmem:[%s3 + $0xd0] sm:$0xff]
    %v8125 = vld [vmem:[%s3 + $0xd8] sm:$0xff]
    %v8126 = vld [vmem:[%s3 + $0xe0] sm:$0xff]
    %v8127 = vld [vmem:[%s3 + $0xe8] sm:$0xff]
    %v8128 = vld [vmem:[%s3 + $0xf0] sm:$0xff]
    %v8129 = vld [vmem:[%s3 + $0xf8] sm:$0xff]
    %v8130 = vld [vmem:[%s3 + $0x100] sm:$0xff]
    %v8131 = vld [vmem:[%s3 + $0x108] sm:$0xff]
    %v8132 = vld [vmem:[%s3 + $0x110] sm:$0xff]
    %v8133 = vld [vmem:[%s3 + $0x118] sm:$0xff]
    %v8134 = vld [vmem:[%s3 + $0x120] sm:$0xff]
    %v8135 = vld [vmem:[%s3 + $0x128] sm:$0xff]
    %v8136 = vld [vmem:[%s3 + $0x130] sm:$0xff]
    %v8137 = vld [vmem:[%s3 + $0x138] sm:$0xff]
    %v8138 = vld [vmem:[%s3 + $0x140] sm:$0xff]
    %v8139 = vld [vmem:[%s3 + $0x148] sm:$0xff]
    %v8140 = vld [vmem:[%s3 + $0x150] sm:$0xff]
    %v8141 = vld [vmem:[%s3 + $0x158] sm:$0xff]
    %v8142 = vld [vmem:[%s3 + $0x160] sm:$0xff]
    %v8143 = vld [vmem:[%s3 + $0x168] sm:$0xff]
    %v8144 = vld [vmem:[%s3 + $0x170] sm:$0xff]
    %v8145 = vld [vmem:[%s3 + $0x178] sm:$0xff]
    %v8146 = vld [vmem:[%s3 + $0x180] sm:$0xff]
    %v8147 = vsel %vm6212, %v7568, 0
    %v8149 = vsel %vm6212, %v7570, 0
    %v8151 = vsel %vm6212, %v7572, 0
    %v8153 = vsel %vm6212, %v7574, 0
    %v8155 = vsel %vm6212, %v7576, 0
    %v8157 = vsel %vm6212, %v7578, 0
    %v8159 = vsel %vm6212, %v7580, 0
    %v8161 = vsel %vm6212, %v7582, 0
    %v8163 = vsel %vm6212, %v7584, 0
    %v8165 = vsel %vm6212, %v7586, 0
    %v8167 = vsel %vm6212, %v7588, 0
    %v8169 = vsel %vm6212, %v7590, 0
    %v8171 = vsel %vm6212, %v7592, 0
    %v8173 = vsel %vm6212, %v7594, 0
    %v8175 = vsel %vm6212, %v7596, 0
    %v8177 = vsel %vm6212, %v7598, 0
    %v8179 = vsel %vm6212, %v7600, 0
    %v8181 = vsel %vm6212, %v7602, 0
    %v8183 = vsel %vm6212, %v7604, 0
    %v8185 = vsel %vm6212, %v7606, 0
    %v8187 = vsel %vm6212, %v7608, 0
    %v8189 = vsel %vm6212, %v7610, 0
    %v8191 = vsel %vm6212, %v7612, 0
    %v8193 = vsel %vm6212, %v7614, 0
    %v8195 = vsel %vm6212, %v7616, 0
    %v8197 = vsel %vm6212, %v7618, 0
    %v8199 = vsel %vm6212, %v7620, 0
    %v8201 = vsel %vm6212, %v7622, 0
    %v8203 = vsel %vm6212, %v7624, 0
    %v8205 = vsel %vm6212, %v7626, 0
    %v8207 = vsel %vm6212, %v7628, 0
    %v8209 = vsel %vm6212, %v7630, 0
    %v8211 = vsel %vm6212, %v7632, 0
    %v8213 = vsel %vm6212, %v7634, 0
    %v8215 = vsel %vm6212, %v7636, 0
    %v8217 = vsel %vm6212, %v7638, 0
    %v8219 = vsel %vm6212, %v7640, 0
    %v8221 = vsel %vm6212, %v7642, 0
    %v8223 = vsel %vm6212, %v7644, 0
    %v8225 = vsel %vm6212, %v7646, 0
    %v8227 = vsel %vm6212, %v7648, 0
    %v8229 = vsel %vm6212, %v7650, 0
    %v8231 = vsel %vm6212, %v7652, 0
    %v8233 = vsel %vm6212, %v7654, 0
    %v8235 = vsel %vm6212, %v7656, 0
    %v8237 = vsel %vm6212, %v7658, 0
    %v8239 = vsel %vm6212, %v7660, 0
    %v8241 = vsel %vm6212, %v7662, 0
    %v8243 = vsel %vm6212, %v7664, 0
    %v8245 = vsel %vm6212, %v7666, 0
    %v8247 = vsel %vm6212, %v7668, 0
    %v8249 = vsel %vm6212, %v7670, 0
    %v8251 = vsel %vm6212, %v7672, 0
    %8253 = vmatprep.subr.mxu0 0.0
    %8254 = vmatpush1.msra.mxu0 %v8113
    %8255 = vmatprep.subr.mxu0 0.0
    %8256 = vmatpush1.msra.mxu0 %v8112
    %8257 = vmatprep.subr.mxu0 0.0
    %8258 = vmatpush1.msra.mxu0 %v8111
    %8259 = vmatprep.subr.mxu0 0.0
    %8260 = vmatpush1.msra.mxu0 %v8110
    %8261 = vmatprep.subr.mxu0 0.0
    %8262 = vmatpush1.msra.mxu0 %v8109
    %8263 = vmatprep.subr.mxu0 0.0
    %8264 = vmatpush1.msra.mxu0 %v8108
    %8265 = vmatprep.subr.mxu0 0.0
    %8266 = vmatpush1.msra.mxu0 %v8107
    %8267 = vmatprep.subr.mxu0 0.0
    %8268 = vmatpush1.msra.mxu0 %v8106
    %8269 = vmatprep.subr.mxu0 0.0
    %8270 = vmatpush1.msra.mxu0 %v8105
    %8271 = vmatprep.subr.mxu0 0.0
    %8272 = vmatpush1.msra.mxu0 %v8104
    %8273 = vmatprep.subr.mxu0 0.0
    %8274 = vmatpush1.msra.mxu0 %v8103
    %8275 = vmatprep.subr.mxu0 0.0
    %8276 = vmatpush1.msra.mxu0 %v8102
    %8277 = vmatprep.subr.mxu0 0.0
    %8278 = vmatpush1.msra.mxu0 %v8101
    %8279 = vmatprep.subr.mxu0 0.0
    %8280 = vmatpush1.msra.mxu0 %v8100
    %8281 = vmatprep.subr.mxu0 0.0
    %8282 = vmatpush1.msra.mxu0 %v8099
    %8283 = vmatprep.subr.mxu0 0.0
    %8284 = vmatpush1.msra.mxu0 %v8098
    %8285 = vmatprep.subr.mxu0 0.0
    %8286 = vmatpush2.msra.mxu0 %v8129
    %8287 = vmatprep.subr.mxu0 0.0
    %8288 = vmatpush2.msra.mxu0 %v8128
    %8289 = vmatprep.subr.mxu0 0.0
    %8290 = vmatpush2.msra.mxu0 %v8127
    %8291 = vmatprep.subr.mxu0 0.0
    %8292 = vmatpush2.msra.mxu0 %v8126
    %8293 = vmatprep.subr.mxu0 0.0
    %8294 = vmatpush2.msra.mxu0 %v8125
    %8295 = vmatprep.subr.mxu0 0.0
    %8296 = vmatpush2.msra.mxu0 %v8124
    %8297 = vmatprep.subr.mxu0 0.0
    %8298 = vmatpush2.msra.mxu0 %v8123
    %8299 = vmatprep.subr.mxu0 0.0
    %8300 = vmatpush2.msra.mxu0 %v8122
    %8301 = vmatprep.subr.mxu0 0.0
    %8302 = vmatpush2.msra.mxu0 %v8121
    %8303 = vmatprep.subr.mxu0 0.0
    %8304 = vmatpush2.msra.mxu0 %v8120
    %8305 = vmatprep.subr.mxu0 0.0
    %8306 = vmatpush2.msra.mxu0 %v8119
    %8307 = vmatprep.subr.mxu0 0.0
    %8308 = vmatpush2.msra.mxu0 %v8118
    %8309 = vmatprep.subr.mxu0 0.0
    %8310 = vmatpush2.msra.mxu0 %v8117
    %8311 = vmatprep.subr.mxu0 0.0
    %8312 = vmatpush2.msra.mxu0 %v8116
    %8313 = vmatprep.subr.mxu0 0.0
    %8314 = vmatpush2.msra.mxu0 %v8115
    %8315 = vmatprep.subr.mxu0 0.0
    %8316 = vmatpush2.msra.mxu0 %v8114
    %8317 = vmatprep.mubr.f32.mxu0 %v7911
    %8318 = vmatmul.mubr.f32.gmra.mxu0 %v7785
    %v8319 = vpop.f32.mrf.mxu0
    %v8320 = vadd.f32 0.0, %v8319
    %v8321 = vpop.f32.mrf.mxu0
    %8322 = vmatprep.mubr.f32.mxu0 %v7912
    %8323 = vmatmul.mubr.f32.gmra.mxu0 %v7785
    %v8324 = vpop.f32.mrf.mxu0
    %v8325 = vadd.f32 0.0, %v8324
    %v8326 = vpop.f32.mrf.mxu0
    %8327 = vmatprep.mubr.f32.mxu0 %v7913
    %8328 = vmatmul.mubr.f32.gmra.mxu0 %v7786
    %v8329 = vpop.f32.mrf.mxu0
    %v8330 = vadd.f32 0.0, %v8329
    %v8331 = vpop.f32.mrf.mxu0
    %8332 = vmatprep.mubr.f32.mxu0 %v7914
    %8333 = vmatmul.mubr.f32.gmra.mxu0 %v7787
    %v8334 = vpop.f32.mrf.mxu0
    %v8335 = vadd.f32 0.0, %v8334
    %v8336 = vpop.f32.mrf.mxu0
    %8337 = vmatprep.mubr.f32.mxu0 %v7915
    %8338 = vmatmul.mubr.f32.gmra.mxu0 %v7788
    %v8339 = vpop.f32.mrf.mxu0
    %v8340 = vadd.f32 0.0, %v8339
    %v8341 = vpop.f32.mrf.mxu0
    %8342 = vmatprep.mubr.f32.mxu0 %v7916
    %8343 = vmatmul.mubr.f32.gmra.mxu0 %v7789
    %v8344 = vpop.f32.mrf.mxu0
    %v8345 = vadd.f32 0.0, %v8344
    %v8346 = vpop.f32.mrf.mxu0
    %8347 = vmatprep.mubr.f32.mxu0 %v7917
    %8348 = vmatmul.mubr.f32.gmra.mxu0 %v7790
    %v8349 = vpop.f32.mrf.mxu0
    %v8350 = vadd.f32 0.0, %v8349
    %v8351 = vpop.f32.mrf.mxu0
    %8352 = vmatprep.mubr.f32.mxu0 %v7918
    %8353 = vmatmul.mubr.f32.gmra.mxu0 %v7791
    %v8354 = vpop.f32.mrf.mxu0
    %v8355 = vadd.f32 0.0, %v8354
    %v8356 = vpop.f32.mrf.mxu0
    %8357 = vmatprep.mubr.f32.mxu0 %v7919
    %8358 = vmatmul.mubr.f32.gmra.mxu0 %v7792
    %v8359 = vpop.f32.mrf.mxu0
    %v8360 = vadd.f32 0.0, %v8359
    %v8361 = vpop.f32.mrf.mxu0
    %8362 = vmatprep.mubr.f32.mxu0 %v7920
    %8363 = vmatmul.mubr.f32.gmra.mxu0 %v7793
    %v8364 = vpop.f32.mrf.mxu0
    %v8365 = vadd.f32 0.0, %v8364
    %v8366 = vpop.f32.mrf.mxu0
    %8367 = vmatprep.mubr.f32.mxu0 %v7921
    %8368 = vmatmul.mubr.f32.gmra.mxu0 %v7794
    %v8369 = vpop.f32.mrf.mxu0
    %v8370 = vadd.f32 0.0, %v8369
    %v8371 = vpop.f32.mrf.mxu0
    %8372 = vmatprep.mubr.f32.mxu0 %v7922
    %8373 = vmatmul.mubr.f32.gmra.mxu0 %v7795
    %v8374 = vpop.f32.mrf.mxu0
    %v8375 = vadd.f32 0.0, %v8374
    %v8376 = vpop.f32.mrf.mxu0
    %8377 = vmatprep.mubr.f32.mxu0 %v7923
    %8378 = vmatmul.mubr.f32.gmra.mxu0 %v7796
    %v8379 = vpop.f32.mrf.mxu0
    %v8380 = vadd.f32 0.0, %v8379
    %v8381 = vpop.f32.mrf.mxu0
    %8382 = vmatprep.mubr.f32.mxu0 %v7924
    %8383 = vmatmul.mubr.f32.gmra.mxu0 %v7797
    %v8384 = vpop.f32.mrf.mxu0
    %v8385 = vadd.f32 0.0, %v8384
    %v8386 = vpop.f32.mrf.mxu0
    %8387 = vmatprep.mubr.f32.mxu0 %v7925
    %8388 = vmatmul.mubr.f32.gmra.mxu0 %v7798
    %v8389 = vpop.f32.mrf.mxu0
    %v8390 = vadd.f32 0.0, %v8389
    %v8391 = vpop.f32.mrf.mxu0
    %8392 = vmatprep.mubr.f32.mxu0 %v7926
    %8393 = vmatmul.mubr.f32.gmra.mxu0 %v7799
    %v8394 = vpop.f32.mrf.mxu0
    %v8395 = vadd.f32 0.0, %v8394
    %v8396 = vpop.f32.mrf.mxu0
    %8397 = vmatprep.mubr.f32.mxu0 %v7927
    %8398 = vmatmul.mubr.f32.gmra.mxu0 %v7800
    %v8399 = vpop.f32.mrf.mxu0
    %v8400 = vadd.f32 0.0, %v8399
    %v8401 = vpop.f32.mrf.mxu0
    %8402 = vmatprep.mubr.f32.mxu0 %v7928
    %8403 = vmatmul.mubr.f32.gmra.mxu0 %v7801
    %v8404 = vpop.f32.mrf.mxu0
    %v8405 = vadd.f32 0.0, %v8404
    %v8406 = vpop.f32.mrf.mxu0
    %8407 = vmatprep.mubr.f32.mxu0 %v7929
    %8408 = vmatmul.mubr.f32.gmra.mxu0 %v7802
    %v8409 = vpop.f32.mrf.mxu0
    %v8410 = vadd.f32 0.0, %v8409
    %v8411 = vpop.f32.mrf.mxu0
    %8412 = vmatprep.mubr.f32.mxu0 %v7930
    %8413 = vmatmul.mubr.f32.gmra.mxu0 %v7803
    %v8414 = vpop.f32.mrf.mxu0
    %v8415 = vadd.f32 0.0, %v8414
    %v8416 = vpop.f32.mrf.mxu0
    %8417 = vmatprep.mubr.f32.mxu0 %v7931
    %8418 = vmatmul.mubr.f32.gmra.mxu0 %v7804
    %v8419 = vpop.f32.mrf.mxu0
    %v8420 = vadd.f32 0.0, %v8419
    %v8421 = vpop.f32.mrf.mxu0
    %8422 = vmatprep.mubr.f32.mxu0 %v7932
    %8423 = vmatmul.mubr.f32.gmra.mxu0 %v7805
    %v8424 = vpop.f32.mrf.mxu0
    %v8425 = vadd.f32 0.0, %v8424
    %v8426 = vpop.f32.mrf.mxu0
    %8427 = vmatprep.mubr.f32.mxu0 %v7933
    %8428 = vmatmul.mubr.f32.gmra.mxu0 %v7806
    %v8429 = vpop.f32.mrf.mxu0
    %v8430 = vadd.f32 0.0, %v8429
    %v8431 = vpop.f32.mrf.mxu0
    %8432 = vmatprep.mubr.f32.mxu0 %v7934
    %8433 = vmatmul.mubr.f32.gmra.mxu0 %v7807
    %v8434 = vpop.f32.mrf.mxu0
    %v8435 = vadd.f32 0.0, %v8434
    %v8436 = vpop.f32.mrf.mxu0
    %8437 = vmatprep.mubr.f32.mxu0 %v7935
    %8438 = vmatmul.mubr.f32.gmra.mxu0 %v7808
    %v8439 = vpop.f32.mrf.mxu0
    %v8440 = vadd.f32 0.0, %v8439
    %v8441 = vpop.f32.mrf.mxu0
    %8442 = vmatprep.mubr.f32.mxu0 %v7936
    %8443 = vmatmul.mubr.f32.gmra.mxu0 %v7809
    %v8444 = vpop.f32.mrf.mxu0
    %v8445 = vadd.f32 0.0, %v8444
    %v8446 = vpop.f32.mrf.mxu0
    %8447 = vmatprep.mubr.f32.mxu0 %v7937
    %8448 = vmatmul.mubr.f32.gmra.mxu0 %v7810
    %v8449 = vpop.f32.mrf.mxu0
    %v8450 = vadd.f32 0.0, %v8449
    %v8451 = vpop.f32.mrf.mxu0
    %8452 = vmatprep.mubr.f32.mxu0 %v7938
    %8453 = vmatmul.mubr.f32.gmra.mxu0 %v7811
    %v8454 = vpop.f32.mrf.mxu0
    %v8455 = vadd.f32 0.0, %v8454
    %v8456 = vpop.f32.mrf.mxu0
    %8457 = vmatprep.mubr.f32.mxu0 %v7939
    %8458 = vmatmul.mubr.f32.gmra.mxu0 %v7812
    %v8459 = vpop.f32.mrf.mxu0
    %v8460 = vadd.f32 0.0, %v8459
    %v8461 = vpop.f32.mrf.mxu0
    %8462 = vmatprep.mubr.f32.mxu0 %v7940
    %8463 = vmatmul.mubr.f32.gmra.mxu0 %v7813
    %v8464 = vpop.f32.mrf.mxu0
    %v8465 = vadd.f32 0.0, %v8464
    %v8466 = vpop.f32.mrf.mxu0
    %8467 = vmatprep.mubr.f32.mxu0 %v7941
    %8468 = vmatmul.mubr.f32.gmra.mxu0 %v7814
    %v8469 = vpop.f32.mrf.mxu0
    %v8470 = vadd.f32 0.0, %v8469
    %v8471 = vpop.f32.mrf.mxu0
    %8472 = vmatprep.mubr.f32.mxu0 %v7942
    %8473 = vmatmul.mubr.f32.gmra.mxu0 %v7815
    %v8474 = vpop.f32.mrf.mxu0
    %v8475 = vadd.f32 0.0, %v8474
    %v8476 = vpop.f32.mrf.mxu0
    %8477 = vmatprep.mubr.f32.mxu0 %v7943
    %8478 = vmatmul.mubr.f32.gmra.mxu0 %v7785
    %v8479 = vpop.f32.mrf.mxu0
    %v8480 = vadd.f32 0.0, %v8479
    %v8481 = vpop.f32.mrf.mxu0
    %8482 = vmatprep.mubr.f32.mxu0 %v7944
    %8483 = vmatmul.mubr.f32.gmra.mxu0 %v7785
    %v8484 = vpop.f32.mrf.mxu0
    %v8485 = vadd.f32 0.0, %v8484
    %v8486 = vpop.f32.mrf.mxu0
    %8487 = vmatprep.mubr.f32.mxu0 %v7945
    %8488 = vmatmul.mubr.f32.gmra.mxu0 %v7816
    %v8489 = vpop.f32.mrf.mxu0
    %v8490 = vadd.f32 0.0, %v8489
    %v8491 = vpop.f32.mrf.mxu0
    %8492 = vmatprep.mubr.f32.mxu0 %v7946
    %8493 = vmatmul.mubr.f32.gmra.mxu0 %v7817
    %v8494 = vpop.f32.mrf.mxu0
    %v8495 = vadd.f32 0.0, %v8494
    %v8496 = vpop.f32.mrf.mxu0
    %8497 = vmatprep.mubr.f32.mxu0 %v7947
    %8498 = vmatmul.mubr.f32.gmra.mxu0 %v7818
    %v8499 = vpop.f32.mrf.mxu0
    %v8500 = vadd.f32 0.0, %v8499
    %v8501 = vpop.f32.mrf.mxu0
    %8502 = vmatprep.mubr.f32.mxu0 %v7948
    %8503 = vmatmul.mubr.f32.gmra.mxu0 %v7819
    %v8504 = vpop.f32.mrf.mxu0
    %v8505 = vadd.f32 0.0, %v8504
    %v8506 = vpop.f32.mrf.mxu0
    %8507 = vmatprep.mubr.f32.mxu0 %v7949
    %8508 = vmatmul.mubr.f32.gmra.mxu0 %v7820
    %v8509 = vpop.f32.mrf.mxu0
    %v8510 = vadd.f32 0.0, %v8509
    %v8511 = vpop.f32.mrf.mxu0
    %8512 = vmatprep.mubr.f32.mxu0 %v7950
    %8513 = vmatmul.mubr.f32.gmra.mxu0 %v7821
    %v8514 = vpop.f32.mrf.mxu0
    %v8515 = vadd.f32 0.0, %v8514
    %v8516 = vpop.f32.mrf.mxu0
    %8517 = vmatprep.mubr.f32.mxu0 %v7951
    %8518 = vmatmul.mubr.f32.gmra.mxu0 %v7822
    %v8519 = vpop.f32.mrf.mxu0
    %v8520 = vadd.f32 0.0, %v8519
    %v8521 = vpop.f32.mrf.mxu0
    %8522 = vmatprep.mubr.f32.mxu0 %v7952
    %8523 = vmatmul.mubr.f32.gmra.mxu0 %v7823
    %v8524 = vpop.f32.mrf.mxu0
    %v8525 = vadd.f32 0.0, %v8524
    %v8526 = vpop.f32.mrf.mxu0
    %8527 = vmatprep.mubr.f32.mxu0 %v7953
    %8528 = vmatmul.mubr.f32.gmra.mxu0 %v7824
    %v8529 = vpop.f32.mrf.mxu0
    %v8530 = vadd.f32 0.0, %v8529
    %v8531 = vpop.f32.mrf.mxu0
    %8532 = vmatprep.mubr.f32.mxu0 %v7954
    %8533 = vmatmul.mubr.f32.gmra.mxu0 %v7825
    %v8534 = vpop.f32.mrf.mxu0
    %v8535 = vadd.f32 0.0, %v8534
    %v8536 = vpop.f32.mrf.mxu0
    %8537 = vmatprep.mubr.f32.mxu0 %v7955
    %8538 = vmatmul.mubr.f32.gmra.mxu0 %v7826
    %v8539 = vpop.f32.mrf.mxu0
    %v8540 = vadd.f32 0.0, %v8539
    %v8541 = vpop.f32.mrf.mxu0
    %8542 = vmatprep.mubr.f32.mxu0 %v7956
    %8543 = vmatmul.mubr.f32.gmra.mxu0 %v7827
    %v8544 = vpop.f32.mrf.mxu0
    %v8545 = vadd.f32 0.0, %v8544
    %v8546 = vpop.f32.mrf.mxu0
    %8547 = vmatprep.mubr.f32.mxu0 %v7957
    %8548 = vmatmul.mubr.f32.gmra.mxu0 %v7828
    %v8549 = vpop.f32.mrf.mxu0
    %v8550 = vadd.f32 0.0, %v8549
    %v8551 = vpop.f32.mrf.mxu0
    %8552 = vmatprep.mubr.f32.mxu0 %v7958
    %8553 = vmatmul.mubr.f32.gmra.mxu0 %v7829
    %v8554 = vpop.f32.mrf.mxu0
    %v8555 = vadd.f32 0.0, %v8554
    %v8556 = vpop.f32.mrf.mxu0
    %8557 = vmatprep.mubr.f32.mxu0 %v7959
    %8558 = vmatmul.mubr.f32.gmra.mxu0 %v7830
    %v8559 = vpop.f32.mrf.mxu0
    %v8560 = vadd.f32 0.0, %v8559
    %v8561 = vpop.f32.mrf.mxu0
    %8562 = vmatprep.mubr.f32.mxu0 %v7960
    %8563 = vmatmul.mubr.f32.gmra.mxu0 %v7831
    %v8564 = vpop.f32.mrf.mxu0
    %v8565 = vadd.f32 0.0, %v8564
    %v8566 = vpop.f32.mrf.mxu0
    %8567 = vmatprep.mubr.f32.mxu0 %v7961
    %8568 = vmatmul.mubr.f32.gmra.mxu0 %v7832
    %v8569 = vpop.f32.mrf.mxu0
    %v8570 = vadd.f32 0.0, %v8569
    %v8571 = vpop.f32.mrf.mxu0
    %8572 = vmatprep.mubr.f32.mxu0 %v7962
    %8573 = vmatmul.mubr.f32.gmra.mxu0 %v7833
    %v8574 = vpop.f32.mrf.mxu0
    %v8575 = vadd.f32 0.0, %v8574
    %v8576 = vpop.f32.mrf.mxu0
    %8577 = vmatprep.mubr.f32.mxu0 %v7963
    %8578 = vmatmul.mubr.f32.gmra.mxu0 %v7834
    %v8579 = vpop.f32.mrf.mxu0
    %v8580 = vadd.f32 0.0, %v8579
    %v8581 = vpop.f32.mrf.mxu0
    %8582 = vmatprep.mubr.f32.mxu0 %v7964
    %8583 = vmatmul.mubr.f32.gmra.mxu0 %v7835
    %v8584 = vpop.f32.mrf.mxu0
    %v8585 = vadd.f32 0.0, %v8584
    %v8586 = vpop.f32.mrf.mxu0
    %8587 = vmatprep.mubr.f32.mxu0 %v7965
    %8588 = vmatmul.mubr.f32.gmra.mxu0 %v7836
    %v8589 = vpop.f32.mrf.mxu0
    %v8590 = vadd.f32 0.0, %v8589
    %v8591 = vpop.f32.mrf.mxu0
    %8592 = vmatprep.mubr.f32.mxu0 %v7966
    %8593 = vmatmul.mubr.f32.gmra.mxu0 %v7837
    %v8594 = vpop.f32.mrf.mxu0
    %v8595 = vadd.f32 0.0, %v8594
    %v8596 = vpop.f32.mrf.mxu0
    %8597 = vmatprep.mubr.f32.mxu0 %v7967
    %8598 = vmatmul.mubr.f32.gmra.mxu0 %v7838
    %v8599 = vpop.f32.mrf.mxu0
    %v8600 = vadd.f32 0.0, %v8599
    %v8601 = vpop.f32.mrf.mxu0
    %8602 = vmatprep.mubr.f32.mxu0 %v7968
    %8603 = vmatmul.mubr.f32.gmra.mxu0 %v7839
    %v8604 = vpop.f32.mrf.mxu0
    %v8605 = vadd.f32 0.0, %v8604
    %v8606 = vpop.f32.mrf.mxu0
    %8607 = vmatprep.mubr.f32.mxu0 %v7969
    %8608 = vmatmul.mubr.f32.gmra.mxu0 %v7840
    %v8609 = vpop.f32.mrf.mxu0
    %v8610 = vadd.f32 0.0, %v8609
    %v8611 = vpop.f32.mrf.mxu0
    %8612 = vmatprep.mubr.f32.mxu0 %v7970
    %8613 = vmatmul.mubr.f32.gmra.mxu0 %v7841
    %v8614 = vpop.f32.mrf.mxu0
    %v8615 = vadd.f32 0.0, %v8614
    %v8616 = vpop.f32.mrf.mxu0
    %8617 = vmatprep.mubr.f32.mxu0 %v7971
    %8618 = vmatmul.mubr.f32.gmra.mxu0 %v7842
    %v8619 = vpop.f32.mrf.mxu0
    %v8620 = vadd.f32 0.0, %v8619
    %v8621 = vpop.f32.mrf.mxu0
    %8622 = vmatprep.mubr.f32.mxu0 %v7972
    %8623 = vmatmul.mubr.f32.gmra.mxu0 %v7843
    %v8624 = vpop.f32.mrf.mxu0
    %v8625 = vadd.f32 0.0, %v8624
    %v8626 = vpop.f32.mrf.mxu0
    %8627 = vmatprep.mubr.f32.mxu0 %v7973
    %8628 = vmatmul.mubr.f32.gmra.mxu0 %v7844
    %v8629 = vpop.f32.mrf.mxu0
    %v8630 = vadd.f32 0.0, %v8629
    %v8631 = vpop.f32.mrf.mxu0
    %8632 = vmatprep.mubr.f32.mxu0 %v7974
    %8633 = vmatmul.mubr.f32.gmra.mxu0 %v7845
    %v8634 = vpop.f32.mrf.mxu0
    %v8635 = vadd.f32 0.0, %v8634
    %v8636 = vpop.f32.mrf.mxu0
    %8637 = vdwg.mxu0
    %8638 = vmatprep.subr.mxu0 0.0
    %8639 = vmatpush1.msra.mxu0 %v8145
    %8640 = vmatprep.subr.mxu0 0.0
    %8641 = vmatpush1.msra.mxu0 %v8144
    %8642 = vmatprep.subr.mxu0 0.0
    %8643 = vmatpush1.msra.mxu0 %v8143
    %8644 = vmatprep.subr.mxu0 0.0
    %8645 = vmatpush1.msra.mxu0 %v8142
    %8646 = vmatprep.subr.mxu0 0.0
    %8647 = vmatpush1.msra.mxu0 %v8141
    %8648 = vmatprep.subr.mxu0 0.0
    %8649 = vmatpush1.msra.mxu0 %v8140
    %8650 = vmatprep.subr.mxu0 0.0
    %8651 = vmatpush1.msra.mxu0 %v8139
    %8652 = vmatprep.subr.mxu0 0.0
    %8653 = vmatpush1.msra.mxu0 %v8138
    %8654 = vmatprep.subr.mxu0 0.0
    %8655 = vmatpush1.msra.mxu0 %v8137
    %8656 = vmatprep.subr.mxu0 0.0
    %8657 = vmatpush1.msra.mxu0 %v8136
    %8658 = vmatprep.subr.mxu0 0.0
    %8659 = vmatpush1.msra.mxu0 %v8135
    %8660 = vmatprep.subr.mxu0 0.0
    %8661 = vmatpush1.msra.mxu0 %v8134
    %8662 = vmatprep.subr.mxu0 0.0
    %8663 = vmatpush1.msra.mxu0 %v8133
    %8664 = vmatprep.subr.mxu0 0.0
    %8665 = vmatpush1.msra.mxu0 %v8132
    %8666 = vmatprep.subr.mxu0 0.0
    %8667 = vmatpush1.msra.mxu0 %v8131
    %8668 = vmatprep.subr.mxu0 0.0
    %8669 = vmatpush1.msra.mxu0 %v8130
    %8670 = vmatprep.subr.mxu0 0.0
    %8671 = vmatpush2.msra.mxu0 0.0
    %8672 = vmatprep.subr.mxu0 0.0
    %8673 = vmatpush2.msra.mxu0 0.0
    %8674 = vmatprep.subr.mxu0 0.0
    %8675 = vmatpush2.msra.mxu0 0.0
    %8676 = vmatprep.subr.mxu0 0.0
    %8677 = vmatpush2.msra.mxu0 0.0
    %8678 = vmatprep.subr.mxu0 0.0
    %8679 = vmatpush2.msra.mxu0 0.0
    %8680 = vmatprep.subr.mxu0 0.0
    %8681 = vmatpush2.msra.mxu0 0.0
    %8682 = vmatprep.subr.mxu0 0.0
    %8683 = vmatpush2.msra.mxu0 0.0
    %8684 = vmatprep.subr.mxu0 0.0
    %8685 = vmatpush2.msra.mxu0 0.0
    %8686 = vmatprep.subr.mxu0 0.0
    %8687 = vmatpush2.msra.mxu0 0.0
    %8688 = vmatprep.subr.mxu0 0.0
    %8689 = vmatpush2.msra.mxu0 0.0
    %8690 = vmatprep.subr.mxu0 0.0
    %8691 = vmatpush2.msra.mxu0 0.0
    %8692 = vmatprep.subr.mxu0 0.0
    %8693 = vmatpush2.msra.mxu0 0.0
    %8694 = vmatprep.subr.mxu0 0.0
    %8695 = vmatpush2.msra.mxu0 0.0
    %8696 = vmatprep.subr.mxu0 0.0
    %8697 = vmatpush2.msra.mxu0 0.0
    %8698 = vmatprep.subr.mxu0 0.0
    %8699 = vmatpush2.msra.mxu0 0.0
    %8700 = vmatprep.subr.mxu0 0.0
    %8701 = vmatpush2.msra.mxu0 %v8146
    %8702 = vmatprep.mubr.f32.mxu0 %v8147
    %8703 = vmatmul.mubr.f32.gmra.mxu0 %v8037
    %v8704 = vpop.f32.mrf.mxu0
    %v8705 = vadd.f32 %v8320, %v8704
    %v8706 = vpop.f32.mrf.mxu0
    %8707 = vmatprep.mubr.f32.mxu0 %v8149
    %8708 = vmatmul.mubr.f32.gmra.mxu0 %v8038
    %v8709 = vpop.f32.mrf.mxu0
    %v8710 = vadd.f32 %v8325, %v8709
    %v8711 = vpop.f32.mrf.mxu0
    %8712 = vmatprep.mubr.f32.mxu0 %v8151
    %8713 = vmatmul.mubr.f32.gmra.mxu0 %v8039
    %v8714 = vpop.f32.mrf.mxu0
    %v8715 = vadd.f32 %v8330, %v8714
    %v8716 = vpop.f32.mrf.mxu0
    %8717 = vmatprep.mubr.f32.mxu0 %v8153
    %8718 = vmatmul.mubr.f32.gmra.mxu0 %v8040
    %v8719 = vpop.f32.mrf.mxu0
    %v8720 = vadd.f32 %v8335, %v8719
    %v8721 = vpop.f32.mrf.mxu0
    %8722 = vmatprep.mubr.f32.mxu0 %v8155
    %8723 = vmatmul.mubr.f32.gmra.mxu0 %v8041
    %v8724 = vpop.f32.mrf.mxu0
    %v8725 = vadd.f32 %v8340, %v8724
    %v8726 = vpop.f32.mrf.mxu0
    %8727 = vmatprep.mubr.f32.mxu0 %v8157
    %8728 = vmatmul.mubr.f32.gmra.mxu0 %v8042
    %v8729 = vpop.f32.mrf.mxu0
    %v8730 = vadd.f32 %v8345, %v8729
    %v8731 = vpop.f32.mrf.mxu0
    %8732 = vmatprep.mubr.f32.mxu0 %v8159
    %8733 = vmatmul.mubr.f32.gmra.mxu0 %v8043
    %v8734 = vpop.f32.mrf.mxu0
    %v8735 = vadd.f32 %v8350, %v8734
    %v8736 = vpop.f32.mrf.mxu0
    %8737 = vmatprep.mubr.f32.mxu0 %v8161
    %8738 = vmatmul.mubr.f32.gmra.mxu0 %v8044
    %v8739 = vpop.f32.mrf.mxu0
    %v8740 = vadd.f32 %v8355, %v8739
    %v8741 = vpop.f32.mrf.mxu0
    %8742 = vmatprep.mubr.f32.mxu0 %v8163
    %8743 = vmatmul.mubr.f32.gmra.mxu0 %v8045
    %v8744 = vpop.f32.mrf.mxu0
    %v8745 = vadd.f32 %v8360, %v8744
    %v8746 = vpop.f32.mrf.mxu0
    %8747 = vmatprep.mubr.f32.mxu0 %v8165
    %8748 = vmatmul.mubr.f32.gmra.mxu0 %v8046
    %v8749 = vpop.f32.mrf.mxu0
    %v8750 = vadd.f32 %v8365, %v8749
    %v8751 = vpop.f32.mrf.mxu0
    %8752 = vmatprep.mubr.f32.mxu0 %v8167
    %8753 = vmatmul.mubr.f32.gmra.mxu0 %v8047
    %v8754 = vpop.f32.mrf.mxu0
    %v8755 = vadd.f32 %v8370, %v8754
    %v8756 = vpop.f32.mrf.mxu0
    %8757 = vmatprep.mubr.f32.mxu0 %v8169
    %8758 = vmatmul.mubr.f32.gmra.mxu0 %v8048
    %v8759 = vpop.f32.mrf.mxu0
    %v8760 = vadd.f32 %v8375, %v8759
    %v8761 = vpop.f32.mrf.mxu0
    %8762 = vmatprep.mubr.f32.mxu0 %v8171
    %8763 = vmatmul.mubr.f32.gmra.mxu0 %v8049
    %v8764 = vpop.f32.mrf.mxu0
    %v8765 = vadd.f32 %v8380, %v8764
    %v8766 = vpop.f32.mrf.mxu0
    %8767 = vmatprep.mubr.f32.mxu0 %v8173
    %8768 = vmatmul.mubr.f32.gmra.mxu0 %v8050
    %v8769 = vpop.f32.mrf.mxu0
    %v8770 = vadd.f32 %v8385, %v8769
    %v8771 = vpop.f32.mrf.mxu0
    %8772 = vmatprep.mubr.f32.mxu0 %v8175
    %8773 = vmatmul.mubr.f32.gmra.mxu0 %v8051
    %v8774 = vpop.f32.mrf.mxu0
    %v8775 = vadd.f32 %v8390, %v8774
    %v8776 = vpop.f32.mrf.mxu0
    %8777 = vmatprep.mubr.f32.mxu0 %v8177
    %8778 = vmatmul.mubr.f32.gmra.mxu0 %v8052
    %v8779 = vpop.f32.mrf.mxu0
    %v8780 = vadd.f32 %v8395, %v8779
    %v8781 = vpop.f32.mrf.mxu0
    %8782 = vmatprep.mubr.f32.mxu0 %v8179
    %8783 = vmatmul.mubr.f32.gmra.mxu0 %v8053
    %v8784 = vpop.f32.mrf.mxu0
    %v8785 = vadd.f32 %v8400, %v8784
    %v8786 = vpop.f32.mrf.mxu0
    %8787 = vmatprep.mubr.f32.mxu0 %v8181
    %8788 = vmatmul.mubr.f32.gmra.mxu0 %v8054
    %v8789 = vpop.f32.mrf.mxu0
    %v8790 = vadd.f32 %v8405, %v8789
    %v8791 = vpop.f32.mrf.mxu0
    %8792 = vmatprep.mubr.f32.mxu0 %v8183
    %8793 = vmatmul.mubr.f32.gmra.mxu0 %v8055
    %v8794 = vpop.f32.mrf.mxu0
    %v8795 = vadd.f32 %v8410, %v8794
    %v8796 = vpop.f32.mrf.mxu0
    %8797 = vmatprep.mubr.f32.mxu0 %v8185
    %8798 = vmatmul.mubr.f32.gmra.mxu0 %v8056
    %v8799 = vpop.f32.mrf.mxu0
    %v8800 = vadd.f32 %v8415, %v8799
    %v8801 = vpop.f32.mrf.mxu0
    %8802 = vmatprep.mubr.f32.mxu0 %v8187
    %8803 = vmatmul.mubr.f32.gmra.mxu0 %v8057
    %v8804 = vpop.f32.mrf.mxu0
    %v8805 = vadd.f32 %v8420, %v8804
    %v8806 = vpop.f32.mrf.mxu0
    %8807 = vmatprep.mubr.f32.mxu0 %v8189
    %8808 = vmatmul.mubr.f32.gmra.mxu0 %v8058
    %v8809 = vpop.f32.mrf.mxu0
    %v8810 = vadd.f32 %v8425, %v8809
    %v8811 = vpop.f32.mrf.mxu0
    %8812 = vmatprep.mubr.f32.mxu0 %v8191
    %8813 = vmatmul.mubr.f32.gmra.mxu0 %v8059
    %v8814 = vpop.f32.mrf.mxu0
    %v8815 = vadd.f32 %v8430, %v8814
    %v8816 = vpop.f32.mrf.mxu0
    %8817 = vmatprep.mubr.f32.mxu0 %v8193
    %8818 = vmatmul.mubr.f32.gmra.mxu0 %v8060
    %v8819 = vpop.f32.mrf.mxu0
    %v8820 = vadd.f32 %v8435, %v8819
    %v8821 = vpop.f32.mrf.mxu0
    %8822 = vmatprep.mubr.f32.mxu0 %v8195
    %8823 = vmatmul.mubr.f32.gmra.mxu0 %v8061
    %v8824 = vpop.f32.mrf.mxu0
    %v8825 = vadd.f32 %v8440, %v8824
    %v8826 = vpop.f32.mrf.mxu0
    %8827 = vmatprep.mubr.f32.mxu0 %v8197
    %8828 = vmatmul.mubr.f32.gmra.mxu0 %v8062
    %v8829 = vpop.f32.mrf.mxu0
    %v8830 = vadd.f32 %v8445, %v8829
    %v8831 = vpop.f32.mrf.mxu0
    %8832 = vmatprep.mubr.f32.mxu0 %v8199
    %8833 = vmatmul.mubr.f32.gmra.mxu0 %v8063
    %v8834 = vpop.f32.mrf.mxu0
    %v8835 = vadd.f32 %v8450, %v8834
    %v8836 = vpop.f32.mrf.mxu0
    %8837 = vmatprep.mubr.f32.mxu0 %v8199
    %8838 = vmatmul.mubr.f32.gmra.mxu0 %v8064
    %v8839 = vpop.f32.mrf.mxu0
    %v8840 = vadd.f32 %v8455, %v8839
    %v8841 = vpop.f32.mrf.mxu0
    %8842 = vmatprep.mubr.f32.mxu0 %v8199
    %8843 = vmatmul.mubr.f32.gmra.mxu0 %v8065
    %v8844 = vpop.f32.mrf.mxu0
    %v8845 = vadd.f32 %v8460, %v8844
    %v8846 = vpop.f32.mrf.mxu0
    %8847 = vmatprep.mubr.f32.mxu0 %v8199
    %8848 = vmatmul.mubr.f32.gmra.mxu0 %v8066
    %v8849 = vpop.f32.mrf.mxu0
    %v8850 = vadd.f32 %v8465, %v8849
    %v8851 = vpop.f32.mrf.mxu0
    %8852 = vmatprep.mubr.f32.mxu0 %v8199
    %8853 = vmatmul.mubr.f32.gmra.mxu0 %v8067
    %v8854 = vpop.f32.mrf.mxu0
    %v8855 = vadd.f32 %v8470, %v8854
    %v8856 = vpop.f32.mrf.mxu0
    %8857 = vmatprep.mubr.f32.mxu0 %v8199
    %8858 = vmatmul.mubr.f32.gmra.mxu0 %v8067
    %v8859 = vpop.f32.mrf.mxu0
    %v8860 = vadd.f32 %v8475, %v8859
    %v8861 = vpop.f32.mrf.mxu0
    %8862 = vmatprep.mubr.f32.mxu0 %v8201
    %8863 = vmatmul.mubr.f32.gmra.mxu0 %v8068
    %v8864 = vpop.f32.mrf.mxu0
    %v8865 = vadd.f32 %v8480, %v8864
    %v8866 = vpop.f32.mrf.mxu0
    %8867 = vmatprep.mubr.f32.mxu0 %v8203
    %8868 = vmatmul.mubr.f32.gmra.mxu0 %v8069
    %v8869 = vpop.f32.mrf.mxu0
    %v8870 = vadd.f32 %v8485, %v8869
    %v8871 = vpop.f32.mrf.mxu0
    %8872 = vmatprep.mubr.f32.mxu0 %v8205
    %8873 = vmatmul.mubr.f32.gmra.mxu0 %v8070
    %v8874 = vpop.f32.mrf.mxu0
    %v8875 = vadd.f32 %v8490, %v8874
    %v8876 = vpop.f32.mrf.mxu0
    %8877 = vmatprep.mubr.f32.mxu0 %v8207
    %8878 = vmatmul.mubr.f32.gmra.mxu0 %v8071
    %v8879 = vpop.f32.mrf.mxu0
    %v8880 = vadd.f32 %v8495, %v8879
    %v8881 = vpop.f32.mrf.mxu0
    %8882 = vmatprep.mubr.f32.mxu0 %v8209
    %8883 = vmatmul.mubr.f32.gmra.mxu0 %v8072
    %v8884 = vpop.f32.mrf.mxu0
    %v8885 = vadd.f32 %v8500, %v8884
    %v8886 = vpop.f32.mrf.mxu0
    %8887 = vmatprep.mubr.f32.mxu0 %v8211
    %8888 = vmatmul.mubr.f32.gmra.mxu0 %v8073
    %v8889 = vpop.f32.mrf.mxu0
    %v8890 = vadd.f32 %v8505, %v8889
    %v8891 = vpop.f32.mrf.mxu0
    %8892 = vmatprep.mubr.f32.mxu0 %v8213
    %8893 = vmatmul.mubr.f32.gmra.mxu0 %v8074
    %v8894 = vpop.f32.mrf.mxu0
    %v8895 = vadd.f32 %v8510, %v8894
    %v8896 = vpop.f32.mrf.mxu0
    %8897 = vmatprep.mubr.f32.mxu0 %v8215
    %8898 = vmatmul.mubr.f32.gmra.mxu0 %v8075
    %v8899 = vpop.f32.mrf.mxu0
    %v8900 = vadd.f32 %v8515, %v8899
    %v8901 = vpop.f32.mrf.mxu0
    %8902 = vmatprep.mubr.f32.mxu0 %v8217
    %8903 = vmatmul.mubr.f32.gmra.mxu0 %v8076
    %v8904 = vpop.f32.mrf.mxu0
    %v8905 = vadd.f32 %v8520, %v8904
    %v8906 = vpop.f32.mrf.mxu0
    %8907 = vmatprep.mubr.f32.mxu0 %v8219
    %8908 = vmatmul.mubr.f32.gmra.mxu0 %v8077
    %v8909 = vpop.f32.mrf.mxu0
    %v8910 = vadd.f32 %v8525, %v8909
    %v8911 = vpop.f32.mrf.mxu0
    %8912 = vmatprep.mubr.f32.mxu0 %v8221
    %8913 = vmatmul.mubr.f32.gmra.mxu0 %v8078
    %v8914 = vpop.f32.mrf.mxu0
    %v8915 = vadd.f32 %v8530, %v8914
    %v8916 = vpop.f32.mrf.mxu0
    %8917 = vmatprep.mubr.f32.mxu0 %v8223
    %8918 = vmatmul.mubr.f32.gmra.mxu0 %v8079
    %v8919 = vpop.f32.mrf.mxu0
    %v8920 = vadd.f32 %v8535, %v8919
    %v8921 = vpop.f32.mrf.mxu0
    %8922 = vmatprep.mubr.f32.mxu0 %v8225
    %8923 = vmatmul.mubr.f32.gmra.mxu0 %v8080
    %v8924 = vpop.f32.mrf.mxu0
    %v8925 = vadd.f32 %v8540, %v8924
    %v8926 = vpop.f32.mrf.mxu0
    %8927 = vmatprep.mubr.f32.mxu0 %v8227
    %8928 = vmatmul.mubr.f32.gmra.mxu0 %v8081
    %v8929 = vpop.f32.mrf.mxu0
    %v8930 = vadd.f32 %v8545, %v8929
    %v8931 = vpop.f32.mrf.mxu0
    %8932 = vmatprep.mubr.f32.mxu0 %v8229
    %8933 = vmatmul.mubr.f32.gmra.mxu0 %v8082
    %v8934 = vpop.f32.mrf.mxu0
    %v8935 = vadd.f32 %v8550, %v8934
    %v8936 = vpop.f32.mrf.mxu0
    %8937 = vmatprep.mubr.f32.mxu0 %v8231
    %8938 = vmatmul.mubr.f32.gmra.mxu0 %v8083
    %v8939 = vpop.f32.mrf.mxu0
    %v8940 = vadd.f32 %v8555, %v8939
    %v8941 = vpop.f32.mrf.mxu0
    %8942 = vmatprep.mubr.f32.mxu0 %v8233
    %8943 = vmatmul.mubr.f32.gmra.mxu0 %v8084
    %v8944 = vpop.f32.mrf.mxu0
    %v8945 = vadd.f32 %v8560, %v8944
    %v8946 = vpop.f32.mrf.mxu0
    %8947 = vmatprep.mubr.f32.mxu0 %v8235
    %8948 = vmatmul.mubr.f32.gmra.mxu0 %v8085
    %v8949 = vpop.f32.mrf.mxu0
    %v8950 = vadd.f32 %v8565, %v8949
    %v8951 = vpop.f32.mrf.mxu0
    %8952 = vmatprep.mubr.f32.mxu0 %v8237
    %8953 = vmatmul.mubr.f32.gmra.mxu0 %v8086
    %v8954 = vpop.f32.mrf.mxu0
    %v8955 = vadd.f32 %v8570, %v8954
    %v8956 = vpop.f32.mrf.mxu0
    %8957 = vmatprep.mubr.f32.mxu0 %v8239
    %8958 = vmatmul.mubr.f32.gmra.mxu0 %v8087
    %v8959 = vpop.f32.mrf.mxu0
    %v8960 = vadd.f32 %v8575, %v8959
    %v8961 = vpop.f32.mrf.mxu0
    %8962 = vmatprep.mubr.f32.mxu0 %v8241
    %8963 = vmatmul.mubr.f32.gmra.mxu0 %v8088
    %v8964 = vpop.f32.mrf.mxu0
    %v8965 = vadd.f32 %v8580, %v8964
    %v8966 = vpop.f32.mrf.mxu0
    %8967 = vmatprep.mubr.f32.mxu0 %v8243
    %8968 = vmatmul.mubr.f32.gmra.mxu0 %v8089
    %v8969 = vpop.f32.mrf.mxu0
    %v8970 = vadd.f32 %v8585, %v8969
    %v8971 = vpop.f32.mrf.mxu0
    %8972 = vmatprep.mubr.f32.mxu0 %v8245
    %8973 = vmatmul.mubr.f32.gmra.mxu0 %v8090
    %v8974 = vpop.f32.mrf.mxu0
    %v8975 = vadd.f32 %v8590, %v8974
    %v8976 = vpop.f32.mrf.mxu0
    %8977 = vmatprep.mubr.f32.mxu0 %v8247
    %8978 = vmatmul.mubr.f32.gmra.mxu0 %v8091
    %v8979 = vpop.f32.mrf.mxu0
    %v8980 = vadd.f32 %v8595, %v8979
    %v8981 = vpop.f32.mrf.mxu0
    %8982 = vmatprep.mubr.f32.mxu0 %v8249
    %8983 = vmatmul.mubr.f32.gmra.mxu0 %v8092
    %v8984 = vpop.f32.mrf.mxu0
    %v8985 = vadd.f32 %v8600, %v8984
    %v8986 = vpop.f32.mrf.mxu0
    %8987 = vmatprep.mubr.f32.mxu0 %v8251
    %8988 = vmatmul.mubr.f32.gmra.mxu0 %v8093
    %v8989 = vpop.f32.mrf.mxu0
    %v8990 = vadd.f32 %v8605, %v8989
    %v8991 = vpop.f32.mrf.mxu0
    %8992 = vmatprep.mubr.f32.mxu0 %v8199
    %8993 = vmatmul.mubr.f32.gmra.mxu0 %v8094
    %v8994 = vpop.f32.mrf.mxu0
    %v8995 = vadd.f32 %v8610, %v8994
    %v8996 = vpop.f32.mrf.mxu0
    %8997 = vmatprep.mubr.f32.mxu0 %v8199
    %8998 = vmatmul.mubr.f32.gmra.mxu0 %v8095
    %v8999 = vpop.f32.mrf.mxu0
    %v9000 = vadd.f32 %v8615, %v8999
    %v9001 = vpop.f32.mrf.mxu0
    %9002 = vmatprep.mubr.f32.mxu0 %v8199
    %9003 = vmatmul.mubr.f32.gmra.mxu0 %v8096
    %v9004 = vpop.f32.mrf.mxu0
    %v9005 = vadd.f32 %v8620, %v9004
    %v9006 = vpop.f32.mrf.mxu0
    %9007 = vmatprep.mubr.f32.mxu0 %v8199
    %9008 = vmatmul.mubr.f32.gmra.mxu0 %v8097
    %v9009 = vpop.f32.mrf.mxu0
    %v9010 = vadd.f32 %v8625, %v9009
    %v9011 = vpop.f32.mrf.mxu0
    %9012 = vmatprep.mubr.f32.mxu0 %v8199
    %9013 = vmatmul.mubr.f32.gmra.mxu0 %v8067
    %v9014 = vpop.f32.mrf.mxu0
    %v9015 = vadd.f32 %v8630, %v9014
    %v9016 = vpop.f32.mrf.mxu0
    %9017 = vmatprep.mubr.f32.mxu0 %v8199
    %9018 = vmatmul.mubr.f32.gmra.mxu0 %v8067
    %v9019 = vpop.f32.mrf.mxu0
    %v9020 = vadd.f32 %v8635, %v9019
    %v9021 = vpop.f32.mrf.mxu0
    %9022 = vdwg.mxu0
    %v9023 = vlaneseq
    %v9024 = vand.u32 %v9023, 127
    %vm9025 = vcmp.lt.s32.totalorder %v9024, 8
    %v9026 = vsel %vm9025, 1, 0
    %vm9027 = vcmp.eq.s32.totalorder %v9026, 1
    %v9028 = vsel %vm9027, %v8705, %v3648
    %v9029 = vsel %vm9027, %v8710, %v3649
    %v9030 = vsel %vm9027, %v8715, %v3650
    %v9031 = vsel %vm9027, %v8720, %v3651
    %v9032 = vsel %vm9027, %v8725, %v3652
    %v9033 = vsel %vm9027, %v8730, %v3653
    %v9034 = vsel %vm9027, %v8735, %v3654
    %v9035 = vsel %vm9027, %v8740, %v3655
    %v9036 = vsel %vm9027, %v8745, %v3656
    %v9037 = vsel %vm9027, %v8750, %v3657
    %v9038 = vsel %vm9027, %v8755, %v3658
    %v9039 = vsel %vm9027, %v8760, %v3659
    %v9040 = vsel %vm9027, %v8765, %v3660
    %v9041 = vsel %vm9027, %v8770, %v3661
    %v9042 = vsel %vm9027, %v8775, %v3662
    %v9043 = vsel %vm9027, %v8780, %v3663
    %v9044 = vsel %vm9027, %v8785, %v3664
    %v9045 = vsel %vm9027, %v8790, %v3665
    %v9046 = vsel %vm9027, %v8795, %v3666
    %v9047 = vsel %vm9027, %v8800, %v3667
    %v9048 = vsel %vm9027, %v8805, %v3668
    %v9049 = vsel %vm9027, %v8810, %v3669
    %v9050 = vsel %vm9027, %v8815, %v3670
    %v9051 = vsel %vm9027, %v8820, %v3671
    %v9052 = vsel %vm9027, %v8825, %v3672
    %v9053 = vsel %vm9027, %v8830, %v3673
    %v9054 = vsel %vm9027, %v8835, %v3674
    %v9055 = vsel %vm9027, %v8840, %v3675
    %v9056 = vsel %vm9027, %v8845, %v3676
    %v9057 = vsel %vm9027, %v8850, %v3677
    %v9058 = vsel %vm9027, %v8855, %v3678
    %v9059 = vsel %vm9027, %v8860, %v3679
    %v9060 = vsel %vm9027, %v8865, %v3680
    %v9061 = vsel %vm9027, %v8870, %v3681
    %v9062 = vsel %vm9027, %v8875, %v3682
    %v9063 = vsel %vm9027, %v8880, %v3683
    %v9064 = vsel %vm9027, %v8885, %v3684
    %v9065 = vsel %vm9027, %v8890, %v3685
    %v9066 = vsel %vm9027, %v8895, %v3686
    %v9067 = vsel %vm9027, %v8900, %v3687
    %v9068 = vsel %vm9027, %v8905, %v3688
    %v9069 = vsel %vm9027, %v8910, %v3689
    %v9070 = vsel %vm9027, %v8915, %v3690
    %v9071 = vsel %vm9027, %v8920, %v3691
    %v9072 = vsel %vm9027, %v8925, %v3692
    %v9073 = vsel %vm9027, %v8930, %v3693
    %v9074 = vsel %vm9027, %v8935, %v3694
    %v9075 = vsel %vm9027, %v8940, %v3695
    %v9076 = vsel %vm9027, %v8945, %v3696
    %v9077 = vsel %vm9027, %v8950, %v3697
    %v9078 = vsel %vm9027, %v8955, %v3698
    %v9079 = vsel %vm9027, %v8960, %v3699
    %v9080 = vsel %vm9027, %v8965, %v3700
    %v9081 = vsel %vm9027, %v8970, %v3701
    %v9082 = vsel %vm9027, %v8975, %v3702
    %v9083 = vsel %vm9027, %v8980, %v3703
    %v9084 = vsel %vm9027, %v8985, %v3704
    %v9085 = vsel %vm9027, %v8990, %v3705
    %v9086 = vsel %vm9027, %v8995, %v3706
    %v9087 = vsel %vm9027, %v9000, %v3707
    %v9088 = vsel %vm9027, %v9005, %v3708
    %v9089 = vsel %vm9027, %v9010, %v3709
    %v9090 = vsel %vm9027, %v9015, %v3710
    %v9091 = vsel %vm9027, %v9020, %v3711
    %v9092 = vsel %vm6407, %v9028, 0.0
    %9093 = vadd.xlane.f32.xlu0 %v9092
    %v9094 = vpop.xlane.xlu0 %9093
    %v9095 = vsel %vm6407, %v9029, 0.0
    %9096 = vadd.xlane.f32.xlu0 %v9095
    %v9097 = vpop.xlane.xlu0 %9096
    %v9098 = vsel %vm6407, %v9030, 0.0
    %9099 = vadd.xlane.f32.xlu0 %v9098
    %v9100 = vpop.xlane.xlu0 %9099
    %v9101 = vsel %vm6407, %v9031, 0.0
    %9102 = vadd.xlane.f32.xlu0 %v9101
    %v9103 = vpop.xlane.xlu0 %9102
    %v9104 = vsel %vm6407, %v9032, 0.0
    %9105 = vadd.xlane.f32.xlu0 %v9104
    %v9106 = vpop.xlane.xlu0 %9105
    %v9107 = vsel %vm6407, %v9033, 0.0
    %9108 = vadd.xlane.f32.xlu0 %v9107
    %v9109 = vpop.xlane.xlu0 %9108
    %v9110 = vsel %vm6407, %v9034, 0.0
    %9111 = vadd.xlane.f32.xlu0 %v9110
    %v9112 = vpop.xlane.xlu0 %9111
    %v9113 = vsel %vm6407, %v9035, 0.0
    %9114 = vadd.xlane.f32.xlu0 %v9113
    %v9115 = vpop.xlane.xlu0 %9114
    %v9116 = vsel %vm6407, %v9036, 0.0
    %9117 = vadd.xlane.f32.xlu0 %v9116
    %v9118 = vpop.xlane.xlu0 %9117
    %v9119 = vsel %vm6407, %v9037, 0.0
    %9120 = vadd.xlane.f32.xlu0 %v9119
    %v9121 = vpop.xlane.xlu0 %9120
    %v9122 = vsel %vm6407, %v9038, 0.0
    %9123 = vadd.xlane.f32.xlu0 %v9122
    %v9124 = vpop.xlane.xlu0 %9123
    %v9125 = vsel %vm6407, %v9039, 0.0
    %9126 = vadd.xlane.f32.xlu0 %v9125
    %v9127 = vpop.xlane.xlu0 %9126
    %v9128 = vsel %vm6407, %v9040, 0.0
    %9129 = vadd.xlane.f32.xlu0 %v9128
    %v9130 = vpop.xlane.xlu0 %9129
    %v9131 = vsel %vm6407, %v9041, 0.0
    %9132 = vadd.xlane.f32.xlu0 %v9131
    %v9133 = vpop.xlane.xlu0 %9132
    %v9134 = vsel %vm6407, %v9042, 0.0
    %9135 = vadd.xlane.f32.xlu0 %v9134
    %v9136 = vpop.xlane.xlu0 %9135
    %v9137 = vsel %vm6407, %v9043, 0.0
    %9138 = vadd.xlane.f32.xlu0 %v9137
    %v9139 = vpop.xlane.xlu0 %9138
    %v9140 = vsel %vm6407, %v9044, 0.0
    %9141 = vadd.xlane.f32.xlu0 %v9140
    %v9142 = vpop.xlane.xlu0 %9141
    %v9143 = vsel %vm6407, %v9045, 0.0
    %9144 = vadd.xlane.f32.xlu0 %v9143
    %v9145 = vpop.xlane.xlu0 %9144
    %v9146 = vsel %vm6407, %v9046, 0.0
    %9147 = vadd.xlane.f32.xlu0 %v9146
    %v9148 = vpop.xlane.xlu0 %9147
    %v9149 = vsel %vm6407, %v9047, 0.0
    %9150 = vadd.xlane.f32.xlu0 %v9149
    %v9151 = vpop.xlane.xlu0 %9150
    %v9152 = vsel %vm6407, %v9048, 0.0
    %9153 = vadd.xlane.f32.xlu0 %v9152
    %v9154 = vpop.xlane.xlu0 %9153
    %v9155 = vsel %vm6407, %v9049, 0.0
    %9156 = vadd.xlane.f32.xlu0 %v9155
    %v9157 = vpop.xlane.xlu0 %9156
    %v9158 = vsel %vm6407, %v9050, 0.0
    %9159 = vadd.xlane.f32.xlu0 %v9158
    %v9160 = vpop.xlane.xlu0 %9159
    %v9161 = vsel %vm6407, %v9051, 0.0
    %9162 = vadd.xlane.f32.xlu0 %v9161
    %v9163 = vpop.xlane.xlu0 %9162
    %v9164 = vsel %vm6407, %v9052, 0.0
    %9165 = vadd.xlane.f32.xlu0 %v9164
    %v9166 = vpop.xlane.xlu0 %9165
    %v9167 = vsel %vm6407, %v9053, 0.0
    %9168 = vadd.xlane.f32.xlu0 %v9167
    %v9169 = vpop.xlane.xlu0 %9168
    %v9170 = vsel %vm6407, %v9054, 0.0
    %9171 = vadd.xlane.f32.xlu0 %v9170
    %v9172 = vpop.xlane.xlu0 %9171
    %v9173 = vsel %vm6407, %v9055, 0.0
    %9174 = vadd.xlane.f32.xlu0 %v9173
    %v9175 = vpop.xlane.xlu0 %9174
    %v9176 = vsel %vm6407, %v9056, 0.0
    %9177 = vadd.xlane.f32.xlu0 %v9176
    %v9178 = vpop.xlane.xlu0 %9177
    %v9179 = vsel %vm6407, %v9057, 0.0
    %9180 = vadd.xlane.f32.xlu0 %v9179
    %v9181 = vpop.xlane.xlu0 %9180
    %v9182 = vsel %vm6407, %v9058, 0.0
    %9183 = vadd.xlane.f32.xlu0 %v9182
    %v9184 = vpop.xlane.xlu0 %9183
    %v9185 = vsel %vm6407, %v9059, 0.0
    %9186 = vadd.xlane.f32.xlu0 %v9185
    %v9187 = vpop.xlane.xlu0 %9186
    %v9188 = vsel %vm6407, %v9060, 0.0
    %9189 = vadd.xlane.f32.xlu0 %v9188
    %v9190 = vpop.xlane.xlu0 %9189
    %v9191 = vsel %vm6407, %v9061, 0.0
    %9192 = vadd.xlane.f32.xlu0 %v9191
    %v9193 = vpop.xlane.xlu0 %9192
    %v9194 = vsel %vm6407, %v9062, 0.0
    %9195 = vadd.xlane.f32.xlu0 %v9194
    %v9196 = vpop.xlane.xlu0 %9195
    %v9197 = vsel %vm6407, %v9063, 0.0
    %9198 = vadd.xlane.f32.xlu0 %v9197
    %v9199 = vpop.xlane.xlu0 %9198
    %v9200 = vsel %vm6407, %v9064, 0.0
    %9201 = vadd.xlane.f32.xlu0 %v9200
    %v9202 = vpop.xlane.xlu0 %9201
    %v9203 = vsel %vm6407, %v9065, 0.0
    %9204 = vadd.xlane.f32.xlu0 %v9203
    %v9205 = vpop.xlane.xlu0 %9204
    %v9206 = vsel %vm6407, %v9066, 0.0
    %9207 = vadd.xlane.f32.xlu0 %v9206
    %v9208 = vpop.xlane.xlu0 %9207
    %v9209 = vsel %vm6407, %v9067, 0.0
    %9210 = vadd.xlane.f32.xlu0 %v9209
    %v9211 = vpop.xlane.xlu0 %9210
    %v9212 = vsel %vm6407, %v9068, 0.0
    %9213 = vadd.xlane.f32.xlu0 %v9212
    %v9214 = vpop.xlane.xlu0 %9213
    %v9215 = vsel %vm6407, %v9069, 0.0
    %9216 = vadd.xlane.f32.xlu0 %v9215
    %v9217 = vpop.xlane.xlu0 %9216
    %v9218 = vsel %vm6407, %v9070, 0.0
    %9219 = vadd.xlane.f32.xlu0 %v9218
    %v9220 = vpop.xlane.xlu0 %9219
    %v9221 = vsel %vm6407, %v9071, 0.0
    %9222 = vadd.xlane.f32.xlu0 %v9221
    %v9223 = vpop.xlane.xlu0 %9222
    %v9224 = vsel %vm6407, %v9072, 0.0
    %9225 = vadd.xlane.f32.xlu0 %v9224
    %v9226 = vpop.xlane.xlu0 %9225
    %v9227 = vsel %vm6407, %v9073, 0.0
    %9228 = vadd.xlane.f32.xlu0 %v9227
    %v9229 = vpop.xlane.xlu0 %9228
    %v9230 = vsel %vm6407, %v9074, 0.0
    %9231 = vadd.xlane.f32.xlu0 %v9230
    %v9232 = vpop.xlane.xlu0 %9231
    %v9233 = vsel %vm6407, %v9075, 0.0
    %9234 = vadd.xlane.f32.xlu0 %v9233
    %v9235 = vpop.xlane.xlu0 %9234
    %v9236 = vsel %vm6407, %v9076, 0.0
    %9237 = vadd.xlane.f32.xlu0 %v9236
    %v9238 = vpop.xlane.xlu0 %9237
    %v9239 = vsel %vm6407, %v9077, 0.0
    %9240 = vadd.xlane.f32.xlu0 %v9239
    %v9241 = vpop.xlane.xlu0 %9240
    %v9242 = vsel %vm6407, %v9078, 0.0
    %9243 = vadd.xlane.f32.xlu0 %v9242
    %v9244 = vpop.xlane.xlu0 %9243
    %v9245 = vsel %vm6407, %v9079, 0.0
    %9246 = vadd.xlane.f32.xlu0 %v9245
    %v9247 = vpop.xlane.xlu0 %9246
    %v9248 = vsel %vm6407, %v9080, 0.0
    %9249 = vadd.xlane.f32.xlu0 %v9248
    %v9250 = vpop.xlane.xlu0 %9249
    %v9251 = vsel %vm6407, %v9081, 0.0
    %9252 = vadd.xlane.f32.xlu0 %v9251
    %v9253 = vpop.xlane.xlu0 %9252
    %v9254 = vsel %vm6407, %v9082, 0.0
    %9255 = vadd.xlane.f32.xlu0 %v9254
    %v9256 = vpop.xlane.xlu0 %9255
    %v9257 = vsel %vm6407, %v9083, 0.0
    %9258 = vadd.xlane.f32.xlu0 %v9257
    %v9259 = vpop.xlane.xlu0 %9258
    %v9260 = vsel %vm6407, %v9084, 0.0
    %9261 = vadd.xlane.f32.xlu0 %v9260
    %v9262 = vpop.xlane.xlu0 %9261
    %v9263 = vsel %vm6407, %v9085, 0.0
    %9264 = vadd.xlane.f32.xlu0 %v9263
    %v9265 = vpop.xlane.xlu0 %9264
    %v9266 = vsel %vm6407, %v9086, 0.0
    %9267 = vadd.xlane.f32.xlu0 %v9266
    %v9268 = vpop.xlane.xlu0 %9267
    %v9269 = vsel %vm6407, %v9087, 0.0
    %9270 = vadd.xlane.f32.xlu0 %v9269
    %v9271 = vpop.xlane.xlu0 %9270
    %v9272 = vsel %vm6407, %v9088, 0.0
    %9273 = vadd.xlane.f32.xlu0 %v9272
    %v9274 = vpop.xlane.xlu0 %9273
    %v9275 = vsel %vm6407, %v9089, 0.0
    %9276 = vadd.xlane.f32.xlu0 %v9275
    %v9277 = vpop.xlane.xlu0 %9276
    %v9278 = vsel %vm6407, %v9090, 0.0
    %9279 = vadd.xlane.f32.xlu0 %v9278
    %v9280 = vpop.xlane.xlu0 %9279
    %v9281 = vsel %vm6407, %v9091, 0.0
    %9282 = vadd.xlane.f32.xlu0 %v9281
    %v9283 = vpop.xlane.xlu0 %9282
    %v9284 = vrcp.pop 32.0
    %v9285 = vmul.f32 %v9094, %v9284
    %v9286 = vmul.f32 %v9097, %v9284
    %v9287 = vmul.f32 %v9100, %v9284
    %v9288 = vmul.f32 %v9103, %v9284
    %v9289 = vmul.f32 %v9106, %v9284
    %v9290 = vmul.f32 %v9109, %v9284
    %v9291 = vmul.f32 %v9112, %v9284
    %v9292 = vmul.f32 %v9115, %v9284
    %v9293 = vmul.f32 %v9118, %v9284
    %v9294 = vmul.f32 %v9121, %v9284
    %v9295 = vmul.f32 %v9124, %v9284
    %v9296 = vmul.f32 %v9127, %v9284
    %v9297 = vmul.f32 %v9130, %v9284
    %v9298 = vmul.f32 %v9133, %v9284
    %v9299 = vmul.f32 %v9136, %v9284
    %v9300 = vmul.f32 %v9139, %v9284
    %v9301 = vmul.f32 %v9142, %v9284
    %v9302 = vmul.f32 %v9145, %v9284
    %v9303 = vmul.f32 %v9148, %v9284
    %v9304 = vmul.f32 %v9151, %v9284
    %v9305 = vmul.f32 %v9154, %v9284
    %v9306 = vmul.f32 %v9157, %v9284
    %v9307 = vmul.f32 %v9160, %v9284
    %v9308 = vmul.f32 %v9163, %v9284
    %v9309 = vmul.f32 %v9166, %v9284
    %v9310 = vmul.f32 %v9169, %v9284
    %v9311 = vmul.f32 %v9172, %v9284
    %v9312 = vmul.f32 %v9175, %v9284
    %v9313 = vmul.f32 %v9178, %v9284
    %v9314 = vmul.f32 %v9181, %v9284
    %v9315 = vmul.f32 %v9184, %v9284
    %v9316 = vmul.f32 %v9187, %v9284
    %v9317 = vmul.f32 %v9190, %v9284
    %v9318 = vmul.f32 %v9193, %v9284
    %v9319 = vmul.f32 %v9196, %v9284
    %v9320 = vmul.f32 %v9199, %v9284
    %v9321 = vmul.f32 %v9202, %v9284
    %v9322 = vmul.f32 %v9205, %v9284
    %v9323 = vmul.f32 %v9208, %v9284
    %v9324 = vmul.f32 %v9211, %v9284
    %v9325 = vmul.f32 %v9214, %v9284
    %v9326 = vmul.f32 %v9217, %v9284
    %v9327 = vmul.f32 %v9220, %v9284
    %v9328 = vmul.f32 %v9223, %v9284
    %v9329 = vmul.f32 %v9226, %v9284
    %v9330 = vmul.f32 %v9229, %v9284
    %v9331 = vmul.f32 %v9232, %v9284
    %v9332 = vmul.f32 %v9235, %v9284
    %v9333 = vmul.f32 %v9238, %v9284
    %v9334 = vmul.f32 %v9241, %v9284
    %v9335 = vmul.f32 %v9244, %v9284
    %v9336 = vmul.f32 %v9247, %v9284
    %v9337 = vmul.f32 %v9250, %v9284
    %v9338 = vmul.f32 %v9253, %v9284
    %v9339 = vmul.f32 %v9256, %v9284
    %v9340 = vmul.f32 %v9259, %v9284
    %v9341 = vmul.f32 %v9262, %v9284
    %v9342 = vmul.f32 %v9265, %v9284
    %v9343 = vmul.f32 %v9268, %v9284
    %v9344 = vmul.f32 %v9271, %v9284
    %v9345 = vmul.f32 %v9274, %v9284
    %v9346 = vmul.f32 %v9277, %v9284
    %v9347 = vmul.f32 %v9280, %v9284
    %v9348 = vmul.f32 %v9283, %v9284
    %v9349 = vsub.f32 %v9028, %v9285
    %v9350 = vsub.f32 %v9029, %v9286
    %v9351 = vsub.f32 %v9030, %v9287
    %v9352 = vsub.f32 %v9031, %v9288
    %v9353 = vsub.f32 %v9032, %v9289
    %v9354 = vsub.f32 %v9033, %v9290
    %v9355 = vsub.f32 %v9034, %v9291
    %v9356 = vsub.f32 %v9035, %v9292
    %v9357 = vsub.f32 %v9036, %v9293
    %v9358 = vsub.f32 %v9037, %v9294
    %v9359 = vsub.f32 %v9038, %v9295
    %v9360 = vsub.f32 %v9039, %v9296
    %v9361 = vsub.f32 %v9040, %v9297
    %v9362 = vsub.f32 %v9041, %v9298
    %v9363 = vsub.f32 %v9042, %v9299
    %v9364 = vsub.f32 %v9043, %v9300
    %v9365 = vsub.f32 %v9044, %v9301
    %v9366 = vsub.f32 %v9045, %v9302
    %v9367 = vsub.f32 %v9046, %v9303
    %v9368 = vsub.f32 %v9047, %v9304
    %v9369 = vsub.f32 %v9048, %v9305
    %v9370 = vsub.f32 %v9049, %v9306
    %v9371 = vsub.f32 %v9050, %v9307
    %v9372 = vsub.f32 %v9051, %v9308
    %v9373 = vsub.f32 %v9052, %v9309
    %v9374 = vsub.f32 %v9053, %v9310
    %v9375 = vsub.f32 %v9054, %v9311
    %v9376 = vsub.f32 %v9055, %v9312
    %v9377 = vsub.f32 %v9056, %v9313
    %v9378 = vsub.f32 %v9057, %v9314
    %v9379 = vsub.f32 %v9058, %v9315
    %v9380 = vsub.f32 %v9059, %v9316
    %v9381 = vsub.f32 %v9060, %v9317
    %v9382 = vsub.f32 %v9061, %v9318
    %v9383 = vsub.f32 %v9062, %v9319
    %v9384 = vsub.f32 %v9063, %v9320
    %v9385 = vsub.f32 %v9064, %v9321
    %v9386 = vsub.f32 %v9065, %v9322
    %v9387 = vsub.f32 %v9066, %v9323
    %v9388 = vsub.f32 %v9067, %v9324
    %v9389 = vsub.f32 %v9068, %v9325
    %v9390 = vsub.f32 %v9069, %v9326
    %v9391 = vsub.f32 %v9070, %v9327
    %v9392 = vsub.f32 %v9071, %v9328
    %v9393 = vsub.f32 %v9072, %v9329
    %v9394 = vsub.f32 %v9073, %v9330
    %v9395 = vsub.f32 %v9074, %v9331
    %v9396 = vsub.f32 %v9075, %v9332
    %v9397 = vsub.f32 %v9076, %v9333
    %v9398 = vsub.f32 %v9077, %v9334
    %v9399 = vsub.f32 %v9078, %v9335
    %v9400 = vsub.f32 %v9079, %v9336
    %v9401 = vsub.f32 %v9080, %v9337
    %v9402 = vsub.f32 %v9081, %v9338
    %v9403 = vsub.f32 %v9082, %v9339
    %v9404 = vsub.f32 %v9083, %v9340
    %v9405 = vsub.f32 %v9084, %v9341
    %v9406 = vsub.f32 %v9085, %v9342
    %v9407 = vsub.f32 %v9086, %v9343
    %v9408 = vsub.f32 %v9087, %v9344
    %v9409 = vsub.f32 %v9088, %v9345
    %v9410 = vsub.f32 %v9089, %v9346
    %v9411 = vsub.f32 %v9090, %v9347
    %v9412 = vsub.f32 %v9091, %v9348
    %v9413 = vmul.f32 %v9349, %v9349
    %v9414 = vmul.f32 %v9350, %v9350
    %v9415 = vmul.f32 %v9351, %v9351
    %v9416 = vmul.f32 %v9352, %v9352
    %v9417 = vmul.f32 %v9353, %v9353
    %v9418 = vmul.f32 %v9354, %v9354
    %v9419 = vmul.f32 %v9355, %v9355
    %v9420 = vmul.f32 %v9356, %v9356
    %v9421 = vmul.f32 %v9357, %v9357
    %v9422 = vmul.f32 %v9358, %v9358
    %v9423 = vmul.f32 %v9359, %v9359
    %v9424 = vmul.f32 %v9360, %v9360
    %v9425 = vmul.f32 %v9361, %v9361
    %v9426 = vmul.f32 %v9362, %v9362
    %v9427 = vmul.f32 %v9363, %v9363
    %v9428 = vmul.f32 %v9364, %v9364
    %v9429 = vmul.f32 %v9365, %v9365
    %v9430 = vmul.f32 %v9366, %v9366
    %v9431 = vmul.f32 %v9367, %v9367
    %v9432 = vmul.f32 %v9368, %v9368
    %v9433 = vmul.f32 %v9369, %v9369
    %v9434 = vmul.f32 %v9370, %v9370
    %v9435 = vmul.f32 %v9371, %v9371
    %v9436 = vmul.f32 %v9372, %v9372
    %v9437 = vmul.f32 %v9373, %v9373
    %v9438 = vmul.f32 %v9374, %v9374
    %v9439 = vmul.f32 %v9375, %v9375
    %v9440 = vmul.f32 %v9376, %v9376
    %v9441 = vmul.f32 %v9377, %v9377
    %v9442 = vmul.f32 %v9378, %v9378
    %v9443 = vmul.f32 %v9379, %v9379
    %v9444 = vmul.f32 %v9380, %v9380
    %v9445 = vmul.f32 %v9381, %v9381
    %v9446 = vmul.f32 %v9382, %v9382
    %v9447 = vmul.f32 %v9383, %v9383
    %v9448 = vmul.f32 %v9384, %v9384
    %v9449 = vmul.f32 %v9385, %v9385
    %v9450 = vmul.f32 %v9386, %v9386
    %v9451 = vmul.f32 %v9387, %v9387
    %v9452 = vmul.f32 %v9388, %v9388
    %v9453 = vmul.f32 %v9389, %v9389
    %v9454 = vmul.f32 %v9390, %v9390
    %v9455 = vmul.f32 %v9391, %v9391
    %v9456 = vmul.f32 %v9392, %v9392
    %v9457 = vmul.f32 %v9393, %v9393
    %v9458 = vmul.f32 %v9394, %v9394
    %v9459 = vmul.f32 %v9395, %v9395
    %v9460 = vmul.f32 %v9396, %v9396
    %v9461 = vmul.f32 %v9397, %v9397
    %v9462 = vmul.f32 %v9398, %v9398
    %v9463 = vmul.f32 %v9399, %v9399
    %v9464 = vmul.f32 %v9400, %v9400
    %v9465 = vmul.f32 %v9401, %v9401
    %v9466 = vmul.f32 %v9402, %v9402
    %v9467 = vmul.f32 %v9403, %v9403
    %v9468 = vmul.f32 %v9404, %v9404
    %v9469 = vmul.f32 %v9405, %v9405
    %v9470 = vmul.f32 %v9406, %v9406
    %v9471 = vmul.f32 %v9407, %v9407
    %v9472 = vmul.f32 %v9408, %v9408
    %v9473 = vmul.f32 %v9409, %v9409
    %v9474 = vmul.f32 %v9410, %v9410
    %v9475 = vmul.f32 %v9411, %v9411
    %v9476 = vmul.f32 %v9412, %v9412
    %v9477 = vsel %vm6407, %v9413, 0.0
    %9478 = vadd.xlane.f32.xlu0 %v9477
    %v9479 = vpop.xlane.xlu0 %9478
    %v9480 = vsel %vm6407, %v9414, 0.0
    %9481 = vadd.xlane.f32.xlu0 %v9480
    %v9482 = vpop.xlane.xlu0 %9481
    %v9483 = vsel %vm6407, %v9415, 0.0
    %9484 = vadd.xlane.f32.xlu0 %v9483
    %v9485 = vpop.xlane.xlu0 %9484
    %v9486 = vsel %vm6407, %v9416, 0.0
    %9487 = vadd.xlane.f32.xlu0 %v9486
    %v9488 = vpop.xlane.xlu0 %9487
    %v9489 = vsel %vm6407, %v9417, 0.0
    %9490 = vadd.xlane.f32.xlu0 %v9489
    %v9491 = vpop.xlane.xlu0 %9490
    %v9492 = vsel %vm6407, %v9418, 0.0
    %9493 = vadd.xlane.f32.xlu0 %v9492
    %v9494 = vpop.xlane.xlu0 %9493
    %v9495 = vsel %vm6407, %v9419, 0.0
    %9496 = vadd.xlane.f32.xlu0 %v9495
    %v9497 = vpop.xlane.xlu0 %9496
    %v9498 = vsel %vm6407, %v9420, 0.0
    %9499 = vadd.xlane.f32.xlu0 %v9498
    %v9500 = vpop.xlane.xlu0 %9499
    %v9501 = vsel %vm6407, %v9421, 0.0
    %9502 = vadd.xlane.f32.xlu0 %v9501
    %v9503 = vpop.xlane.xlu0 %9502
    %v9504 = vsel %vm6407, %v9422, 0.0
    %9505 = vadd.xlane.f32.xlu0 %v9504
    %v9506 = vpop.xlane.xlu0 %9505
    %v9507 = vsel %vm6407, %v9423, 0.0
    %9508 = vadd.xlane.f32.xlu0 %v9507
    %v9509 = vpop.xlane.xlu0 %9508
    %v9510 = vsel %vm6407, %v9424, 0.0
    %9511 = vadd.xlane.f32.xlu0 %v9510
    %v9512 = vpop.xlane.xlu0 %9511
    %v9513 = vsel %vm6407, %v9425, 0.0
    %9514 = vadd.xlane.f32.xlu0 %v9513
    %v9515 = vpop.xlane.xlu0 %9514
    %v9516 = vsel %vm6407, %v9426, 0.0
    %9517 = vadd.xlane.f32.xlu0 %v9516
    %v9518 = vpop.xlane.xlu0 %9517
    %v9519 = vsel %vm6407, %v9427, 0.0
    %9520 = vadd.xlane.f32.xlu0 %v9519
    %v9521 = vpop.xlane.xlu0 %9520
    %v9522 = vsel %vm6407, %v9428, 0.0
    %9523 = vadd.xlane.f32.xlu0 %v9522
    %v9524 = vpop.xlane.xlu0 %9523
    %v9525 = vsel %vm6407, %v9429, 0.0
    %9526 = vadd.xlane.f32.xlu0 %v9525
    %v9527 = vpop.xlane.xlu0 %9526
    %v9528 = vsel %vm6407, %v9430, 0.0
    %9529 = vadd.xlane.f32.xlu0 %v9528
    %v9530 = vpop.xlane.xlu0 %9529
    %v9531 = vsel %vm6407, %v9431, 0.0
    %9532 = vadd.xlane.f32.xlu0 %v9531
    %v9533 = vpop.xlane.xlu0 %9532
    %v9534 = vsel %vm6407, %v9432, 0.0
    %9535 = vadd.xlane.f32.xlu0 %v9534
    %v9536 = vpop.xlane.xlu0 %9535
    %v9537 = vsel %vm6407, %v9433, 0.0
    %9538 = vadd.xlane.f32.xlu0 %v9537
    %v9539 = vpop.xlane.xlu0 %9538
    %v9540 = vsel %vm6407, %v9434, 0.0
    %9541 = vadd.xlane.f32.xlu0 %v9540
    %v9542 = vpop.xlane.xlu0 %9541
    %v9543 = vsel %vm6407, %v9435, 0.0
    %9544 = vadd.xlane.f32.xlu0 %v9543
    %v9545 = vpop.xlane.xlu0 %9544
    %v9546 = vsel %vm6407, %v9436, 0.0
    %9547 = vadd.xlane.f32.xlu0 %v9546
    %v9548 = vpop.xlane.xlu0 %9547
    %v9549 = vsel %vm6407, %v9437, 0.0
    %9550 = vadd.xlane.f32.xlu0 %v9549
    %v9551 = vpop.xlane.xlu0 %9550
    %v9552 = vsel %vm6407, %v9438, 0.0
    %9553 = vadd.xlane.f32.xlu0 %v9552
    %v9554 = vpop.xlane.xlu0 %9553
    %v9555 = vsel %vm6407, %v9439, 0.0
    %9556 = vadd.xlane.f32.xlu0 %v9555
    %v9557 = vpop.xlane.xlu0 %9556
    %v9558 = vsel %vm6407, %v9440, 0.0
    %9559 = vadd.xlane.f32.xlu0 %v9558
    %v9560 = vpop.xlane.xlu0 %9559
    %v9561 = vsel %vm6407, %v9441, 0.0
    %9562 = vadd.xlane.f32.xlu0 %v9561
    %v9563 = vpop.xlane.xlu0 %9562
    %v9564 = vsel %vm6407, %v9442, 0.0
    %9565 = vadd.xlane.f32.xlu0 %v9564
    %v9566 = vpop.xlane.xlu0 %9565
    %v9567 = vsel %vm6407, %v9443, 0.0
    %9568 = vadd.xlane.f32.xlu0 %v9567
    %v9569 = vpop.xlane.xlu0 %9568
    %v9570 = vsel %vm6407, %v9444, 0.0
    %9571 = vadd.xlane.f32.xlu0 %v9570
    %v9572 = vpop.xlane.xlu0 %9571
    %v9573 = vsel %vm6407, %v9445, 0.0
    %9574 = vadd.xlane.f32.xlu0 %v9573
    %v9575 = vpop.xlane.xlu0 %9574
    %v9576 = vsel %vm6407, %v9446, 0.0
    %9577 = vadd.xlane.f32.xlu0 %v9576
    %v9578 = vpop.xlane.xlu0 %9577
    %v9579 = vsel %vm6407, %v9447, 0.0
    %9580 = vadd.xlane.f32.xlu0 %v9579
    %v9581 = vpop.xlane.xlu0 %9580
    %v9582 = vsel %vm6407, %v9448, 0.0
    %9583 = vadd.xlane.f32.xlu0 %v9582
    %v9584 = vpop.xlane.xlu0 %9583
    %v9585 = vsel %vm6407, %v9449, 0.0
    %9586 = vadd.xlane.f32.xlu0 %v9585
    %v9587 = vpop.xlane.xlu0 %9586
    %v9588 = vsel %vm6407, %v9450, 0.0
    %9589 = vadd.xlane.f32.xlu0 %v9588
    %v9590 = vpop.xlane.xlu0 %9589
    %v9591 = vsel %vm6407, %v9451, 0.0
    %9592 = vadd.xlane.f32.xlu0 %v9591
    %v9593 = vpop.xlane.xlu0 %9592
    %v9594 = vsel %vm6407, %v9452, 0.0
    %9595 = vadd.xlane.f32.xlu0 %v9594
    %v9596 = vpop.xlane.xlu0 %9595
    %v9597 = vsel %vm6407, %v9453, 0.0
    %9598 = vadd.xlane.f32.xlu0 %v9597
    %v9599 = vpop.xlane.xlu0 %9598
    %v9600 = vsel %vm6407, %v9454, 0.0
    %9601 = vadd.xlane.f32.xlu0 %v9600
    %v9602 = vpop.xlane.xlu0 %9601
    %v9603 = vsel %vm6407, %v9455, 0.0
    %9604 = vadd.xlane.f32.xlu0 %v9603
    %v9605 = vpop.xlane.xlu0 %9604
    %v9606 = vsel %vm6407, %v9456, 0.0
    %9607 = vadd.xlane.f32.xlu0 %v9606
    %v9608 = vpop.xlane.xlu0 %9607
    %v9609 = vsel %vm6407, %v9457, 0.0
    %9610 = vadd.xlane.f32.xlu0 %v9609
    %v9611 = vpop.xlane.xlu0 %9610
    %v9612 = vsel %vm6407, %v9458, 0.0
    %9613 = vadd.xlane.f32.xlu0 %v9612
    %v9614 = vpop.xlane.xlu0 %9613
    %v9615 = vsel %vm6407, %v9459, 0.0
    %9616 = vadd.xlane.f32.xlu0 %v9615
    %v9617 = vpop.xlane.xlu0 %9616
    %v9618 = vsel %vm6407, %v9460, 0.0
    %9619 = vadd.xlane.f32.xlu0 %v9618
    %v9620 = vpop.xlane.xlu0 %9619
    %v9621 = vsel %vm6407, %v9461, 0.0
    %9622 = vadd.xlane.f32.xlu0 %v9621
    %v9623 = vpop.xlane.xlu0 %9622
    %v9624 = vsel %vm6407, %v9462, 0.0
    %9625 = vadd.xlane.f32.xlu0 %v9624
    %v9626 = vpop.xlane.xlu0 %9625
    %v9627 = vsel %vm6407, %v9463, 0.0
    %9628 = vadd.xlane.f32.xlu0 %v9627
    %v9629 = vpop.xlane.xlu0 %9628
    %v9630 = vsel %vm6407, %v9464, 0.0
    %9631 = vadd.xlane.f32.xlu0 %v9630
    %v9632 = vpop.xlane.xlu0 %9631
    %v9633 = vsel %vm6407, %v9465, 0.0
    %9634 = vadd.xlane.f32.xlu0 %v9633
    %v9635 = vpop.xlane.xlu0 %9634
    %v9636 = vsel %vm6407, %v9466, 0.0
    %9637 = vadd.xlane.f32.xlu0 %v9636
    %v9638 = vpop.xlane.xlu0 %9637
    %v9639 = vsel %vm6407, %v9467, 0.0
    %9640 = vadd.xlane.f32.xlu0 %v9639
    %v9641 = vpop.xlane.xlu0 %9640
    %v9642 = vsel %vm6407, %v9468, 0.0
    %9643 = vadd.xlane.f32.xlu0 %v9642
    %v9644 = vpop.xlane.xlu0 %9643
    %v9645 = vsel %vm6407, %v9469, 0.0
    %9646 = vadd.xlane.f32.xlu0 %v9645
    %v9647 = vpop.xlane.xlu0 %9646
    %v9648 = vsel %vm6407, %v9470, 0.0
    %9649 = vadd.xlane.f32.xlu0 %v9648
    %v9650 = vpop.xlane.xlu0 %9649
    %v9651 = vsel %vm6407, %v9471, 0.0
    %9652 = vadd.xlane.f32.xlu0 %v9651
    %v9653 = vpop.xlane.xlu0 %9652
    %v9654 = vsel %vm6407, %v9472, 0.0
    %9655 = vadd.xlane.f32.xlu0 %v9654
    %v9656 = vpop.xlane.xlu0 %9655
    %v9657 = vsel %vm6407, %v9473, 0.0
    %9658 = vadd.xlane.f32.xlu0 %v9657
    %v9659 = vpop.xlane.xlu0 %9658
    %v9660 = vsel %vm6407, %v9474, 0.0
    %9661 = vadd.xlane.f32.xlu0 %v9660
    %v9662 = vpop.xlane.xlu0 %9661
    %v9663 = vsel %vm6407, %v9475, 0.0
    %9664 = vadd.xlane.f32.xlu0 %v9663
    %v9665 = vpop.xlane.xlu0 %9664
    %v9666 = vsel %vm6407, %v9476, 0.0
    %9667 = vadd.xlane.f32.xlu0 %v9666
    %v9668 = vpop.xlane.xlu0 %9667
    %v9669 = vmul.f32 %v9479, %v9284
    %v9670 = vmul.f32 %v9482, %v9284
    %v9671 = vmul.f32 %v9485, %v9284
    %v9672 = vmul.f32 %v9488, %v9284
    %v9673 = vmul.f32 %v9491, %v9284
    %v9674 = vmul.f32 %v9494, %v9284
    %v9675 = vmul.f32 %v9497, %v9284
    %v9676 = vmul.f32 %v9500, %v9284
    %v9677 = vmul.f32 %v9503, %v9284
    %v9678 = vmul.f32 %v9506, %v9284
    %v9679 = vmul.f32 %v9509, %v9284
    %v9680 = vmul.f32 %v9512, %v9284
    %v9681 = vmul.f32 %v9515, %v9284
    %v9682 = vmul.f32 %v9518, %v9284
    %v9683 = vmul.f32 %v9521, %v9284
    %v9684 = vmul.f32 %v9524, %v9284
    %v9685 = vmul.f32 %v9527, %v9284
    %v9686 = vmul.f32 %v9530, %v9284
    %v9687 = vmul.f32 %v9533, %v9284
    %v9688 = vmul.f32 %v9536, %v9284
    %v9689 = vmul.f32 %v9539, %v9284
    %v9690 = vmul.f32 %v9542, %v9284
    %v9691 = vmul.f32 %v9545, %v9284
    %v9692 = vmul.f32 %v9548, %v9284
    %v9693 = vmul.f32 %v9551, %v9284
    %v9694 = vmul.f32 %v9554, %v9284
    %v9695 = vmul.f32 %v9557, %v9284
    %v9696 = vmul.f32 %v9560, %v9284
    %v9697 = vmul.f32 %v9563, %v9284
    %v9698 = vmul.f32 %v9566, %v9284
    %v9699 = vmul.f32 %v9569, %v9284
    %v9700 = vmul.f32 %v9572, %v9284
    %v9701 = vmul.f32 %v9575, %v9284
    %v9702 = vmul.f32 %v9578, %v9284
    %v9703 = vmul.f32 %v9581, %v9284
    %v9704 = vmul.f32 %v9584, %v9284
    %v9705 = vmul.f32 %v9587, %v9284
    %v9706 = vmul.f32 %v9590, %v9284
    %v9707 = vmul.f32 %v9593, %v9284
    %v9708 = vmul.f32 %v9596, %v9284
    %v9709 = vmul.f32 %v9599, %v9284
    %v9710 = vmul.f32 %v9602, %v9284
    %v9711 = vmul.f32 %v9605, %v9284
    %v9712 = vmul.f32 %v9608, %v9284
    %v9713 = vmul.f32 %v9611, %v9284
    %v9714 = vmul.f32 %v9614, %v9284
    %v9715 = vmul.f32 %v9617, %v9284
    %v9716 = vmul.f32 %v9620, %v9284
    %v9717 = vmul.f32 %v9623, %v9284
    %v9718 = vmul.f32 %v9626, %v9284
    %v9719 = vmul.f32 %v9629, %v9284
    %v9720 = vmul.f32 %v9632, %v9284
    %v9721 = vmul.f32 %v9635, %v9284
    %v9722 = vmul.f32 %v9638, %v9284
    %v9723 = vmul.f32 %v9641, %v9284
    %v9724 = vmul.f32 %v9644, %v9284
    %v9725 = vmul.f32 %v9647, %v9284
    %v9726 = vmul.f32 %v9650, %v9284
    %v9727 = vmul.f32 %v9653, %v9284
    %v9728 = vmul.f32 %v9656, %v9284
    %v9729 = vmul.f32 %v9659, %v9284
    %v9730 = vmul.f32 %v9662, %v9284
    %v9731 = vmul.f32 %v9665, %v9284
    %v9732 = vmul.f32 %v9668, %v9284
    %v9733 = vadd.f32 %v9669, 1e-06
    %v9734 = vadd.f32 %v9670, 1e-06
    %v9735 = vadd.f32 %v9671, 1e-06
    %v9736 = vadd.f32 %v9672, 1e-06
    %v9737 = vadd.f32 %v9673, 1e-06
    %v9738 = vadd.f32 %v9674, 1e-06
    %v9739 = vadd.f32 %v9675, 1e-06
    %v9740 = vadd.f32 %v9676, 1e-06
    %v9741 = vadd.f32 %v9677, 1e-06
    %v9742 = vadd.f32 %v9678, 1e-06
    %v9743 = vadd.f32 %v9679, 1e-06
    %v9744 = vadd.f32 %v9680, 1e-06
    %v9745 = vadd.f32 %v9681, 1e-06
    %v9746 = vadd.f32 %v9682, 1e-06
    %v9747 = vadd.f32 %v9683, 1e-06
    %v9748 = vadd.f32 %v9684, 1e-06
    %v9749 = vadd.f32 %v9685, 1e-06
    %v9750 = vadd.f32 %v9686, 1e-06
    %v9751 = vadd.f32 %v9687, 1e-06
    %v9752 = vadd.f32 %v9688, 1e-06
    %v9753 = vadd.f32 %v9689, 1e-06
    %v9754 = vadd.f32 %v9690, 1e-06
    %v9755 = vadd.f32 %v9691, 1e-06
    %v9756 = vadd.f32 %v9692, 1e-06
    %v9757 = vadd.f32 %v9693, 1e-06
    %v9758 = vadd.f32 %v9694, 1e-06
    %v9759 = vadd.f32 %v9695, 1e-06
    %v9760 = vadd.f32 %v9696, 1e-06
    %v9761 = vadd.f32 %v9697, 1e-06
    %v9762 = vadd.f32 %v9698, 1e-06
    %v9763 = vadd.f32 %v9699, 1e-06
    %v9764 = vadd.f32 %v9700, 1e-06
    %v9765 = vadd.f32 %v9701, 1e-06
    %v9766 = vadd.f32 %v9702, 1e-06
    %v9767 = vadd.f32 %v9703, 1e-06
    %v9768 = vadd.f32 %v9704, 1e-06
    %v9769 = vadd.f32 %v9705, 1e-06
    %v9770 = vadd.f32 %v9706, 1e-06
    %v9771 = vadd.f32 %v9707, 1e-06
    %v9772 = vadd.f32 %v9708, 1e-06
    %v9773 = vadd.f32 %v9709, 1e-06
    %v9774 = vadd.f32 %v9710, 1e-06
    %v9775 = vadd.f32 %v9711, 1e-06
    %v9776 = vadd.f32 %v9712, 1e-06
    %v9777 = vadd.f32 %v9713, 1e-06
    %v9778 = vadd.f32 %v9714, 1e-06
    %v9779 = vadd.f32 %v9715, 1e-06
    %v9780 = vadd.f32 %v9716, 1e-06
    %v9781 = vadd.f32 %v9717, 1e-06
    %v9782 = vadd.f32 %v9718, 1e-06
    %v9783 = vadd.f32 %v9719, 1e-06
    %v9784 = vadd.f32 %v9720, 1e-06
    %v9785 = vadd.f32 %v9721, 1e-06
    %v9786 = vadd.f32 %v9722, 1e-06
    %v9787 = vadd.f32 %v9723, 1e-06
    %v9788 = vadd.f32 %v9724, 1e-06
    %v9789 = vadd.f32 %v9725, 1e-06
    %v9790 = vadd.f32 %v9726, 1e-06
    %v9791 = vadd.f32 %v9727, 1e-06
    %v9792 = vadd.f32 %v9728, 1e-06
    %v9793 = vadd.f32 %v9729, 1e-06
    %v9794 = vadd.f32 %v9730, 1e-06
    %v9795 = vadd.f32 %v9731, 1e-06
    %v9796 = vadd.f32 %v9732, 1e-06
    %v9797 = vrsqrt.pop %v9733
    %v9798 = vrsqrt.pop %v9734
    %v9799 = vrsqrt.pop %v9735
    %v9800 = vrsqrt.pop %v9736
    %v9801 = vrsqrt.pop %v9737
    %v9802 = vrsqrt.pop %v9738
    %v9803 = vrsqrt.pop %v9739
    %v9804 = vrsqrt.pop %v9740
    %v9805 = vrsqrt.pop %v9741
    %v9806 = vrsqrt.pop %v9742
    %v9807 = vrsqrt.pop %v9743
    %v9808 = vrsqrt.pop %v9744
    %v9809 = vrsqrt.pop %v9745
    %v9810 = vrsqrt.pop %v9746
    %v9811 = vrsqrt.pop %v9747
    %v9812 = vrsqrt.pop %v9748
    %v9813 = vrsqrt.pop %v9749
    %v9814 = vrsqrt.pop %v9750
    %v9815 = vrsqrt.pop %v9751
    %v9816 = vrsqrt.pop %v9752
    %v9817 = vrsqrt.pop %v9753
    %v9818 = vrsqrt.pop %v9754
    %v9819 = vrsqrt.pop %v9755
    %v9820 = vrsqrt.pop %v9756
    %v9821 = vrsqrt.pop %v9757
    %v9822 = vrsqrt.pop %v9758
    %v9823 = vrsqrt.pop %v9759
    %v9824 = vrsqrt.pop %v9760
    %v9825 = vrsqrt.pop %v9761
    %v9826 = vrsqrt.pop %v9762
    %v9827 = vrsqrt.pop %v9763
    %v9828 = vrsqrt.pop %v9764
    %v9829 = vrsqrt.pop %v9765
    %v9830 = vrsqrt.pop %v9766
    %v9831 = vrsqrt.pop %v9767
    %v9832 = vrsqrt.pop %v9768
    %v9833 = vrsqrt.pop %v9769
    %v9834 = vrsqrt.pop %v9770
    %v9835 = vrsqrt.pop %v9771
    %v9836 = vrsqrt.pop %v9772
    %v9837 = vrsqrt.pop %v9773
    %v9838 = vrsqrt.pop %v9774
    %v9839 = vrsqrt.pop %v9775
    %v9840 = vrsqrt.pop %v9776
    %v9841 = vrsqrt.pop %v9777
    %v9842 = vrsqrt.pop %v9778
    %v9843 = vrsqrt.pop %v9779
    %v9844 = vrsqrt.pop %v9780
    %v9845 = vrsqrt.pop %v9781
    %v9846 = vrsqrt.pop %v9782
    %v9847 = vrsqrt.pop %v9783
    %v9848 = vrsqrt.pop %v9784
    %v9849 = vrsqrt.pop %v9785
    %v9850 = vrsqrt.pop %v9786
    %v9851 = vrsqrt.pop %v9787
    %v9852 = vrsqrt.pop %v9788
    %v9853 = vrsqrt.pop %v9789
    %v9854 = vrsqrt.pop %v9790
    %v9855 = vrsqrt.pop %v9791
    %v9856 = vrsqrt.pop %v9792
    %v9857 = vrsqrt.pop %v9793
    %v9858 = vrsqrt.pop %v9794
    %v9859 = vrsqrt.pop %v9795
    %v9860 = vrsqrt.pop %v9796
    %v9861 = vmul.f32 %v9349, %v9797
    %v9862 = vmul.f32 %v9350, %v9798
    %v9863 = vmul.f32 %v9351, %v9799
    %v9864 = vmul.f32 %v9352, %v9800
    %v9865 = vmul.f32 %v9353, %v9801
    %v9866 = vmul.f32 %v9354, %v9802
    %v9867 = vmul.f32 %v9355, %v9803
    %v9868 = vmul.f32 %v9356, %v9804
    %v9869 = vmul.f32 %v9357, %v9805
    %v9870 = vmul.f32 %v9358, %v9806
    %v9871 = vmul.f32 %v9359, %v9807
    %v9872 = vmul.f32 %v9360, %v9808
    %v9873 = vmul.f32 %v9361, %v9809
    %v9874 = vmul.f32 %v9362, %v9810
    %v9875 = vmul.f32 %v9363, %v9811
    %v9876 = vmul.f32 %v9364, %v9812
    %v9877 = vmul.f32 %v9365, %v9813
    %v9878 = vmul.f32 %v9366, %v9814
    %v9879 = vmul.f32 %v9367, %v9815
    %v9880 = vmul.f32 %v9368, %v9816
    %v9881 = vmul.f32 %v9369, %v9817
    %v9882 = vmul.f32 %v9370, %v9818
    %v9883 = vmul.f32 %v9371, %v9819
    %v9884 = vmul.f32 %v9372, %v9820
    %v9885 = vmul.f32 %v9373, %v9821
    %v9886 = vmul.f32 %v9374, %v9822
    %v9887 = vmul.f32 %v9375, %v9823
    %v9888 = vmul.f32 %v9376, %v9824
    %v9889 = vmul.f32 %v9377, %v9825
    %v9890 = vmul.f32 %v9378, %v9826
    %v9891 = vmul.f32 %v9379, %v9827
    %v9892 = vmul.f32 %v9380, %v9828
    %v9893 = vmul.f32 %v9381, %v9829
    %v9894 = vmul.f32 %v9382, %v9830
    %v9895 = vmul.f32 %v9383, %v9831
    %v9896 = vmul.f32 %v9384, %v9832
    %v9897 = vmul.f32 %v9385, %v9833
    %v9898 = vmul.f32 %v9386, %v9834
    %v9899 = vmul.f32 %v9387, %v9835
    %v9900 = vmul.f32 %v9388, %v9836
    %v9901 = vmul.f32 %v9389, %v9837
    %v9902 = vmul.f32 %v9390, %v9838
    %v9903 = vmul.f32 %v9391, %v9839
    %v9904 = vmul.f32 %v9392, %v9840
    %v9905 = vmul.f32 %v9393, %v9841
    %v9906 = vmul.f32 %v9394, %v9842
    %v9907 = vmul.f32 %v9395, %v9843
    %v9908 = vmul.f32 %v9396, %v9844
    %v9909 = vmul.f32 %v9397, %v9845
    %v9910 = vmul.f32 %v9398, %v9846
    %v9911 = vmul.f32 %v9399, %v9847
    %v9912 = vmul.f32 %v9400, %v9848
    %v9913 = vmul.f32 %v9401, %v9849
    %v9914 = vmul.f32 %v9402, %v9850
    %v9915 = vmul.f32 %v9403, %v9851
    %v9916 = vmul.f32 %v9404, %v9852
    %v9917 = vmul.f32 %v9405, %v9853
    %v9918 = vmul.f32 %v9406, %v9854
    %v9919 = vmul.f32 %v9407, %v9855
    %v9920 = vmul.f32 %v9408, %v9856
    %v9921 = vmul.f32 %v9409, %v9857
    %v9922 = vmul.f32 %v9410, %v9858
    %v9923 = vmul.f32 %v9411, %v9859
    %v9924 = vmul.f32 %v9412, %v9860
    %v9925 = vld [vmem:[%s4] sm:$0x1]
    %v9927 = vlaneseq
    %v9928 = vshrl.u32 %v9927, 7
    %v9929 = vsub.s32 0, %v9928
    %v9930 = vrot.slane %v9925, %v9929
    %v9932 = vmul.f32 %v9861, %v9930
    %v9933 = vmul.f32 %v9862, %v9930
    %v9934 = vmul.f32 %v9863, %v9930
    %v9935 = vmul.f32 %v9864, %v9930
    %v9936 = vmul.f32 %v9865, %v9930
    %v9937 = vmul.f32 %v9866, %v9930
    %v9938 = vmul.f32 %v9867, %v9930
    %v9939 = vmul.f32 %v9868, %v9930
    %v9940 = vmul.f32 %v9869, %v9930
    %v9941 = vmul.f32 %v9870, %v9930
    %v9942 = vmul.f32 %v9871, %v9930
    %v9943 = vmul.f32 %v9872, %v9930
    %v9944 = vmul.f32 %v9873, %v9930
    %v9945 = vmul.f32 %v9874, %v9930
    %v9946 = vmul.f32 %v9875, %v9930
    %v9947 = vmul.f32 %v9876, %v9930
    %v9948 = vmul.f32 %v9877, %v9930
    %v9949 = vmul.f32 %v9878, %v9930
    %v9950 = vmul.f32 %v9879, %v9930
    %v9951 = vmul.f32 %v9880, %v9930
    %v9952 = vmul.f32 %v9881, %v9930
    %v9953 = vmul.f32 %v9882, %v9930
    %v9954 = vmul.f32 %v9883, %v9930
    %v9955 = vmul.f32 %v9884, %v9930
    %v9956 = vmul.f32 %v9885, %v9930
    %v9957 = vmul.f32 %v9886, %v9930
    %v9958 = vmul.f32 %v9887, %v9930
    %v9959 = vmul.f32 %v9888, %v9930
    %v9960 = vmul.f32 %v9889, %v9930
    %v9961 = vmul.f32 %v9890, %v9930
    %v9962 = vmul.f32 %v9891, %v9930
    %v9963 = vmul.f32 %v9892, %v9930
    %v9964 = vmul.f32 %v9893, %v9930
    %v9965 = vmul.f32 %v9894, %v9930
    %v9966 = vmul.f32 %v9895, %v9930
    %v9967 = vmul.f32 %v9896, %v9930
    %v9968 = vmul.f32 %v9897, %v9930
    %v9969 = vmul.f32 %v9898, %v9930
    %v9970 = vmul.f32 %v9899, %v9930
    %v9971 = vmul.f32 %v9900, %v9930
    %v9972 = vmul.f32 %v9901, %v9930
    %v9973 = vmul.f32 %v9902, %v9930
    %v9974 = vmul.f32 %v9903, %v9930
    %v9975 = vmul.f32 %v9904, %v9930
    %v9976 = vmul.f32 %v9905, %v9930
    %v9977 = vmul.f32 %v9906, %v9930
    %v9978 = vmul.f32 %v9907, %v9930
    %v9979 = vmul.f32 %v9908, %v9930
    %v9980 = vmul.f32 %v9909, %v9930
    %v9981 = vmul.f32 %v9910, %v9930
    %v9982 = vmul.f32 %v9911, %v9930
    %v9983 = vmul.f32 %v9912, %v9930
    %v9984 = vmul.f32 %v9913, %v9930
    %v9985 = vmul.f32 %v9914, %v9930
    %v9986 = vmul.f32 %v9915, %v9930
    %v9987 = vmul.f32 %v9916, %v9930
    %v9988 = vmul.f32 %v9917, %v9930
    %v9989 = vmul.f32 %v9918, %v9930
    %v9990 = vmul.f32 %v9919, %v9930
    %v9991 = vmul.f32 %v9920, %v9930
    %v9992 = vmul.f32 %v9921, %v9930
    %v9993 = vmul.f32 %v9922, %v9930
    %v9994 = vmul.f32 %v9923, %v9930
    %v9995 = vmul.f32 %v9924, %v9930
    %v9996 = vld [vmem:[%s5] sm:$0x1]
    %v9998 = vlaneseq
    %v9999 = vshrl.u32 %v9998, 7
    %v10000 = vsub.s32 0, %v9999
    %v10001 = vrot.slane %v9996, %v10000
    %v10003 = vadd.f32 %v9932, %v10001
    %v10004 = vadd.f32 %v9933, %v10001
    %v10005 = vadd.f32 %v9934, %v10001
    %v10006 = vadd.f32 %v9935, %v10001
    %v10007 = vadd.f32 %v9936, %v10001
    %v10008 = vadd.f32 %v9937, %v10001
    %v10009 = vadd.f32 %v9938, %v10001
    %v10010 = vadd.f32 %v9939, %v10001
    %v10011 = vadd.f32 %v9940, %v10001
    %v10012 = vadd.f32 %v9941, %v10001
    %v10013 = vadd.f32 %v9942, %v10001
    %v10014 = vadd.f32 %v9943, %v10001
    %v10015 = vadd.f32 %v9944, %v10001
    %v10016 = vadd.f32 %v9945, %v10001
    %v10017 = vadd.f32 %v9946, %v10001
    %v10018 = vadd.f32 %v9947, %v10001
    %v10019 = vadd.f32 %v9948, %v10001
    %v10020 = vadd.f32 %v9949, %v10001
    %v10021 = vadd.f32 %v9950, %v10001
    %v10022 = vadd.f32 %v9951, %v10001
    %v10023 = vadd.f32 %v9952, %v10001
    %v10024 = vadd.f32 %v9953, %v10001
    %v10025 = vadd.f32 %v9954, %v10001
    %v10026 = vadd.f32 %v9955, %v10001
    %v10027 = vadd.f32 %v9956, %v10001
    %v10028 = vadd.f32 %v9957, %v10001
    %v10029 = vadd.f32 %v9958, %v10001
    %v10030 = vadd.f32 %v9959, %v10001
    %v10031 = vadd.f32 %v9960, %v10001
    %v10032 = vadd.f32 %v9961, %v10001
    %v10033 = vadd.f32 %v9962, %v10001
    %v10034 = vadd.f32 %v9963, %v10001
    %v10035 = vadd.f32 %v9964, %v10001
    %v10036 = vadd.f32 %v9965, %v10001
    %v10037 = vadd.f32 %v9966, %v10001
    %v10038 = vadd.f32 %v9967, %v10001
    %v10039 = vadd.f32 %v9968, %v10001
    %v10040 = vadd.f32 %v9969, %v10001
    %v10041 = vadd.f32 %v9970, %v10001
    %v10042 = vadd.f32 %v9971, %v10001
    %v10043 = vadd.f32 %v9972, %v10001
    %v10044 = vadd.f32 %v9973, %v10001
    %v10045 = vadd.f32 %v9974, %v10001
    %v10046 = vadd.f32 %v9975, %v10001
    %v10047 = vadd.f32 %v9976, %v10001
    %v10048 = vadd.f32 %v9977, %v10001
    %v10049 = vadd.f32 %v9978, %v10001
    %v10050 = vadd.f32 %v9979, %v10001
    %v10051 = vadd.f32 %v9980, %v10001
    %v10052 = vadd.f32 %v9981, %v10001
    %v10053 = vadd.f32 %v9982, %v10001
    %v10054 = vadd.f32 %v9983, %v10001
    %v10055 = vadd.f32 %v9984, %v10001
    %v10056 = vadd.f32 %v9985, %v10001
    %v10057 = vadd.f32 %v9986, %v10001
    %v10058 = vadd.f32 %v9987, %v10001
    %v10059 = vadd.f32 %v9988, %v10001
    %v10060 = vadd.f32 %v9989, %v10001
    %v10061 = vadd.f32 %v9990, %v10001
    %v10062 = vadd.f32 %v9991, %v10001
    %v10063 = vadd.f32 %v9992, %v10001
    %v10064 = vadd.f32 %v9993, %v10001
    %v10065 = vadd.f32 %v9994, %v10001
    %v10066 = vadd.f32 %v9995, %v10001
    %v10067 = vld [vmem:[%s6] sm:$0xff]
    %v10068 = vld [vmem:[%s6 + $0x8] sm:$0xff]
    %v10069 = vld [vmem:[%s6 + $0x10] sm:$0xff]
    %v10070 = vld [vmem:[%s6 + $0x18] sm:$0xff]
    %v10071 = vld [vmem:[%s7] sm:$0x1]
    %v10073 = vlaneseq
    %v10074 = vshrl.u32 %v10073, 7
    %v10075 = vsub.s32 0, %v10074
    %v10076 = vrot.slane %v10071, %v10075
    %v10079 = vsel %vm6407, %v10003, 0
    %v10082 = vsel %vm6407, %v10004, 0
    %v10085 = vsel %vm6407, %v10005, 0
    %v10088 = vsel %vm6407, %v10006, 0
    %v10091 = vsel %vm6407, %v10007, 0
    %v10094 = vsel %vm6407, %v10008, 0
    %v10097 = vsel %vm6407, %v10009, 0
    %v10100 = vsel %vm6407, %v10010, 0
    %v10103 = vsel %vm6407, %v10011, 0
    %v10106 = vsel %vm6407, %v10012, 0
    %v10109 = vsel %vm6407, %v10013, 0
    %v10112 = vsel %vm6407, %v10014, 0
    %v10115 = vsel %vm6407, %v10015, 0
    %v10118 = vsel %vm6407, %v10016, 0
    %v10121 = vsel %vm6407, %v10017, 0
    %v10124 = vsel %vm6407, %v10018, 0
    %v10127 = vsel %vm6407, %v10019, 0
    %v10130 = vsel %vm6407, %v10020, 0
    %v10133 = vsel %vm6407, %v10021, 0
    %v10136 = vsel %vm6407, %v10022, 0
    %v10139 = vsel %vm6407, %v10023, 0
    %v10142 = vsel %vm6407, %v10024, 0
    %v10145 = vsel %vm6407, %v10025, 0
    %v10148 = vsel %vm6407, %v10026, 0
    %v10151 = vsel %vm6407, %v10027, 0
    %v10154 = vsel %vm6407, %v10028, 0
    %v10157 = vsel %vm6407, %v10029, 0
    %v10160 = vsel %vm6407, %v10030, 0
    %v10163 = vsel %vm6407, %v10031, 0
    %v10166 = vsel %vm6407, %v10032, 0
    %v10169 = vsel %vm6407, %v10033, 0
    %v10172 = vsel %vm6407, %v10034, 0
    %v10175 = vsel %vm6407, %v10035, 0
    %v10178 = vsel %vm6407, %v10036, 0
    %v10181 = vsel %vm6407, %v10037, 0
    %v10184 = vsel %vm6407, %v10038, 0
    %v10187 = vsel %vm6407, %v10039, 0
    %v10190 = vsel %vm6407, %v10040, 0
    %v10193 = vsel %vm6407, %v10041, 0
    %v10196 = vsel %vm6407, %v10042, 0
    %v10199 = vsel %vm6407, %v10043, 0
    %v10202 = vsel %vm6407, %v10044, 0
    %v10205 = vsel %vm6407, %v10045, 0
    %v10208 = vsel %vm6407, %v10046, 0
    %v10211 = vsel %vm6407, %v10047, 0
    %v10214 = vsel %vm6407, %v10048, 0
    %v10217 = vsel %vm6407, %v10049, 0
    %v10220 = vsel %vm6407, %v10050, 0
    %v10223 = vsel %vm6407, %v10051, 0
    %v10226 = vsel %vm6407, %v10052, 0
    %v10229 = vsel %vm6407, %v10053, 0
    %v10232 = vsel %vm6407, %v10054, 0
    %v10235 = vsel %vm6407, %v10055, 0
    %v10238 = vsel %vm6407, %v10056, 0
    %v10241 = vsel %vm6407, %v10057, 0
    %v10244 = vsel %vm6407, %v10058, 0
    %v10247 = vsel %vm6407, %v10059, 0
    %v10250 = vsel %vm6407, %v10060, 0
    %v10253 = vsel %vm6407, %v10061, 0
    %v10256 = vsel %vm6407, %v10062, 0
    %v10259 = vsel %vm6407, %v10063, 0
    %v10262 = vsel %vm6407, %v10064, 0
    %v10265 = vsel %vm6407, %v10065, 0
    %v10268 = vsel %vm6407, %v10066, 0
    %10270 = vmatprep.subr.mxu0 0.0
    %10271 = vmatpush1.msra.mxu0 0.0
    %10272 = vmatprep.subr.mxu0 0.0
    %10273 = vmatpush1.msra.mxu0 0.0
    %10274 = vmatprep.subr.mxu0 0.0
    %10275 = vmatpush1.msra.mxu0 0.0
    %10276 = vmatprep.subr.mxu0 0.0
    %10277 = vmatpush1.msra.mxu0 0.0
    %10278 = vmatprep.subr.mxu0 0.0
    %10279 = vmatpush1.msra.mxu0 0.0
    %10280 = vmatprep.subr.mxu0 0.0
    %10281 = vmatpush1.msra.mxu0 0.0
    %10282 = vmatprep.subr.mxu0 0.0
    %10283 = vmatpush1.msra.mxu0 0.0
    %10284 = vmatprep.subr.mxu0 0.0
    %10285 = vmatpush1.msra.mxu0 0.0
    %10286 = vmatprep.subr.mxu0 0.0
    %10287 = vmatpush1.msra.mxu0 0.0
    %10288 = vmatprep.subr.mxu0 0.0
    %10289 = vmatpush1.msra.mxu0 0.0
    %10290 = vmatprep.subr.mxu0 0.0
    %10291 = vmatpush1.msra.mxu0 0.0
    %10292 = vmatprep.subr.mxu0 0.0
    %10293 = vmatpush1.msra.mxu0 0.0
    %10294 = vmatprep.subr.mxu0 0.0
    %10295 = vmatpush1.msra.mxu0 %v10070
    %10296 = vmatprep.subr.mxu0 0.0
    %10297 = vmatpush1.msra.mxu0 %v10069
    %10298 = vmatprep.subr.mxu0 0.0
    %10299 = vmatpush1.msra.mxu0 %v10068
    %10300 = vmatprep.subr.mxu0 0.0
    %10301 = vmatpush1.msra.mxu0 %v10067
    %10302 = vmatprep.subr.mxu0 0.0
    %10303 = vmatpush2.msra.mxu0 0.0
    %10304 = vmatprep.subr.mxu0 0.0
    %10305 = vmatpush2.msra.mxu0 0.0
    %10306 = vmatprep.subr.mxu0 0.0
    %10307 = vmatpush2.msra.mxu0 0.0
    %10308 = vmatprep.subr.mxu0 0.0
    %10309 = vmatpush2.msra.mxu0 0.0
    %10310 = vmatprep.subr.mxu0 0.0
    %10311 = vmatpush2.msra.mxu0 0.0
    %10312 = vmatprep.subr.mxu0 0.0
    %10313 = vmatpush2.msra.mxu0 0.0
    %10314 = vmatprep.subr.mxu0 0.0
    %10315 = vmatpush2.msra.mxu0 0.0
    %10316 = vmatprep.subr.mxu0 0.0
    %10317 = vmatpush2.msra.mxu0 0.0
    %10318 = vmatprep.subr.mxu0 0.0
    %10319 = vmatpush2.msra.mxu0 0.0
    %10320 = vmatprep.subr.mxu0 0.0
    %10321 = vmatpush2.msra.mxu0 0.0
    %10322 = vmatprep.subr.mxu0 0.0
    %10323 = vmatpush2.msra.mxu0 0.0
    %10324 = vmatprep.subr.mxu0 0.0
    %10325 = vmatpush2.msra.mxu0 0.0
    %10326 = vmatprep.subr.mxu0 0.0
    %10327 = vmatpush2.msra.mxu0 0.0
    %10328 = vmatprep.subr.mxu0 0.0
    %10329 = vmatpush2.msra.mxu0 0.0
    %10330 = vmatprep.subr.mxu0 0.0
    %10331 = vmatpush2.msra.mxu0 0.0
    %10332 = vmatprep.subr.mxu0 0.0
    %10333 = vmatpush2.msra.mxu0 0.0
    %10334 = vmatprep.mubr.f32.mxu0 0.0
    %10335 = vmatmul.mubr.f32.gmra.mxu0 %v10079
    %v10336 = vpop.f32.mrf.mxu0
    %v10337 = vadd.f32 %v10076, %v10336
    %v10338 = vpop.f32.mrf.mxu0
    %10339 = vmatprep.mubr.f32.mxu0 0.0
    %10340 = vmatmul.mubr.f32.gmra.mxu0 %v10082
    %v10341 = vpop.f32.mrf.mxu0
    %v10342 = vadd.f32 %v10076, %v10341
    %v10343 = vpop.f32.mrf.mxu0
    %10344 = vmatprep.mubr.f32.mxu0 0.0
    %10345 = vmatmul.mubr.f32.gmra.mxu0 %v10085
    %v10346 = vpop.f32.mrf.mxu0
    %v10347 = vadd.f32 %v10076, %v10346
    %v10348 = vpop.f32.mrf.mxu0
    %10349 = vmatprep.mubr.f32.mxu0 0.0
    %10350 = vmatmul.mubr.f32.gmra.mxu0 %v10088
    %v10351 = vpop.f32.mrf.mxu0
    %v10352 = vadd.f32 %v10076, %v10351
    %v10353 = vpop.f32.mrf.mxu0
    %10354 = vmatprep.mubr.f32.mxu0 0.0
    %10355 = vmatmul.mubr.f32.gmra.mxu0 %v10091
    %v10356 = vpop.f32.mrf.mxu0
    %v10357 = vadd.f32 %v10076, %v10356
    %v10358 = vpop.f32.mrf.mxu0
    %10359 = vmatprep.mubr.f32.mxu0 0.0
    %10360 = vmatmul.mubr.f32.gmra.mxu0 %v10094
    %v10361 = vpop.f32.mrf.mxu0
    %v10362 = vadd.f32 %v10076, %v10361
    %v10363 = vpop.f32.mrf.mxu0
    %10364 = vmatprep.mubr.f32.mxu0 0.0
    %10365 = vmatmul.mubr.f32.gmra.mxu0 %v10097
    %v10366 = vpop.f32.mrf.mxu0
    %v10367 = vadd.f32 %v10076, %v10366
    %v10368 = vpop.f32.mrf.mxu0
    %10369 = vmatprep.mubr.f32.mxu0 0.0
    %10370 = vmatmul.mubr.f32.gmra.mxu0 %v10100
    %v10371 = vpop.f32.mrf.mxu0
    %v10372 = vadd.f32 %v10076, %v10371
    %v10373 = vpop.f32.mrf.mxu0
    %10374 = vmatprep.mubr.f32.mxu0 0.0
    %10375 = vmatmul.mubr.f32.gmra.mxu0 %v10103
    %v10376 = vpop.f32.mrf.mxu0
    %v10377 = vadd.f32 %v10076, %v10376
    %v10378 = vpop.f32.mrf.mxu0
    %10379 = vmatprep.mubr.f32.mxu0 0.0
    %10380 = vmatmul.mubr.f32.gmra.mxu0 %v10106
    %v10381 = vpop.f32.mrf.mxu0
    %v10382 = vadd.f32 %v10076, %v10381
    %v10383 = vpop.f32.mrf.mxu0
    %10384 = vmatprep.mubr.f32.mxu0 0.0
    %10385 = vmatmul.mubr.f32.gmra.mxu0 %v10109
    %v10386 = vpop.f32.mrf.mxu0
    %v10387 = vadd.f32 %v10076, %v10386
    %v10388 = vpop.f32.mrf.mxu0
    %10389 = vmatprep.mubr.f32.mxu0 0.0
    %10390 = vmatmul.mubr.f32.gmra.mxu0 %v10112
    %v10391 = vpop.f32.mrf.mxu0
    %v10392 = vadd.f32 %v10076, %v10391
    %v10393 = vpop.f32.mrf.mxu0
    %10394 = vmatprep.mubr.f32.mxu0 0.0
    %10395 = vmatmul.mubr.f32.gmra.mxu0 %v10115
    %v10396 = vpop.f32.mrf.mxu0
    %v10397 = vadd.f32 %v10076, %v10396
    %v10398 = vpop.f32.mrf.mxu0
    %10399 = vmatprep.mubr.f32.mxu0 0.0
    %10400 = vmatmul.mubr.f32.gmra.mxu0 %v10118
    %v10401 = vpop.f32.mrf.mxu0
    %v10402 = vadd.f32 %v10076, %v10401
    %v10403 = vpop.f32.mrf.mxu0
    %10404 = vmatprep.mubr.f32.mxu0 0.0
    %10405 = vmatmul.mubr.f32.gmra.mxu0 %v10121
    %v10406 = vpop.f32.mrf.mxu0
    %v10407 = vadd.f32 %v10076, %v10406
    %v10408 = vpop.f32.mrf.mxu0
    %10409 = vmatprep.mubr.f32.mxu0 0.0
    %10410 = vmatmul.mubr.f32.gmra.mxu0 %v10124
    %v10411 = vpop.f32.mrf.mxu0
    %v10412 = vadd.f32 %v10076, %v10411
    %v10413 = vpop.f32.mrf.mxu0
    %10414 = vmatprep.mubr.f32.mxu0 0.0
    %10415 = vmatmul.mubr.f32.gmra.mxu0 %v10127
    %v10416 = vpop.f32.mrf.mxu0
    %v10417 = vadd.f32 %v10076, %v10416
    %v10418 = vpop.f32.mrf.mxu0
    %10419 = vmatprep.mubr.f32.mxu0 0.0
    %10420 = vmatmul.mubr.f32.gmra.mxu0 %v10130
    %v10421 = vpop.f32.mrf.mxu0
    %v10422 = vadd.f32 %v10076, %v10421
    %v10423 = vpop.f32.mrf.mxu0
    %10424 = vmatprep.mubr.f32.mxu0 0.0
    %10425 = vmatmul.mubr.f32.gmra.mxu0 %v10133
    %v10426 = vpop.f32.mrf.mxu0
    %v10427 = vadd.f32 %v10076, %v10426
    %v10428 = vpop.f32.mrf.mxu0
    %10429 = vmatprep.mubr.f32.mxu0 0.0
    %10430 = vmatmul.mubr.f32.gmra.mxu0 %v10136
    %v10431 = vpop.f32.mrf.mxu0
    %v10432 = vadd.f32 %v10076, %v10431
    %v10433 = vpop.f32.mrf.mxu0
    %10434 = vmatprep.mubr.f32.mxu0 0.0
    %10435 = vmatmul.mubr.f32.gmra.mxu0 %v10139
    %v10436 = vpop.f32.mrf.mxu0
    %v10437 = vadd.f32 %v10076, %v10436
    %v10438 = vpop.f32.mrf.mxu0
    %10439 = vmatprep.mubr.f32.mxu0 0.0
    %10440 = vmatmul.mubr.f32.gmra.mxu0 %v10142
    %v10441 = vpop.f32.mrf.mxu0
    %v10442 = vadd.f32 %v10076, %v10441
    %v10443 = vpop.f32.mrf.mxu0
    %10444 = vmatprep.mubr.f32.mxu0 0.0
    %10445 = vmatmul.mubr.f32.gmra.mxu0 %v10145
    %v10446 = vpop.f32.mrf.mxu0
    %v10447 = vadd.f32 %v10076, %v10446
    %v10448 = vpop.f32.mrf.mxu0
    %10449 = vmatprep.mubr.f32.mxu0 0.0
    %10450 = vmatmul.mubr.f32.gmra.mxu0 %v10148
    %v10451 = vpop.f32.mrf.mxu0
    %v10452 = vadd.f32 %v10076, %v10451
    %v10453 = vpop.f32.mrf.mxu0
    %10454 = vmatprep.mubr.f32.mxu0 0.0
    %10455 = vmatmul.mubr.f32.gmra.mxu0 %v10151
    %v10456 = vpop.f32.mrf.mxu0
    %v10457 = vadd.f32 %v10076, %v10456
    %v10458 = vpop.f32.mrf.mxu0
    %10459 = vmatprep.mubr.f32.mxu0 0.0
    %10460 = vmatmul.mubr.f32.gmra.mxu0 %v10154
    %v10461 = vpop.f32.mrf.mxu0
    %v10462 = vadd.f32 %v10076, %v10461
    %v10463 = vpop.f32.mrf.mxu0
    %10464 = vmatprep.mubr.f32.mxu0 0.0
    %10465 = vmatmul.mubr.f32.gmra.mxu0 %v10157
    %v10466 = vpop.f32.mrf.mxu0
    %v10467 = vadd.f32 %v10076, %v10466
    %v10468 = vpop.f32.mrf.mxu0
    %10469 = vmatprep.mubr.f32.mxu0 0.0
    %10470 = vmatmul.mubr.f32.gmra.mxu0 %v10160
    %v10471 = vpop.f32.mrf.mxu0
    %v10472 = vadd.f32 %v10076, %v10471
    %v10473 = vpop.f32.mrf.mxu0
    %10474 = vmatprep.mubr.f32.mxu0 0.0
    %10475 = vmatmul.mubr.f32.gmra.mxu0 %v10163
    %v10476 = vpop.f32.mrf.mxu0
    %v10477 = vadd.f32 %v10076, %v10476
    %v10478 = vpop.f32.mrf.mxu0
    %10479 = vmatprep.mubr.f32.mxu0 0.0
    %10480 = vmatmul.mubr.f32.gmra.mxu0 %v10166
    %v10481 = vpop.f32.mrf.mxu0
    %v10482 = vadd.f32 %v10076, %v10481
    %v10483 = vpop.f32.mrf.mxu0
    %10484 = vmatprep.mubr.f32.mxu0 0.0
    %10485 = vmatmul.mubr.f32.gmra.mxu0 %v10169
    %v10486 = vpop.f32.mrf.mxu0
    %v10487 = vadd.f32 %v10076, %v10486
    %v10488 = vpop.f32.mrf.mxu0
    %10489 = vmatprep.mubr.f32.mxu0 0.0
    %10490 = vmatmul.mubr.f32.gmra.mxu0 %v10172
    %v10491 = vpop.f32.mrf.mxu0
    %v10492 = vadd.f32 %v10076, %v10491
    %v10493 = vpop.f32.mrf.mxu0
    %10494 = vmatprep.mubr.f32.mxu0 0.0
    %10495 = vmatmul.mubr.f32.gmra.mxu0 %v10175
    %v10496 = vpop.f32.mrf.mxu0
    %v10497 = vadd.f32 %v10076, %v10496
    %v10498 = vpop.f32.mrf.mxu0
    %10499 = vmatprep.mubr.f32.mxu0 0.0
    %10500 = vmatmul.mubr.f32.gmra.mxu0 %v10178
    %v10501 = vpop.f32.mrf.mxu0
    %v10502 = vadd.f32 %v10076, %v10501
    %v10503 = vpop.f32.mrf.mxu0
    %10504 = vmatprep.mubr.f32.mxu0 0.0
    %10505 = vmatmul.mubr.f32.gmra.mxu0 %v10181
    %v10506 = vpop.f32.mrf.mxu0
    %v10507 = vadd.f32 %v10076, %v10506
    %v10508 = vpop.f32.mrf.mxu0
    %10509 = vmatprep.mubr.f32.mxu0 0.0
    %10510 = vmatmul.mubr.f32.gmra.mxu0 %v10184
    %v10511 = vpop.f32.mrf.mxu0
    %v10512 = vadd.f32 %v10076, %v10511
    %v10513 = vpop.f32.mrf.mxu0
    %10514 = vmatprep.mubr.f32.mxu0 0.0
    %10515 = vmatmul.mubr.f32.gmra.mxu0 %v10187
    %v10516 = vpop.f32.mrf.mxu0
    %v10517 = vadd.f32 %v10076, %v10516
    %v10518 = vpop.f32.mrf.mxu0
    %10519 = vmatprep.mubr.f32.mxu0 0.0
    %10520 = vmatmul.mubr.f32.gmra.mxu0 %v10190
    %v10521 = vpop.f32.mrf.mxu0
    %v10522 = vadd.f32 %v10076, %v10521
    %v10523 = vpop.f32.mrf.mxu0
    %10524 = vmatprep.mubr.f32.mxu0 0.0
    %10525 = vmatmul.mubr.f32.gmra.mxu0 %v10193
    %v10526 = vpop.f32.mrf.mxu0
    %v10527 = vadd.f32 %v10076, %v10526
    %v10528 = vpop.f32.mrf.mxu0
    %10529 = vmatprep.mubr.f32.mxu0 0.0
    %10530 = vmatmul.mubr.f32.gmra.mxu0 %v10196
    %v10531 = vpop.f32.mrf.mxu0
    %v10532 = vadd.f32 %v10076, %v10531
    %v10533 = vpop.f32.mrf.mxu0
    %10534 = vmatprep.mubr.f32.mxu0 0.0
    %10535 = vmatmul.mubr.f32.gmra.mxu0 %v10199
    %v10536 = vpop.f32.mrf.mxu0
    %v10537 = vadd.f32 %v10076, %v10536
    %v10538 = vpop.f32.mrf.mxu0
    %10539 = vmatprep.mubr.f32.mxu0 0.0
    %10540 = vmatmul.mubr.f32.gmra.mxu0 %v10202
    %v10541 = vpop.f32.mrf.mxu0
    %v10542 = vadd.f32 %v10076, %v10541
    %v10543 = vpop.f32.mrf.mxu0
    %10544 = vmatprep.mubr.f32.mxu0 0.0
    %10545 = vmatmul.mubr.f32.gmra.mxu0 %v10205
    %v10546 = vpop.f32.mrf.mxu0
    %v10547 = vadd.f32 %v10076, %v10546
    %v10548 = vpop.f32.mrf.mxu0
    %10549 = vmatprep.mubr.f32.mxu0 0.0
    %10550 = vmatmul.mubr.f32.gmra.mxu0 %v10208
    %v10551 = vpop.f32.mrf.mxu0
    %v10552 = vadd.f32 %v10076, %v10551
    %v10553 = vpop.f32.mrf.mxu0
    %10554 = vmatprep.mubr.f32.mxu0 0.0
    %10555 = vmatmul.mubr.f32.gmra.mxu0 %v10211
    %v10556 = vpop.f32.mrf.mxu0
    %v10557 = vadd.f32 %v10076, %v10556
    %v10558 = vpop.f32.mrf.mxu0
    %10559 = vmatprep.mubr.f32.mxu0 0.0
    %10560 = vmatmul.mubr.f32.gmra.mxu0 %v10214
    %v10561 = vpop.f32.mrf.mxu0
    %v10562 = vadd.f32 %v10076, %v10561
    %v10563 = vpop.f32.mrf.mxu0
    %10564 = vmatprep.mubr.f32.mxu0 0.0
    %10565 = vmatmul.mubr.f32.gmra.mxu0 %v10217
    %v10566 = vpop.f32.mrf.mxu0
    %v10567 = vadd.f32 %v10076, %v10566
    %v10568 = vpop.f32.mrf.mxu0
    %10569 = vmatprep.mubr.f32.mxu0 0.0
    %10570 = vmatmul.mubr.f32.gmra.mxu0 %v10220
    %v10571 = vpop.f32.mrf.mxu0
    %v10572 = vadd.f32 %v10076, %v10571
    %v10573 = vpop.f32.mrf.mxu0
    %10574 = vmatprep.mubr.f32.mxu0 0.0
    %10575 = vmatmul.mubr.f32.gmra.mxu0 %v10223
    %v10576 = vpop.f32.mrf.mxu0
    %v10577 = vadd.f32 %v10076, %v10576
    %v10578 = vpop.f32.mrf.mxu0
    %10579 = vmatprep.mubr.f32.mxu0 0.0
    %10580 = vmatmul.mubr.f32.gmra.mxu0 %v10226
    %v10581 = vpop.f32.mrf.mxu0
    %v10582 = vadd.f32 %v10076, %v10581
    %v10583 = vpop.f32.mrf.mxu0
    %10584 = vmatprep.mubr.f32.mxu0 0.0
    %10585 = vmatmul.mubr.f32.gmra.mxu0 %v10229
    %v10586 = vpop.f32.mrf.mxu0
    %v10587 = vadd.f32 %v10076, %v10586
    %v10588 = vpop.f32.mrf.mxu0
    %10589 = vmatprep.mubr.f32.mxu0 0.0
    %10590 = vmatmul.mubr.f32.gmra.mxu0 %v10232
    %v10591 = vpop.f32.mrf.mxu0
    %v10592 = vadd.f32 %v10076, %v10591
    %v10593 = vpop.f32.mrf.mxu0
    %10594 = vmatprep.mubr.f32.mxu0 0.0
    %10595 = vmatmul.mubr.f32.gmra.mxu0 %v10235
    %v10596 = vpop.f32.mrf.mxu0
    %v10597 = vadd.f32 %v10076, %v10596
    %v10598 = vpop.f32.mrf.mxu0
    %10599 = vmatprep.mubr.f32.mxu0 0.0
    %10600 = vmatmul.mubr.f32.gmra.mxu0 %v10238
    %v10601 = vpop.f32.mrf.mxu0
    %v10602 = vadd.f32 %v10076, %v10601
    %v10603 = vpop.f32.mrf.mxu0
    %10604 = vmatprep.mubr.f32.mxu0 0.0
    %10605 = vmatmul.mubr.f32.gmra.mxu0 %v10241
    %v10606 = vpop.f32.mrf.mxu0
    %v10607 = vadd.f32 %v10076, %v10606
    %v10608 = vpop.f32.mrf.mxu0
    %10609 = vmatprep.mubr.f32.mxu0 0.0
    %10610 = vmatmul.mubr.f32.gmra.mxu0 %v10244
    %v10611 = vpop.f32.mrf.mxu0
    %v10612 = vadd.f32 %v10076, %v10611
    %v10613 = vpop.f32.mrf.mxu0
    %10614 = vmatprep.mubr.f32.mxu0 0.0
    %10615 = vmatmul.mubr.f32.gmra.mxu0 %v10247
    %v10616 = vpop.f32.mrf.mxu0
    %v10617 = vadd.f32 %v10076, %v10616
    %v10618 = vpop.f32.mrf.mxu0
    %10619 = vmatprep.mubr.f32.mxu0 0.0
    %10620 = vmatmul.mubr.f32.gmra.mxu0 %v10250
    %v10621 = vpop.f32.mrf.mxu0
    %v10622 = vadd.f32 %v10076, %v10621
    %v10623 = vpop.f32.mrf.mxu0
    %10624 = vmatprep.mubr.f32.mxu0 0.0
    %10625 = vmatmul.mubr.f32.gmra.mxu0 %v10253
    %v10626 = vpop.f32.mrf.mxu0
    %v10627 = vadd.f32 %v10076, %v10626
    %v10628 = vpop.f32.mrf.mxu0
    %10629 = vmatprep.mubr.f32.mxu0 0.0
    %10630 = vmatmul.mubr.f32.gmra.mxu0 %v10256
    %v10631 = vpop.f32.mrf.mxu0
    %v10632 = vadd.f32 %v10076, %v10631
    %v10633 = vpop.f32.mrf.mxu0
    %10634 = vmatprep.mubr.f32.mxu0 0.0
    %10635 = vmatmul.mubr.f32.gmra.mxu0 %v10259
    %v10636 = vpop.f32.mrf.mxu0
    %v10637 = vadd.f32 %v10076, %v10636
    %v10638 = vpop.f32.mrf.mxu0
    %10639 = vmatprep.mubr.f32.mxu0 0.0
    %10640 = vmatmul.mubr.f32.gmra.mxu0 %v10262
    %v10641 = vpop.f32.mrf.mxu0
    %v10642 = vadd.f32 %v10076, %v10641
    %v10643 = vpop.f32.mrf.mxu0
    %10644 = vmatprep.mubr.f32.mxu0 0.0
    %10645 = vmatmul.mubr.f32.gmra.mxu0 %v10265
    %v10646 = vpop.f32.mrf.mxu0
    %v10647 = vadd.f32 %v10076, %v10646
    %v10648 = vpop.f32.mrf.mxu0
    %10649 = vmatprep.mubr.f32.mxu0 0.0
    %10650 = vmatmul.mubr.f32.gmra.mxu0 %v10268
    %v10651 = vpop.f32.mrf.mxu0
    %v10652 = vadd.f32 %v10076, %v10651
    %v10653 = vpop.f32.mrf.mxu0
    %10654 = vdwg.mxu0
    %v10655 = vmul.f32 %v10337, 0.5
    %v10656 = vmul.f32 %v10342, 0.5
    %v10657 = vmul.f32 %v10347, 0.5
    %v10658 = vmul.f32 %v10352, 0.5
    %v10659 = vmul.f32 %v10357, 0.5
    %v10660 = vmul.f32 %v10362, 0.5
    %v10661 = vmul.f32 %v10367, 0.5
    %v10662 = vmul.f32 %v10372, 0.5
    %v10663 = vmul.f32 %v10377, 0.5
    %v10664 = vmul.f32 %v10382, 0.5
    %v10665 = vmul.f32 %v10387, 0.5
    %v10666 = vmul.f32 %v10392, 0.5
    %v10667 = vmul.f32 %v10397, 0.5
    %v10668 = vmul.f32 %v10402, 0.5
    %v10669 = vmul.f32 %v10407, 0.5
    %v10670 = vmul.f32 %v10412, 0.5
    %v10671 = vmul.f32 %v10417, 0.5
    %v10672 = vmul.f32 %v10422, 0.5
    %v10673 = vmul.f32 %v10427, 0.5
    %v10674 = vmul.f32 %v10432, 0.5
    %v10675 = vmul.f32 %v10437, 0.5
    %v10676 = vmul.f32 %v10442, 0.5
    %v10677 = vmul.f32 %v10447, 0.5
    %v10678 = vmul.f32 %v10452, 0.5
    %v10679 = vmul.f32 %v10457, 0.5
    %v10680 = vmul.f32 %v10462, 0.5
    %v10681 = vmul.f32 %v10467, 0.5
    %v10682 = vmul.f32 %v10472, 0.5
    %v10683 = vmul.f32 %v10477, 0.5
    %v10684 = vmul.f32 %v10482, 0.5
    %v10685 = vmul.f32 %v10487, 0.5
    %v10686 = vmul.f32 %v10492, 0.5
    %v10687 = vmul.f32 %v10497, 0.5
    %v10688 = vmul.f32 %v10502, 0.5
    %v10689 = vmul.f32 %v10507, 0.5
    %v10690 = vmul.f32 %v10512, 0.5
    %v10691 = vmul.f32 %v10517, 0.5
    %v10692 = vmul.f32 %v10522, 0.5
    %v10693 = vmul.f32 %v10527, 0.5
    %v10694 = vmul.f32 %v10532, 0.5
    %v10695 = vmul.f32 %v10537, 0.5
    %v10696 = vmul.f32 %v10542, 0.5
    %v10697 = vmul.f32 %v10547, 0.5
    %v10698 = vmul.f32 %v10552, 0.5
    %v10699 = vmul.f32 %v10557, 0.5
    %v10700 = vmul.f32 %v10562, 0.5
    %v10701 = vmul.f32 %v10567, 0.5
    %v10702 = vmul.f32 %v10572, 0.5
    %v10703 = vmul.f32 %v10577, 0.5
    %v10704 = vmul.f32 %v10582, 0.5
    %v10705 = vmul.f32 %v10587, 0.5
    %v10706 = vmul.f32 %v10592, 0.5
    %v10707 = vmul.f32 %v10597, 0.5
    %v10708 = vmul.f32 %v10602, 0.5
    %v10709 = vmul.f32 %v10607, 0.5
    %v10710 = vmul.f32 %v10612, 0.5
    %v10711 = vmul.f32 %v10617, 0.5
    %v10712 = vmul.f32 %v10622, 0.5
    %v10713 = vmul.f32 %v10627, 0.5
    %v10714 = vmul.f32 %v10632, 0.5
    %v10715 = vmul.f32 %v10637, 0.5
    %v10716 = vmul.f32 %v10642, 0.5
    %v10717 = vmul.f32 %v10647, 0.5
    %v10718 = vmul.f32 %v10652, 0.5
    %v10719 = vmul.f32 %v10337, 0.70710677
    %v10720 = vmul.f32 %v10342, 0.70710677
    %v10721 = vmul.f32 %v10347, 0.70710677
    %v10722 = vmul.f32 %v10352, 0.70710677
    %v10723 = vmul.f32 %v10357, 0.70710677
    %v10724 = vmul.f32 %v10362, 0.70710677
    %v10725 = vmul.f32 %v10367, 0.70710677
    %v10726 = vmul.f32 %v10372, 0.70710677
    %v10727 = vmul.f32 %v10377, 0.70710677
    %v10728 = vmul.f32 %v10382, 0.70710677
    %v10729 = vmul.f32 %v10387, 0.70710677
    %v10730 = vmul.f32 %v10392, 0.70710677
    %v10731 = vmul.f32 %v10397, 0.70710677
    %v10732 = vmul.f32 %v10402, 0.70710677
    %v10733 = vmul.f32 %v10407, 0.70710677
    %v10734 = vmul.f32 %v10412, 0.70710677
    %v10735 = vmul.f32 %v10417, 0.70710677
    %v10736 = vmul.f32 %v10422, 0.70710677
    %v10737 = vmul.f32 %v10427, 0.70710677
    %v10738 = vmul.f32 %v10432, 0.70710677
    %v10739 = vmul.f32 %v10437, 0.70710677
    %v10740 = vmul.f32 %v10442, 0.70710677
    %v10741 = vmul.f32 %v10447, 0.70710677
    %v10742 = vmul.f32 %v10452, 0.70710677
    %v10743 = vmul.f32 %v10457, 0.70710677
    %v10744 = vmul.f32 %v10462, 0.70710677
    %v10745 = vmul.f32 %v10467, 0.70710677
    %v10746 = vmul.f32 %v10472, 0.70710677
    %v10747 = vmul.f32 %v10477, 0.70710677
    %v10748 = vmul.f32 %v10482, 0.70710677
    %v10749 = vmul.f32 %v10487, 0.70710677
    %v10750 = vmul.f32 %v10492, 0.70710677
    %v10751 = vmul.f32 %v10497, 0.70710677
    %v10752 = vmul.f32 %v10502, 0.70710677
    %v10753 = vmul.f32 %v10507, 0.70710677
    %v10754 = vmul.f32 %v10512, 0.70710677
    %v10755 = vmul.f32 %v10517, 0.70710677
    %v10756 = vmul.f32 %v10522, 0.70710677
    %v10757 = vmul.f32 %v10527, 0.70710677
    %v10758 = vmul.f32 %v10532, 0.70710677
    %v10759 = vmul.f32 %v10537, 0.70710677
    %v10760 = vmul.f32 %v10542, 0.70710677
    %v10761 = vmul.f32 %v10547, 0.70710677
    %v10762 = vmul.f32 %v10552, 0.70710677
    %v10763 = vmul.f32 %v10557, 0.70710677
    %v10764 = vmul.f32 %v10562, 0.70710677
    %v10765 = vmul.f32 %v10567, 0.70710677
    %v10766 = vmul.f32 %v10572, 0.70710677
    %v10767 = vmul.f32 %v10577, 0.70710677
    %v10768 = vmul.f32 %v10582, 0.70710677
    %v10769 = vmul.f32 %v10587, 0.70710677
    %v10770 = vmul.f32 %v10592, 0.70710677
    %v10771 = vmul.f32 %v10597, 0.70710677
    %v10772 = vmul.f32 %v10602, 0.70710677
    %v10773 = vmul.f32 %v10607, 0.70710677
    %v10774 = vmul.f32 %v10612, 0.70710677
    %v10775 = vmul.f32 %v10617, 0.70710677
    %v10776 = vmul.f32 %v10622, 0.70710677
    %v10777 = vmul.f32 %v10627, 0.70710677
    %v10778 = vmul.f32 %v10632, 0.70710677
    %v10779 = vmul.f32 %v10637, 0.70710677
    %v10780 = vmul.f32 %v10642, 0.70710677
    %v10781 = vmul.f32 %v10647, 0.70710677
    %v10782 = vmul.f32 %v10652, 0.70710677
    %vm10783 = vcmp.ge.f32.partialorder %v10719, 0.0
    %vm10784 = vcmp.ge.f32.partialorder %v10720, 0.0
    %vm10785 = vcmp.ge.f32.partialorder %v10721, 0.0
    %vm10786 = vcmp.ge.f32.partialorder %v10722, 0.0
    %vm10787 = vcmp.ge.f32.partialorder %v10723, 0.0
    %vm10788 = vcmp.ge.f32.partialorder %v10724, 0.0
    %vm10789 = vcmp.ge.f32.partialorder %v10725, 0.0
    %vm10790 = vcmp.ge.f32.partialorder %v10726, 0.0
    %vm10791 = vcmp.ge.f32.partialorder %v10727, 0.0
    %vm10792 = vcmp.ge.f32.partialorder %v10728, 0.0
    %vm10793 = vcmp.ge.f32.partialorder %v10729, 0.0
    %vm10794 = vcmp.ge.f32.partialorder %v10730, 0.0
    %vm10795 = vcmp.ge.f32.partialorder %v10731, 0.0
    %vm10796 = vcmp.ge.f32.partialorder %v10732, 0.0
    %vm10797 = vcmp.ge.f32.partialorder %v10733, 0.0
    %vm10798 = vcmp.ge.f32.partialorder %v10734, 0.0
    %vm10799 = vcmp.ge.f32.partialorder %v10735, 0.0
    %vm10800 = vcmp.ge.f32.partialorder %v10736, 0.0
    %vm10801 = vcmp.ge.f32.partialorder %v10737, 0.0
    %vm10802 = vcmp.ge.f32.partialorder %v10738, 0.0
    %vm10803 = vcmp.ge.f32.partialorder %v10739, 0.0
    %vm10804 = vcmp.ge.f32.partialorder %v10740, 0.0
    %vm10805 = vcmp.ge.f32.partialorder %v10741, 0.0
    %vm10806 = vcmp.ge.f32.partialorder %v10742, 0.0
    %vm10807 = vcmp.ge.f32.partialorder %v10743, 0.0
    %vm10808 = vcmp.ge.f32.partialorder %v10744, 0.0
    %vm10809 = vcmp.ge.f32.partialorder %v10745, 0.0
    %vm10810 = vcmp.ge.f32.partialorder %v10746, 0.0
    %vm10811 = vcmp.ge.f32.partialorder %v10747, 0.0
    %vm10812 = vcmp.ge.f32.partialorder %v10748, 0.0
    %vm10813 = vcmp.ge.f32.partialorder %v10749, 0.0
    %vm10814 = vcmp.ge.f32.partialorder %v10750, 0.0
    %vm10815 = vcmp.ge.f32.partialorder %v10751, 0.0
    %vm10816 = vcmp.ge.f32.partialorder %v10752, 0.0
    %vm10817 = vcmp.ge.f32.partialorder %v10753, 0.0
    %vm10818 = vcmp.ge.f32.partialorder %v10754, 0.0
    %vm10819 = vcmp.ge.f32.partialorder %v10755, 0.0
    %vm10820 = vcmp.ge.f32.partialorder %v10756, 0.0
    %vm10821 = vcmp.ge.f32.partialorder %v10757, 0.0
    %vm10822 = vcmp.ge.f32.partialorder %v10758, 0.0
    %vm10823 = vcmp.ge.f32.partialorder %v10759, 0.0
    %vm10824 = vcmp.ge.f32.partialorder %v10760, 0.0
    %vm10825 = vcmp.ge.f32.partialorder %v10761, 0.0
    %vm10826 = vcmp.ge.f32.partialorder %v10762, 0.0
    %vm10827 = vcmp.ge.f32.partialorder %v10763, 0.0
    %vm10828 = vcmp.ge.f32.partialorder %v10764, 0.0
    %vm10829 = vcmp.ge.f32.partialorder %v10765, 0.0
    %vm10830 = vcmp.ge.f32.partialorder %v10766, 0.0
    %vm10831 = vcmp.ge.f32.partialorder %v10767, 0.0
    %vm10832 = vcmp.ge.f32.partialorder %v10768, 0.0
    %vm10833 = vcmp.ge.f32.partialorder %v10769, 0.0
    %vm10834 = vcmp.ge.f32.partialorder %v10770, 0.0
    %vm10835 = vcmp.ge.f32.partialorder %v10771, 0.0
    %vm10836 = vcmp.ge.f32.partialorder %v10772, 0.0
    %vm10837 = vcmp.ge.f32.partialorder %v10773, 0.0
    %vm10838 = vcmp.ge.f32.partialorder %v10774, 0.0
    %vm10839 = vcmp.ge.f32.partialorder %v10775, 0.0
    %vm10840 = vcmp.ge.f32.partialorder %v10776, 0.0
    %vm10841 = vcmp.ge.f32.partialorder %v10777, 0.0
    %vm10842 = vcmp.ge.f32.partialorder %v10778, 0.0
    %vm10843 = vcmp.ge.f32.partialorder %v10779, 0.0
    %vm10844 = vcmp.ge.f32.partialorder %v10780, 0.0
    %vm10845 = vcmp.ge.f32.partialorder %v10781, 0.0
    %vm10846 = vcmp.ge.f32.partialorder %v10782, 0.0
    %v10847 = vsel %vm10783, 1.0, -1.0
    %v10848 = vsel %vm10784, 1.0, -1.0
    %v10849 = vsel %vm10785, 1.0, -1.0
    %v10850 = vsel %vm10786, 1.0, -1.0
    %v10851 = vsel %vm10787, 1.0, -1.0
    %v10852 = vsel %vm10788, 1.0, -1.0
    %v10853 = vsel %vm10789, 1.0, -1.0
    %v10854 = vsel %vm10790, 1.0, -1.0
    %v10855 = vsel %vm10791, 1.0, -1.0
    %v10856 = vsel %vm10792, 1.0, -1.0
    %v10857 = vsel %vm10793, 1.0, -1.0
    %v10858 = vsel %vm10794, 1.0, -1.0
    %v10859 = vsel %vm10795, 1.0, -1.0
    %v10860 = vsel %vm10796, 1.0, -1.0
    %v10861 = vsel %vm10797, 1.0, -1.0
    %v10862 = vsel %vm10798, 1.0, -1.0
    %v10863 = vsel %vm10799, 1.0, -1.0
    %v10864 = vsel %vm10800, 1.0, -1.0
    %v10865 = vsel %vm10801, 1.0, -1.0
    %v10866 = vsel %vm10802, 1.0, -1.0
    %v10867 = vsel %vm10803, 1.0, -1.0
    %v10868 = vsel %vm10804, 1.0, -1.0
    %v10869 = vsel %vm10805, 1.0, -1.0
    %v10870 = vsel %vm10806, 1.0, -1.0
    %v10871 = vsel %vm10807, 1.0, -1.0
    %v10872 = vsel %vm10808, 1.0, -1.0
    %v10873 = vsel %vm10809, 1.0, -1.0
    %v10874 = vsel %vm10810, 1.0, -1.0
    %v10875 = vsel %vm10811, 1.0, -1.0
    %v10876 = vsel %vm10812, 1.0, -1.0
    %v10877 = vsel %vm10813, 1.0, -1.0
    %v10878 = vsel %vm10814, 1.0, -1.0
    %v10879 = vsel %vm10815, 1.0, -1.0
    %v10880 = vsel %vm10816, 1.0, -1.0
    %v10881 = vsel %vm10817, 1.0, -1.0
    %v10882 = vsel %vm10818, 1.0, -1.0
    %v10883 = vsel %vm10819, 1.0, -1.0
    %v10884 = vsel %vm10820, 1.0, -1.0
    %v10885 = vsel %vm10821, 1.0, -1.0
    %v10886 = vsel %vm10822, 1.0, -1.0
    %v10887 = vsel %vm10823, 1.0, -1.0
    %v10888 = vsel %vm10824, 1.0, -1.0
    %v10889 = vsel %vm10825, 1.0, -1.0
    %v10890 = vsel %vm10826, 1.0, -1.0
    %v10891 = vsel %vm10827, 1.0, -1.0
    %v10892 = vsel %vm10828, 1.0, -1.0
    %v10893 = vsel %vm10829, 1.0, -1.0
    %v10894 = vsel %vm10830, 1.0, -1.0
    %v10895 = vsel %vm10831, 1.0, -1.0
    %v10896 = vsel %vm10832, 1.0, -1.0
    %v10897 = vsel %vm10833, 1.0, -1.0
    %v10898 = vsel %vm10834, 1.0, -1.0
    %v10899 = vsel %vm10835, 1.0, -1.0
    %v10900 = vsel %vm10836, 1.0, -1.0
    %v10901 = vsel %vm10837, 1.0, -1.0
    %v10902 = vsel %vm10838, 1.0, -1.0
    %v10903 = vsel %vm10839, 1.0, -1.0
    %v10904 = vsel %vm10840, 1.0, -1.0
    %v10905 = vsel %vm10841, 1.0, -1.0
    %v10906 = vsel %vm10842, 1.0, -1.0
    %v10907 = vsel %vm10843, 1.0, -1.0
    %v10908 = vsel %vm10844, 1.0, -1.0
    %v10909 = vsel %vm10845, 1.0, -1.0
    %v10910 = vsel %vm10846, 1.0, -1.0
    %v10911 = vand.u32 2147483647, %v10719
    %v10912 = vand.u32 2147483647, %v10720
    %v10913 = vand.u32 2147483647, %v10721
    %v10914 = vand.u32 2147483647, %v10722
    %v10915 = vand.u32 2147483647, %v10723
    %v10916 = vand.u32 2147483647, %v10724
    %v10917 = vand.u32 2147483647, %v10725
    %v10918 = vand.u32 2147483647, %v10726
    %v10919 = vand.u32 2147483647, %v10727
    %v10920 = vand.u32 2147483647, %v10728
    %v10921 = vand.u32 2147483647, %v10729
    %v10922 = vand.u32 2147483647, %v10730
    %v10923 = vand.u32 2147483647, %v10731
    %v10924 = vand.u32 2147483647, %v10732
    %v10925 = vand.u32 2147483647, %v10733
    %v10926 = vand.u32 2147483647, %v10734
    %v10927 = vand.u32 2147483647, %v10735
    %v10928 = vand.u32 2147483647, %v10736
    %v10929 = vand.u32 2147483647, %v10737
    %v10930 = vand.u32 2147483647, %v10738
    %v10931 = vand.u32 2147483647, %v10739
    %v10932 = vand.u32 2147483647, %v10740
    %v10933 = vand.u32 2147483647, %v10741
    %v10934 = vand.u32 2147483647, %v10742
    %v10935 = vand.u32 2147483647, %v10743
    %v10936 = vand.u32 2147483647, %v10744
    %v10937 = vand.u32 2147483647, %v10745
    %v10938 = vand.u32 2147483647, %v10746
    %v10939 = vand.u32 2147483647, %v10747
    %v10940 = vand.u32 2147483647, %v10748
    %v10941 = vand.u32 2147483647, %v10749
    %v10942 = vand.u32 2147483647, %v10750
    %v10943 = vand.u32 2147483647, %v10751
    %v10944 = vand.u32 2147483647, %v10752
    %v10945 = vand.u32 2147483647, %v10753
    %v10946 = vand.u32 2147483647, %v10754
    %v10947 = vand.u32 2147483647, %v10755
    %v10948 = vand.u32 2147483647, %v10756
    %v10949 = vand.u32 2147483647, %v10757
    %v10950 = vand.u32 2147483647, %v10758
    %v10951 = vand.u32 2147483647, %v10759
    %v10952 = vand.u32 2147483647, %v10760
    %v10953 = vand.u32 2147483647, %v10761
    %v10954 = vand.u32 2147483647, %v10762
    %v10955 = vand.u32 2147483647, %v10763
    %v10956 = vand.u32 2147483647, %v10764
    %v10957 = vand.u32 2147483647, %v10765
    %v10958 = vand.u32 2147483647, %v10766
    %v10959 = vand.u32 2147483647, %v10767
    %v10960 = vand.u32 2147483647, %v10768
    %v10961 = vand.u32 2147483647, %v10769
    %v10962 = vand.u32 2147483647, %v10770
    %v10963 = vand.u32 2147483647, %v10771
    %v10964 = vand.u32 2147483647, %v10772
    %v10965 = vand.u32 2147483647, %v10773
    %v10966 = vand.u32 2147483647, %v10774
    %v10967 = vand.u32 2147483647, %v10775
    %v10968 = vand.u32 2147483647, %v10776
    %v10969 = vand.u32 2147483647, %v10777
    %v10970 = vand.u32 2147483647, %v10778
    %v10971 = vand.u32 2147483647, %v10779
    %v10972 = vand.u32 2147483647, %v10780
    %v10973 = vand.u32 2147483647, %v10781
    %v10974 = vand.u32 2147483647, %v10782
    %v10975 = vmul.f32 %v10911, 0.3275911
    %v10976 = vmul.f32 %v10912, 0.3275911
    %v10977 = vmul.f32 %v10913, 0.3275911
    %v10978 = vmul.f32 %v10914, 0.3275911
    %v10979 = vmul.f32 %v10915, 0.3275911
    %v10980 = vmul.f32 %v10916, 0.3275911
    %v10981 = vmul.f32 %v10917, 0.3275911
    %v10982 = vmul.f32 %v10918, 0.3275911
    %v10983 = vmul.f32 %v10919, 0.3275911
    %v10984 = vmul.f32 %v10920, 0.3275911
    %v10985 = vmul.f32 %v10921, 0.3275911
    %v10986 = vmul.f32 %v10922, 0.3275911
    %v10987 = vmul.f32 %v10923, 0.3275911
    %v10988 = vmul.f32 %v10924, 0.3275911
    %v10989 = vmul.f32 %v10925, 0.3275911
    %v10990 = vmul.f32 %v10926, 0.3275911
    %v10991 = vmul.f32 %v10927, 0.3275911
    %v10992 = vmul.f32 %v10928, 0.3275911
    %v10993 = vmul.f32 %v10929, 0.3275911
    %v10994 = vmul.f32 %v10930, 0.3275911
    %v10995 = vmul.f32 %v10931, 0.3275911
    %v10996 = vmul.f32 %v10932, 0.3275911
    %v10997 = vmul.f32 %v10933, 0.3275911
    %v10998 = vmul.f32 %v10934, 0.3275911
    %v10999 = vmul.f32 %v10935, 0.3275911
    %v11000 = vmul.f32 %v10936, 0.3275911
    %v11001 = vmul.f32 %v10937, 0.3275911
    %v11002 = vmul.f32 %v10938, 0.3275911
    %v11003 = vmul.f32 %v10939, 0.3275911
    %v11004 = vmul.f32 %v10940, 0.3275911
    %v11005 = vmul.f32 %v10941, 0.3275911
    %v11006 = vmul.f32 %v10942, 0.3275911
    %v11007 = vmul.f32 %v10943, 0.3275911
    %v11008 = vmul.f32 %v10944, 0.3275911
    %v11009 = vmul.f32 %v10945, 0.3275911
    %v11010 = vmul.f32 %v10946, 0.3275911
    %v11011 = vmul.f32 %v10947, 0.3275911
    %v11012 = vmul.f32 %v10948, 0.3275911
    %v11013 = vmul.f32 %v10949, 0.3275911
    %v11014 = vmul.f32 %v10950, 0.3275911
    %v11015 = vmul.f32 %v10951, 0.3275911
    %v11016 = vmul.f32 %v10952, 0.3275911
    %v11017 = vmul.f32 %v10953, 0.3275911
    %v11018 = vmul.f32 %v10954, 0.3275911
    %v11019 = vmul.f32 %v10955, 0.3275911
    %v11020 = vmul.f32 %v10956, 0.3275911
    %v11021 = vmul.f32 %v10957, 0.3275911
    %v11022 = vmul.f32 %v10958, 0.3275911
    %v11023 = vmul.f32 %v10959, 0.3275911
    %v11024 = vmul.f32 %v10960, 0.3275911
    %v11025 = vmul.f32 %v10961, 0.3275911
    %v11026 = vmul.f32 %v10962, 0.3275911
    %v11027 = vmul.f32 %v10963, 0.3275911
    %v11028 = vmul.f32 %v10964, 0.3275911
    %v11029 = vmul.f32 %v10965, 0.3275911
    %v11030 = vmul.f32 %v10966, 0.3275911
    %v11031 = vmul.f32 %v10967, 0.3275911
    %v11032 = vmul.f32 %v10968, 0.3275911
    %v11033 = vmul.f32 %v10969, 0.3275911
    %v11034 = vmul.f32 %v10970, 0.3275911
    %v11035 = vmul.f32 %v10971, 0.3275911
    %v11036 = vmul.f32 %v10972, 0.3275911
    %v11037 = vmul.f32 %v10973, 0.3275911
    %v11038 = vmul.f32 %v10974, 0.3275911
    %v11039 = vadd.f32 %v10975, 1.0
    %v11040 = vadd.f32 %v10976, 1.0
    %v11041 = vadd.f32 %v10977, 1.0
    %v11042 = vadd.f32 %v10978, 1.0
    %v11043 = vadd.f32 %v10979, 1.0
    %v11044 = vadd.f32 %v10980, 1.0
    %v11045 = vadd.f32 %v10981, 1.0
    %v11046 = vadd.f32 %v10982, 1.0
    %v11047 = vadd.f32 %v10983, 1.0
    %v11048 = vadd.f32 %v10984, 1.0
    %v11049 = vadd.f32 %v10985, 1.0
    %v11050 = vadd.f32 %v10986, 1.0
    %v11051 = vadd.f32 %v10987, 1.0
    %v11052 = vadd.f32 %v10988, 1.0
    %v11053 = vadd.f32 %v10989, 1.0
    %v11054 = vadd.f32 %v10990, 1.0
    %v11055 = vadd.f32 %v10991, 1.0
    %v11056 = vadd.f32 %v10992, 1.0
    %v11057 = vadd.f32 %v10993, 1.0
    %v11058 = vadd.f32 %v10994, 1.0
    %v11059 = vadd.f32 %v10995, 1.0
    %v11060 = vadd.f32 %v10996, 1.0
    %v11061 = vadd.f32 %v10997, 1.0
    %v11062 = vadd.f32 %v10998, 1.0
    %v11063 = vadd.f32 %v10999, 1.0
    %v11064 = vadd.f32 %v11000, 1.0
    %v11065 = vadd.f32 %v11001, 1.0
    %v11066 = vadd.f32 %v11002, 1.0
    %v11067 = vadd.f32 %v11003, 1.0
    %v11068 = vadd.f32 %v11004, 1.0
    %v11069 = vadd.f32 %v11005, 1.0
    %v11070 = vadd.f32 %v11006, 1.0
    %v11071 = vadd.f32 %v11007, 1.0
    %v11072 = vadd.f32 %v11008, 1.0
    %v11073 = vadd.f32 %v11009, 1.0
    %v11074 = vadd.f32 %v11010, 1.0
    %v11075 = vadd.f32 %v11011, 1.0
    %v11076 = vadd.f32 %v11012, 1.0
    %v11077 = vadd.f32 %v11013, 1.0
    %v11078 = vadd.f32 %v11014, 1.0
    %v11079 = vadd.f32 %v11015, 1.0
    %v11080 = vadd.f32 %v11016, 1.0
    %v11081 = vadd.f32 %v11017, 1.0
    %v11082 = vadd.f32 %v11018, 1.0
    %v11083 = vadd.f32 %v11019, 1.0
    %v11084 = vadd.f32 %v11020, 1.0
    %v11085 = vadd.f32 %v11021, 1.0
    %v11086 = vadd.f32 %v11022, 1.0
    %v11087 = vadd.f32 %v11023, 1.0
    %v11088 = vadd.f32 %v11024, 1.0
    %v11089 = vadd.f32 %v11025, 1.0
    %v11090 = vadd.f32 %v11026, 1.0
    %v11091 = vadd.f32 %v11027, 1.0
    %v11092 = vadd.f32 %v11028, 1.0
    %v11093 = vadd.f32 %v11029, 1.0
    %v11094 = vadd.f32 %v11030, 1.0
    %v11095 = vadd.f32 %v11031, 1.0
    %v11096 = vadd.f32 %v11032, 1.0
    %v11097 = vadd.f32 %v11033, 1.0
    %v11098 = vadd.f32 %v11034, 1.0
    %v11099 = vadd.f32 %v11035, 1.0
    %v11100 = vadd.f32 %v11036, 1.0
    %v11101 = vadd.f32 %v11037, 1.0
    %v11102 = vadd.f32 %v11038, 1.0
    %v11103 = vrcp.pop %v11039
    %v11104 = vmul.f32 1.0, %v11103
    %v11105 = vrcp.pop %v11040
    %v11106 = vmul.f32 1.0, %v11105
    %v11107 = vrcp.pop %v11041
    %v11108 = vmul.f32 1.0, %v11107
    %v11109 = vrcp.pop %v11042
    %v11110 = vmul.f32 1.0, %v11109
    %v11111 = vrcp.pop %v11043
    %v11112 = vmul.f32 1.0, %v11111
    %v11113 = vrcp.pop %v11044
    %v11114 = vmul.f32 1.0, %v11113
    %v11115 = vrcp.pop %v11045
    %v11116 = vmul.f32 1.0, %v11115
    %v11117 = vrcp.pop %v11046
    %v11118 = vmul.f32 1.0, %v11117
    %v11119 = vrcp.pop %v11047
    %v11120 = vmul.f32 1.0, %v11119
    %v11121 = vrcp.pop %v11048
    %v11122 = vmul.f32 1.0, %v11121
    %v11123 = vrcp.pop %v11049
    %v11124 = vmul.f32 1.0, %v11123
    %v11125 = vrcp.pop %v11050
    %v11126 = vmul.f32 1.0, %v11125
    %v11127 = vrcp.pop %v11051
    %v11128 = vmul.f32 1.0, %v11127
    %v11129 = vrcp.pop %v11052
    %v11130 = vmul.f32 1.0, %v11129
    %v11131 = vrcp.pop %v11053
    %v11132 = vmul.f32 1.0, %v11131
    %v11133 = vrcp.pop %v11054
    %v11134 = vmul.f32 1.0, %v11133
    %v11135 = vrcp.pop %v11055
    %v11136 = vmul.f32 1.0, %v11135
    %v11137 = vrcp.pop %v11056
    %v11138 = vmul.f32 1.0, %v11137
    %v11139 = vrcp.pop %v11057
    %v11140 = vmul.f32 1.0, %v11139
    %v11141 = vrcp.pop %v11058
    %v11142 = vmul.f32 1.0, %v11141
    %v11143 = vrcp.pop %v11059
    %v11144 = vmul.f32 1.0, %v11143
    %v11145 = vrcp.pop %v11060
    %v11146 = vmul.f32 1.0, %v11145
    %v11147 = vrcp.pop %v11061
    %v11148 = vmul.f32 1.0, %v11147
    %v11149 = vrcp.pop %v11062
    %v11150 = vmul.f32 1.0, %v11149
    %v11151 = vrcp.pop %v11063
    %v11152 = vmul.f32 1.0, %v11151
    %v11153 = vrcp.pop %v11064
    %v11154 = vmul.f32 1.0, %v11153
    %v11155 = vrcp.pop %v11065
    %v11156 = vmul.f32 1.0, %v11155
    %v11157 = vrcp.pop %v11066
    %v11158 = vmul.f32 1.0, %v11157
    %v11159 = vrcp.pop %v11067
    %v11160 = vmul.f32 1.0, %v11159
    %v11161 = vrcp.pop %v11068
    %v11162 = vmul.f32 1.0, %v11161
    %v11163 = vrcp.pop %v11069
    %v11164 = vmul.f32 1.0, %v11163
    %v11165 = vrcp.pop %v11070
    %v11166 = vmul.f32 1.0, %v11165
    %v11167 = vrcp.pop %v11071
    %v11168 = vmul.f32 1.0, %v11167
    %v11169 = vrcp.pop %v11072
    %v11170 = vmul.f32 1.0, %v11169
    %v11171 = vrcp.pop %v11073
    %v11172 = vmul.f32 1.0, %v11171
    %v11173 = vrcp.pop %v11074
    %v11174 = vmul.f32 1.0, %v11173
    %v11175 = vrcp.pop %v11075
    %v11176 = vmul.f32 1.0, %v11175
    %v11177 = vrcp.pop %v11076
    %v11178 = vmul.f32 1.0, %v11177
    %v11179 = vrcp.pop %v11077
    %v11180 = vmul.f32 1.0, %v11179
    %v11181 = vrcp.pop %v11078
    %v11182 = vmul.f32 1.0, %v11181
    %v11183 = vrcp.pop %v11079
    %v11184 = vmul.f32 1.0, %v11183
    %v11185 = vrcp.pop %v11080
    %v11186 = vmul.f32 1.0, %v11185
    %v11187 = vrcp.pop %v11081
    %v11188 = vmul.f32 1.0, %v11187
    %v11189 = vrcp.pop %v11082
    %v11190 = vmul.f32 1.0, %v11189
    %v11191 = vrcp.pop %v11083
    %v11192 = vmul.f32 1.0, %v11191
    %v11193 = vrcp.pop %v11084
    %v11194 = vmul.f32 1.0, %v11193
    %v11195 = vrcp.pop %v11085
    %v11196 = vmul.f32 1.0, %v11195
    %v11197 = vrcp.pop %v11086
    %v11198 = vmul.f32 1.0, %v11197
    %v11199 = vrcp.pop %v11087
    %v11200 = vmul.f32 1.0, %v11199
    %v11201 = vrcp.pop %v11088
    %v11202 = vmul.f32 1.0, %v11201
    %v11203 = vrcp.pop %v11089
    %v11204 = vmul.f32 1.0, %v11203
    %v11205 = vrcp.pop %v11090
    %v11206 = vmul.f32 1.0, %v11205
    %v11207 = vrcp.pop %v11091
    %v11208 = vmul.f32 1.0, %v11207
    %v11209 = vrcp.pop %v11092
    %v11210 = vmul.f32 1.0, %v11209
    %v11211 = vrcp.pop %v11093
    %v11212 = vmul.f32 1.0, %v11211
    %v11213 = vrcp.pop %v11094
    %v11214 = vmul.f32 1.0, %v11213
    %v11215 = vrcp.pop %v11095
    %v11216 = vmul.f32 1.0, %v11215
    %v11217 = vrcp.pop %v11096
    %v11218 = vmul.f32 1.0, %v11217
    %v11219 = vrcp.pop %v11097
    %v11220 = vmul.f32 1.0, %v11219
    %v11221 = vrcp.pop %v11098
    %v11222 = vmul.f32 1.0, %v11221
    %v11223 = vrcp.pop %v11099
    %v11224 = vmul.f32 1.0, %v11223
    %v11225 = vrcp.pop %v11100
    %v11226 = vmul.f32 1.0, %v11225
    %v11227 = vrcp.pop %v11101
    %v11228 = vmul.f32 1.0, %v11227
    %v11229 = vrcp.pop %v11102
    %v11230 = vmul.f32 1.0, %v11229
    %v11231 = vmul.f32 %v11104, 1.0614054
    %v11232 = vmul.f32 %v11106, 1.0614054
    %v11233 = vmul.f32 %v11108, 1.0614054
    %v11234 = vmul.f32 %v11110, 1.0614054
    %v11235 = vmul.f32 %v11112, 1.0614054
    %v11236 = vmul.f32 %v11114, 1.0614054
    %v11237 = vmul.f32 %v11116, 1.0614054
    %v11238 = vmul.f32 %v11118, 1.0614054
    %v11239 = vmul.f32 %v11120, 1.0614054
    %v11240 = vmul.f32 %v11122, 1.0614054
    %v11241 = vmul.f32 %v11124, 1.0614054
    %v11242 = vmul.f32 %v11126, 1.0614054
    %v11243 = vmul.f32 %v11128, 1.0614054
    %v11244 = vmul.f32 %v11130, 1.0614054
    %v11245 = vmul.f32 %v11132, 1.0614054
    %v11246 = vmul.f32 %v11134, 1.0614054
    %v11247 = vmul.f32 %v11136, 1.0614054
    %v11248 = vmul.f32 %v11138, 1.0614054
    %v11249 = vmul.f32 %v11140, 1.0614054
    %v11250 = vmul.f32 %v11142, 1.0614054
    %v11251 = vmul.f32 %v11144, 1.0614054
    %v11252 = vmul.f32 %v11146, 1.0614054
    %v11253 = vmul.f32 %v11148, 1.0614054
    %v11254 = vmul.f32 %v11150, 1.0614054
    %v11255 = vmul.f32 %v11152, 1.0614054
    %v11256 = vmul.f32 %v11154, 1.0614054
    %v11257 = vmul.f32 %v11156, 1.0614054
    %v11258 = vmul.f32 %v11158, 1.0614054
    %v11259 = vmul.f32 %v11160, 1.0614054
    %v11260 = vmul.f32 %v11162, 1.0614054
    %v11261 = vmul.f32 %v11164, 1.0614054
    %v11262 = vmul.f32 %v11166, 1.0614054
    %v11263 = vmul.f32 %v11168, 1.0614054
    %v11264 = vmul.f32 %v11170, 1.0614054
    %v11265 = vmul.f32 %v11172, 1.0614054
    %v11266 = vmul.f32 %v11174, 1.0614054
    %v11267 = vmul.f32 %v11176, 1.0614054
    %v11268 = vmul.f32 %v11178, 1.0614054
    %v11269 = vmul.f32 %v11180, 1.0614054
    %v11270 = vmul.f32 %v11182, 1.0614054
    %v11271 = vmul.f32 %v11184, 1.0614054
    %v11272 = vmul.f32 %v11186, 1.0614054
    %v11273 = vmul.f32 %v11188, 1.0614054
    %v11274 = vmul.f32 %v11190, 1.0614054
    %v11275 = vmul.f32 %v11192, 1.0614054
    %v11276 = vmul.f32 %v11194, 1.0614054
    %v11277 = vmul.f32 %v11196, 1.0614054
    %v11278 = vmul.f32 %v11198, 1.0614054
    %v11279 = vmul.f32 %v11200, 1.0614054
    %v11280 = vmul.f32 %v11202, 1.0614054
    %v11281 = vmul.f32 %v11204, 1.0614054
    %v11282 = vmul.f32 %v11206, 1.0614054
    %v11283 = vmul.f32 %v11208, 1.0614054
    %v11284 = vmul.f32 %v11210, 1.0614054
    %v11285 = vmul.f32 %v11212, 1.0614054
    %v11286 = vmul.f32 %v11214, 1.0614054
    %v11287 = vmul.f32 %v11216, 1.0614054
    %v11288 = vmul.f32 %v11218, 1.0614054
    %v11289 = vmul.f32 %v11220, 1.0614054
    %v11290 = vmul.f32 %v11222, 1.0614054
    %v11291 = vmul.f32 %v11224, 1.0614054
    %v11292 = vmul.f32 %v11226, 1.0614054
    %v11293 = vmul.f32 %v11228, 1.0614054
    %v11294 = vmul.f32 %v11230, 1.0614054
    %v11295 = vadd.f32 %v11231, -1.4531521
    %v11296 = vadd.f32 %v11232, -1.4531521
    %v11297 = vadd.f32 %v11233, -1.4531521
    %v11298 = vadd.f32 %v11234, -1.4531521
    %v11299 = vadd.f32 %v11235, -1.4531521
    %v11300 = vadd.f32 %v11236, -1.4531521
    %v11301 = vadd.f32 %v11237, -1.4531521
    %v11302 = vadd.f32 %v11238, -1.4531521
    %v11303 = vadd.f32 %v11239, -1.4531521
    %v11304 = vadd.f32 %v11240, -1.4531521
    %v11305 = vadd.f32 %v11241, -1.4531521
    %v11306 = vadd.f32 %v11242, -1.4531521
    %v11307 = vadd.f32 %v11243, -1.4531521
    %v11308 = vadd.f32 %v11244, -1.4531521
    %v11309 = vadd.f32 %v11245, -1.4531521
    %v11310 = vadd.f32 %v11246, -1.4531521
    %v11311 = vadd.f32 %v11247, -1.4531521
    %v11312 = vadd.f32 %v11248, -1.4531521
    %v11313 = vadd.f32 %v11249, -1.4531521
    %v11314 = vadd.f32 %v11250, -1.4531521
    %v11315 = vadd.f32 %v11251, -1.4531521
    %v11316 = vadd.f32 %v11252, -1.4531521
    %v11317 = vadd.f32 %v11253, -1.4531521
    %v11318 = vadd.f32 %v11254, -1.4531521
    %v11319 = vadd.f32 %v11255, -1.4531521
    %v11320 = vadd.f32 %v11256, -1.4531521
    %v11321 = vadd.f32 %v11257, -1.4531521
    %v11322 = vadd.f32 %v11258, -1.4531521
    %v11323 = vadd.f32 %v11259, -1.4531521
    %v11324 = vadd.f32 %v11260, -1.4531521
    %v11325 = vadd.f32 %v11261, -1.4531521
    %v11326 = vadd.f32 %v11262, -1.4531521
    %v11327 = vadd.f32 %v11263, -1.4531521
    %v11328 = vadd.f32 %v11264, -1.4531521
    %v11329 = vadd.f32 %v11265, -1.4531521
    %v11330 = vadd.f32 %v11266, -1.4531521
    %v11331 = vadd.f32 %v11267, -1.4531521
    %v11332 = vadd.f32 %v11268, -1.4531521
    %v11333 = vadd.f32 %v11269, -1.4531521
    %v11334 = vadd.f32 %v11270, -1.4531521
    %v11335 = vadd.f32 %v11271, -1.4531521
    %v11336 = vadd.f32 %v11272, -1.4531521
    %v11337 = vadd.f32 %v11273, -1.4531521
    %v11338 = vadd.f32 %v11274, -1.4531521
    %v11339 = vadd.f32 %v11275, -1.4531521
    %v11340 = vadd.f32 %v11276, -1.4531521
    %v11341 = vadd.f32 %v11277, -1.4531521
    %v11342 = vadd.f32 %v11278, -1.4531521
    %v11343 = vadd.f32 %v11279, -1.4531521
    %v11344 = vadd.f32 %v11280, -1.4531521
    %v11345 = vadd.f32 %v11281, -1.4531521
    %v11346 = vadd.f32 %v11282, -1.4531521
    %v11347 = vadd.f32 %v11283, -1.4531521
    %v11348 = vadd.f32 %v11284, -1.4531521
    %v11349 = vadd.f32 %v11285, -1.4531521
    %v11350 = vadd.f32 %v11286, -1.4531521
    %v11351 = vadd.f32 %v11287, -1.4531521
    %v11352 = vadd.f32 %v11288, -1.4531521
    %v11353 = vadd.f32 %v11289, -1.4531521
    %v11354 = vadd.f32 %v11290, -1.4531521
    %v11355 = vadd.f32 %v11291, -1.4531521
    %v11356 = vadd.f32 %v11292, -1.4531521
    %v11357 = vadd.f32 %v11293, -1.4531521
    %v11358 = vadd.f32 %v11294, -1.4531521
    %v11359 = vmul.f32 %v11295, %v11104
    %v11360 = vmul.f32 %v11296, %v11106
    %v11361 = vmul.f32 %v11297, %v11108
    %v11362 = vmul.f32 %v11298, %v11110
    %v11363 = vmul.f32 %v11299, %v11112
    %v11364 = vmul.f32 %v11300, %v11114
    %v11365 = vmul.f32 %v11301, %v11116
    %v11366 = vmul.f32 %v11302, %v11118
    %v11367 = vmul.f32 %v11303, %v11120
    %v11368 = vmul.f32 %v11304, %v11122
    %v11369 = vmul.f32 %v11305, %v11124
    %v11370 = vmul.f32 %v11306, %v11126
    %v11371 = vmul.f32 %v11307, %v11128
    %v11372 = vmul.f32 %v11308, %v11130
    %v11373 = vmul.f32 %v11309, %v11132
    %v11374 = vmul.f32 %v11310, %v11134
    %v11375 = vmul.f32 %v11311, %v11136
    %v11376 = vmul.f32 %v11312, %v11138
    %v11377 = vmul.f32 %v11313, %v11140
    %v11378 = vmul.f32 %v11314, %v11142
    %v11379 = vmul.f32 %v11315, %v11144
    %v11380 = vmul.f32 %v11316, %v11146
    %v11381 = vmul.f32 %v11317, %v11148
    %v11382 = vmul.f32 %v11318, %v11150
    %v11383 = vmul.f32 %v11319, %v11152
    %v11384 = vmul.f32 %v11320, %v11154
    %v11385 = vmul.f32 %v11321, %v11156
    %v11386 = vmul.f32 %v11322, %v11158
    %v11387 = vmul.f32 %v11323, %v11160
    %v11388 = vmul.f32 %v11324, %v11162
    %v11389 = vmul.f32 %v11325, %v11164
    %v11390 = vmul.f32 %v11326, %v11166
    %v11391 = vmul.f32 %v11327, %v11168
    %v11392 = vmul.f32 %v11328, %v11170
    %v11393 = vmul.f32 %v11329, %v11172
    %v11394 = vmul.f32 %v11330, %v11174
    %v11395 = vmul.f32 %v11331, %v11176
    %v11396 = vmul.f32 %v11332, %v11178
    %v11397 = vmul.f32 %v11333, %v11180
    %v11398 = vmul.f32 %v11334, %v11182
    %v11399 = vmul.f32 %v11335, %v11184
    %v11400 = vmul.f32 %v11336, %v11186
    %v11401 = vmul.f32 %v11337, %v11188
    %v11402 = vmul.f32 %v11338, %v11190
    %v11403 = vmul.f32 %v11339, %v11192
    %v11404 = vmul.f32 %v11340, %v11194
    %v11405 = vmul.f32 %v11341, %v11196
    %v11406 = vmul.f32 %v11342, %v11198
    %v11407 = vmul.f32 %v11343, %v11200
    %v11408 = vmul.f32 %v11344, %v11202
    %v11409 = vmul.f32 %v11345, %v11204
    %v11410 = vmul.f32 %v11346, %v11206
    %v11411 = vmul.f32 %v11347, %v11208
    %v11412 = vmul.f32 %v11348, %v11210
    %v11413 = vmul.f32 %v11349, %v11212
    %v11414 = vmul.f32 %v11350, %v11214
    %v11415 = vmul.f32 %v11351, %v11216
    %v11416 = vmul.f32 %v11352, %v11218
    %v11417 = vmul.f32 %v11353, %v11220
    %v11418 = vmul.f32 %v11354, %v11222
    %v11419 = vmul.f32 %v11355, %v11224
    %v11420 = vmul.f32 %v11356, %v11226
    %v11421 = vmul.f32 %v11357, %v11228
    %v11422 = vmul.f32 %v11358, %v11230
    %v11423 = vadd.f32 %v11359, 1.4214138
    %v11424 = vadd.f32 %v11360, 1.4214138
    %v11425 = vadd.f32 %v11361, 1.4214138
    %v11426 = vadd.f32 %v11362, 1.4214138
    %v11427 = vadd.f32 %v11363, 1.4214138
    %v11428 = vadd.f32 %v11364, 1.4214138
    %v11429 = vadd.f32 %v11365, 1.4214138
    %v11430 = vadd.f32 %v11366, 1.4214138
    %v11431 = vadd.f32 %v11367, 1.4214138
    %v11432 = vadd.f32 %v11368, 1.4214138
    %v11433 = vadd.f32 %v11369, 1.4214138
    %v11434 = vadd.f32 %v11370, 1.4214138
    %v11435 = vadd.f32 %v11371, 1.4214138
    %v11436 = vadd.f32 %v11372, 1.4214138
    %v11437 = vadd.f32 %v11373, 1.4214138
    %v11438 = vadd.f32 %v11374, 1.4214138
    %v11439 = vadd.f32 %v11375, 1.4214138
    %v11440 = vadd.f32 %v11376, 1.4214138
    %v11441 = vadd.f32 %v11377, 1.4214138
    %v11442 = vadd.f32 %v11378, 1.4214138
    %v11443 = vadd.f32 %v11379, 1.4214138
    %v11444 = vadd.f32 %v11380, 1.4214138
    %v11445 = vadd.f32 %v11381, 1.4214138
    %v11446 = vadd.f32 %v11382, 1.4214138
    %v11447 = vadd.f32 %v11383, 1.4214138
    %v11448 = vadd.f32 %v11384, 1.4214138
    %v11449 = vadd.f32 %v11385, 1.4214138
    %v11450 = vadd.f32 %v11386, 1.4214138
    %v11451 = vadd.f32 %v11387, 1.4214138
    %v11452 = vadd.f32 %v11388, 1.4214138
    %v11453 = vadd.f32 %v11389, 1.4214138
    %v11454 = vadd.f32 %v11390, 1.4214138
    %v11455 = vadd.f32 %v11391, 1.4214138
    %v11456 = vadd.f32 %v11392, 1.4214138
    %v11457 = vadd.f32 %v11393, 1.4214138
    %v11458 = vadd.f32 %v11394, 1.4214138
    %v11459 = vadd.f32 %v11395, 1.4214138
    %v11460 = vadd.f32 %v11396, 1.4214138
    %v11461 = vadd.f32 %v11397, 1.4214138
    %v11462 = vadd.f32 %v11398, 1.4214138
    %v11463 = vadd.f32 %v11399, 1.4214138
    %v11464 = vadd.f32 %v11400, 1.4214138
    %v11465 = vadd.f32 %v11401, 1.4214138
    %v11466 = vadd.f32 %v11402, 1.4214138
    %v11467 = vadd.f32 %v11403, 1.4214138
    %v11468 = vadd.f32 %v11404, 1.4214138
    %v11469 = vadd.f32 %v11405, 1.4214138
    %v11470 = vadd.f32 %v11406, 1.4214138
    %v11471 = vadd.f32 %v11407, 1.4214138
    %v11472 = vadd.f32 %v11408, 1.4214138
    %v11473 = vadd.f32 %v11409, 1.4214138
    %v11474 = vadd.f32 %v11410, 1.4214138
    %v11475 = vadd.f32 %v11411, 1.4214138
    %v11476 = vadd.f32 %v11412, 1.4214138
    %v11477 = vadd.f32 %v11413, 1.4214138
    %v11478 = vadd.f32 %v11414, 1.4214138
    %v11479 = vadd.f32 %v11415, 1.4214138
    %v11480 = vadd.f32 %v11416, 1.4214138
    %v11481 = vadd.f32 %v11417, 1.4214138
    %v11482 = vadd.f32 %v11418, 1.4214138
    %v11483 = vadd.f32 %v11419, 1.4214138
    %v11484 = vadd.f32 %v11420, 1.4214138
    %v11485 = vadd.f32 %v11421, 1.4214138
    %v11486 = vadd.f32 %v11422, 1.4214138
    %v11487 = vmul.f32 %v11423, %v11104
    %v11488 = vmul.f32 %v11424, %v11106
    %v11489 = vmul.f32 %v11425, %v11108
    %v11490 = vmul.f32 %v11426, %v11110
    %v11491 = vmul.f32 %v11427, %v11112
    %v11492 = vmul.f32 %v11428, %v11114
    %v11493 = vmul.f32 %v11429, %v11116
    %v11494 = vmul.f32 %v11430, %v11118
    %v11495 = vmul.f32 %v11431, %v11120
    %v11496 = vmul.f32 %v11432, %v11122
    %v11497 = vmul.f32 %v11433, %v11124
    %v11498 = vmul.f32 %v11434, %v11126
    %v11499 = vmul.f32 %v11435, %v11128
    %v11500 = vmul.f32 %v11436, %v11130
    %v11501 = vmul.f32 %v11437, %v11132
    %v11502 = vmul.f32 %v11438, %v11134
    %v11503 = vmul.f32 %v11439, %v11136
    %v11504 = vmul.f32 %v11440, %v11138
    %v11505 = vmul.f32 %v11441, %v11140
    %v11506 = vmul.f32 %v11442, %v11142
    %v11507 = vmul.f32 %v11443, %v11144
    %v11508 = vmul.f32 %v11444, %v11146
    %v11509 = vmul.f32 %v11445, %v11148
    %v11510 = vmul.f32 %v11446, %v11150
    %v11511 = vmul.f32 %v11447, %v11152
    %v11512 = vmul.f32 %v11448, %v11154
    %v11513 = vmul.f32 %v11449, %v11156
    %v11514 = vmul.f32 %v11450, %v11158
    %v11515 = vmul.f32 %v11451, %v11160
    %v11516 = vmul.f32 %v11452, %v11162
    %v11517 = vmul.f32 %v11453, %v11164
    %v11518 = vmul.f32 %v11454, %v11166
    %v11519 = vmul.f32 %v11455, %v11168
    %v11520 = vmul.f32 %v11456, %v11170
    %v11521 = vmul.f32 %v11457, %v11172
    %v11522 = vmul.f32 %v11458, %v11174
    %v11523 = vmul.f32 %v11459, %v11176
    %v11524 = vmul.f32 %v11460, %v11178
    %v11525 = vmul.f32 %v11461, %v11180
    %v11526 = vmul.f32 %v11462, %v11182
    %v11527 = vmul.f32 %v11463, %v11184
    %v11528 = vmul.f32 %v11464, %v11186
    %v11529 = vmul.f32 %v11465, %v11188
    %v11530 = vmul.f32 %v11466, %v11190
    %v11531 = vmul.f32 %v11467, %v11192
    %v11532 = vmul.f32 %v11468, %v11194
    %v11533 = vmul.f32 %v11469, %v11196
    %v11534 = vmul.f32 %v11470, %v11198
    %v11535 = vmul.f32 %v11471, %v11200
    %v11536 = vmul.f32 %v11472, %v11202
    %v11537 = vmul.f32 %v11473, %v11204
    %v11538 = vmul.f32 %v11474, %v11206
    %v11539 = vmul.f32 %v11475, %v11208
    %v11540 = vmul.f32 %v11476, %v11210
    %v11541 = vmul.f32 %v11477, %v11212
    %v11542 = vmul.f32 %v11478, %v11214
    %v11543 = vmul.f32 %v11479, %v11216
    %v11544 = vmul.f32 %v11480, %v11218
    %v11545 = vmul.f32 %v11481, %v11220
    %v11546 = vmul.f32 %v11482, %v11222
    %v11547 = vmul.f32 %v11483, %v11224
    %v11548 = vmul.f32 %v11484, %v11226
    %v11549 = vmul.f32 %v11485, %v11228
    %v11550 = vmul.f32 %v11486, %v11230
    %v11551 = vadd.f32 %v11487, -0.28449672
    %v11552 = vadd.f32 %v11488, -0.28449672
    %v11553 = vadd.f32 %v11489, -0.28449672
    %v11554 = vadd.f32 %v11490, -0.28449672
    %v11555 = vadd.f32 %v11491, -0.28449672
    %v11556 = vadd.f32 %v11492, -0.28449672
    %v11557 = vadd.f32 %v11493, -0.28449672
    %v11558 = vadd.f32 %v11494, -0.28449672
    %v11559 = vadd.f32 %v11495, -0.28449672
    %v11560 = vadd.f32 %v11496, -0.28449672
    %v11561 = vadd.f32 %v11497, -0.28449672
    %v11562 = vadd.f32 %v11498, -0.28449672
    %v11563 = vadd.f32 %v11499, -0.28449672
    %v11564 = vadd.f32 %v11500, -0.28449672
    %v11565 = vadd.f32 %v11501, -0.28449672
    %v11566 = vadd.f32 %v11502, -0.28449672
    %v11567 = vadd.f32 %v11503, -0.28449672
    %v11568 = vadd.f32 %v11504, -0.28449672
    %v11569 = vadd.f32 %v11505, -0.28449672
    %v11570 = vadd.f32 %v11506, -0.28449672
    %v11571 = vadd.f32 %v11507, -0.28449672
    %v11572 = vadd.f32 %v11508, -0.28449672
    %v11573 = vadd.f32 %v11509, -0.28449672
    %v11574 = vadd.f32 %v11510, -0.28449672
    %v11575 = vadd.f32 %v11511, -0.28449672
    %v11576 = vadd.f32 %v11512, -0.28449672
    %v11577 = vadd.f32 %v11513, -0.28449672
    %v11578 = vadd.f32 %v11514, -0.28449672
    %v11579 = vadd.f32 %v11515, -0.28449672
    %v11580 = vadd.f32 %v11516, -0.28449672
    %v11581 = vadd.f32 %v11517, -0.28449672
    %v11582 = vadd.f32 %v11518, -0.28449672
    %v11583 = vadd.f32 %v11519, -0.28449672
    %v11584 = vadd.f32 %v11520, -0.28449672
    %v11585 = vadd.f32 %v11521, -0.28449672
    %v11586 = vadd.f32 %v11522, -0.28449672
    %v11587 = vadd.f32 %v11523, -0.28449672
    %v11588 = vadd.f32 %v11524, -0.28449672
    %v11589 = vadd.f32 %v11525, -0.28449672
    %v11590 = vadd.f32 %v11526, -0.28449672
    %v11591 = vadd.f32 %v11527, -0.28449672
    %v11592 = vadd.f32 %v11528, -0.28449672
    %v11593 = vadd.f32 %v11529, -0.28449672
    %v11594 = vadd.f32 %v11530, -0.28449672
    %v11595 = vadd.f32 %v11531, -0.28449672
    %v11596 = vadd.f32 %v11532, -0.28449672
    %v11597 = vadd.f32 %v11533, -0.28449672
    %v11598 = vadd.f32 %v11534, -0.28449672
    %v11599 = vadd.f32 %v11535, -0.28449672
    %v11600 = vadd.f32 %v11536, -0.28449672
    %v11601 = vadd.f32 %v11537, -0.28449672
    %v11602 = vadd.f32 %v11538, -0.28449672
    %v11603 = vadd.f32 %v11539, -0.28449672
    %v11604 = vadd.f32 %v11540, -0.28449672
    %v11605 = vadd.f32 %v11541, -0.28449672
    %v11606 = vadd.f32 %v11542, -0.28449672
    %v11607 = vadd.f32 %v11543, -0.28449672
    %v11608 = vadd.f32 %v11544, -0.28449672
    %v11609 = vadd.f32 %v11545, -0.28449672
    %v11610 = vadd.f32 %v11546, -0.28449672
    %v11611 = vadd.f32 %v11547, -0.28449672
    %v11612 = vadd.f32 %v11548, -0.28449672
    %v11613 = vadd.f32 %v11549, -0.28449672
    %v11614 = vadd.f32 %v11550, -0.28449672
    %v11615 = vmul.f32 %v11551, %v11104
    %v11616 = vmul.f32 %v11552, %v11106
    %v11617 = vmul.f32 %v11553, %v11108
    %v11618 = vmul.f32 %v11554, %v11110
    %v11619 = vmul.f32 %v11555, %v11112
    %v11620 = vmul.f32 %v11556, %v11114
    %v11621 = vmul.f32 %v11557, %v11116
    %v11622 = vmul.f32 %v11558, %v11118
    %v11623 = vmul.f32 %v11559, %v11120
    %v11624 = vmul.f32 %v11560, %v11122
    %v11625 = vmul.f32 %v11561, %v11124
    %v11626 = vmul.f32 %v11562, %v11126
    %v11627 = vmul.f32 %v11563, %v11128
    %v11628 = vmul.f32 %v11564, %v11130
    %v11629 = vmul.f32 %v11565, %v11132
    %v11630 = vmul.f32 %v11566, %v11134
    %v11631 = vmul.f32 %v11567, %v11136
    %v11632 = vmul.f32 %v11568, %v11138
    %v11633 = vmul.f32 %v11569, %v11140
    %v11634 = vmul.f32 %v11570, %v11142
    %v11635 = vmul.f32 %v11571, %v11144
    %v11636 = vmul.f32 %v11572, %v11146
    %v11637 = vmul.f32 %v11573, %v11148
    %v11638 = vmul.f32 %v11574, %v11150
    %v11639 = vmul.f32 %v11575, %v11152
    %v11640 = vmul.f32 %v11576, %v11154
    %v11641 = vmul.f32 %v11577, %v11156
    %v11642 = vmul.f32 %v11578, %v11158
    %v11643 = vmul.f32 %v11579, %v11160
    %v11644 = vmul.f32 %v11580, %v11162
    %v11645 = vmul.f32 %v11581, %v11164
    %v11646 = vmul.f32 %v11582, %v11166
    %v11647 = vmul.f32 %v11583, %v11168
    %v11648 = vmul.f32 %v11584, %v11170
    %v11649 = vmul.f32 %v11585, %v11172
    %v11650 = vmul.f32 %v11586, %v11174
    %v11651 = vmul.f32 %v11587, %v11176
    %v11652 = vmul.f32 %v11588, %v11178
    %v11653 = vmul.f32 %v11589, %v11180
    %v11654 = vmul.f32 %v11590, %v11182
    %v11655 = vmul.f32 %v11591, %v11184
    %v11656 = vmul.f32 %v11592, %v11186
    %v11657 = vmul.f32 %v11593, %v11188
    %v11658 = vmul.f32 %v11594, %v11190
    %v11659 = vmul.f32 %v11595, %v11192
    %v11660 = vmul.f32 %v11596, %v11194
    %v11661 = vmul.f32 %v11597, %v11196
    %v11662 = vmul.f32 %v11598, %v11198
    %v11663 = vmul.f32 %v11599, %v11200
    %v11664 = vmul.f32 %v11600, %v11202
    %v11665 = vmul.f32 %v11601, %v11204
    %v11666 = vmul.f32 %v11602, %v11206
    %v11667 = vmul.f32 %v11603, %v11208
    %v11668 = vmul.f32 %v11604, %v11210
    %v11669 = vmul.f32 %v11605, %v11212
    %v11670 = vmul.f32 %v11606, %v11214
    %v11671 = vmul.f32 %v11607, %v11216
    %v11672 = vmul.f32 %v11608, %v11218
    %v11673 = vmul.f32 %v11609, %v11220
    %v11674 = vmul.f32 %v11610, %v11222
    %v11675 = vmul.f32 %v11611, %v11224
    %v11676 = vmul.f32 %v11612, %v11226
    %v11677 = vmul.f32 %v11613, %v11228
    %v11678 = vmul.f32 %v11614, %v11230
    %v11679 = vadd.f32 %v11615, 0.2548296
    %v11680 = vadd.f32 %v11616, 0.2548296
    %v11681 = vadd.f32 %v11617, 0.2548296
    %v11682 = vadd.f32 %v11618, 0.2548296
    %v11683 = vadd.f32 %v11619, 0.2548296
    %v11684 = vadd.f32 %v11620, 0.2548296
    %v11685 = vadd.f32 %v11621, 0.2548296
    %v11686 = vadd.f32 %v11622, 0.2548296
    %v11687 = vadd.f32 %v11623, 0.2548296
    %v11688 = vadd.f32 %v11624, 0.2548296
    %v11689 = vadd.f32 %v11625, 0.2548296
    %v11690 = vadd.f32 %v11626, 0.2548296
    %v11691 = vadd.f32 %v11627, 0.2548296
    %v11692 = vadd.f32 %v11628, 0.2548296
    %v11693 = vadd.f32 %v11629, 0.2548296
    %v11694 = vadd.f32 %v11630, 0.2548296
    %v11695 = vadd.f32 %v11631, 0.2548296
    %v11696 = vadd.f32 %v11632, 0.2548296
    %v11697 = vadd.f32 %v11633, 0.2548296
    %v11698 = vadd.f32 %v11634, 0.2548296
    %v11699 = vadd.f32 %v11635, 0.2548296
    %v11700 = vadd.f32 %v11636, 0.2548296
    %v11701 = vadd.f32 %v11637, 0.2548296
    %v11702 = vadd.f32 %v11638, 0.2548296
    %v11703 = vadd.f32 %v11639, 0.2548296
    %v11704 = vadd.f32 %v11640, 0.2548296
    %v11705 = vadd.f32 %v11641, 0.2548296
    %v11706 = vadd.f32 %v11642, 0.2548296
    %v11707 = vadd.f32 %v11643, 0.2548296
    %v11708 = vadd.f32 %v11644, 0.2548296
    %v11709 = vadd.f32 %v11645, 0.2548296
    %v11710 = vadd.f32 %v11646, 0.2548296
    %v11711 = vadd.f32 %v11647, 0.2548296
    %v11712 = vadd.f32 %v11648, 0.2548296
    %v11713 = vadd.f32 %v11649, 0.2548296
    %v11714 = vadd.f32 %v11650, 0.2548296
    %v11715 = vadd.f32 %v11651, 0.2548296
    %v11716 = vadd.f32 %v11652, 0.2548296
    %v11717 = vadd.f32 %v11653, 0.2548296
    %v11718 = vadd.f32 %v11654, 0.2548296
    %v11719 = vadd.f32 %v11655, 0.2548296
    %v11720 = vadd.f32 %v11656, 0.2548296
    %v11721 = vadd.f32 %v11657, 0.2548296
    %v11722 = vadd.f32 %v11658, 0.2548296
    %v11723 = vadd.f32 %v11659, 0.2548296
    %v11724 = vadd.f32 %v11660, 0.2548296
    %v11725 = vadd.f32 %v11661, 0.2548296
    %v11726 = vadd.f32 %v11662, 0.2548296
    %v11727 = vadd.f32 %v11663, 0.2548296
    %v11728 = vadd.f32 %v11664, 0.2548296
    %v11729 = vadd.f32 %v11665, 0.2548296
    %v11730 = vadd.f32 %v11666, 0.2548296
    %v11731 = vadd.f32 %v11667, 0.2548296
    %v11732 = vadd.f32 %v11668, 0.2548296
    %v11733 = vadd.f32 %v11669, 0.2548296
    %v11734 = vadd.f32 %v11670, 0.2548296
    %v11735 = vadd.f32 %v11671, 0.2548296
    %v11736 = vadd.f32 %v11672, 0.2548296
    %v11737 = vadd.f32 %v11673, 0.2548296
    %v11738 = vadd.f32 %v11674, 0.2548296
    %v11739 = vadd.f32 %v11675, 0.2548296
    %v11740 = vadd.f32 %v11676, 0.2548296
    %v11741 = vadd.f32 %v11677, 0.2548296
    %v11742 = vadd.f32 %v11678, 0.2548296
    %v11743 = vmul.f32 %v11679, %v11104
    %v11744 = vmul.f32 %v11680, %v11106
    %v11745 = vmul.f32 %v11681, %v11108
    %v11746 = vmul.f32 %v11682, %v11110
    %v11747 = vmul.f32 %v11683, %v11112
    %v11748 = vmul.f32 %v11684, %v11114
    %v11749 = vmul.f32 %v11685, %v11116
    %v11750 = vmul.f32 %v11686, %v11118
    %v11751 = vmul.f32 %v11687, %v11120
    %v11752 = vmul.f32 %v11688, %v11122
    %v11753 = vmul.f32 %v11689, %v11124
    %v11754 = vmul.f32 %v11690, %v11126
    %v11755 = vmul.f32 %v11691, %v11128
    %v11756 = vmul.f32 %v11692, %v11130
    %v11757 = vmul.f32 %v11693, %v11132
    %v11758 = vmul.f32 %v11694, %v11134
    %v11759 = vmul.f32 %v11695, %v11136
    %v11760 = vmul.f32 %v11696, %v11138
    %v11761 = vmul.f32 %v11697, %v11140
    %v11762 = vmul.f32 %v11698, %v11142
    %v11763 = vmul.f32 %v11699, %v11144
    %v11764 = vmul.f32 %v11700, %v11146
    %v11765 = vmul.f32 %v11701, %v11148
    %v11766 = vmul.f32 %v11702, %v11150
    %v11767 = vmul.f32 %v11703, %v11152
    %v11768 = vmul.f32 %v11704, %v11154
    %v11769 = vmul.f32 %v11705, %v11156
    %v11770 = vmul.f32 %v11706, %v11158
    %v11771 = vmul.f32 %v11707, %v11160
    %v11772 = vmul.f32 %v11708, %v11162
    %v11773 = vmul.f32 %v11709, %v11164
    %v11774 = vmul.f32 %v11710, %v11166
    %v11775 = vmul.f32 %v11711, %v11168
    %v11776 = vmul.f32 %v11712, %v11170
    %v11777 = vmul.f32 %v11713, %v11172
    %v11778 = vmul.f32 %v11714, %v11174
    %v11779 = vmul.f32 %v11715, %v11176
    %v11780 = vmul.f32 %v11716, %v11178
    %v11781 = vmul.f32 %v11717, %v11180
    %v11782 = vmul.f32 %v11718, %v11182
    %v11783 = vmul.f32 %v11719, %v11184
    %v11784 = vmul.f32 %v11720, %v11186
    %v11785 = vmul.f32 %v11721, %v11188
    %v11786 = vmul.f32 %v11722, %v11190
    %v11787 = vmul.f32 %v11723, %v11192
    %v11788 = vmul.f32 %v11724, %v11194
    %v11789 = vmul.f32 %v11725, %v11196
    %v11790 = vmul.f32 %v11726, %v11198
    %v11791 = vmul.f32 %v11727, %v11200
    %v11792 = vmul.f32 %v11728, %v11202
    %v11793 = vmul.f32 %v11729, %v11204
    %v11794 = vmul.f32 %v11730, %v11206
    %v11795 = vmul.f32 %v11731, %v11208
    %v11796 = vmul.f32 %v11732, %v11210
    %v11797 = vmul.f32 %v11733, %v11212
    %v11798 = vmul.f32 %v11734, %v11214
    %v11799 = vmul.f32 %v11735, %v11216
    %v11800 = vmul.f32 %v11736, %v11218
    %v11801 = vmul.f32 %v11737, %v11220
    %v11802 = vmul.f32 %v11738, %v11222
    %v11803 = vmul.f32 %v11739, %v11224
    %v11804 = vmul.f32 %v11740, %v11226
    %v11805 = vmul.f32 %v11741, %v11228
    %v11806 = vmul.f32 %v11742, %v11230
    %v11807 = vsub.f32 0.0, %v10911
    %v11808 = vsub.f32 0.0, %v10912
    %v11809 = vsub.f32 0.0, %v10913
    %v11810 = vsub.f32 0.0, %v10914
    %v11811 = vsub.f32 0.0, %v10915
    %v11812 = vsub.f32 0.0, %v10916
    %v11813 = vsub.f32 0.0, %v10917
    %v11814 = vsub.f32 0.0, %v10918
    %v11815 = vsub.f32 0.0, %v10919
    %v11816 = vsub.f32 0.0, %v10920
    %v11817 = vsub.f32 0.0, %v10921
    %v11818 = vsub.f32 0.0, %v10922
    %v11819 = vsub.f32 0.0, %v10923
    %v11820 = vsub.f32 0.0, %v10924
    %v11821 = vsub.f32 0.0, %v10925
    %v11822 = vsub.f32 0.0, %v10926
    %v11823 = vsub.f32 0.0, %v10927
    %v11824 = vsub.f32 0.0, %v10928
    %v11825 = vsub.f32 0.0, %v10929
    %v11826 = vsub.f32 0.0, %v10930
    %v11827 = vsub.f32 0.0, %v10931
    %v11828 = vsub.f32 0.0, %v10932
    %v11829 = vsub.f32 0.0, %v10933
    %v11830 = vsub.f32 0.0, %v10934
    %v11831 = vsub.f32 0.0, %v10935
    %v11832 = vsub.f32 0.0, %v10936
    %v11833 = vsub.f32 0.0, %v10937
    %v11834 = vsub.f32 0.0, %v10938
    %v11835 = vsub.f32 0.0, %v10939
    %v11836 = vsub.f32 0.0, %v10940
    %v11837 = vsub.f32 0.0, %v10941
    %v11838 = vsub.f32 0.0, %v10942
    %v11839 = vsub.f32 0.0, %v10943
    %v11840 = vsub.f32 0.0, %v10944
    %v11841 = vsub.f32 0.0, %v10945
    %v11842 = vsub.f32 0.0, %v10946
    %v11843 = vsub.f32 0.0, %v10947
    %v11844 = vsub.f32 0.0, %v10948
    %v11845 = vsub.f32 0.0, %v10949
    %v11846 = vsub.f32 0.0, %v10950
    %v11847 = vsub.f32 0.0, %v10951
    %v11848 = vsub.f32 0.0, %v10952
    %v11849 = vsub.f32 0.0, %v10953
    %v11850 = vsub.f32 0.0, %v10954
    %v11851 = vsub.f32 0.0, %v10955
    %v11852 = vsub.f32 0.0, %v10956
    %v11853 = vsub.f32 0.0, %v10957
    %v11854 = vsub.f32 0.0, %v10958
    %v11855 = vsub.f32 0.0, %v10959
    %v11856 = vsub.f32 0.0, %v10960
    %v11857 = vsub.f32 0.0, %v10961
    %v11858 = vsub.f32 0.0, %v10962
    %v11859 = vsub.f32 0.0, %v10963
    %v11860 = vsub.f32 0.0, %v10964
    %v11861 = vsub.f32 0.0, %v10965
    %v11862 = vsub.f32 0.0, %v10966
    %v11863 = vsub.f32 0.0, %v10967
    %v11864 = vsub.f32 0.0, %v10968
    %v11865 = vsub.f32 0.0, %v10969
    %v11866 = vsub.f32 0.0, %v10970
    %v11867 = vsub.f32 0.0, %v10971
    %v11868 = vsub.f32 0.0, %v10972
    %v11869 = vsub.f32 0.0, %v10973
    %v11870 = vsub.f32 0.0, %v10974
    %v11871 = vmul.f32 %v11807, %v10911
    %v11872 = vmul.f32 %v11808, %v10912
    %v11873 = vmul.f32 %v11809, %v10913
    %v11874 = vmul.f32 %v11810, %v10914
    %v11875 = vmul.f32 %v11811, %v10915
    %v11876 = vmul.f32 %v11812, %v10916
    %v11877 = vmul.f32 %v11813, %v10917
    %v11878 = vmul.f32 %v11814, %v10918
    %v11879 = vmul.f32 %v11815, %v10919
    %v11880 = vmul.f32 %v11816, %v10920
    %v11881 = vmul.f32 %v11817, %v10921
    %v11882 = vmul.f32 %v11818, %v10922
    %v11883 = vmul.f32 %v11819, %v10923
    %v11884 = vmul.f32 %v11820, %v10924
    %v11885 = vmul.f32 %v11821, %v10925
    %v11886 = vmul.f32 %v11822, %v10926
    %v11887 = vmul.f32 %v11823, %v10927
    %v11888 = vmul.f32 %v11824, %v10928
    %v11889 = vmul.f32 %v11825, %v10929
    %v11890 = vmul.f32 %v11826, %v10930
    %v11891 = vmul.f32 %v11827, %v10931
    %v11892 = vmul.f32 %v11828, %v10932
    %v11893 = vmul.f32 %v11829, %v10933
    %v11894 = vmul.f32 %v11830, %v10934
    %v11895 = vmul.f32 %v11831, %v10935
    %v11896 = vmul.f32 %v11832, %v10936
    %v11897 = vmul.f32 %v11833, %v10937
    %v11898 = vmul.f32 %v11834, %v10938
    %v11899 = vmul.f32 %v11835, %v10939
    %v11900 = vmul.f32 %v11836, %v10940
    %v11901 = vmul.f32 %v11837, %v10941
    %v11902 = vmul.f32 %v11838, %v10942
    %v11903 = vmul.f32 %v11839, %v10943
    %v11904 = vmul.f32 %v11840, %v10944
    %v11905 = vmul.f32 %v11841, %v10945
    %v11906 = vmul.f32 %v11842, %v10946
    %v11907 = vmul.f32 %v11843, %v10947
    %v11908 = vmul.f32 %v11844, %v10948
    %v11909 = vmul.f32 %v11845, %v10949
    %v11910 = vmul.f32 %v11846, %v10950
    %v11911 = vmul.f32 %v11847, %v10951
    %v11912 = vmul.f32 %v11848, %v10952
    %v11913 = vmul.f32 %v11849, %v10953
    %v11914 = vmul.f32 %v11850, %v10954
    %v11915 = vmul.f32 %v11851, %v10955
    %v11916 = vmul.f32 %v11852, %v10956
    %v11917 = vmul.f32 %v11853, %v10957
    %v11918 = vmul.f32 %v11854, %v10958
    %v11919 = vmul.f32 %v11855, %v10959
    %v11920 = vmul.f32 %v11856, %v10960
    %v11921 = vmul.f32 %v11857, %v10961
    %v11922 = vmul.f32 %v11858, %v10962
    %v11923 = vmul.f32 %v11859, %v10963
    %v11924 = vmul.f32 %v11860, %v10964
    %v11925 = vmul.f32 %v11861, %v10965
    %v11926 = vmul.f32 %v11862, %v10966
    %v11927 = vmul.f32 %v11863, %v10967
    %v11928 = vmul.f32 %v11864, %v10968
    %v11929 = vmul.f32 %v11865, %v10969
    %v11930 = vmul.f32 %v11866, %v10970
    %v11931 = vmul.f32 %v11867, %v10971
    %v11932 = vmul.f32 %v11868, %v10972
    %v11933 = vmul.f32 %v11869, %v10973
    %v11934 = vmul.f32 %v11870, %v10974
    %v11935 = vmul.f32 %v11871, 1.442695
    %v11936 = vpow.pop %v11935
    %v11937 = vmul.f32 %v11872, 1.442695
    %v11938 = vpow.pop %v11937
    %v11939 = vmul.f32 %v11873, 1.442695
    %v11940 = vpow.pop %v11939
    %v11941 = vmul.f32 %v11874, 1.442695
    %v11942 = vpow.pop %v11941
    %v11943 = vmul.f32 %v11875, 1.442695
    %v11944 = vpow.pop %v11943
    %v11945 = vmul.f32 %v11876, 1.442695
    %v11946 = vpow.pop %v11945
    %v11947 = vmul.f32 %v11877, 1.442695
    %v11948 = vpow.pop %v11947
    %v11949 = vmul.f32 %v11878, 1.442695
    %v11950 = vpow.pop %v11949
    %v11951 = vmul.f32 %v11879, 1.442695
    %v11952 = vpow.pop %v11951
    %v11953 = vmul.f32 %v11880, 1.442695
    %v11954 = vpow.pop %v11953
    %v11955 = vmul.f32 %v11881, 1.442695
    %v11956 = vpow.pop %v11955
    %v11957 = vmul.f32 %v11882, 1.442695
    %v11958 = vpow.pop %v11957
    %v11959 = vmul.f32 %v11883, 1.442695
    %v11960 = vpow.pop %v11959
    %v11961 = vmul.f32 %v11884, 1.442695
    %v11962 = vpow.pop %v11961
    %v11963 = vmul.f32 %v11885, 1.442695
    %v11964 = vpow.pop %v11963
    %v11965 = vmul.f32 %v11886, 1.442695
    %v11966 = vpow.pop %v11965
    %v11967 = vmul.f32 %v11887, 1.442695
    %v11968 = vpow.pop %v11967
    %v11969 = vmul.f32 %v11888, 1.442695
    %v11970 = vpow.pop %v11969
    %v11971 = vmul.f32 %v11889, 1.442695
    %v11972 = vpow.pop %v11971
    %v11973 = vmul.f32 %v11890, 1.442695
    %v11974 = vpow.pop %v11973
    %v11975 = vmul.f32 %v11891, 1.442695
    %v11976 = vpow.pop %v11975
    %v11977 = vmul.f32 %v11892, 1.442695
    %v11978 = vpow.pop %v11977
    %v11979 = vmul.f32 %v11893, 1.442695
    %v11980 = vpow.pop %v11979
    %v11981 = vmul.f32 %v11894, 1.442695
    %v11982 = vpow.pop %v11981
    %v11983 = vmul.f32 %v11895, 1.442695
    %v11984 = vpow.pop %v11983
    %v11985 = vmul.f32 %v11896, 1.442695
    %v11986 = vpow.pop %v11985
    %v11987 = vmul.f32 %v11897, 1.442695
    %v11988 = vpow.pop %v11987
    %v11989 = vmul.f32 %v11898, 1.442695
    %v11990 = vpow.pop %v11989
    %v11991 = vmul.f32 %v11899, 1.442695
    %v11992 = vpow.pop %v11991
    %v11993 = vmul.f32 %v11900, 1.442695
    %v11994 = vpow.pop %v11993
    %v11995 = vmul.f32 %v11901, 1.442695
    %v11996 = vpow.pop %v11995
    %v11997 = vmul.f32 %v11902, 1.442695
    %v11998 = vpow.pop %v11997
    %v11999 = vmul.f32 %v11903, 1.442695
    %v12000 = vpow.pop %v11999
    %v12001 = vmul.f32 %v11904, 1.442695
    %v12002 = vpow.pop %v12001
    %v12003 = vmul.f32 %v11905, 1.442695
    %v12004 = vpow.pop %v12003
    %v12005 = vmul.f32 %v11906, 1.442695
    %v12006 = vpow.pop %v12005
    %v12007 = vmul.f32 %v11907, 1.442695
    %v12008 = vpow.pop %v12007
    %v12009 = vmul.f32 %v11908, 1.442695
    %v12010 = vpow.pop %v12009
    %v12011 = vmul.f32 %v11909, 1.442695
    %v12012 = vpow.pop %v12011
    %v12013 = vmul.f32 %v11910, 1.442695
    %v12014 = vpow.pop %v12013
    %v12015 = vmul.f32 %v11911, 1.442695
    %v12016 = vpow.pop %v12015
    %v12017 = vmul.f32 %v11912, 1.442695
    %v12018 = vpow.pop %v12017
    %v12019 = vmul.f32 %v11913, 1.442695
    %v12020 = vpow.pop %v12019
    %v12021 = vmul.f32 %v11914, 1.442695
    %v12022 = vpow.pop %v12021
    %v12023 = vmul.f32 %v11915, 1.442695
    %v12024 = vpow.pop %v12023
    %v12025 = vmul.f32 %v11916, 1.442695
    %v12026 = vpow.pop %v12025
    %v12027 = vmul.f32 %v11917, 1.442695
    %v12028 = vpow.pop %v12027
    %v12029 = vmul.f32 %v11918, 1.442695
    %v12030 = vpow.pop %v12029
    %v12031 = vmul.f32 %v11919, 1.442695
    %v12032 = vpow.pop %v12031
    %v12033 = vmul.f32 %v11920, 1.442695
    %v12034 = vpow.pop %v12033
    %v12035 = vmul.f32 %v11921, 1.442695
    %v12036 = vpow.pop %v12035
    %v12037 = vmul.f32 %v11922, 1.442695
    %v12038 = vpow.pop %v12037
    %v12039 = vmul.f32 %v11923, 1.442695
    %v12040 = vpow.pop %v12039
    %v12041 = vmul.f32 %v11924, 1.442695
    %v12042 = vpow.pop %v12041
    %v12043 = vmul.f32 %v11925, 1.442695
    %v12044 = vpow.pop %v12043
    %v12045 = vmul.f32 %v11926, 1.442695
    %v12046 = vpow.pop %v12045
    %v12047 = vmul.f32 %v11927, 1.442695
    %v12048 = vpow.pop %v12047
    %v12049 = vmul.f32 %v11928, 1.442695
    %v12050 = vpow.pop %v12049
    %v12051 = vmul.f32 %v11929, 1.442695
    %v12052 = vpow.pop %v12051
    %v12053 = vmul.f32 %v11930, 1.442695
    %v12054 = vpow.pop %v12053
    %v12055 = vmul.f32 %v11931, 1.442695
    %v12056 = vpow.pop %v12055
    %v12057 = vmul.f32 %v11932, 1.442695
    %v12058 = vpow.pop %v12057
    %v12059 = vmul.f32 %v11933, 1.442695
    %v12060 = vpow.pop %v12059
    %v12061 = vmul.f32 %v11934, 1.442695
    %v12062 = vpow.pop %v12061
    %v12063 = vmul.f32 %v11743, %v11936
    %v12064 = vmul.f32 %v11744, %v11938
    %v12065 = vmul.f32 %v11745, %v11940
    %v12066 = vmul.f32 %v11746, %v11942
    %v12067 = vmul.f32 %v11747, %v11944
    %v12068 = vmul.f32 %v11748, %v11946
    %v12069 = vmul.f32 %v11749, %v11948
    %v12070 = vmul.f32 %v11750, %v11950
    %v12071 = vmul.f32 %v11751, %v11952
    %v12072 = vmul.f32 %v11752, %v11954
    %v12073 = vmul.f32 %v11753, %v11956
    %v12074 = vmul.f32 %v11754, %v11958
    %v12075 = vmul.f32 %v11755, %v11960
    %v12076 = vmul.f32 %v11756, %v11962
    %v12077 = vmul.f32 %v11757, %v11964
    %v12078 = vmul.f32 %v11758, %v11966
    %v12079 = vmul.f32 %v11759, %v11968
    %v12080 = vmul.f32 %v11760, %v11970
    %v12081 = vmul.f32 %v11761, %v11972
    %v12082 = vmul.f32 %v11762, %v11974
    %v12083 = vmul.f32 %v11763, %v11976
    %v12084 = vmul.f32 %v11764, %v11978
    %v12085 = vmul.f32 %v11765, %v11980
    %v12086 = vmul.f32 %v11766, %v11982
    %v12087 = vmul.f32 %v11767, %v11984
    %v12088 = vmul.f32 %v11768, %v11986
    %v12089 = vmul.f32 %v11769, %v11988
    %v12090 = vmul.f32 %v11770, %v11990
    %v12091 = vmul.f32 %v11771, %v11992
    %v12092 = vmul.f32 %v11772, %v11994
    %v12093 = vmul.f32 %v11773, %v11996
    %v12094 = vmul.f32 %v11774, %v11998
    %v12095 = vmul.f32 %v11775, %v12000
    %v12096 = vmul.f32 %v11776, %v12002
    %v12097 = vmul.f32 %v11777, %v12004
    %v12098 = vmul.f32 %v11778, %v12006
    %v12099 = vmul.f32 %v11779, %v12008
    %v12100 = vmul.f32 %v11780, %v12010
    %v12101 = vmul.f32 %v11781, %v12012
    %v12102 = vmul.f32 %v11782, %v12014
    %v12103 = vmul.f32 %v11783, %v12016
    %v12104 = vmul.f32 %v11784, %v12018
    %v12105 = vmul.f32 %v11785, %v12020
    %v12106 = vmul.f32 %v11786, %v12022
    %v12107 = vmul.f32 %v11787, %v12024
    %v12108 = vmul.f32 %v11788, %v12026
    %v12109 = vmul.f32 %v11789, %v12028
    %v12110 = vmul.f32 %v11790, %v12030
    %v12111 = vmul.f32 %v11791, %v12032
    %v12112 = vmul.f32 %v11792, %v12034
    %v12113 = vmul.f32 %v11793, %v12036
    %v12114 = vmul.f32 %v11794, %v12038
    %v12115 = vmul.f32 %v11795, %v12040
    %v12116 = vmul.f32 %v11796, %v12042
    %v12117 = vmul.f32 %v11797, %v12044
    %v12118 = vmul.f32 %v11798, %v12046
    %v12119 = vmul.f32 %v11799, %v12048
    %v12120 = vmul.f32 %v11800, %v12050
    %v12121 = vmul.f32 %v11801, %v12052
    %v12122 = vmul.f32 %v11802, %v12054
    %v12123 = vmul.f32 %v11803, %v12056
    %v12124 = vmul.f32 %v11804, %v12058
    %v12125 = vmul.f32 %v11805, %v12060
    %v12126 = vmul.f32 %v11806, %v12062
    %v12127 = vsub.f32 1.0, %v12063
    %v12128 = vsub.f32 1.0, %v12064
    %v12129 = vsub.f32 1.0, %v12065
    %v12130 = vsub.f32 1.0, %v12066
    %v12131 = vsub.f32 1.0, %v12067
    %v12132 = vsub.f32 1.0, %v12068
    %v12133 = vsub.f32 1.0, %v12069
    %v12134 = vsub.f32 1.0, %v12070
    %v12135 = vsub.f32 1.0, %v12071
    %v12136 = vsub.f32 1.0, %v12072
    %v12137 = vsub.f32 1.0, %v12073
    %v12138 = vsub.f32 1.0, %v12074
    %v12139 = vsub.f32 1.0, %v12075
    %v12140 = vsub.f32 1.0, %v12076
    %v12141 = vsub.f32 1.0, %v12077
    %v12142 = vsub.f32 1.0, %v12078
    %v12143 = vsub.f32 1.0, %v12079
    %v12144 = vsub.f32 1.0, %v12080
    %v12145 = vsub.f32 1.0, %v12081
    %v12146 = vsub.f32 1.0, %v12082
    %v12147 = vsub.f32 1.0, %v12083
    %v12148 = vsub.f32 1.0, %v12084
    %v12149 = vsub.f32 1.0, %v12085
    %v12150 = vsub.f32 1.0, %v12086
    %v12151 = vsub.f32 1.0, %v12087
    %v12152 = vsub.f32 1.0, %v12088
    %v12153 = vsub.f32 1.0, %v12089
    %v12154 = vsub.f32 1.0, %v12090
    %v12155 = vsub.f32 1.0, %v12091
    %v12156 = vsub.f32 1.0, %v12092
    %v12157 = vsub.f32 1.0, %v12093
    %v12158 = vsub.f32 1.0, %v12094
    %v12159 = vsub.f32 1.0, %v12095
    %v12160 = vsub.f32 1.0, %v12096
    %v12161 = vsub.f32 1.0, %v12097
    %v12162 = vsub.f32 1.0, %v12098
    %v12163 = vsub.f32 1.0, %v12099
    %v12164 = vsub.f32 1.0, %v12100
    %v12165 = vsub.f32 1.0, %v12101
    %v12166 = vsub.f32 1.0, %v12102
    %v12167 = vsub.f32 1.0, %v12103
    %v12168 = vsub.f32 1.0, %v12104
    %v12169 = vsub.f32 1.0, %v12105
    %v12170 = vsub.f32 1.0, %v12106
    %v12171 = vsub.f32 1.0, %v12107
    %v12172 = vsub.f32 1.0, %v12108
    %v12173 = vsub.f32 1.0, %v12109
    %v12174 = vsub.f32 1.0, %v12110
    %v12175 = vsub.f32 1.0, %v12111
    %v12176 = vsub.f32 1.0, %v12112
    %v12177 = vsub.f32 1.0, %v12113
    %v12178 = vsub.f32 1.0, %v12114
    %v12179 = vsub.f32 1.0, %v12115
    %v12180 = vsub.f32 1.0, %v12116
    %v12181 = vsub.f32 1.0, %v12117
    %v12182 = vsub.f32 1.0, %v12118
    %v12183 = vsub.f32 1.0, %v12119
    %v12184 = vsub.f32 1.0, %v12120
    %v12185 = vsub.f32 1.0, %v12121
    %v12186 = vsub.f32 1.0, %v12122
    %v12187 = vsub.f32 1.0, %v12123
    %v12188 = vsub.f32 1.0, %v12124
    %v12189 = vsub.f32 1.0, %v12125
    %v12190 = vsub.f32 1.0, %v12126
    %v12191 = vmul.f32 %v10847, %v12127
    %v12192 = vmul.f32 %v10848, %v12128
    %v12193 = vmul.f32 %v10849, %v12129
    %v12194 = vmul.f32 %v10850, %v12130
    %v12195 = vmul.f32 %v10851, %v12131
    %v12196 = vmul.f32 %v10852, %v12132
    %v12197 = vmul.f32 %v10853, %v12133
    %v12198 = vmul.f32 %v10854, %v12134
    %v12199 = vmul.f32 %v10855, %v12135
    %v12200 = vmul.f32 %v10856, %v12136
    %v12201 = vmul.f32 %v10857, %v12137
    %v12202 = vmul.f32 %v10858, %v12138
    %v12203 = vmul.f32 %v10859, %v12139
    %v12204 = vmul.f32 %v10860, %v12140
    %v12205 = vmul.f32 %v10861, %v12141
    %v12206 = vmul.f32 %v10862, %v12142
    %v12207 = vmul.f32 %v10863, %v12143
    %v12208 = vmul.f32 %v10864, %v12144
    %v12209 = vmul.f32 %v10865, %v12145
    %v12210 = vmul.f32 %v10866, %v12146
    %v12211 = vmul.f32 %v10867, %v12147
    %v12212 = vmul.f32 %v10868, %v12148
    %v12213 = vmul.f32 %v10869, %v12149
    %v12214 = vmul.f32 %v10870, %v12150
    %v12215 = vmul.f32 %v10871, %v12151
    %v12216 = vmul.f32 %v10872, %v12152
    %v12217 = vmul.f32 %v10873, %v12153
    %v12218 = vmul.f32 %v10874, %v12154
    %v12219 = vmul.f32 %v10875, %v12155
    %v12220 = vmul.f32 %v10876, %v12156
    %v12221 = vmul.f32 %v10877, %v12157
    %v12222 = vmul.f32 %v10878, %v12158
    %v12223 = vmul.f32 %v10879, %v12159
    %v12224 = vmul.f32 %v10880, %v12160
    %v12225 = vmul.f32 %v10881, %v12161
    %v12226 = vmul.f32 %v10882, %v12162
    %v12227 = vmul.f32 %v10883, %v12163
    %v12228 = vmul.f32 %v10884, %v12164
    %v12229 = vmul.f32 %v10885, %v12165
    %v12230 = vmul.f32 %v10886, %v12166
    %v12231 = vmul.f32 %v10887, %v12167
    %v12232 = vmul.f32 %v10888, %v12168
    %v12233 = vmul.f32 %v10889, %v12169
    %v12234 = vmul.f32 %v10890, %v12170
    %v12235 = vmul.f32 %v10891, %v12171
    %v12236 = vmul.f32 %v10892, %v12172
    %v12237 = vmul.f32 %v10893, %v12173
    %v12238 = vmul.f32 %v10894, %v12174
    %v12239 = vmul.f32 %v10895, %v12175
    %v12240 = vmul.f32 %v10896, %v12176
    %v12241 = vmul.f32 %v10897, %v12177
    %v12242 = vmul.f32 %v10898, %v12178
    %v12243 = vmul.f32 %v10899, %v12179
    %v12244 = vmul.f32 %v10900, %v12180
    %v12245 = vmul.f32 %v10901, %v12181
    %v12246 = vmul.f32 %v10902, %v12182
    %v12247 = vmul.f32 %v10903, %v12183
    %v12248 = vmul.f32 %v10904, %v12184
    %v12249 = vmul.f32 %v10905, %v12185
    %v12250 = vmul.f32 %v10906, %v12186
    %v12251 = vmul.f32 %v10907, %v12187
    %v12252 = vmul.f32 %v10908, %v12188
    %v12253 = vmul.f32 %v10909, %v12189
    %v12254 = vmul.f32 %v10910, %v12190
    %v12255 = vadd.f32 %v12191, 1.0
    %v12256 = vadd.f32 %v12192, 1.0
    %v12257 = vadd.f32 %v12193, 1.0
    %v12258 = vadd.f32 %v12194, 1.0
    %v12259 = vadd.f32 %v12195, 1.0
    %v12260 = vadd.f32 %v12196, 1.0
    %v12261 = vadd.f32 %v12197, 1.0
    %v12262 = vadd.f32 %v12198, 1.0
    %v12263 = vadd.f32 %v12199, 1.0
    %v12264 = vadd.f32 %v12200, 1.0
    %v12265 = vadd.f32 %v12201, 1.0
    %v12266 = vadd.f32 %v12202, 1.0
    %v12267 = vadd.f32 %v12203, 1.0
    %v12268 = vadd.f32 %v12204, 1.0
    %v12269 = vadd.f32 %v12205, 1.0
    %v12270 = vadd.f32 %v12206, 1.0
    %v12271 = vadd.f32 %v12207, 1.0
    %v12272 = vadd.f32 %v12208, 1.0
    %v12273 = vadd.f32 %v12209, 1.0
    %v12274 = vadd.f32 %v12210, 1.0
    %v12275 = vadd.f32 %v12211, 1.0
    %v12276 = vadd.f32 %v12212, 1.0
    %v12277 = vadd.f32 %v12213, 1.0
    %v12278 = vadd.f32 %v12214, 1.0
    %v12279 = vadd.f32 %v12215, 1.0
    %v12280 = vadd.f32 %v12216, 1.0
    %v12281 = vadd.f32 %v12217, 1.0
    %v12282 = vadd.f32 %v12218, 1.0
    %v12283 = vadd.f32 %v12219, 1.0
    %v12284 = vadd.f32 %v12220, 1.0
    %v12285 = vadd.f32 %v12221, 1.0
    %v12286 = vadd.f32 %v12222, 1.0
    %v12287 = vadd.f32 %v12223, 1.0
    %v12288 = vadd.f32 %v12224, 1.0
    %v12289 = vadd.f32 %v12225, 1.0
    %v12290 = vadd.f32 %v12226, 1.0
    %v12291 = vadd.f32 %v12227, 1.0
    %v12292 = vadd.f32 %v12228, 1.0
    %v12293 = vadd.f32 %v12229, 1.0
    %v12294 = vadd.f32 %v12230, 1.0
    %v12295 = vadd.f32 %v12231, 1.0
    %v12296 = vadd.f32 %v12232, 1.0
    %v12297 = vadd.f32 %v12233, 1.0
    %v12298 = vadd.f32 %v12234, 1.0
    %v12299 = vadd.f32 %v12235, 1.0
    %v12300 = vadd.f32 %v12236, 1.0
    %v12301 = vadd.f32 %v12237, 1.0
    %v12302 = vadd.f32 %v12238, 1.0
    %v12303 = vadd.f32 %v12239, 1.0
    %v12304 = vadd.f32 %v12240, 1.0
    %v12305 = vadd.f32 %v12241, 1.0
    %v12306 = vadd.f32 %v12242, 1.0
    %v12307 = vadd.f32 %v12243, 1.0
    %v12308 = vadd.f32 %v12244, 1.0
    %v12309 = vadd.f32 %v12245, 1.0
    %v12310 = vadd.f32 %v12246, 1.0
    %v12311 = vadd.f32 %v12247, 1.0
    %v12312 = vadd.f32 %v12248, 1.0
    %v12313 = vadd.f32 %v12249, 1.0
    %v12314 = vadd.f32 %v12250, 1.0
    %v12315 = vadd.f32 %v12251, 1.0
    %v12316 = vadd.f32 %v12252, 1.0
    %v12317 = vadd.f32 %v12253, 1.0
    %v12318 = vadd.f32 %v12254, 1.0
    %v12319 = vmul.f32 %v10655, %v12255
    %v12320 = vmul.f32 %v10656, %v12256
    %v12321 = vmul.f32 %v10657, %v12257
    %v12322 = vmul.f32 %v10658, %v12258
    %v12323 = vmul.f32 %v10659, %v12259
    %v12324 = vmul.f32 %v10660, %v12260
    %v12325 = vmul.f32 %v10661, %v12261
    %v12326 = vmul.f32 %v10662, %v12262
    %v12327 = vmul.f32 %v10663, %v12263
    %v12328 = vmul.f32 %v10664, %v12264
    %v12329 = vmul.f32 %v10665, %v12265
    %v12330 = vmul.f32 %v10666, %v12266
    %v12331 = vmul.f32 %v10667, %v12267
    %v12332 = vmul.f32 %v10668, %v12268
    %v12333 = vmul.f32 %v10669, %v12269
    %v12334 = vmul.f32 %v10670, %v12270
    %v12335 = vmul.f32 %v10671, %v12271
    %v12336 = vmul.f32 %v10672, %v12272
    %v12337 = vmul.f32 %v10673, %v12273
    %v12338 = vmul.f32 %v10674, %v12274
    %v12339 = vmul.f32 %v10675, %v12275
    %v12340 = vmul.f32 %v10676, %v12276
    %v12341 = vmul.f32 %v10677, %v12277
    %v12342 = vmul.f32 %v10678, %v12278
    %v12343 = vmul.f32 %v10679, %v12279
    %v12344 = vmul.f32 %v10680, %v12280
    %v12345 = vmul.f32 %v10681, %v12281
    %v12346 = vmul.f32 %v10682, %v12282
    %v12347 = vmul.f32 %v10683, %v12283
    %v12348 = vmul.f32 %v10684, %v12284
    %v12349 = vmul.f32 %v10685, %v12285
    %v12350 = vmul.f32 %v10686, %v12286
    %v12351 = vmul.f32 %v10687, %v12287
    %v12352 = vmul.f32 %v10688, %v12288
    %v12353 = vmul.f32 %v10689, %v12289
    %v12354 = vmul.f32 %v10690, %v12290
    %v12355 = vmul.f32 %v10691, %v12291
    %v12356 = vmul.f32 %v10692, %v12292
    %v12357 = vmul.f32 %v10693, %v12293
    %v12358 = vmul.f32 %v10694, %v12294
    %v12359 = vmul.f32 %v10695, %v12295
    %v12360 = vmul.f32 %v10696, %v12296
    %v12361 = vmul.f32 %v10697, %v12297
    %v12362 = vmul.f32 %v10698, %v12298
    %v12363 = vmul.f32 %v10699, %v12299
    %v12364 = vmul.f32 %v10700, %v12300
    %v12365 = vmul.f32 %v10701, %v12301
    %v12366 = vmul.f32 %v10702, %v12302
    %v12367 = vmul.f32 %v10703, %v12303
    %v12368 = vmul.f32 %v10704, %v12304
    %v12369 = vmul.f32 %v10705, %v12305
    %v12370 = vmul.f32 %v10706, %v12306
    %v12371 = vmul.f32 %v10707, %v12307
    %v12372 = vmul.f32 %v10708, %v12308
    %v12373 = vmul.f32 %v10709, %v12309
    %v12374 = vmul.f32 %v10710, %v12310
    %v12375 = vmul.f32 %v10711, %v12311
    %v12376 = vmul.f32 %v10712, %v12312
    %v12377 = vmul.f32 %v10713, %v12313
    %v12378 = vmul.f32 %v10714, %v12314
    %v12379 = vmul.f32 %v10715, %v12315
    %v12380 = vmul.f32 %v10716, %v12316
    %v12381 = vmul.f32 %v10717, %v12317
    %v12382 = vmul.f32 %v10718, %v12318
    %v12383 = vld [vmem:[%s8] sm:$0xff]
    %v12384 = vld [vmem:[%s8 + $0x8] sm:$0xff]
    %v12385 = vld [vmem:[%s8 + $0x10] sm:$0xff]
    %v12386 = vld [vmem:[%s8 + $0x18] sm:$0xff]
    %v12387 = vld [vmem:[%s8 + $0x20] sm:$0xff]
    %v12388 = vld [vmem:[%s8 + $0x28] sm:$0xff]
    %v12389 = vld [vmem:[%s8 + $0x30] sm:$0xff]
    %v12390 = vld [vmem:[%s8 + $0x38] sm:$0xff]
    %v12391 = vld [vmem:[%s8 + $0x40] sm:$0xff]
    %v12392 = vld [vmem:[%s8 + $0x48] sm:$0xff]
    %v12393 = vld [vmem:[%s8 + $0x50] sm:$0xff]
    %v12394 = vld [vmem:[%s8 + $0x58] sm:$0xff]
    %v12395 = vld [vmem:[%s8 + $0x60] sm:$0xff]
    %v12396 = vld [vmem:[%s8 + $0x68] sm:$0xff]
    %v12397 = vld [vmem:[%s8 + $0x70] sm:$0xff]
    %v12398 = vld [vmem:[%s8 + $0x78] sm:$0xff]
    %v12399 = vld [vmem:[%s9] sm:$0x1]
    %v12401 = vlaneseq
    %v12402 = vshrl.u32 %v12401, 7
    %v12403 = vsub.s32 0, %v12402
    %v12404 = vrot.slane %v12399, %v12403
    %12406 = vmatprep.subr.mxu0 0.0
    %12407 = vmatpush1.msra.mxu0 %v12398
    %12408 = vmatprep.subr.mxu0 0.0
    %12409 = vmatpush1.msra.mxu0 %v12397
    %12410 = vmatprep.subr.mxu0 0.0
    %12411 = vmatpush1.msra.mxu0 %v12396
    %12412 = vmatprep.subr.mxu0 0.0
    %12413 = vmatpush1.msra.mxu0 %v12395
    %12414 = vmatprep.subr.mxu0 0.0
    %12415 = vmatpush1.msra.mxu0 %v12394
    %12416 = vmatprep.subr.mxu0 0.0
    %12417 = vmatpush1.msra.mxu0 %v12393
    %12418 = vmatprep.subr.mxu0 0.0
    %12419 = vmatpush1.msra.mxu0 %v12392
    %12420 = vmatprep.subr.mxu0 0.0
    %12421 = vmatpush1.msra.mxu0 %v12391
    %12422 = vmatprep.subr.mxu0 0.0
    %12423 = vmatpush1.msra.mxu0 %v12390
    %12424 = vmatprep.subr.mxu0 0.0
    %12425 = vmatpush1.msra.mxu0 %v12389
    %12426 = vmatprep.subr.mxu0 0.0
    %12427 = vmatpush1.msra.mxu0 %v12388
    %12428 = vmatprep.subr.mxu0 0.0
    %12429 = vmatpush1.msra.mxu0 %v12387
    %12430 = vmatprep.subr.mxu0 0.0
    %12431 = vmatpush1.msra.mxu0 %v12386
    %12432 = vmatprep.subr.mxu0 0.0
    %12433 = vmatpush1.msra.mxu0 %v12385
    %12434 = vmatprep.subr.mxu0 0.0
    %12435 = vmatpush1.msra.mxu0 %v12384
    %12436 = vmatprep.subr.mxu0 0.0
    %12437 = vmatpush1.msra.mxu0 %v12383
    %12438 = vmatprep.subr.mxu0 0.0
    %12439 = vmatpush2.msra.mxu0 0.0
    %12440 = vmatprep.subr.mxu0 0.0
    %12441 = vmatpush2.msra.mxu0 0.0
    %12442 = vmatprep.subr.mxu0 0.0
    %12443 = vmatpush2.msra.mxu0 0.0
    %12444 = vmatprep.subr.mxu0 0.0
    %12445 = vmatpush2.msra.mxu0 0.0
    %12446 = vmatprep.subr.mxu0 0.0
    %12447 = vmatpush2.msra.mxu0 0.0
    %12448 = vmatprep.subr.mxu0 0.0
    %12449 = vmatpush2.msra.mxu0 0.0
    %12450 = vmatprep.subr.mxu0 0.0
    %12451 = vmatpush2.msra.mxu0 0.0
    %12452 = vmatprep.subr.mxu0 0.0
    %12453 = vmatpush2.msra.mxu0 0.0
    %12454 = vmatprep.subr.mxu0 0.0
    %12455 = vmatpush2.msra.mxu0 0.0
    %12456 = vmatprep.subr.mxu0 0.0
    %12457 = vmatpush2.msra.mxu0 0.0
    %12458 = vmatprep.subr.mxu0 0.0
    %12459 = vmatpush2.msra.mxu0 0.0
    %12460 = vmatprep.subr.mxu0 0.0
    %12461 = vmatpush2.msra.mxu0 0.0
    %12462 = vmatprep.subr.mxu0 0.0
    %12463 = vmatpush2.msra.mxu0 0.0
    %12464 = vmatprep.subr.mxu0 0.0
    %12465 = vmatpush2.msra.mxu0 0.0
    %12466 = vmatprep.subr.mxu0 0.0
    %12467 = vmatpush2.msra.mxu0 0.0
    %12468 = vmatprep.subr.mxu0 0.0
    %12469 = vmatpush2.msra.mxu0 0.0
    %12470 = vmatprep.mubr.f32.mxu0 0.0
    %12471 = vmatmul.mubr.f32.gmra.mxu0 %v12319
    %v12472 = vpop.f32.mrf.mxu0
    %v12473 = vadd.f32 %v12404, %v12472
    %v12474 = vpop.f32.mrf.mxu0
    %12475 = vmatprep.mubr.f32.mxu0 0.0
    %12476 = vmatmul.mubr.f32.gmra.mxu0 %v12320
    %v12477 = vpop.f32.mrf.mxu0
    %v12478 = vadd.f32 %v12404, %v12477
    %v12479 = vpop.f32.mrf.mxu0
    %12480 = vmatprep.mubr.f32.mxu0 0.0
    %12481 = vmatmul.mubr.f32.gmra.mxu0 %v12321
    %v12482 = vpop.f32.mrf.mxu0
    %v12483 = vadd.f32 %v12404, %v12482
    %v12484 = vpop.f32.mrf.mxu0
    %12485 = vmatprep.mubr.f32.mxu0 0.0
    %12486 = vmatmul.mubr.f32.gmra.mxu0 %v12322
    %v12487 = vpop.f32.mrf.mxu0
    %v12488 = vadd.f32 %v12404, %v12487
    %v12489 = vpop.f32.mrf.mxu0
    %12490 = vmatprep.mubr.f32.mxu0 0.0
    %12491 = vmatmul.mubr.f32.gmra.mxu0 %v12323
    %v12492 = vpop.f32.mrf.mxu0
    %v12493 = vadd.f32 %v12404, %v12492
    %v12494 = vpop.f32.mrf.mxu0
    %12495 = vmatprep.mubr.f32.mxu0 0.0
    %12496 = vmatmul.mubr.f32.gmra.mxu0 %v12324
    %v12497 = vpop.f32.mrf.mxu0
    %v12498 = vadd.f32 %v12404, %v12497
    %v12499 = vpop.f32.mrf.mxu0
    %12500 = vmatprep.mubr.f32.mxu0 0.0
    %12501 = vmatmul.mubr.f32.gmra.mxu0 %v12325
    %v12502 = vpop.f32.mrf.mxu0
    %v12503 = vadd.f32 %v12404, %v12502
    %v12504 = vpop.f32.mrf.mxu0
    %12505 = vmatprep.mubr.f32.mxu0 0.0
    %12506 = vmatmul.mubr.f32.gmra.mxu0 %v12326
    %v12507 = vpop.f32.mrf.mxu0
    %v12508 = vadd.f32 %v12404, %v12507
    %v12509 = vpop.f32.mrf.mxu0
    %12510 = vmatprep.mubr.f32.mxu0 0.0
    %12511 = vmatmul.mubr.f32.gmra.mxu0 %v12327
    %v12512 = vpop.f32.mrf.mxu0
    %v12513 = vadd.f32 %v12404, %v12512
    %v12514 = vpop.f32.mrf.mxu0
    %12515 = vmatprep.mubr.f32.mxu0 0.0
    %12516 = vmatmul.mubr.f32.gmra.mxu0 %v12328
    %v12517 = vpop.f32.mrf.mxu0
    %v12518 = vadd.f32 %v12404, %v12517
    %v12519 = vpop.f32.mrf.mxu0
    %12520 = vmatprep.mubr.f32.mxu0 0.0
    %12521 = vmatmul.mubr.f32.gmra.mxu0 %v12329
    %v12522 = vpop.f32.mrf.mxu0
    %v12523 = vadd.f32 %v12404, %v12522
    %v12524 = vpop.f32.mrf.mxu0
    %12525 = vmatprep.mubr.f32.mxu0 0.0
    %12526 = vmatmul.mubr.f32.gmra.mxu0 %v12330
    %v12527 = vpop.f32.mrf.mxu0
    %v12528 = vadd.f32 %v12404, %v12527
    %v12529 = vpop.f32.mrf.mxu0
    %12530 = vmatprep.mubr.f32.mxu0 0.0
    %12531 = vmatmul.mubr.f32.gmra.mxu0 %v12331
    %v12532 = vpop.f32.mrf.mxu0
    %v12533 = vadd.f32 %v12404, %v12532
    %v12534 = vpop.f32.mrf.mxu0
    %12535 = vmatprep.mubr.f32.mxu0 0.0
    %12536 = vmatmul.mubr.f32.gmra.mxu0 %v12332
    %v12537 = vpop.f32.mrf.mxu0
    %v12538 = vadd.f32 %v12404, %v12537
    %v12539 = vpop.f32.mrf.mxu0
    %12540 = vmatprep.mubr.f32.mxu0 0.0
    %12541 = vmatmul.mubr.f32.gmra.mxu0 %v12333
    %v12542 = vpop.f32.mrf.mxu0
    %v12543 = vadd.f32 %v12404, %v12542
    %v12544 = vpop.f32.mrf.mxu0
    %12545 = vmatprep.mubr.f32.mxu0 0.0
    %12546 = vmatmul.mubr.f32.gmra.mxu0 %v12334
    %v12547 = vpop.f32.mrf.mxu0
    %v12548 = vadd.f32 %v12404, %v12547
    %v12549 = vpop.f32.mrf.mxu0
    %12550 = vmatprep.mubr.f32.mxu0 0.0
    %12551 = vmatmul.mubr.f32.gmra.mxu0 %v12335
    %v12552 = vpop.f32.mrf.mxu0
    %v12553 = vadd.f32 %v12404, %v12552
    %v12554 = vpop.f32.mrf.mxu0
    %12555 = vmatprep.mubr.f32.mxu0 0.0
    %12556 = vmatmul.mubr.f32.gmra.mxu0 %v12336
    %v12557 = vpop.f32.mrf.mxu0
    %v12558 = vadd.f32 %v12404, %v12557
    %v12559 = vpop.f32.mrf.mxu0
    %12560 = vmatprep.mubr.f32.mxu0 0.0
    %12561 = vmatmul.mubr.f32.gmra.mxu0 %v12337
    %v12562 = vpop.f32.mrf.mxu0
    %v12563 = vadd.f32 %v12404, %v12562
    %v12564 = vpop.f32.mrf.mxu0
    %12565 = vmatprep.mubr.f32.mxu0 0.0
    %12566 = vmatmul.mubr.f32.gmra.mxu0 %v12338
    %v12567 = vpop.f32.mrf.mxu0
    %v12568 = vadd.f32 %v12404, %v12567
    %v12569 = vpop.f32.mrf.mxu0
    %12570 = vmatprep.mubr.f32.mxu0 0.0
    %12571 = vmatmul.mubr.f32.gmra.mxu0 %v12339
    %v12572 = vpop.f32.mrf.mxu0
    %v12573 = vadd.f32 %v12404, %v12572
    %v12574 = vpop.f32.mrf.mxu0
    %12575 = vmatprep.mubr.f32.mxu0 0.0
    %12576 = vmatmul.mubr.f32.gmra.mxu0 %v12340
    %v12577 = vpop.f32.mrf.mxu0
    %v12578 = vadd.f32 %v12404, %v12577
    %v12579 = vpop.f32.mrf.mxu0
    %12580 = vmatprep.mubr.f32.mxu0 0.0
    %12581 = vmatmul.mubr.f32.gmra.mxu0 %v12341
    %v12582 = vpop.f32.mrf.mxu0
    %v12583 = vadd.f32 %v12404, %v12582
    %v12584 = vpop.f32.mrf.mxu0
    %12585 = vmatprep.mubr.f32.mxu0 0.0
    %12586 = vmatmul.mubr.f32.gmra.mxu0 %v12342
    %v12587 = vpop.f32.mrf.mxu0
    %v12588 = vadd.f32 %v12404, %v12587
    %v12589 = vpop.f32.mrf.mxu0
    %12590 = vmatprep.mubr.f32.mxu0 0.0
    %12591 = vmatmul.mubr.f32.gmra.mxu0 %v12343
    %v12592 = vpop.f32.mrf.mxu0
    %v12593 = vadd.f32 %v12404, %v12592
    %v12594 = vpop.f32.mrf.mxu0
    %12595 = vmatprep.mubr.f32.mxu0 0.0
    %12596 = vmatmul.mubr.f32.gmra.mxu0 %v12344
    %v12597 = vpop.f32.mrf.mxu0
    %v12598 = vadd.f32 %v12404, %v12597
    %v12599 = vpop.f32.mrf.mxu0
    %12600 = vmatprep.mubr.f32.mxu0 0.0
    %12601 = vmatmul.mubr.f32.gmra.mxu0 %v12345
    %v12602 = vpop.f32.mrf.mxu0
    %v12603 = vadd.f32 %v12404, %v12602
    %v12604 = vpop.f32.mrf.mxu0
    %12605 = vmatprep.mubr.f32.mxu0 0.0
    %12606 = vmatmul.mubr.f32.gmra.mxu0 %v12346
    %v12607 = vpop.f32.mrf.mxu0
    %v12608 = vadd.f32 %v12404, %v12607
    %v12609 = vpop.f32.mrf.mxu0
    %12610 = vmatprep.mubr.f32.mxu0 0.0
    %12611 = vmatmul.mubr.f32.gmra.mxu0 %v12347
    %v12612 = vpop.f32.mrf.mxu0
    %v12613 = vadd.f32 %v12404, %v12612
    %v12614 = vpop.f32.mrf.mxu0
    %12615 = vmatprep.mubr.f32.mxu0 0.0
    %12616 = vmatmul.mubr.f32.gmra.mxu0 %v12348
    %v12617 = vpop.f32.mrf.mxu0
    %v12618 = vadd.f32 %v12404, %v12617
    %v12619 = vpop.f32.mrf.mxu0
    %12620 = vmatprep.mubr.f32.mxu0 0.0
    %12621 = vmatmul.mubr.f32.gmra.mxu0 %v12349
    %v12622 = vpop.f32.mrf.mxu0
    %v12623 = vadd.f32 %v12404, %v12622
    %v12624 = vpop.f32.mrf.mxu0
    %12625 = vmatprep.mubr.f32.mxu0 0.0
    %12626 = vmatmul.mubr.f32.gmra.mxu0 %v12350
    %v12627 = vpop.f32.mrf.mxu0
    %v12628 = vadd.f32 %v12404, %v12627
    %v12629 = vpop.f32.mrf.mxu0
    %12630 = vmatprep.mubr.f32.mxu0 0.0
    %12631 = vmatmul.mubr.f32.gmra.mxu0 %v12351
    %v12632 = vpop.f32.mrf.mxu0
    %v12633 = vadd.f32 %v12404, %v12632
    %v12634 = vpop.f32.mrf.mxu0
    %12635 = vmatprep.mubr.f32.mxu0 0.0
    %12636 = vmatmul.mubr.f32.gmra.mxu0 %v12352
    %v12637 = vpop.f32.mrf.mxu0
    %v12638 = vadd.f32 %v12404, %v12637
    %v12639 = vpop.f32.mrf.mxu0
    %12640 = vmatprep.mubr.f32.mxu0 0.0
    %12641 = vmatmul.mubr.f32.gmra.mxu0 %v12353
    %v12642 = vpop.f32.mrf.mxu0
    %v12643 = vadd.f32 %v12404, %v12642
    %v12644 = vpop.f32.mrf.mxu0
    %12645 = vmatprep.mubr.f32.mxu0 0.0
    %12646 = vmatmul.mubr.f32.gmra.mxu0 %v12354
    %v12647 = vpop.f32.mrf.mxu0
    %v12648 = vadd.f32 %v12404, %v12647
    %v12649 = vpop.f32.mrf.mxu0
    %12650 = vmatprep.mubr.f32.mxu0 0.0
    %12651 = vmatmul.mubr.f32.gmra.mxu0 %v12355
    %v12652 = vpop.f32.mrf.mxu0
    %v12653 = vadd.f32 %v12404, %v12652
    %v12654 = vpop.f32.mrf.mxu0
    %12655 = vmatprep.mubr.f32.mxu0 0.0
    %12656 = vmatmul.mubr.f32.gmra.mxu0 %v12356
    %v12657 = vpop.f32.mrf.mxu0
    %v12658 = vadd.f32 %v12404, %v12657
    %v12659 = vpop.f32.mrf.mxu0
    %12660 = vmatprep.mubr.f32.mxu0 0.0
    %12661 = vmatmul.mubr.f32.gmra.mxu0 %v12357
    %v12662 = vpop.f32.mrf.mxu0
    %v12663 = vadd.f32 %v12404, %v12662
    %v12664 = vpop.f32.mrf.mxu0
    %12665 = vmatprep.mubr.f32.mxu0 0.0
    %12666 = vmatmul.mubr.f32.gmra.mxu0 %v12358
    %v12667 = vpop.f32.mrf.mxu0
    %v12668 = vadd.f32 %v12404, %v12667
    %v12669 = vpop.f32.mrf.mxu0
    %12670 = vmatprep.mubr.f32.mxu0 0.0
    %12671 = vmatmul.mubr.f32.gmra.mxu0 %v12359
    %v12672 = vpop.f32.mrf.mxu0
    %v12673 = vadd.f32 %v12404, %v12672
    %v12674 = vpop.f32.mrf.mxu0
    %12675 = vmatprep.mubr.f32.mxu0 0.0
    %12676 = vmatmul.mubr.f32.gmra.mxu0 %v12360
    %v12677 = vpop.f32.mrf.mxu0
    %v12678 = vadd.f32 %v12404, %v12677
    %v12679 = vpop.f32.mrf.mxu0
    %12680 = vmatprep.mubr.f32.mxu0 0.0
    %12681 = vmatmul.mubr.f32.gmra.mxu0 %v12361
    %v12682 = vpop.f32.mrf.mxu0
    %v12683 = vadd.f32 %v12404, %v12682
    %v12684 = vpop.f32.mrf.mxu0
    %12685 = vmatprep.mubr.f32.mxu0 0.0
    %12686 = vmatmul.mubr.f32.gmra.mxu0 %v12362
    %v12687 = vpop.f32.mrf.mxu0
    %v12688 = vadd.f32 %v12404, %v12687
    %v12689 = vpop.f32.mrf.mxu0
    %12690 = vmatprep.mubr.f32.mxu0 0.0
    %12691 = vmatmul.mubr.f32.gmra.mxu0 %v12363
    %v12692 = vpop.f32.mrf.mxu0
    %v12693 = vadd.f32 %v12404, %v12692
    %v12694 = vpop.f32.mrf.mxu0
    %12695 = vmatprep.mubr.f32.mxu0 0.0
    %12696 = vmatmul.mubr.f32.gmra.mxu0 %v12364
    %v12697 = vpop.f32.mrf.mxu0
    %v12698 = vadd.f32 %v12404, %v12697
    %v12699 = vpop.f32.mrf.mxu0
    %12700 = vmatprep.mubr.f32.mxu0 0.0
    %12701 = vmatmul.mubr.f32.gmra.mxu0 %v12365
    %v12702 = vpop.f32.mrf.mxu0
    %v12703 = vadd.f32 %v12404, %v12702
    %v12704 = vpop.f32.mrf.mxu0
    %12705 = vmatprep.mubr.f32.mxu0 0.0
    %12706 = vmatmul.mubr.f32.gmra.mxu0 %v12366
    %v12707 = vpop.f32.mrf.mxu0
    %v12708 = vadd.f32 %v12404, %v12707
    %v12709 = vpop.f32.mrf.mxu0
    %12710 = vmatprep.mubr.f32.mxu0 0.0
    %12711 = vmatmul.mubr.f32.gmra.mxu0 %v12367
    %v12712 = vpop.f32.mrf.mxu0
    %v12713 = vadd.f32 %v12404, %v12712
    %v12714 = vpop.f32.mrf.mxu0
    %12715 = vmatprep.mubr.f32.mxu0 0.0
    %12716 = vmatmul.mubr.f32.gmra.mxu0 %v12368
    %v12717 = vpop.f32.mrf.mxu0
    %v12718 = vadd.f32 %v12404, %v12717
    %v12719 = vpop.f32.mrf.mxu0
    %12720 = vmatprep.mubr.f32.mxu0 0.0
    %12721 = vmatmul.mubr.f32.gmra.mxu0 %v12369
    %v12722 = vpop.f32.mrf.mxu0
    %v12723 = vadd.f32 %v12404, %v12722
    %v12724 = vpop.f32.mrf.mxu0
    %12725 = vmatprep.mubr.f32.mxu0 0.0
    %12726 = vmatmul.mubr.f32.gmra.mxu0 %v12370
    %v12727 = vpop.f32.mrf.mxu0
    %v12728 = vadd.f32 %v12404, %v12727
    %v12729 = vpop.f32.mrf.mxu0
    %12730 = vmatprep.mubr.f32.mxu0 0.0
    %12731 = vmatmul.mubr.f32.gmra.mxu0 %v12371
    %v12732 = vpop.f32.mrf.mxu0
    %v12733 = vadd.f32 %v12404, %v12732
    %v12734 = vpop.f32.mrf.mxu0
    %12735 = vmatprep.mubr.f32.mxu0 0.0
    %12736 = vmatmul.mubr.f32.gmra.mxu0 %v12372
    %v12737 = vpop.f32.mrf.mxu0
    %v12738 = vadd.f32 %v12404, %v12737
    %v12739 = vpop.f32.mrf.mxu0
    %12740 = vmatprep.mubr.f32.mxu0 0.0
    %12741 = vmatmul.mubr.f32.gmra.mxu0 %v12373
    %v12742 = vpop.f32.mrf.mxu0
    %v12743 = vadd.f32 %v12404, %v12742
    %v12744 = vpop.f32.mrf.mxu0
    %12745 = vmatprep.mubr.f32.mxu0 0.0
    %12746 = vmatmul.mubr.f32.gmra.mxu0 %v12374
    %v12747 = vpop.f32.mrf.mxu0
    %v12748 = vadd.f32 %v12404, %v12747
    %v12749 = vpop.f32.mrf.mxu0
    %12750 = vmatprep.mubr.f32.mxu0 0.0
    %12751 = vmatmul.mubr.f32.gmra.mxu0 %v12375
    %v12752 = vpop.f32.mrf.mxu0
    %v12753 = vadd.f32 %v12404, %v12752
    %v12754 = vpop.f32.mrf.mxu0
    %12755 = vmatprep.mubr.f32.mxu0 0.0
    %12756 = vmatmul.mubr.f32.gmra.mxu0 %v12376
    %v12757 = vpop.f32.mrf.mxu0
    %v12758 = vadd.f32 %v12404, %v12757
    %v12759 = vpop.f32.mrf.mxu0
    %12760 = vmatprep.mubr.f32.mxu0 0.0
    %12761 = vmatmul.mubr.f32.gmra.mxu0 %v12377
    %v12762 = vpop.f32.mrf.mxu0
    %v12763 = vadd.f32 %v12404, %v12762
    %v12764 = vpop.f32.mrf.mxu0
    %12765 = vmatprep.mubr.f32.mxu0 0.0
    %12766 = vmatmul.mubr.f32.gmra.mxu0 %v12378
    %v12767 = vpop.f32.mrf.mxu0
    %v12768 = vadd.f32 %v12404, %v12767
    %v12769 = vpop.f32.mrf.mxu0
    %12770 = vmatprep.mubr.f32.mxu0 0.0
    %12771 = vmatmul.mubr.f32.gmra.mxu0 %v12379
    %v12772 = vpop.f32.mrf.mxu0
    %v12773 = vadd.f32 %v12404, %v12772
    %v12774 = vpop.f32.mrf.mxu0
    %12775 = vmatprep.mubr.f32.mxu0 0.0
    %12776 = vmatmul.mubr.f32.gmra.mxu0 %v12380
    %v12777 = vpop.f32.mrf.mxu0
    %v12778 = vadd.f32 %v12404, %v12777
    %v12779 = vpop.f32.mrf.mxu0
    %12780 = vmatprep.mubr.f32.mxu0 0.0
    %12781 = vmatmul.mubr.f32.gmra.mxu0 %v12381
    %v12782 = vpop.f32.mrf.mxu0
    %v12783 = vadd.f32 %v12404, %v12782
    %v12784 = vpop.f32.mrf.mxu0
    %12785 = vmatprep.mubr.f32.mxu0 0.0
    %12786 = vmatmul.mubr.f32.gmra.mxu0 %v12382
    %v12787 = vpop.f32.mrf.mxu0
    %v12788 = vadd.f32 %v12404, %v12787
    %v12789 = vpop.f32.mrf.mxu0
    %12790 = vdwg.mxu0
    %v12791 = vadd.f32 %v42, %v12473
    %v12792 = vadd.f32 %v43, %v12478
    %v12793 = vadd.f32 %v44, %v12483
    %v12794 = vadd.f32 %v45, %v12488
    %v12795 = vadd.f32 %v46, %v12493
    %v12796 = vadd.f32 %v47, %v12498
    %v12797 = vadd.f32 %v48, %v12503
    %v12798 = vadd.f32 %v49, %v12508
    %v12799 = vadd.f32 %v50, %v12513
    %v12800 = vadd.f32 %v51, %v12518
    %v12801 = vadd.f32 %v52, %v12523
    %v12802 = vadd.f32 %v53, %v12528
    %v12803 = vadd.f32 %v54, %v12533
    %v12804 = vadd.f32 %v55, %v12538
    %v12805 = vadd.f32 %v56, %v12543
    %v12806 = vadd.f32 %v57, %v12548
    %v12807 = vadd.f32 %v58, %v12553
    %v12808 = vadd.f32 %v59, %v12558
    %v12809 = vadd.f32 %v60, %v12563
    %v12810 = vadd.f32 %v61, %v12568
    %v12811 = vadd.f32 %v62, %v12573
    %v12812 = vadd.f32 %v63, %v12578
    %v12813 = vadd.f32 %v64, %v12583
    %v12814 = vadd.f32 %v65, %v12588
    %v12815 = vadd.f32 %v66, %v12593
    %v12816 = vadd.f32 %v67, %v12598
    %v12817 = vadd.f32 %v68, %v12603
    %v12818 = vadd.f32 %v69, %v12608
    %v12819 = vadd.f32 %v70, %v12613
    %v12820 = vadd.f32 %v71, %v12618
    %v12821 = vadd.f32 %v72, %v12623
    %v12822 = vadd.f32 %v73, %v12628
    %v12823 = vadd.f32 %v74, %v12633
    %v12824 = vadd.f32 %v75, %v12638
    %v12825 = vadd.f32 %v76, %v12643
    %v12826 = vadd.f32 %v77, %v12648
    %v12827 = vadd.f32 %v78, %v12653
    %v12828 = vadd.f32 %v79, %v12658
    %v12829 = vadd.f32 %v80, %v12663
    %v12830 = vadd.f32 %v81, %v12668
    %v12831 = vadd.f32 %v82, %v12673
    %v12832 = vadd.f32 %v83, %v12678
    %v12833 = vadd.f32 %v84, %v12683
    %v12834 = vadd.f32 %v85, %v12688
    %v12835 = vadd.f32 %v86, %v12693
    %v12836 = vadd.f32 %v87, %v12698
    %v12837 = vadd.f32 %v88, %v12703
    %v12838 = vadd.f32 %v89, %v12708
    %v12839 = vadd.f32 %v90, %v12713
    %v12840 = vadd.f32 %v91, %v12718
    %v12841 = vadd.f32 %v92, %v12723
    %v12842 = vadd.f32 %v93, %v12728
    %v12843 = vadd.f32 %v94, %v12733
    %v12844 = vadd.f32 %v95, %v12738
    %v12845 = vadd.f32 %v96, %v12743
    %v12846 = vadd.f32 %v97, %v12748
    %v12847 = vadd.f32 %v98, %v12753
    %v12848 = vadd.f32 %v99, %v12758
    %v12849 = vadd.f32 %v100, %v12763
    %v12850 = vadd.f32 %v101, %v12768
    %v12851 = vadd.f32 %v102, %v12773
    %v12852 = vadd.f32 %v103, %v12778
    %v12853 = vadd.f32 %v104, %v12783
    %v12854 = vadd.f32 %v105, %v12788
    %v12855 = vsel %vm6407, %v12791, 0.0
    %v12856 = vsel %vm6407, %v12792, 0.0
    %v12857 = vadd.f32 %v12855, %v12856
    %v12858 = vsel %vm6407, %v12793, 0.0
    %v12859 = vadd.f32 %v12857, %v12858
    %v12860 = vsel %vm6407, %v12794, 0.0
    %v12861 = vadd.f32 %v12859, %v12860
    %v12862 = vsel %vm6407, %v12795, 0.0
    %v12863 = vadd.f32 %v12861, %v12862
    %v12864 = vsel %vm6407, %v12796, 0.0
    %v12865 = vadd.f32 %v12863, %v12864
    %v12866 = vsel %vm6407, %v12797, 0.0
    %v12867 = vadd.f32 %v12865, %v12866
    %v12868 = vsel %vm6407, %v12798, 0.0
    %v12869 = vadd.f32 %v12867, %v12868
    %v12870 = vsel %vm6407, %v12799, 0.0
    %v12871 = vadd.f32 %v12869, %v12870
    %v12872 = vsel %vm6407, %v12800, 0.0
    %v12873 = vadd.f32 %v12871, %v12872
    %v12874 = vsel %vm6407, %v12801, 0.0
    %v12875 = vadd.f32 %v12873, %v12874
    %v12876 = vsel %vm6407, %v12802, 0.0
    %v12877 = vadd.f32 %v12875, %v12876
    %v12878 = vsel %vm6407, %v12803, 0.0
    %v12879 = vadd.f32 %v12877, %v12878
    %v12880 = vsel %vm6407, %v12804, 0.0
    %v12881 = vadd.f32 %v12879, %v12880
    %v12882 = vsel %vm6407, %v12805, 0.0
    %v12883 = vadd.f32 %v12881, %v12882
    %v12884 = vsel %vm6407, %v12806, 0.0
    %v12885 = vadd.f32 %v12883, %v12884
    %v12886 = vsel %vm6407, %v12807, 0.0
    %v12887 = vadd.f32 %v12885, %v12886
    %v12888 = vsel %vm6407, %v12808, 0.0
    %v12889 = vadd.f32 %v12887, %v12888
    %v12890 = vsel %vm6407, %v12809, 0.0
    %v12891 = vadd.f32 %v12889, %v12890
    %v12892 = vsel %vm6407, %v12810, 0.0
    %v12893 = vadd.f32 %v12891, %v12892
    %v12894 = vsel %vm6407, %v12811, 0.0
    %v12895 = vadd.f32 %v12893, %v12894
    %v12896 = vsel %vm6407, %v12812, 0.0
    %v12897 = vadd.f32 %v12895, %v12896
    %v12898 = vsel %vm6407, %v12813, 0.0
    %v12899 = vadd.f32 %v12897, %v12898
    %v12900 = vsel %vm6407, %v12814, 0.0
    %v12901 = vadd.f32 %v12899, %v12900
    %v12902 = vsel %vm6407, %v12815, 0.0
    %v12903 = vadd.f32 %v12901, %v12902
    %v12904 = vsel %vm6407, %v12816, 0.0
    %v12905 = vadd.f32 %v12903, %v12904
    %v12906 = vsel %vm6407, %v12817, 0.0
    %v12907 = vadd.f32 %v12905, %v12906
    %v12908 = vsel %vm6407, %v12818, 0.0
    %v12909 = vadd.f32 %v12907, %v12908
    %v12910 = vsel %vm6407, %v12819, 0.0
    %v12911 = vadd.f32 %v12909, %v12910
    %v12912 = vsel %vm6407, %v12820, 0.0
    %v12913 = vadd.f32 %v12911, %v12912
    %v12914 = vsel %vm6407, %v12821, 0.0
    %v12915 = vadd.f32 %v12913, %v12914
    %v12916 = vsel %vm6407, %v12822, 0.0
    %v12917 = vadd.f32 %v12915, %v12916
    %v12918 = vrot.slane %v12917, 4
    %v12919 = vadd.f32 %v12917, %v12918
    %v12920 = vrot.slane %v12919, 2
    %v12921 = vadd.f32 %v12919, %v12920
    %v12922 = vrot.slane %v12921, 1
    %v12923 = vadd.f32 %v12921, %v12922
    %v12924 = vsel %vm6407, %v12823, 0.0
    %v12925 = vsel %vm6407, %v12824, 0.0
    %v12926 = vadd.f32 %v12924, %v12925
    %v12927 = vsel %vm6407, %v12825, 0.0
    %v12928 = vadd.f32 %v12926, %v12927
    %v12929 = vsel %vm6407, %v12826, 0.0
    %v12930 = vadd.f32 %v12928, %v12929
    %v12931 = vsel %vm6407, %v12827, 0.0
    %v12932 = vadd.f32 %v12930, %v12931
    %v12933 = vsel %vm6407, %v12828, 0.0
    %v12934 = vadd.f32 %v12932, %v12933
    %v12935 = vsel %vm6407, %v12829, 0.0
    %v12936 = vadd.f32 %v12934, %v12935
    %v12937 = vsel %vm6407, %v12830, 0.0
    %v12938 = vadd.f32 %v12936, %v12937
    %v12939 = vsel %vm6407, %v12831, 0.0
    %v12940 = vadd.f32 %v12938, %v12939
    %v12941 = vsel %vm6407, %v12832, 0.0
    %v12942 = vadd.f32 %v12940, %v12941
    %v12943 = vsel %vm6407, %v12833, 0.0
    %v12944 = vadd.f32 %v12942, %v12943
    %v12945 = vsel %vm6407, %v12834, 0.0
    %v12946 = vadd.f32 %v12944, %v12945
    %v12947 = vsel %vm6407, %v12835, 0.0
    %v12948 = vadd.f32 %v12946, %v12947
    %v12949 = vsel %vm6407, %v12836, 0.0
    %v12950 = vadd.f32 %v12948, %v12949
    %v12951 = vsel %vm6407, %v12837, 0.0
    %v12952 = vadd.f32 %v12950, %v12951
    %v12953 = vsel %vm6407, %v12838, 0.0
    %v12954 = vadd.f32 %v12952, %v12953
    %v12955 = vsel %vm6407, %v12839, 0.0
    %v12956 = vadd.f32 %v12954, %v12955
    %v12957 = vsel %vm6407, %v12840, 0.0
    %v12958 = vadd.f32 %v12956, %v12957
    %v12959 = vsel %vm6407, %v12841, 0.0
    %v12960 = vadd.f32 %v12958, %v12959
    %v12961 = vsel %vm6407, %v12842, 0.0
    %v12962 = vadd.f32 %v12960, %v12961
    %v12963 = vsel %vm6407, %v12843, 0.0
    %v12964 = vadd.f32 %v12962, %v12963
    %v12965 = vsel %vm6407, %v12844, 0.0
    %v12966 = vadd.f32 %v12964, %v12965
    %v12967 = vsel %vm6407, %v12845, 0.0
    %v12968 = vadd.f32 %v12966, %v12967
    %v12969 = vsel %vm6407, %v12846, 0.0
    %v12970 = vadd.f32 %v12968, %v12969
    %v12971 = vsel %vm6407, %v12847, 0.0
    %v12972 = vadd.f32 %v12970, %v12971
    %v12973 = vsel %vm6407, %v12848, 0.0
    %v12974 = vadd.f32 %v12972, %v12973
    %v12975 = vsel %vm6407, %v12849, 0.0
    %v12976 = vadd.f32 %v12974, %v12975
    %v12977 = vsel %vm6407, %v12850, 0.0
    %v12978 = vadd.f32 %v12976, %v12977
    %v12979 = vsel %vm6407, %v12851, 0.0
    %v12980 = vadd.f32 %v12978, %v12979
    %v12981 = vsel %vm6407, %v12852, 0.0
    %v12982 = vadd.f32 %v12980, %v12981
    %v12983 = vsel %vm6407, %v12853, 0.0
    %v12984 = vadd.f32 %v12982, %v12983
    %v12985 = vsel %vm6407, %v12854, 0.0
    %v12986 = vadd.f32 %v12984, %v12985
    %v12987 = vrot.slane %v12986, 4
    %v12988 = vadd.f32 %v12986, %v12987
    %v12989 = vrot.slane %v12988, 2
    %v12990 = vadd.f32 %v12988, %v12989
    %v12991 = vrot.slane %v12990, 1
    %v12992 = vadd.f32 %v12990, %v12991
    %v12993 = vrcp.pop 256.0
    %v12994 = vmul.f32 %v12923, %v12993
    %v12995 = vmul.f32 %v12992, %v12993
    %v12996 = vld [vmem:[%s10] sm:$0x3]
    %v12997 = vld [vmem:[%s11] sm:$0x3]
    %v12998 = vlaneseq
    %v12999 = vshrl.u32 %v12998, 7
    %v13000 = vsub.s32 0, %v12999
    %v13001 = vrot.slane %v12996, %v13000
    %v13002 = vmul.f32 %v12994, %v13001
    %v13003 = vmul.f32 %v12995, %v13001
    %v13006 = vrot.slane %v13003, 7
    %vm13007 = vcmask 1041409
    %v13008 = vsel %vm13007, %v13006, %v13002
    %vm13010 = vcmask 254976
    %v13011 = vsel %vm13010, %v13008, 0.0
    %13012 = vadd.xlane.f32.xlu0 %v13011
    %v13013 = vpop.xlane.xlu0 %13012
    %v13014 = vmax.f32 %v13013, 0.0
    %v13015 = vlaneseq
    %v13016 = vshrl.u32 %v13015, 7
    %v13017 = vsub.s32 0, %v13016
    %v13018 = vrot.slane %v12997, %v13017
    %v13019 = vmul.f32 %v13014, %v13018
    %v13020 = vadd.f32 %v13019, 0.0
    %v13021 = vlaneseq
    %v13022 = vshrl.u32 %v13021, 7
    %v13023 = vsub.s32 1, %v13022
    %v13024 = vrot.slane %v12996, %v13023
    %v13025 = vmul.f32 %v12994, %v13024
    %v13026 = vmul.f32 %v12995, %v13024
    %v13029 = vrot.slane %v13026, 7
    %v13030 = vsel %vm13007, %v13029, %v13025
    %v13032 = vsel %vm13010, %v13030, 0.0
    %13033 = vadd.xlane.f32.xlu0 %v13032
    %v13034 = vpop.xlane.xlu0 %13033
    %v13035 = vmax.f32 %v13034, 0.0
    %v13036 = vlaneseq
    %v13037 = vshrl.u32 %v13036, 7
    %v13038 = vsub.s32 1, %v13037
    %v13039 = vrot.slane %v12997, %v13038
    %v13040 = vmul.f32 %v13035, %v13039
    %v13041 = vadd.f32 %v13020, %v13040
    %v13042 = vxor.u32 %v13041, 2147483648
    %v13043 = vmul.f32 %v13042, 1.442695
    %v13044 = vpow.pop %v13043
    %v13045 = vadd.f32 %v13044, 1.0
    %v13046 = vrcp.pop %v13045
    %v13047 = vmul.f32 1.0, %v13046
    %v13050 = vunpack.c.l.s4 1966171168
    %v13051 = vunpack.c.0.s8 %v13050
    %v13052 = vlaneseq
    %v13053 = vshrl.u32 %v13052, 7
    %v13054 = vsub.s32 %v13051, %v13053
    %v13055 = vrot.slane %v13047, %v13054
    %v13056 = vcombine.high %v13055, %v13055
    %v13058 = vunpack.c.l.s4 1966171168
    %v13059 = vunpack.c.0.s8 %v13058
    %v13060 = vlaneseq
    %v13061 = vshrl.u32 %v13060, 7
    %v13062 = vsub.s32 %v13059, %v13061
    %v13063 = vrot.slane %v13055, %v13062
    %v13065 = vunpack.c.l.s4 1966171168
    %v13066 = vunpack.c.0.s8 %v13065
    %v13067 = vlaneseq
    %v13068 = vshrl.u32 %v13067, 7
    %v13069 = vsub.s32 %v13066, %v13068
    %v13070 = vrot.slane %v13056, %v13069
    %v13071 = vlaneseq
    %v13072 = vshrl.u32 %v13071, 7
    %v13073 = vsub.s32 0, %v13072
    %v13074 = vrot.slane %v13063, %v13073
    %v13075 = vlaneseq
    %v13076 = vshrl.u32 %v13075, 7
    %v13077 = vsub.s32 0, %v13076
    %v13078 = vrot.slane %v13070, %v13077
    %v13081 = vmul.f32 %v12791, %v13074
    %v13082 = vmul.f32 %v12792, %v13074
    %v13083 = vmul.f32 %v12793, %v13074
    %v13084 = vmul.f32 %v12794, %v13074
    %v13085 = vmul.f32 %v12795, %v13074
    %v13086 = vmul.f32 %v12796, %v13074
    %v13087 = vmul.f32 %v12797, %v13074
    %v13088 = vmul.f32 %v12798, %v13074
    %v13089 = vmul.f32 %v12799, %v13074
    %v13090 = vmul.f32 %v12800, %v13074
    %v13091 = vmul.f32 %v12801, %v13074
    %v13092 = vmul.f32 %v12802, %v13074
    %v13093 = vmul.f32 %v12803, %v13074
    %v13094 = vmul.f32 %v12804, %v13074
    %v13095 = vmul.f32 %v12805, %v13074
    %v13096 = vmul.f32 %v12806, %v13074
    %v13097 = vmul.f32 %v12807, %v13074
    %v13098 = vmul.f32 %v12808, %v13074
    %v13099 = vmul.f32 %v12809, %v13074
    %v13100 = vmul.f32 %v12810, %v13074
    %v13101 = vmul.f32 %v12811, %v13074
    %v13102 = vmul.f32 %v12812, %v13074
    %v13103 = vmul.f32 %v12813, %v13074
    %v13104 = vmul.f32 %v12814, %v13074
    %v13105 = vmul.f32 %v12815, %v13074
    %v13106 = vmul.f32 %v12816, %v13074
    %v13107 = vmul.f32 %v12817, %v13074
    %v13108 = vmul.f32 %v12818, %v13074
    %v13109 = vmul.f32 %v12819, %v13074
    %v13110 = vmul.f32 %v12820, %v13074
    %v13111 = vmul.f32 %v12821, %v13074
    %v13112 = vmul.f32 %v12822, %v13074
    %v13113 = vmul.f32 %v12823, %v13078
    %v13114 = vmul.f32 %v12824, %v13078
    %v13115 = vmul.f32 %v12825, %v13078
    %v13116 = vmul.f32 %v12826, %v13078
    %v13117 = vmul.f32 %v12827, %v13078
    %v13118 = vmul.f32 %v12828, %v13078
    %v13119 = vmul.f32 %v12829, %v13078
    %v13120 = vmul.f32 %v12830, %v13078
    %v13121 = vmul.f32 %v12831, %v13078
    %v13122 = vmul.f32 %v12832, %v13078
    %v13123 = vmul.f32 %v12833, %v13078
    %v13124 = vmul.f32 %v12834, %v13078
    %v13125 = vmul.f32 %v12835, %v13078
    %v13126 = vmul.f32 %v12836, %v13078
    %v13127 = vmul.f32 %v12837, %v13078
    %v13128 = vmul.f32 %v12838, %v13078
    %v13129 = vmul.f32 %v12839, %v13078
    %v13130 = vmul.f32 %v12840, %v13078
    %v13131 = vmul.f32 %v12841, %v13078
    %v13132 = vmul.f32 %v12842, %v13078
    %v13133 = vmul.f32 %v12843, %v13078
    %v13134 = vmul.f32 %v12844, %v13078
    %v13135 = vmul.f32 %v12845, %v13078
    %v13136 = vmul.f32 %v12846, %v13078
    %v13137 = vmul.f32 %v12847, %v13078
    %v13138 = vmul.f32 %v12848, %v13078
    %v13139 = vmul.f32 %v12849, %v13078
    %v13140 = vmul.f32 %v12850, %v13078
    %v13141 = vmul.f32 %v12851, %v13078
    %v13142 = vmul.f32 %v12852, %v13078
    %v13143 = vmul.f32 %v12853, %v13078
    %v13144 = vmul.f32 %v12854, %v13078
    %v13145 = vadd.f32 %v13081, %v42
    %v13146 = vadd.f32 %v13082, %v43
    %v13147 = vadd.f32 %v13083, %v44
    %v13148 = vadd.f32 %v13084, %v45
    %v13149 = vadd.f32 %v13085, %v46
    %v13150 = vadd.f32 %v13086, %v47
    %v13151 = vadd.f32 %v13087, %v48
    %v13152 = vadd.f32 %v13088, %v49
    %v13153 = vadd.f32 %v13089, %v50
    %v13154 = vadd.f32 %v13090, %v51
    %v13155 = vadd.f32 %v13091, %v52
    %v13156 = vadd.f32 %v13092, %v53
    %v13157 = vadd.f32 %v13093, %v54
    %v13158 = vadd.f32 %v13094, %v55
    %v13159 = vadd.f32 %v13095, %v56
    %v13160 = vadd.f32 %v13096, %v57
    %v13161 = vadd.f32 %v13097, %v58
    %v13162 = vadd.f32 %v13098, %v59
    %v13163 = vadd.f32 %v13099, %v60
    %v13164 = vadd.f32 %v13100, %v61
    %v13165 = vadd.f32 %v13101, %v62
    %v13166 = vadd.f32 %v13102, %v63
    %v13167 = vadd.f32 %v13103, %v64
    %v13168 = vadd.f32 %v13104, %v65
    %v13169 = vadd.f32 %v13105, %v66
    %v13170 = vadd.f32 %v13106, %v67
    %v13171 = vadd.f32 %v13107, %v68
    %v13172 = vadd.f32 %v13108, %v69
    %v13173 = vadd.f32 %v13109, %v70
    %v13174 = vadd.f32 %v13110, %v71
    %v13175 = vadd.f32 %v13111, %v72
    %v13176 = vadd.f32 %v13112, %v73
    %v13177 = vadd.f32 %v13113, %v74
    %v13178 = vadd.f32 %v13114, %v75
    %v13179 = vadd.f32 %v13115, %v76
    %v13180 = vadd.f32 %v13116, %v77
    %v13181 = vadd.f32 %v13117, %v78
    %v13182 = vadd.f32 %v13118, %v79
    %v13183 = vadd.f32 %v13119, %v80
    %v13184 = vadd.f32 %v13120, %v81
    %v13185 = vadd.f32 %v13121, %v82
    %v13186 = vadd.f32 %v13122, %v83
    %v13187 = vadd.f32 %v13123, %v84
    %v13188 = vadd.f32 %v13124, %v85
    %v13189 = vadd.f32 %v13125, %v86
    %v13190 = vadd.f32 %v13126, %v87
    %v13191 = vadd.f32 %v13127, %v88
    %v13192 = vadd.f32 %v13128, %v89
    %v13193 = vadd.f32 %v13129, %v90
    %v13194 = vadd.f32 %v13130, %v91
    %v13195 = vadd.f32 %v13131, %v92
    %v13196 = vadd.f32 %v13132, %v93
    %v13197 = vadd.f32 %v13133, %v94
    %v13198 = vadd.f32 %v13134, %v95
    %v13199 = vadd.f32 %v13135, %v96
    %v13200 = vadd.f32 %v13136, %v97
    %v13201 = vadd.f32 %v13137, %v98
    %v13202 = vadd.f32 %v13138, %v99
    %v13203 = vadd.f32 %v13139, %v100
    %v13204 = vadd.f32 %v13140, %v101
    %v13205 = vadd.f32 %v13141, %v102
    %v13206 = vadd.f32 %v13142, %v103
    %v13207 = vadd.f32 %v13143, %v104
    %v13208 = vadd.f32 %v13144, %v105
    %13209 = vst.msk [vmem:[#allocation2] sm:$0xff] %vm6407, %v13145
    %13210 = vst.msk [vmem:[#allocation2 + $0x8] sm:$0xff] %vm6407, %v13146
    %13211 = vst.msk [vmem:[#allocation2 + $0x10] sm:$0xff] %vm6407, %v13147
    %13212 = vst.msk [vmem:[#allocation2 + $0x18] sm:$0xff] %vm6407, %v13148
    %13213 = vst.msk [vmem:[#allocation2 + $0x20] sm:$0xff] %vm6407, %v13149
    %13214 = vst.msk [vmem:[#allocation2 + $0x28] sm:$0xff] %vm6407, %v13150
    %13215 = vst.msk [vmem:[#allocation2 + $0x30] sm:$0xff] %vm6407, %v13151
    %13216 = vst.msk [vmem:[#allocation2 + $0x38] sm:$0xff] %vm6407, %v13152
    %13217 = vst.msk [vmem:[#allocation2 + $0x40] sm:$0xff] %vm6407, %v13153
    %13218 = vst.msk [vmem:[#allocation2 + $0x48] sm:$0xff] %vm6407, %v13154
    %13219 = vst.msk [vmem:[#allocation2 + $0x50] sm:$0xff] %vm6407, %v13155
    %13220 = vst.msk [vmem:[#allocation2 + $0x58] sm:$0xff] %vm6407, %v13156
    %13221 = vst.msk [vmem:[#allocation2 + $0x60] sm:$0xff] %vm6407, %v13157
    %13222 = vst.msk [vmem:[#allocation2 + $0x68] sm:$0xff] %vm6407, %v13158
    %13223 = vst.msk [vmem:[#allocation2 + $0x70] sm:$0xff] %vm6407, %v13159
    %13224 = vst.msk [vmem:[#allocation2 + $0x78] sm:$0xff] %vm6407, %v13160
    %13225 = vst.msk [vmem:[#allocation2 + $0x80] sm:$0xff] %vm6407, %v13161
    %13226 = vst.msk [vmem:[#allocation2 + $0x88] sm:$0xff] %vm6407, %v13162
    %13227 = vst.msk [vmem:[#allocation2 + $0x90] sm:$0xff] %vm6407, %v13163
    %13228 = vst.msk [vmem:[#allocation2 + $0x98] sm:$0xff] %vm6407, %v13164
    %13229 = vst.msk [vmem:[#allocation2 + $0xa0] sm:$0xff] %vm6407, %v13165
    %13230 = vst.msk [vmem:[#allocation2 + $0xa8] sm:$0xff] %vm6407, %v13166
    %13231 = vst.msk [vmem:[#allocation2 + $0xb0] sm:$0xff] %vm6407, %v13167
    %13232 = vst.msk [vmem:[#allocation2 + $0xb8] sm:$0xff] %vm6407, %v13168
    %13233 = vst.msk [vmem:[#allocation2 + $0xc0] sm:$0xff] %vm6407, %v13169
    %13234 = vst.msk [vmem:[#allocation2 + $0xc8] sm:$0xff] %vm6407, %v13170
    %13235 = vst.msk [vmem:[#allocation2 + $0xd0] sm:$0xff] %vm6407, %v13171
    %13236 = vst.msk [vmem:[#allocation2 + $0xd8] sm:$0xff] %vm6407, %v13172
    %13237 = vst.msk [vmem:[#allocation2 + $0xe0] sm:$0xff] %vm6407, %v13173
    %13238 = vst.msk [vmem:[#allocation2 + $0xe8] sm:$0xff] %vm6407, %v13174
    %13239 = vst.msk [vmem:[#allocation2 + $0xf0] sm:$0xff] %vm6407, %v13175
    %13240 = vst.msk [vmem:[#allocation2 + $0xf8] sm:$0xff] %vm6407, %v13176
    %13241 = vst.msk [vmem:[#allocation2 + $0x100] sm:$0xff] %vm6407, %v13177
    %13242 = vst.msk [vmem:[#allocation2 + $0x108] sm:$0xff] %vm6407, %v13178
    %13243 = vst.msk [vmem:[#allocation2 + $0x110] sm:$0xff] %vm6407, %v13179
    %13244 = vst.msk [vmem:[#allocation2 + $0x118] sm:$0xff] %vm6407, %v13180
    %13245 = vst.msk [vmem:[#allocation2 + $0x120] sm:$0xff] %vm6407, %v13181
    %13246 = vst.msk [vmem:[#allocation2 + $0x128] sm:$0xff] %vm6407, %v13182
    %13247 = vst.msk [vmem:[#allocation2 + $0x130] sm:$0xff] %vm6407, %v13183
    %13248 = vst.msk [vmem:[#allocation2 + $0x138] sm:$0xff] %vm6407, %v13184
    %13249 = vst.msk [vmem:[#allocation2 + $0x140] sm:$0xff] %vm6407, %v13185
    %13250 = vst.msk [vmem:[#allocation2 + $0x148] sm:$0xff] %vm6407, %v13186
    %13251 = vst.msk [vmem:[#allocation2 + $0x150] sm:$0xff] %vm6407, %v13187
    %13252 = vst.msk [vmem:[#allocation2 + $0x158] sm:$0xff] %vm6407, %v13188
    %13253 = vst.msk [vmem:[#allocation2 + $0x160] sm:$0xff] %vm6407, %v13189
    %13254 = vst.msk [vmem:[#allocation2 + $0x168] sm:$0xff] %vm6407, %v13190
    %13255 = vst.msk [vmem:[#allocation2 + $0x170] sm:$0xff] %vm6407, %v13191
    %13256 = vst.msk [vmem:[#allocation2 + $0x178] sm:$0xff] %vm6407, %v13192
    %13257 = vst.msk [vmem:[#allocation2 + $0x180] sm:$0xff] %vm6407, %v13193
    %13258 = vst.msk [vmem:[#allocation2 + $0x188] sm:$0xff] %vm6407, %v13194
    %13259 = vst.msk [vmem:[#allocation2 + $0x190] sm:$0xff] %vm6407, %v13195
    %13260 = vst.msk [vmem:[#allocation2 + $0x198] sm:$0xff] %vm6407, %v13196
    %13261 = vst.msk [vmem:[#allocation2 + $0x1a0] sm:$0xff] %vm6407, %v13197
    %13262 = vst.msk [vmem:[#allocation2 + $0x1a8] sm:$0xff] %vm6407, %v13198
    %13263 = vst.msk [vmem:[#allocation2 + $0x1b0] sm:$0xff] %vm6407, %v13199
    %13264 = vst.msk [vmem:[#allocation2 + $0x1b8] sm:$0xff] %vm6407, %v13200
    %13265 = vst.msk [vmem:[#allocation2 + $0x1c0] sm:$0xff] %vm6407, %v13201
    %13266 = vst.msk [vmem:[#allocation2 + $0x1c8] sm:$0xff] %vm6407, %v13202
    %13267 = vst.msk [vmem:[#allocation2 + $0x1d0] sm:$0xff] %vm6407, %v13203
    %13268 = vst.msk [vmem:[#allocation2 + $0x1d8] sm:$0xff] %vm6407, %v13204
    %13269 = vst.msk [vmem:[#allocation2 + $0x1e0] sm:$0xff] %vm6407, %v13205
    %13270 = vst.msk [vmem:[#allocation2 + $0x1e8] sm:$0xff] %vm6407, %v13206
    %13271 = vst.msk [vmem:[#allocation2 + $0x1f0] sm:$0xff] %vm6407, %v13207
    %13272 = vst.msk [vmem:[#allocation2 + $0x1f8] sm:$0xff] %vm6407, %v13208
    // Predicated region
    $region50: #{lfa_encoder_forward.1} parent=1 // pred_check
      _
    $region51: #{lfa_encoder_forward.1} parent=1 // pred_check_branch
      %13274 = sbr.rel (0) target = $region53
    $region52: #{lfa_encoder_forward.1} parent=1 // pred_region
      %s13276 = ssub.s32 8192, 8192
      %13277 = vsyncadd [#allocation3], %s13276
      %s13278 = sshll.u32 [#allocation2], 4
      %s13279 = int_to_ptr.vmem [resolvable:$true] %s13278
      %13284 = dma.vmem_to_hbm [thread:$0]  %s13279, 8192, %s12, [#allocation3], 128, 128, 8
    $region53: #{lfa_encoder_forward.1} parent=1 // pred_fallthru
      _
    // Predicated region
    $region54: #{lfa_encoder_forward.1} parent=1 // pred_check
      _
    $region55: #{lfa_encoder_forward.1} parent=1 // pred_check_branch
      %13286 = sbr.rel (0) target = $region57
    $region56: #{lfa_encoder_forward.1} parent=1 // pred_region
      %13287 = dma.done [#allocation3], 8192
    $region57: #{lfa_encoder_forward.1} parent=1 // pred_fallthru
      _
    %13288 = vsyncpa [#allocation3], 1

</llo_original>
